<compile_context>
chip_gen: v7x
topology: tpu7x:2x2x1
jax: 0.10.0
libtpu: 0.0.40
codegen_flags: <defaults>
</compile_context>

<pallas_src>
import functools

import jax
import jax.numpy as jnp
from jax.experimental import pallas as pl
from jax.experimental.pallas import tpu as pltpu

_BN_EPS = 1e-5
_LANE = 128


# ----------------------------------------------------------------------------
# Pallas kernels
# ----------------------------------------------------------------------------
def _apply_act(y, act):
    if act == "relu":
        return jnp.maximum(y, 0.0)
    if act == "sigmoid":
        return jax.nn.sigmoid(y)
    if act == "sigmoid_half":          # sigmoid((x)/2), used by T_CCA
        return jax.nn.sigmoid(0.5 * y)
    if act == "hswish":                # x * relu6(x+3)/6
        return y * jnp.clip(y + 3.0, 0.0, 6.0) * (1.0 / 6.0)
    return y


def _mm1_kernel(a_ref, b_ref, c_ref, o_ref, *, act):
    y = jnp.dot(a_ref[...], b_ref[...], preferred_element_type=jnp.float32)
    o_ref[...] = _apply_act(y + c_ref[...], act)


def _mm2_kernel(a_ref, b1_ref, c1_ref, b2_ref, c2_ref, o_ref, *, act1, act2):
    y1 = jnp.dot(a_ref[...], b1_ref[...], preferred_element_type=jnp.float32)
    y1 = _apply_act(y1 + c1_ref[...], act1)
    y2 = jnp.dot(y1.astype(b2_ref.dtype), b2_ref[...],
                 preferred_element_type=jnp.float32)
    o_ref[...] = _apply_act(y2 + c2_ref[...], act2)


def _row_tiles(m):
    # Split M into 2 row tiles when big enough (lets v7x shard across its 2 TCs);
    # otherwise a single full-M block (no M padding ever needed).
    if m >= 256 and m % 32 == 0:
        return m // 2, 2
    return m, 1


def fused_matmul(a, b, bias, act="none"):
    """act(a @ b + bias); b is pre-padded lane-dense (N % 128 == 0), bf16."""
    m, k = a.shape
    kb, n = b.shape
    assert kb == k and n % _LANE == 0
    a = a.astype(jnp.bfloat16)
    tm, steps = _row_tiles(m)
    return pl.pallas_call(
        functools.partial(_mm1_kernel, act=act),
        out_shape=jax.ShapeDtypeStruct((m, n), jnp.float32),
        grid_spec=pltpu.PrefetchScalarGridSpec(
            num_scalar_prefetch=0,
            grid=(steps,),
            in_specs=[
                pl.BlockSpec((tm, k), lambda i: (i, 0)),
                pl.BlockSpec((k, n), lambda i: (0, 0)),
                pl.BlockSpec((1, n), lambda i: (0, 0)),
            ],
            out_specs=pl.BlockSpec((tm, n), lambda i: (i, 0)),
        ),
        compiler_params=pltpu.CompilerParams(dimension_semantics=("parallel",)),
    )(a, b, bias)


def fused_matmul2(a, b1, c1, b2, c2, act1, act2):
    """act2(act1(a @ b1 + c1) @ b2 + c2); intermediate never leaves VMEM."""
    m, k = a.shape
    _, n1 = b1.shape
    _, n2 = b2.shape
    assert n1 % _LANE == 0 and n2 % _LANE == 0
    a = a.astype(jnp.bfloat16)
    tm, steps = _row_tiles(m)
    return pl.pallas_call(
        functools.partial(_mm2_kernel, act1=act1, act2=act2),
        out_shape=jax.ShapeDtypeStruct((m, n2), jnp.float32),
        grid_spec=pltpu.PrefetchScalarGridSpec(
            num_scalar_prefetch=0,
            grid=(steps,),
            in_specs=[
                pl.BlockSpec((tm, k), lambda i: (i, 0)),
                pl.BlockSpec((k, n1), lambda i: (0, 0)),
                pl.BlockSpec((1, n1), lambda i: (0, 0)),
                pl.BlockSpec((n1, n2), lambda i: (0, 0)),
                pl.BlockSpec((1, n2), lambda i: (0, 0)),
            ],
            out_specs=pl.BlockSpec((tm, n2), lambda i: (i, 0)),
        ),
        compiler_params=pltpu.CompilerParams(dimension_semantics=("parallel",)),
    )(a, b1, c1, b2, c2)


# ----------------------------------------------------------------------------
# Parameter construction (synthetic weights; BN folded; N padded to 128)
# ----------------------------------------------------------------------------
def _pad_cols(w, n_to):
    return jnp.pad(w, ((0, 0), (0, n_to - w.shape[1])))


def _pad_vec(v, n_to):
    return jnp.pad(v.reshape(-1), (0, n_to - v.shape[0]))


def make_cbn(key, cin, cout):
    """Conv3x3 + BatchNorm(eval) + activation, BN folded into weight/bias."""
    kw_, kb_ = jax.random.split(key)
    w = jax.random.normal(kw_, (9 * cin, cout), jnp.float32) / jnp.sqrt(
        jnp.float32(9 * cin))
    b = 0.01 * jax.random.normal(kb_, (cout,), jnp.float32)
    # BN (eval, fresh stats): gamma=1, beta=0, mean=0, var=1
    s = 1.0 / jnp.sqrt(1.0 + _BN_EPS)
    w_f = w * s
    b_f = b * s
    return {
        "w": _pad_cols(w_f, _LANE).astype(jnp.bfloat16),
        "b": _pad_vec(b_f, _LANE).reshape(1, _LANE).astype(jnp.float32),
    }


def make_coord(key, c):
    temp = max(8, c // 32)
    k = jax.random.split(key, 6)
    s1 = 1.0 / jnp.sqrt(1.0 + _BN_EPS)
    w1 = jax.random.normal(k[0], (c, temp), jnp.float32) / jnp.sqrt(jnp.float32(c)) * s1
    b1 = 0.01 * jax.random.normal(k[1], (temp,), jnp.float32) * s1
    w2 = jax.random.normal(k[2], (temp, c), jnp.float32) / jnp.sqrt(jnp.float32(temp))
    b2 = 0.01 * jax.random.normal(k[3], (c,), jnp.float32)
    w3 = jax.random.normal(k[4], (temp, c), jnp.float32) / jnp.sqrt(jnp.float32(temp))
    b3 = 0.01 * jax.random.normal(k[5], (c,), jnp.float32)
    # stage-2 weight holds [conv2 | conv3] side by side, rows beyond temp are zero
    w23 = jnp.zeros((_LANE, 2 * _LANE), jnp.float32)
    w23 = w23.at[:temp, :c].set(w2).at[:temp, _LANE:_LANE + c].set(w3)
    b23 = jnp.zeros((2 * _LANE,), jnp.float32).at[:c].set(b2).at[_LANE:_LANE + c].set(b3)
    return {
        "w1": _pad_cols(w1, _LANE).astype(jnp.bfloat16),
        "b1": _pad_vec(b1, _LANE).reshape(1, _LANE).astype(jnp.float32),
        "w23": w23.astype(jnp.bfloat16),
        "b23": b23.reshape(1, 2 * _LANE).astype(jnp.float32),
    }


def make_tcca(key, f_g, f_x):
    k = jax.random.split(key, 4)
    wx = jax.random.normal(k[0], (f_x, f_x), jnp.float32) / jnp.sqrt(jnp.float32(f_x))
    bx = 0.01 * jax.random.normal(k[1], (f_x,), jnp.float32)
    wg = jax.random.normal(k[2], (f_g, f_x), jnp.float32) / jnp.sqrt(jnp.float32(f_g))
    bg = 0.01 * jax.random.normal(k[3], (f_x,), jnp.float32)
    # one GEMM: [px | pg] @ [wx ; wg] + (bx + bg)  ==  px@wx + pg@wg + bx + bg
    w = jnp.concatenate([wx, wg], axis=0)
    return {
        "w": _pad_cols(w, _LANE).astype(jnp.bfloat16),
        "b": _pad_vec(bx + bg, _LANE).reshape(1, _LANE).astype(jnp.float32),
    }


def make_outc(key, c, n_classes):
    kw_, kb_ = jax.random.split(key)
    w = jax.random.normal(kw_, (c, n_classes), jnp.float32) / jnp.sqrt(jnp.float32(c))
    b = 0.01 * jax.random.normal(kb_, (n_classes,), jnp.float32)
    wp = jnp.zeros((_LANE, _LANE), jnp.float32).at[:c, :n_classes].set(w)
    return {
        "w": wp.astype(jnp.bfloat16),
        "b": _pad_vec(b, _LANE).reshape(1, _LANE).astype(jnp.float32),
    }


def make_down(key, cin, cout):
    k1, k2 = jax.random.split(key)
    return {"c1": make_cbn(k1, cin, cout), "c2": make_cbn(k2, cout, cout)}


def make_up(key, cin, cout):
    k1, k2, k3 = jax.random.split(key, 3)
    half = cin // 2
    return {
        "tcca": make_tcca(k1, half, half),
        "c1": make_cbn(k2, cin, cout),
        "c2": make_cbn(k3, cout, cout),
    }


def init_params(key, base_c=8, n_channels=3, n_classes=1):
    ks = jax.random.split(key, 11)
    c = base_c
    cin_pad = max(8, -(-n_channels // 8) * 8)   # input channels padded to >= 8
    p = {}
    p["inc"] = make_cbn(ks[0], cin_pad, c)
    p["att1"] = make_coord(ks[1], c)
    p["down1"] = make_down(ks[2], c, 2 * c)
    p["down2"] = make_down(ks[3], 2 * c, 4 * c)
    p["down3"] = make_down(ks[4], 4 * c, 8 * c)
    p["down4"] = make_down(ks[5], 8 * c, 8 * c)
    p["up4"] = make_up(ks[6], 16 * c, 4 * c)
    p["up3"] = make_up(ks[7], 8 * c, 2 * c)
    p["up2"] = make_up(ks[8], 4 * c, c)
    p["up1"] = make_up(ks[9], 2 * c, c)
    p["outc"] = make_outc(ks[10], c, n_classes)
    return p


# ----------------------------------------------------------------------------
# Forward-pass building blocks (glue in JAX, hot path in the Pallas kernels)
# ----------------------------------------------------------------------------
def _im2col3(x):
    n, h, w, cin = x.shape
    xp = jnp.pad(x, ((0, 0), (1, 1), (1, 1), (0, 0)))
    cols = [xp[:, dy:dy + h, dx:dx + w, :] for dy in range(3) for dx in range(3)]
    return jnp.concatenate(cols, axis=-1).reshape(n * h * w, 9 * cin)


def conv_bn_relu(x, p, cout):
    n, h, w, _ = x.shape
    out = fused_matmul(_im2col3(x), p["w"], p["b"], act="relu")
    return out[:, :cout].reshape(n, h, w, cout)


def conv_then_1x1(x, p_conv, p_out, n_out, act2):
    """3x3 conv+BN+ReLU fused with a following 1x1 conv + activation (1 call)."""
    n, h, w, _ = x.shape
    out = fused_matmul2(_im2col3(x), p_conv["w"], p_conv["b"],
                        p_out["w"], p_out["b"], act1="relu", act2=act2)
    return out[:, :n_out].reshape(n, h, w, n_out)


def coord_attention(x, p):
    n, h, w, c = x.shape
    x_h = jnp.mean(x, axis=2)                       # pool over W -> (N, H, C)
    x_w = jnp.mean(x, axis=1)                       # pool over H -> (N, W, C)
    x_cat = jnp.concatenate([x_h, x_w], axis=1).reshape(n * (h + w), c)
    # conv1+BN+hswish and conv2/conv3+sigmoid fused into one two-stage kernel
    out = fused_matmul2(x_cat, p["w1"], p["b1"], p["w23"], p["b23"],
                        act1="hswish", act2="sigmoid")
    out = out.reshape(n, h + w, 2 * _LANE)
    out_h = out[:, :h, :c].reshape(n, h, 1, c)                  # conv2 on x_h rows
    out_w = out[:, h:, _LANE:_LANE + c].reshape(n, 1, w, c)     # conv3 on x_w rows
    return x * out_w * out_h


def maxpool2(x):
    n, h, w, c = x.shape
    return jnp.max(x.reshape(n, h // 2, 2, w // 2, 2, c), axis=(2, 4))


def upsample2(x):  # nn.Upsample(scale_factor=2), nearest
    return jnp.repeat(jnp.repeat(x, 2, axis=1), 2, axis=2)


def down_block(x, p, cout):
    x = maxpool2(x)
    x = conv_bn_relu(x, p["c1"], cout)
    return conv_bn_relu(x, p["c2"], cout)


def soft_pool_global(x):
    # soft_pool2d with kernel == full spatial extent (matches the reference code:
    # e_x = sum_c exp(x); out = sum_hw(x * e_x) / sum_hw(e_x); the sum(kernel)
    # factor cancels between numerator and denominator).
    e = jnp.sum(jnp.exp(x), axis=-1, keepdims=True)      # (N, H, W, 1)
    num = jnp.sum(x * e, axis=(1, 2))                    # (N, C)
    den = jnp.sum(e, axis=(1, 2))                        # (N, 1)
    return num / den


def t_cca(g, x, p):
    c = x.shape[-1]
    px = soft_pool_global(x)
    pg = soft_pool_global(g)
    pxg = jnp.concatenate([px, pg], axis=-1)             # (N, Cx+Cg)
    att = fused_matmul(pxg, p["w"], p["b"], act="sigmoid_half")
    scale = att[:, :c]                                   # sigmoid((ax+ag)/2)
    return jnp.maximum(x * scale[:, None, None, :], 0.0)


def up_block(x, skip, p, cout):
    up = upsample2(x)
    skip_att = t_cca(up, skip, p["tcca"])
    cat = jnp.concatenate([skip_att, up], axis=-1)       # torch cat(dim=1) == NHWC last
    out = conv_bn_relu(cat, p["c1"], cout)
    return conv_bn_relu(out, p["c2"], cout)


def maunet_forward(x_nchw, params, base_c=8, n_classes=1):
    c = base_c
    x = jnp.transpose(x_nchw, (0, 2, 3, 1)).astype(jnp.float32)   # NCHW -> NHWC
    cin = x.shape[-1]
    cin_pad = max(8, -(-cin // 8) * 8)
    if cin_pad != cin:     # one-time zero pad; extra weight rows see only zeros
        x = jnp.pad(x, ((0, 0), (0, 0), (0, 0), (0, cin_pad - cin)))
    d1 = conv_bn_relu(x, params["inc"], c)
    d1 = coord_attention(d1, params["att1"])
    d2 = down_block(d1, params["down1"], 2 * c)
    d3 = down_block(d2, params["down2"], 4 * c)
    d4 = down_block(d3, params["down3"], 8 * c)
    d5 = down_block(d4, params["down4"], 8 * c)
    # TODO(synk): DCT13/DCT24 channel-transformer blocks are not defined in the
    # provided source; treated as identity pass-through so o_i == d_i.
    o1, o2, o3, o4 = d1, d2, d3, d4
    u4 = up_block(d5, o4, params["up4"], 4 * c)
    u3 = up_block(u4, o3, params["up3"], 2 * c)
    u2 = up_block(u3, o2, params["up2"], c)
    # up1: its second conv is fused with the 1x1 output head (+ sigmoid) in 1 call
    p1 = params["up1"]
    up = upsample2(u2)
    skip_att = t_cca(up, o1, p1["tcca"])
    cat = jnp.concatenate([skip_att, up], axis=-1)
    h = conv_bn_relu(cat, p1["c1"], c)
    act2 = "sigmoid" if n_classes == 1 else "none"       # last_activation
    logits = conv_then_1x1(h, p1["c2"], params["outc"], n_classes, act2)
    return jnp.transpose(logits, (0, 3, 1, 2))           # back to NCHW


if __name__ == "__main__":
    key = jax.random.PRNGKey(0)
    pkey, xkey = jax.random.split(key)
    params = init_params(pkey, base_c=8, n_channels=3, n_classes=1)
    x = jax.random.normal(xkey, (2, 3, 16, 16), jnp.float32)

    fwd = jax.jit(maunet_forward)
    out = jax.block_until_ready(fwd(x, params))

    assert out.shape == (2, 1, 16, 16), out.shape
    assert bool(jnp.all(jnp.isfinite(out)))
    print("KERNEL_OK")
</pallas_src>

<mosaic_0001>
module attributes {stable_mosaic.version = 11 : i64} {
  func.func @_mm1_kernel(%arg0: i32, %arg1: memref<256x72xbf16, #tpu.memory_space<vmem>>, %arg2: memref<72x128xbf16, #tpu.memory_space<vmem>>, %arg3: memref<1x128xf32, #tpu.memory_space<vmem>>, %arg4: memref<256x128xf32, #tpu.memory_space<vmem>>) attributes {dimension_semantics = [#tpu.dimension_semantics<parallel>], iteration_bounds = array<i64: 2>, scalar_prefetch = 0 : i64, scratch_operands = 0 : i64, tpu.core_type = #tpu.core_type<tc>, window_params = [{transform_indices = @transform_0, window_bounds = array<i64: 256, 72>}, {pipeline_mode = #tpu.pipeline_mode<synchronous>, transform_indices = @transform_1, window_bounds = array<i64: 72, 128>}, {pipeline_mode = #tpu.pipeline_mode<synchronous>, transform_indices = @transform_2, window_bounds = array<i64: 1, 128>}, {transform_indices = @transform_3, window_bounds = array<i64: 256, 128>}]} {
    %c0 = arith.constant 0 : index
    %c0_0 = arith.constant 0 : index
    %0 = vector.load %arg1[%c0, %c0_0] : memref<256x72xbf16, #tpu.memory_space<vmem>>, vector<256x72xbf16>
    %c0_1 = arith.constant 0 : index
    %c0_2 = arith.constant 0 : index
    %1 = vector.load %arg2[%c0_1, %c0_2] : memref<72x128xbf16, #tpu.memory_space<vmem>>, vector<72x128xbf16>
    %cst = arith.constant dense<0.000000e+00> : vector<256x128xf32>
    %2 = tpu.matmul %0, %1, %cst {dimension_numbers = #tpu.dot_dimension_numbers<[1], [0], [0], [1], [0, 0, 1, 1], [], []>} : vector<256x72xbf16>, vector<72x128xbf16>, vector<256x128xf32> -> vector<256x128xf32>
    %c0_3 = arith.constant 0 : index
    %c0_4 = arith.constant 0 : index
    %3 = vector.load %arg3[%c0_3, %c0_4] : memref<1x128xf32, #tpu.memory_space<vmem>>, vector<1x128xf32>
    %4 = vector.broadcast %3 : vector<1x128xf32> to vector<256x128xf32>
    %5 = arith.addf %2, %4 : vector<256x128xf32>
    %cst_5 = arith.constant 0.000000e+00 : f32
    %6 = vector.broadcast %cst_5 : f32 to vector<256x128xf32>
    %7 = arith.maximumf %5, %6 : vector<256x128xf32>
    %c0_6 = arith.constant 0 : index
    %c0_7 = arith.constant 0 : index
    %8 = vector.load %arg4[%c0_6, %c0_7] : memref<256x128xf32, #tpu.memory_space<vmem>>, vector<256x128xf32>
    tpu.vector_store %arg4[%c0_6, %c0_7], %7 {strides = array<i32>} : memref<256x128xf32, #tpu.memory_space<vmem>>, vector<256x128xf32>,
    return
  }
  func.func @transform_0(%arg0: i32) -> (i32, i32) {
    %c0_i32 = arith.constant 0 : i32
    %c0_i32_0 = arith.constant 0 : i32
    return %arg0, %c0_i32 : i32, i32
  }
  func.func @transform_1(%arg0: i32) -> (i32, i32) {
    %c0_i32 = arith.constant 0 : i32
    %c0_i32_0 = arith.constant 0 : i32
    %c0_i32_1 = arith.constant 0 : i32
    return %c0_i32, %c0_i32_0 : i32, i32
  }
  func.func @transform_2(%arg0: i32) -> (i32, i32) {
    %c0_i32 = arith.constant 0 : i32
    %c0_i32_0 = arith.constant 0 : i32
    %c0_i32_1 = arith.constant 0 : i32
    return %c0_i32, %c0_i32_0 : i32, i32
  }
  func.func @transform_3(%arg0: i32) -> (i32, i32) {
    %c0_i32 = arith.constant 0 : i32
    %c0_i32_0 = arith.constant 0 : i32
    return %arg0, %c0_i32 : i32, i32
  }
}

module attributes {stable_mosaic.version = 11 : i64} {
  func.func @_mm2_kernel(%arg0: i32, %arg1: memref<64x8xbf16, #tpu.memory_space<vmem>>, %arg2: memref<8x128xbf16, #tpu.memory_space<vmem>>, %arg3: memref<1x128xf32, #tpu.memory_space<vmem>>, %arg4: memref<128x256xbf16, #tpu.memory_space<vmem>>, %arg5: memref<1x256xf32, #tpu.memory_space<vmem>>, %arg6: memref<64x256xf32, #tpu.memory_space<vmem>>) attributes {dimension_semantics = [#tpu.dimension_semantics<parallel>], iteration_bounds = array<i64: 1>, scalar_prefetch = 0 : i64, scratch_operands = 0 : i64, tpu.core_type = #tpu.core_type<tc>, window_params = [{transform_indices = @transform_0, window_bounds = array<i64: 64, 8>}, {pipeline_mode = #tpu.pipeline_mode<synchronous>, transform_indices = @transform_1, window_bounds = array<i64: 8, 128>}, {pipeline_mode = #tpu.pipeline_mode<synchronous>, transform_indices = @transform_2, window_bounds = array<i64: 1, 128>}, {pipeline_mode = #tpu.pipeline_mode<synchronous>, transform_indices = @transform_3, window_bounds = array<i64: 128, 256>}, {pipeline_mode = #tpu.pipeline_mode<synchronous>, transform_indices = @transform_4, window_bounds = array<i64: 1, 256>}, {transform_indices = @transform_5, window_bounds = array<i64: 64, 256>}]} {
    %c0 = arith.constant 0 : index
    %c0_0 = arith.constant 0 : index
    %0 = vector.load %arg1[%c0, %c0_0] : memref<64x8xbf16, #tpu.memory_space<vmem>>, vector<64x8xbf16>
    %c0_1 = arith.constant 0 : index
    %c0_2 = arith.constant 0 : index
    %1 = vector.load %arg2[%c0_1, %c0_2] : memref<8x128xbf16, #tpu.memory_space<vmem>>, vector<8x128xbf16>
    %cst = arith.constant dense<0.000000e+00> : vector<64x128xf32>
    %2 = tpu.matmul %0, %1, %cst {dimension_numbers = #tpu.dot_dimension_numbers<[1], [0], [0], [1], [0, 0, 1, 1], [], []>} : vector<64x8xbf16>, vector<8x128xbf16>, vector<64x128xf32> -> vector<64x128xf32>
    %c0_3 = arith.constant 0 : index
    %c0_4 = arith.constant 0 : index
    %3 = vector.load %arg3[%c0_3, %c0_4] : memref<1x128xf32, #tpu.memory_space<vmem>>, vector<1x128xf32>
    %4 = vector.broadcast %3 : vector<1x128xf32> to vector<64x128xf32>
    %5 = arith.addf %2, %4 : vector<64x128xf32>
    %cst_5 = arith.constant 3.000000e+00 : f32
    %6 = vector.broadcast %cst_5 : f32 to vector<64x128xf32>
    %7 = arith.addf %5, %6 : vector<64x128xf32>
    %cst_6 = arith.constant 0.000000e+00 : f32
    %cst_7 = arith.constant 6.000000e+00 : f32
    %8 = vector.broadcast %cst_6 : f32 to vector<64x128xf32>
    %9 = arith.maximumf %8, %7 : vector<64x128xf32>
    %10 = vector.broadcast %cst_7 : f32 to vector<64x128xf32>
    %11 = arith.minimumf %10, %9 : vector<64x128xf32>
    %12 = arith.mulf %5, %11 : vector<64x128xf32>
    %cst_8 = arith.constant 0.166666672 : f32
    %13 = vector.broadcast %cst_8 : f32 to vector<64x128xf32>
    %14 = arith.mulf %12, %13 : vector<64x128xf32>
    %15 = arith.truncf %14 : vector<64x128xf32> to vector<64x128xbf16>
    %c0_9 = arith.constant 0 : index
    %c0_10 = arith.constant 0 : index
    %16 = vector.load %arg4[%c0_9, %c0_10] : memref<128x256xbf16, #tpu.memory_space<vmem>>, vector<128x256xbf16>
    %cst_11 = arith.constant dense<0.000000e+00> : vector<64x256xf32>
    %17 = tpu.matmul %15, %16, %cst_11 {dimension_numbers = #tpu.dot_dimension_numbers<[1], [0], [0], [1], [0, 0, 1, 1], [], []>} : vector<64x128xbf16>, vector<128x256xbf16>, vector<64x256xf32> -> vector<64x256xf32>
    %c0_12 = arith.constant 0 : index
    %c0_13 = arith.constant 0 : index
    %18 = vector.load %arg5[%c0_12, %c0_13] : memref<1x256xf32, #tpu.memory_space<vmem>>, vector<1x256xf32>
    %19 = vector.broadcast %18 : vector<1x256xf32> to vector<64x256xf32>
    %20 = arith.addf %17, %19 : vector<64x256xf32>
    %21 = arith.negf %20 : vector<64x256xf32>
    %22 = math.exp %21 : vector<64x256xf32>
    %cst_14 = arith.constant 1.000000e+00 : f32
    %23 = vector.broadcast %cst_14 : f32 to vector<64x256xf32>
    %24 = arith.addf %23, %22 : vector<64x256xf32>
    %25 = arith.divf %23, %24 : vector<64x256xf32>
    %c0_15 = arith.constant 0 : index
    %c0_16 = arith.constant 0 : index
    %26 = vector.load %arg6[%c0_15, %c0_16] : memref<64x256xf32, #tpu.memory_space<vmem>>, vector<64x256xf32>
    tpu.vector_store %arg6[%c0_15, %c0_16], %25 {strides = array<i32>} : memref<64x256xf32, #tpu.memory_space<vmem>>, vector<64x256xf32>,
    return
  }
  func.func @transform_0(%arg0: i32) -> (i32, i32) {
    %c0_i32 = arith.constant 0 : i32
    %c0_i32_0 = arith.constant 0 : i32
    return %arg0, %c0_i32 : i32, i32
  }
  func.func @transform_1(%arg0: i32) -> (i32, i32) {
    %c0_i32 = arith.constant 0 : i32
    %c0_i32_0 = arith.constant 0 : i32
    %c0_i32_1 = arith.constant 0 : i32
    return %c0_i32, %c0_i32_0 : i32, i32
  }
  func.func @transform_2(%arg0: i32) -> (i32, i32) {
    %c0_i32 = arith.constant 0 : i32
    %c0_i32_0 = arith.constant 0 : i32
    %c0_i32_1 = arith.constant 0 : i32
    return %c0_i32, %c0_i32_0 : i32, i32
  }
  func.func @transform_3(%arg0: i32) -> (i32, i32) {
    %c0_i32 = arith.constant 0 : i32
    %c0_i32_0 = arith.constant 0 : i32
    %c0_i32_1 = arith.constant 0 : i32
    return %c0_i32, %c0_i32_0 : i32, i32
  }
  func.func @transform_4(%arg0: i32) -> (i32, i32) {
    %c0_i32 = arith.constant 0 : i32
    %c0_i32_0 = arith.constant 0 : i32
    %c0_i32_1 = arith.constant 0 : i32
    return %c0_i32, %c0_i32_0 : i32, i32
  }
  func.func @transform_5(%arg0: i32) -> (i32, i32) {
    %c0_i32 = arith.constant 0 : i32
    %c0_i32_0 = arith.constant 0 : i32
    return %arg0, %c0_i32 : i32, i32
  }
}

module attributes {stable_mosaic.version = 11 : i64} {
  func.func @_mm1_kernel(%arg0: i32, %arg1: memref<128x72xbf16, #tpu.memory_space<vmem>>, %arg2: memref<72x128xbf16, #tpu.memory_space<vmem>>, %arg3: memref<1x128xf32, #tpu.memory_space<vmem>>, %arg4: memref<128x128xf32, #tpu.memory_space<vmem>>) attributes {dimension_semantics = [#tpu.dimension_semantics<parallel>], iteration_bounds = array<i64: 1>, scalar_prefetch = 0 : i64, scratch_operands = 0 : i64, tpu.core_type = #tpu.core_type<tc>, window_params = [{transform_indices = @transform_0, window_bounds = array<i64: 128, 72>}, {pipeline_mode = #tpu.pipeline_mode<synchronous>, transform_indices = @transform_1, window_bounds = array<i64: 72, 128>}, {pipeline_mode = #tpu.pipeline_mode<synchronous>, transform_indices = @transform_2, window_bounds = array<i64: 1, 128>}, {transform_indices = @transform_3, window_bounds = array<i64: 128, 128>}]} {
    %c0 = arith.constant 0 : index
    %c0_0 = arith.constant 0 : index
    %0 = vector.load %arg1[%c0, %c0_0] : memref<128x72xbf16, #tpu.memory_space<vmem>>, vector<128x72xbf16>
    %c0_1 = arith.constant 0 : index
    %c0_2 = arith.constant 0 : index
    %1 = vector.load %arg2[%c0_1, %c0_2] : memref<72x128xbf16, #tpu.memory_space<vmem>>, vector<72x128xbf16>
    %cst = arith.constant dense<0.000000e+00> : vector<128x128xf32>
    %2 = tpu.matmul %0, %1, %cst {dimension_numbers = #tpu.dot_dimension_numbers<[1], [0], [0], [1], [0, 0, 1, 1], [], []>} : vector<128x72xbf16>, vector<72x128xbf16>, vector<128x128xf32> -> vector<128x128xf32>
    %c0_3 = arith.constant 0 : index
    %c0_4 = arith.constant 0 : index
    %3 = vector.load %arg3[%c0_3, %c0_4] : memref<1x128xf32, #tpu.memory_space<vmem>>, vector<1x128xf32>
    %4 = vector.broadcast %3 : vector<1x128xf32> to vector<128x128xf32>
    %5 = arith.addf %2, %4 : vector<128x128xf32>
    %cst_5 = arith.constant 0.000000e+00 : f32
    %6 = vector.broadcast %cst_5 : f32 to vector<128x128xf32>
    %7 = arith.maximumf %5, %6 : vector<128x128xf32>
    %c0_6 = arith.constant 0 : index
    %c0_7 = arith.constant 0 : index
    %8 = vector.load %arg4[%c0_6, %c0_7] : memref<128x128xf32, #tpu.memory_space<vmem>>, vector<128x128xf32>
    tpu.vector_store %arg4[%c0_6, %c0_7], %7 {strides = array<i32>} : memref<128x128xf32, #tpu.memory_space<vmem>>, vector<128x128xf32>,
    return
  }
  func.func @transform_0(%arg0: i32) -> (i32, i32) {
    %c0_i32 = arith.constant 0 : i32
    %c0_i32_0 = arith.constant 0 : i32
    return %arg0, %c0_i32 : i32, i32
  }
  func.func @transform_1(%arg0: i32) -> (i32, i32) {
    %c0_i32 = arith.constant 0 : i32
    %c0_i32_0 = arith.constant 0 : i32
    %c0_i32_1 = arith.constant 0 : i32
    return %c0_i32, %c0_i32_0 : i32, i32
  }
  func.func @transform_2(%arg0: i32) -> (i32, i32) {
    %c0_i32 = arith.constant 0 : i32
    %c0_i32_0 = arith.constant 0 : i32
    %c0_i32_1 = arith.constant 0 : i32
    return %c0_i32, %c0_i32_0 : i32, i32
  }
  func.func @transform_3(%arg0: i32) -> (i32, i32) {
    %c0_i32 = arith.constant 0 : i32
    %c0_i32_0 = arith.constant 0 : i32
    return %arg0, %c0_i32 : i32, i32
  }
}

module attributes {stable_mosaic.version = 11 : i64} {
  func.func @_mm1_kernel(%arg0: i32, %arg1: memref<128x144xbf16, #tpu.memory_space<vmem>>, %arg2: memref<144x128xbf16, #tpu.memory_space<vmem>>, %arg3: memref<1x128xf32, #tpu.memory_space<vmem>>, %arg4: memref<128x128xf32, #tpu.memory_space<vmem>>) attributes {dimension_semantics = [#tpu.dimension_semantics<parallel>], iteration_bounds = array<i64: 1>, scalar_prefetch = 0 : i64, scratch_operands = 0 : i64, tpu.core_type = #tpu.core_type<tc>, window_params = [{transform_indices = @transform_0, window_bounds = array<i64: 128, 144>}, {pipeline_mode = #tpu.pipeline_mode<synchronous>, transform_indices = @transform_1, window_bounds = array<i64: 144, 128>}, {pipeline_mode = #tpu.pipeline_mode<synchronous>, transform_indices = @transform_2, window_bounds = array<i64: 1, 128>}, {transform_indices = @transform_3, window_bounds = array<i64: 128, 128>}]} {
    %c0 = arith.constant 0 : index
    %c0_0 = arith.constant 0 : index
    %0 = vector.load %arg1[%c0, %c0_0] : memref<128x144xbf16, #tpu.memory_space<vmem>>, vector<128x144xbf16>
    %c0_1 = arith.constant 0 : index
    %c0_2 = arith.constant 0 : index
    %1 = vector.load %arg2[%c0_1, %c0_2] : memref<144x128xbf16, #tpu.memory_space<vmem>>, vector<144x128xbf16>
    %cst = arith.constant dense<0.000000e+00> : vector<128x128xf32>
    %2 = tpu.matmul %0, %1, %cst {dimension_numbers = #tpu.dot_dimension_numbers<[1], [0], [0], [1], [0, 0, 1, 1], [], []>} : vector<128x144xbf16>, vector<144x128xbf16>, vector<128x128xf32> -> vector<128x128xf32>
    %c0_3 = arith.constant 0 : index
    %c0_4 = arith.constant 0 : index
    %3 = vector.load %arg3[%c0_3, %c0_4] : memref<1x128xf32, #tpu.memory_space<vmem>>, vector<1x128xf32>
    %4 = vector.broadcast %3 : vector<1x128xf32> to vector<128x128xf32>
    %5 = arith.addf %2, %4 : vector<128x128xf32>
    %cst_5 = arith.constant 0.000000e+00 : f32
    %6 = vector.broadcast %cst_5 : f32 to vector<128x128xf32>
    %7 = arith.maximumf %5, %6 : vector<128x128xf32>
    %c0_6 = arith.constant 0 : index
    %c0_7 = arith.constant 0 : index
    %8 = vector.load %arg4[%c0_6, %c0_7] : memref<128x128xf32, #tpu.memory_space<vmem>>, vector<128x128xf32>
    tpu.vector_store %arg4[%c0_6, %c0_7], %7 {strides = array<i32>} : memref<128x128xf32, #tpu.memory_space<vmem>>, vector<128x128xf32>,
    return
  }
  func.func @transform_0(%arg0: i32) -> (i32, i32) {
    %c0_i32 = arith.constant 0 : i32
    %c0_i32_0 = arith.constant 0 : i32
    return %arg0, %c0_i32 : i32, i32
  }
  func.func @transform_1(%arg0: i32) -> (i32, i32) {
    %c0_i32 = arith.constant 0 : i32
    %c0_i32_0 = arith.constant 0 : i32
    %c0_i32_1 = arith.constant 0 : i32
    return %c0_i32, %c0_i32_0 : i32, i32
  }
  func.func @transform_2(%arg0: i32) -> (i32, i32) {
    %c0_i32 = arith.constant 0 : i32
    %c0_i32_0 = arith.constant 0 : i32
    %c0_i32_1 = arith.constant 0 : i32
    return %c0_i32, %c0_i32_0 : i32, i32
  }
  func.func @transform_3(%arg0: i32) -> (i32, i32) {
    %c0_i32 = arith.constant 0 : i32
    %c0_i32_0 = arith.constant 0 : i32
    return %arg0, %c0_i32 : i32, i32
  }
}

module attributes {stable_mosaic.version = 11 : i64} {
  func.func @_mm1_kernel(%arg0: i32, %arg1: memref<32x144xbf16, #tpu.memory_space<vmem>>, %arg2: memref<144x128xbf16, #tpu.memory_space<vmem>>, %arg3: memref<1x128xf32, #tpu.memory_space<vmem>>, %arg4: memref<32x128xf32, #tpu.memory_space<vmem>>) attributes {dimension_semantics = [#tpu.dimension_semantics<parallel>], iteration_bounds = array<i64: 1>, scalar_prefetch = 0 : i64, scratch_operands = 0 : i64, tpu.core_type = #tpu.core_type<tc>, window_params = [{transform_indices = @transform_0, window_bounds = array<i64: 32, 144>}, {pipeline_mode = #tpu.pipeline_mode<synchronous>, transform_indices = @transform_1, window_bounds = array<i64: 144, 128>}, {pipeline_mode = #tpu.pipeline_mode<synchronous>, transform_indices = @transform_2, window_bounds = array<i64: 1, 128>}, {transform_indices = @transform_3, window_bounds = array<i64: 32, 128>}]} {
    %c0 = arith.constant 0 : index
    %c0_0 = arith.constant 0 : index
    %0 = vector.load %arg1[%c0, %c0_0] : memref<32x144xbf16, #tpu.memory_space<vmem>>, vector<32x144xbf16>
    %c0_1 = arith.constant 0 : index
    %c0_2 = arith.constant 0 : index
    %1 = vector.load %arg2[%c0_1, %c0_2] : memref<144x128xbf16, #tpu.memory_space<vmem>>, vector<144x128xbf16>
    %cst = arith.constant dense<0.000000e+00> : vector<32x128xf32>
    %2 = tpu.matmul %0, %1, %cst {dimension_numbers = #tpu.dot_dimension_numbers<[1], [0], [0], [1], [0, 0, 1, 1], [], []>} : vector<32x144xbf16>, vector<144x128xbf16>, vector<32x128xf32> -> vector<32x128xf32>
    %c0_3 = arith.constant 0 : index
    %c0_4 = arith.constant 0 : index
    %3 = vector.load %arg3[%c0_3, %c0_4] : memref<1x128xf32, #tpu.memory_space<vmem>>, vector<1x128xf32>
    %4 = vector.broadcast %3 : vector<1x128xf32> to vector<32x128xf32>
    %5 = arith.addf %2, %4 : vector<32x128xf32>
    %cst_5 = arith.constant 0.000000e+00 : f32
    %6 = vector.broadcast %cst_5 : f32 to vector<32x128xf32>
    %7 = arith.maximumf %5, %6 : vector<32x128xf32>
    %c0_6 = arith.constant 0 : index
    %c0_7 = arith.constant 0 : index
    %8 = vector.load %arg4[%c0_6, %c0_7] : memref<32x128xf32, #tpu.memory_space<vmem>>, vector<32x128xf32>
    tpu.vector_store %arg4[%c0_6, %c0_7], %7 {strides = array<i32>} : memref<32x128xf32, #tpu.memory_space<vmem>>, vector<32x128xf32>,
    return
  }
  func.func @transform_0(%arg0: i32) -> (i32, i32) {
    %c0_i32 = arith.constant 0 : i32
    %c0_i32_0 = arith.constant 0 : i32
    return %arg0, %c0_i32 : i32, i32
  }
  func.func @transform_1(%arg0: i32) -> (i32, i32) {
    %c0_i32 = arith.constant 0 : i32
    %c0_i32_0 = arith.constant 0 : i32
    %c0_i32_1 = arith.constant 0 : i32
    return %c0_i32, %c0_i32_0 : i32, i32
  }
  func.func @transform_2(%arg0: i32) -> (i32, i32) {
    %c0_i32 = arith.constant 0 : i32
    %c0_i32_0 = arith.constant 0 : i32
    %c0_i32_1 = arith.constant 0 : i32
    return %c0_i32, %c0_i32_0 : i32, i32
  }
  func.func @transform_3(%arg0: i32) -> (i32, i32) {
    %c0_i32 = arith.constant 0 : i32
    %c0_i32_0 = arith.constant 0 : i32
    return %arg0, %c0_i32 : i32, i32
  }
}

module attributes {stable_mosaic.version = 11 : i64} {
  func.func @_mm1_kernel(%arg0: i32, %arg1: memref<32x288xbf16, #tpu.memory_space<vmem>>, %arg2: memref<288x128xbf16, #tpu.memory_space<vmem>>, %arg3: memref<1x128xf32, #tpu.memory_space<vmem>>, %arg4: memref<32x128xf32, #tpu.memory_space<vmem>>) attributes {dimension_semantics = [#tpu.dimension_semantics<parallel>], iteration_bounds = array<i64: 1>, scalar_prefetch = 0 : i64, scratch_operands = 0 : i64, tpu.core_type = #tpu.core_type<tc>, window_params = [{transform_indices = @transform_0, window_bounds = array<i64: 32, 288>}, {pipeline_mode = #tpu.pipeline_mode<synchronous>, transform_indices = @transform_1, window_bounds = array<i64: 288, 128>}, {pipeline_mode = #tpu.pipeline_mode<synchronous>, transform_indices = @transform_2, window_bounds = array<i64: 1, 128>}, {transform_indices = @transform_3, window_bounds = array<i64: 32, 128>}]} {
    %c0 = arith.constant 0 : index
    %c0_0 = arith.constant 0 : index
    %0 = vector.load %arg1[%c0, %c0_0] : memref<32x288xbf16, #tpu.memory_space<vmem>>, vector<32x288xbf16>
    %c0_1 = arith.constant 0 : index
    %c0_2 = arith.constant 0 : index
    %1 = vector.load %arg2[%c0_1, %c0_2] : memref<288x128xbf16, #tpu.memory_space<vmem>>, vector<288x128xbf16>
    %cst = arith.constant dense<0.000000e+00> : vector<32x128xf32>
    %2 = tpu.matmul %0, %1, %cst {dimension_numbers = #tpu.dot_dimension_numbers<[1], [0], [0], [1], [0, 0, 1, 1], [], []>} : vector<32x288xbf16>, vector<288x128xbf16>, vector<32x128xf32> -> vector<32x128xf32>
    %c0_3 = arith.constant 0 : index
    %c0_4 = arith.constant 0 : index
    %3 = vector.load %arg3[%c0_3, %c0_4] : memref<1x128xf32, #tpu.memory_space<vmem>>, vector<1x128xf32>
    %4 = vector.broadcast %3 : vector<1x128xf32> to vector<32x128xf32>
    %5 = arith.addf %2, %4 : vector<32x128xf32>
    %cst_5 = arith.constant 0.000000e+00 : f32
    %6 = vector.broadcast %cst_5 : f32 to vector<32x128xf32>
    %7 = arith.maximumf %5, %6 : vector<32x128xf32>
    %c0_6 = arith.constant 0 : index
    %c0_7 = arith.constant 0 : index
    %8 = vector.load %arg4[%c0_6, %c0_7] : memref<32x128xf32, #tpu.memory_space<vmem>>, vector<32x128xf32>
    tpu.vector_store %arg4[%c0_6, %c0_7], %7 {strides = array<i32>} : memref<32x128xf32, #tpu.memory_space<vmem>>, vector<32x128xf32>,
    return
  }
  func.func @transform_0(%arg0: i32) -> (i32, i32) {
    %c0_i32 = arith.constant 0 : i32
    %c0_i32_0 = arith.constant 0 : i32
    return %arg0, %c0_i32 : i32, i32
  }
  func.func @transform_1(%arg0: i32) -> (i32, i32) {
    %c0_i32 = arith.constant 0 : i32
    %c0_i32_0 = arith.constant 0 : i32
    %c0_i32_1 = arith.constant 0 : i32
    return %c0_i32, %c0_i32_0 : i32, i32
  }
  func.func @transform_2(%arg0: i32) -> (i32, i32) {
    %c0_i32 = arith.constant 0 : i32
    %c0_i32_0 = arith.constant 0 : i32
    %c0_i32_1 = arith.constant 0 : i32
    return %c0_i32, %c0_i32_0 : i32, i32
  }
  func.func @transform_3(%arg0: i32) -> (i32, i32) {
    %c0_i32 = arith.constant 0 : i32
    %c0_i32_0 = arith.constant 0 : i32
    return %arg0, %c0_i32 : i32, i32
  }
}

module attributes {stable_mosaic.version = 11 : i64} {
  func.func @_mm1_kernel(%arg0: i32, %arg1: memref<8x288xbf16, #tpu.memory_space<vmem>>, %arg2: memref<288x128xbf16, #tpu.memory_space<vmem>>, %arg3: memref<1x128xf32, #tpu.memory_space<vmem>>, %arg4: memref<8x128xf32, #tpu.memory_space<vmem>>) attributes {dimension_semantics = [#tpu.dimension_semantics<parallel>], iteration_bounds = array<i64: 1>, scalar_prefetch = 0 : i64, scratch_operands = 0 : i64, tpu.core_type = #tpu.core_type<tc>, window_params = [{transform_indices = @transform_0, window_bounds = array<i64: 8, 288>}, {pipeline_mode = #tpu.pipeline_mode<synchronous>, transform_indices = @transform_1, window_bounds = array<i64: 288, 128>}, {pipeline_mode = #tpu.pipeline_mode<synchronous>, transform_indices = @transform_2, window_bounds = array<i64: 1, 128>}, {transform_indices = @transform_3, window_bounds = array<i64: 8, 128>}]} {
    %c0 = arith.constant 0 : index
    %c0_0 = arith.constant 0 : index
    %0 = vector.load %arg1[%c0, %c0_0] : memref<8x288xbf16, #tpu.memory_space<vmem>>, vector<8x288xbf16>
    %c0_1 = arith.constant 0 : index
    %c0_2 = arith.constant 0 : index
    %1 = vector.load %arg2[%c0_1, %c0_2] : memref<288x128xbf16, #tpu.memory_space<vmem>>, vector<288x128xbf16>
    %cst = arith.constant dense<0.000000e+00> : vector<8x128xf32>
    %2 = tpu.matmul %0, %1, %cst {dimension_numbers = #tpu.dot_dimension_numbers<[1], [0], [0], [1], [0, 0, 1, 1], [], []>} : vector<8x288xbf16>, vector<288x128xbf16>, vector<8x128xf32> -> vector<8x128xf32>
    %c0_3 = arith.constant 0 : index
    %c0_4 = arith.constant 0 : index
    %3 = vector.load %arg3[%c0_3, %c0_4] : memref<1x128xf32, #tpu.memory_space<vmem>>, vector<1x128xf32>
    %4 = vector.broadcast %3 : vector<1x128xf32> to vector<8x128xf32>
    %5 = arith.addf %2, %4 : vector<8x128xf32>
    %cst_5 = arith.constant 0.000000e+00 : f32
    %6 = vector.broadcast %cst_5 : f32 to vector<8x128xf32>
    %7 = arith.maximumf %5, %6 : vector<8x128xf32>
    %c0_6 = arith.constant 0 : index
    %c0_7 = arith.constant 0 : index
    %8 = vector.load %arg4[%c0_6, %c0_7] : memref<8x128xf32, #tpu.memory_space<vmem>>, vector<8x128xf32>
    tpu.vector_store %arg4[%c0_6, %c0_7], %7 {strides = array<i32>} : memref<8x128xf32, #tpu.memory_space<vmem>>, vector<8x128xf32>,
    return
  }
  func.func @transform_0(%arg0: i32) -> (i32, i32) {
    %c0_i32 = arith.constant 0 : i32
    %c0_i32_0 = arith.constant 0 : i32
    return %arg0, %c0_i32 : i32, i32
  }
  func.func @transform_1(%arg0: i32) -> (i32, i32) {
    %c0_i32 = arith.constant 0 : i32
    %c0_i32_0 = arith.constant 0 : i32
    %c0_i32_1 = arith.constant 0 : i32
    return %c0_i32, %c0_i32_0 : i32, i32
  }
  func.func @transform_2(%arg0: i32) -> (i32, i32) {
    %c0_i32 = arith.constant 0 : i32
    %c0_i32_0 = arith.constant 0 : i32
    %c0_i32_1 = arith.constant 0 : i32
    return %c0_i32, %c0_i32_0 : i32, i32
  }
  func.func @transform_3(%arg0: i32) -> (i32, i32) {
    %c0_i32 = arith.constant 0 : i32
    %c0_i32_0 = arith.constant 0 : i32
    return %arg0, %c0_i32 : i32, i32
  }
}

module attributes {stable_mosaic.version = 11 : i64} {
  func.func @_mm1_kernel(%arg0: i32, %arg1: memref<8x576xbf16, #tpu.memory_space<vmem>>, %arg2: memref<576x128xbf16, #tpu.memory_space<vmem>>, %arg3: memref<1x128xf32, #tpu.memory_space<vmem>>, %arg4: memref<8x128xf32, #tpu.memory_space<vmem>>) attributes {dimension_semantics = [#tpu.dimension_semantics<parallel>], iteration_bounds = array<i64: 1>, scalar_prefetch = 0 : i64, scratch_operands = 0 : i64, tpu.core_type = #tpu.core_type<tc>, window_params = [{transform_indices = @transform_0, window_bounds = array<i64: 8, 576>}, {pipeline_mode = #tpu.pipeline_mode<synchronous>, transform_indices = @transform_1, window_bounds = array<i64: 576, 128>}, {pipeline_mode = #tpu.pipeline_mode<synchronous>, transform_indices = @transform_2, window_bounds = array<i64: 1, 128>}, {transform_indices = @transform_3, window_bounds = array<i64: 8, 128>}]} {
    %c0 = arith.constant 0 : index
    %c0_0 = arith.constant 0 : index
    %0 = vector.load %arg1[%c0, %c0_0] : memref<8x576xbf16, #tpu.memory_space<vmem>>, vector<8x576xbf16>
    %c0_1 = arith.constant 0 : index
    %c0_2 = arith.constant 0 : index
    %1 = vector.load %arg2[%c0_1, %c0_2] : memref<576x128xbf16, #tpu.memory_space<vmem>>, vector<576x128xbf16>
    %cst = arith.constant dense<0.000000e+00> : vector<8x128xf32>
    %2 = tpu.matmul %0, %1, %cst {dimension_numbers = #tpu.dot_dimension_numbers<[1], [0], [0], [1], [0, 0, 1, 1], [], []>} : vector<8x576xbf16>, vector<576x128xbf16>, vector<8x128xf32> -> vector<8x128xf32>
    %c0_3 = arith.constant 0 : index
    %c0_4 = arith.constant 0 : index
    %3 = vector.load %arg3[%c0_3, %c0_4] : memref<1x128xf32, #tpu.memory_space<vmem>>, vector<1x128xf32>
    %4 = vector.broadcast %3 : vector<1x128xf32> to vector<8x128xf32>
    %5 = arith.addf %2, %4 : vector<8x128xf32>
    %cst_5 = arith.constant 0.000000e+00 : f32
    %6 = vector.broadcast %cst_5 : f32 to vector<8x128xf32>
    %7 = arith.maximumf %5, %6 : vector<8x128xf32>
    %c0_6 = arith.constant 0 : index
    %c0_7 = arith.constant 0 : index
    %8 = vector.load %arg4[%c0_6, %c0_7] : memref<8x128xf32, #tpu.memory_space<vmem>>, vector<8x128xf32>
    tpu.vector_store %arg4[%c0_6, %c0_7], %7 {strides = array<i32>} : memref<8x128xf32, #tpu.memory_space<vmem>>, vector<8x128xf32>,
    return
  }
  func.func @transform_0(%arg0: i32) -> (i32, i32) {
    %c0_i32 = arith.constant 0 : i32
    %c0_i32_0 = arith.constant 0 : i32
    return %arg0, %c0_i32 : i32, i32
  }
  func.func @transform_1(%arg0: i32) -> (i32, i32) {
    %c0_i32 = arith.constant 0 : i32
    %c0_i32_0 = arith.constant 0 : i32
    %c0_i32_1 = arith.constant 0 : i32
    return %c0_i32, %c0_i32_0 : i32, i32
  }
  func.func @transform_2(%arg0: i32) -> (i32, i32) {
    %c0_i32 = arith.constant 0 : i32
    %c0_i32_0 = arith.constant 0 : i32
    %c0_i32_1 = arith.constant 0 : i32
    return %c0_i32, %c0_i32_0 : i32, i32
  }
  func.func @transform_3(%arg0: i32) -> (i32, i32) {
    %c0_i32 = arith.constant 0 : i32
    %c0_i32_0 = arith.constant 0 : i32
    return %arg0, %c0_i32 : i32, i32
  }
}

module attributes {stable_mosaic.version = 11 : i64} {
  func.func @_mm1_kernel(%arg0: i32, %arg1: memref<2x576xbf16, #tpu.memory_space<vmem>>, %arg2: memref<576x128xbf16, #tpu.memory_space<vmem>>, %arg3: memref<1x128xf32, #tpu.memory_space<vmem>>, %arg4: memref<2x128xf32, #tpu.memory_space<vmem>>) attributes {dimension_semantics = [#tpu.dimension_semantics<parallel>], iteration_bounds = array<i64: 1>, scalar_prefetch = 0 : i64, scratch_operands = 0 : i64, tpu.core_type = #tpu.core_type<tc>, window_params = [{transform_indices = @transform_0, window_bounds = array<i64: 2, 576>}, {pipeline_mode = #tpu.pipeline_mode<synchronous>, transform_indices = @transform_1, window_bounds = array<i64: 576, 128>}, {pipeline_mode = #tpu.pipeline_mode<synchronous>, transform_indices = @transform_2, window_bounds = array<i64: 1, 128>}, {transform_indices = @transform_3, window_bounds = array<i64: 2, 128>}]} {
    %c0 = arith.constant 0 : index
    %c0_0 = arith.constant 0 : index
    %0 = vector.load %arg1[%c0, %c0_0] : memref<2x576xbf16, #tpu.memory_space<vmem>>, vector<2x576xbf16>
    %c0_1 = arith.constant 0 : index
    %c0_2 = arith.constant 0 : index
    %1 = vector.load %arg2[%c0_1, %c0_2] : memref<576x128xbf16, #tpu.memory_space<vmem>>, vector<576x128xbf16>
    %cst = arith.constant dense<0.000000e+00> : vector<2x128xf32>
    %2 = tpu.matmul %0, %1, %cst {dimension_numbers = #tpu.dot_dimension_numbers<[1], [0], [0], [1], [0, 0, 1, 1], [], []>} : vector<2x576xbf16>, vector<576x128xbf16>, vector<2x128xf32> -> vector<2x128xf32>
    %c0_3 = arith.constant 0 : index
    %c0_4 = arith.constant 0 : index
    %3 = vector.load %arg3[%c0_3, %c0_4] : memref<1x128xf32, #tpu.memory_space<vmem>>, vector<1x128xf32>
    %4 = vector.broadcast %3 : vector<1x128xf32> to vector<2x128xf32>
    %5 = arith.addf %2, %4 : vector<2x128xf32>
    %cst_5 = arith.constant 0.000000e+00 : f32
    %6 = vector.broadcast %cst_5 : f32 to vector<2x128xf32>
    %7 = arith.maximumf %5, %6 : vector<2x128xf32>
    %c0_6 = arith.constant 0 : index
    %c0_7 = arith.constant 0 : index
    %8 = vector.load %arg4[%c0_6, %c0_7] : memref<2x128xf32, #tpu.memory_space<vmem>>, vector<2x128xf32>
    tpu.vector_store %arg4[%c0_6, %c0_7], %7 {strides = array<i32>} : memref<2x128xf32, #tpu.memory_space<vmem>>, vector<2x128xf32>,
    return
  }
  func.func @transform_0(%arg0: i32) -> (i32, i32) {
    %c0_i32 = arith.constant 0 : i32
    %c0_i32_0 = arith.constant 0 : i32
    return %arg0, %c0_i32 : i32, i32
  }
  func.func @transform_1(%arg0: i32) -> (i32, i32) {
    %c0_i32 = arith.constant 0 : i32
    %c0_i32_0 = arith.constant 0 : i32
    %c0_i32_1 = arith.constant 0 : i32
    return %c0_i32, %c0_i32_0 : i32, i32
  }
  func.func @transform_2(%arg0: i32) -> (i32, i32) {
    %c0_i32 = arith.constant 0 : i32
    %c0_i32_0 = arith.constant 0 : i32
    %c0_i32_1 = arith.constant 0 : i32
    return %c0_i32, %c0_i32_0 : i32, i32
  }
  func.func @transform_3(%arg0: i32) -> (i32, i32) {
    %c0_i32 = arith.constant 0 : i32
    %c0_i32_0 = arith.constant 0 : i32
    return %arg0, %c0_i32 : i32, i32
  }
}

module attributes {stable_mosaic.version = 11 : i64} {
  func.func @_mm1_kernel(%arg0: i32, %arg1: memref<2x128xbf16, #tpu.memory_space<vmem>>, %arg2: memref<128x128xbf16, #tpu.memory_space<vmem>>, %arg3: memref<1x128xf32, #tpu.memory_space<vmem>>, %arg4: memref<2x128xf32, #tpu.memory_space<vmem>>) attributes {dimension_semantics = [#tpu.dimension_semantics<parallel>], iteration_bounds = array<i64: 1>, scalar_prefetch = 0 : i64, scratch_operands = 0 : i64, tpu.core_type = #tpu.core_type<tc>, window_params = [{transform_indices = @transform_0, window_bounds = array<i64: 2, 128>}, {pipeline_mode = #tpu.pipeline_mode<synchronous>, transform_indices = @transform_1, window_bounds = array<i64: 128, 128>}, {pipeline_mode = #tpu.pipeline_mode<synchronous>, transform_indices = @transform_2, window_bounds = array<i64: 1, 128>}, {transform_indices = @transform_3, window_bounds = array<i64: 2, 128>}]} {
    %c0 = arith.constant 0 : index
    %c0_0 = arith.constant 0 : index
    %0 = vector.load %arg1[%c0, %c0_0] : memref<2x128xbf16, #tpu.memory_space<vmem>>, vector<2x128xbf16>
    %c0_1 = arith.constant 0 : index
    %c0_2 = arith.constant 0 : index
    %1 = vector.load %arg2[%c0_1, %c0_2] : memref<128x128xbf16, #tpu.memory_space<vmem>>, vector<128x128xbf16>
    %cst = arith.constant dense<0.000000e+00> : vector<2x128xf32>
    %2 = tpu.matmul %0, %1, %cst {dimension_numbers = #tpu.dot_dimension_numbers<[1], [0], [0], [1], [0, 0, 1, 1], [], []>} : vector<2x128xbf16>, vector<128x128xbf16>, vector<2x128xf32> -> vector<2x128xf32>
    %c0_3 = arith.constant 0 : index
    %c0_4 = arith.constant 0 : index
    %3 = vector.load %arg3[%c0_3, %c0_4] : memref<1x128xf32, #tpu.memory_space<vmem>>, vector<1x128xf32>
    %4 = vector.broadcast %3 : vector<1x128xf32> to vector<2x128xf32>
    %5 = arith.addf %2, %4 : vector<2x128xf32>
    %cst_5 = arith.constant 5.000000e-01 : f32
    %6 = vector.broadcast %cst_5 : f32 to vector<2x128xf32>
    %7 = arith.mulf %6, %5 : vector<2x128xf32>
    %8 = arith.negf %7 : vector<2x128xf32>
    %9 = math.exp %8 : vector<2x128xf32>
    %cst_6 = arith.constant 1.000000e+00 : f32
    %10 = vector.broadcast %cst_6 : f32 to vector<2x128xf32>
    %11 = arith.addf %10, %9 : vector<2x128xf32>
    %12 = arith.divf %10, %11 : vector<2x128xf32>
    %c0_7 = arith.constant 0 : index
    %c0_8 = arith.constant 0 : index
    %13 = vector.load %arg4[%c0_7, %c0_8] : memref<2x128xf32, #tpu.memory_space<vmem>>, vector<2x128xf32>
    tpu.vector_store %arg4[%c0_7, %c0_8], %12 {strides = array<i32>} : memref<2x128xf32, #tpu.memory_space<vmem>>, vector<2x128xf32>,
    return
  }
  func.func @transform_0(%arg0: i32) -> (i32, i32) {
    %c0_i32 = arith.constant 0 : i32
    %c0_i32_0 = arith.constant 0 : i32
    return %arg0, %c0_i32 : i32, i32
  }
  func.func @transform_1(%arg0: i32) -> (i32, i32) {
    %c0_i32 = arith.constant 0 : i32
    %c0_i32_0 = arith.constant 0 : i32
    %c0_i32_1 = arith.constant 0 : i32
    return %c0_i32, %c0_i32_0 : i32, i32
  }
  func.func @transform_2(%arg0: i32) -> (i32, i32) {
    %c0_i32 = arith.constant 0 : i32
    %c0_i32_0 = arith.constant 0 : i32
    %c0_i32_1 = arith.constant 0 : i32
    return %c0_i32, %c0_i32_0 : i32, i32
  }
  func.func @transform_3(%arg0: i32) -> (i32, i32) {
    %c0_i32 = arith.constant 0 : i32
    %c0_i32_0 = arith.constant 0 : i32
    return %arg0, %c0_i32 : i32, i32
  }
}

module attributes {stable_mosaic.version = 11 : i64} {
  func.func @_mm1_kernel(%arg0: i32, %arg1: memref<8x1152xbf16, #tpu.memory_space<vmem>>, %arg2: memref<1152x128xbf16, #tpu.memory_space<vmem>>, %arg3: memref<1x128xf32, #tpu.memory_space<vmem>>, %arg4: memref<8x128xf32, #tpu.memory_space<vmem>>) attributes {dimension_semantics = [#tpu.dimension_semantics<parallel>], iteration_bounds = array<i64: 1>, scalar_prefetch = 0 : i64, scratch_operands = 0 : i64, tpu.core_type = #tpu.core_type<tc>, window_params = [{transform_indices = @transform_0, window_bounds = array<i64: 8, 1152>}, {pipeline_mode = #tpu.pipeline_mode<synchronous>, transform_indices = @transform_1, window_bounds = array<i64: 1152, 128>}, {pipeline_mode = #tpu.pipeline_mode<synchronous>, transform_indices = @transform_2, window_bounds = array<i64: 1, 128>}, {transform_indices = @transform_3, window_bounds = array<i64: 8, 128>}]} {
    %c0 = arith.constant 0 : index
    %c0_0 = arith.constant 0 : index
    %0 = vector.load %arg1[%c0, %c0_0] : memref<8x1152xbf16, #tpu.memory_space<vmem>>, vector<8x1152xbf16>
    %c0_1 = arith.constant 0 : index
    %c0_2 = arith.constant 0 : index
    %1 = vector.load %arg2[%c0_1, %c0_2] : memref<1152x128xbf16, #tpu.memory_space<vmem>>, vector<1152x128xbf16>
    %cst = arith.constant dense<0.000000e+00> : vector<8x128xf32>
    %2 = tpu.matmul %0, %1, %cst {dimension_numbers = #tpu.dot_dimension_numbers<[1], [0], [0], [1], [0, 0, 1, 1], [], []>} : vector<8x1152xbf16>, vector<1152x128xbf16>, vector<8x128xf32> -> vector<8x128xf32>
    %c0_3 = arith.constant 0 : index
    %c0_4 = arith.constant 0 : index
    %3 = vector.load %arg3[%c0_3, %c0_4] : memref<1x128xf32, #tpu.memory_space<vmem>>, vector<1x128xf32>
    %4 = vector.broadcast %3 : vector<1x128xf32> to vector<8x128xf32>
    %5 = arith.addf %2, %4 : vector<8x128xf32>
    %cst_5 = arith.constant 0.000000e+00 : f32
    %6 = vector.broadcast %cst_5 : f32 to vector<8x128xf32>
    %7 = arith.maximumf %5, %6 : vector<8x128xf32>
    %c0_6 = arith.constant 0 : index
    %c0_7 = arith.constant 0 : index
    %8 = vector.load %arg4[%c0_6, %c0_7] : memref<8x128xf32, #tpu.memory_space<vmem>>, vector<8x128xf32>
    tpu.vector_store %arg4[%c0_6, %c0_7], %7 {strides = array<i32>} : memref<8x128xf32, #tpu.memory_space<vmem>>, vector<8x128xf32>,
    return
  }
  func.func @transform_0(%arg0: i32) -> (i32, i32) {
    %c0_i32 = arith.constant 0 : i32
    %c0_i32_0 = arith.constant 0 : i32
    return %arg0, %c0_i32 : i32, i32
  }
  func.func @transform_1(%arg0: i32) -> (i32, i32) {
    %c0_i32 = arith.constant 0 : i32
    %c0_i32_0 = arith.constant 0 : i32
    %c0_i32_1 = arith.constant 0 : i32
    return %c0_i32, %c0_i32_0 : i32, i32
  }
  func.func @transform_2(%arg0: i32) -> (i32, i32) {
    %c0_i32 = arith.constant 0 : i32
    %c0_i32_0 = arith.constant 0 : i32
    %c0_i32_1 = arith.constant 0 : i32
    return %c0_i32, %c0_i32_0 : i32, i32
  }
  func.func @transform_3(%arg0: i32) -> (i32, i32) {
    %c0_i32 = arith.constant 0 : i32
    %c0_i32_0 = arith.constant 0 : i32
    return %arg0, %c0_i32 : i32, i32
  }
}

module attributes {stable_mosaic.version = 11 : i64} {
  func.func @_mm1_kernel(%arg0: i32, %arg1: memref<2x64xbf16, #tpu.memory_space<vmem>>, %arg2: memref<64x128xbf16, #tpu.memory_space<vmem>>, %arg3: memref<1x128xf32, #tpu.memory_space<vmem>>, %arg4: memref<2x128xf32, #tpu.memory_space<vmem>>) attributes {dimension_semantics = [#tpu.dimension_semantics<parallel>], iteration_bounds = array<i64: 1>, scalar_prefetch = 0 : i64, scratch_operands = 0 : i64, tpu.core_type = #tpu.core_type<tc>, window_params = [{transform_indices = @transform_0, window_bounds = array<i64: 2, 64>}, {pipeline_mode = #tpu.pipeline_mode<synchronous>, transform_indices = @transform_1, window_bounds = array<i64: 64, 128>}, {pipeline_mode = #tpu.pipeline_mode<synchronous>, transform_indices = @transform_2, window_bounds = array<i64: 1, 128>}, {transform_indices = @transform_3, window_bounds = array<i64: 2, 128>}]} {
    %c0 = arith.constant 0 : index
    %c0_0 = arith.constant 0 : index
    %0 = vector.load %arg1[%c0, %c0_0] : memref<2x64xbf16, #tpu.memory_space<vmem>>, vector<2x64xbf16>
    %c0_1 = arith.constant 0 : index
    %c0_2 = arith.constant 0 : index
    %1 = vector.load %arg2[%c0_1, %c0_2] : memref<64x128xbf16, #tpu.memory_space<vmem>>, vector<64x128xbf16>
    %cst = arith.constant dense<0.000000e+00> : vector<2x128xf32>
    %2 = tpu.matmul %0, %1, %cst {dimension_numbers = #tpu.dot_dimension_numbers<[1], [0], [0], [1], [0, 0, 1, 1], [], []>} : vector<2x64xbf16>, vector<64x128xbf16>, vector<2x128xf32> -> vector<2x128xf32>
    %c0_3 = arith.constant 0 : index
    %c0_4 = arith.constant 0 : index
    %3 = vector.load %arg3[%c0_3, %c0_4] : memref<1x128xf32, #tpu.memory_space<vmem>>, vector<1x128xf32>
    %4 = vector.broadcast %3 : vector<1x128xf32> to vector<2x128xf32>
    %5 = arith.addf %2, %4 : vector<2x128xf32>
    %cst_5 = arith.constant 5.000000e-01 : f32
    %6 = vector.broadcast %cst_5 : f32 to vector<2x128xf32>
    %7 = arith.mulf %6, %5 : vector<2x128xf32>
    %8 = arith.negf %7 : vector<2x128xf32>
    %9 = math.exp %8 : vector<2x128xf32>
    %cst_6 = arith.constant 1.000000e+00 : f32
    %10 = vector.broadcast %cst_6 : f32 to vector<2x128xf32>
    %11 = arith.addf %10, %9 : vector<2x128xf32>
    %12 = arith.divf %10, %11 : vector<2x128xf32>
    %c0_7 = arith.constant 0 : index
    %c0_8 = arith.constant 0 : index
    %13 = vector.load %arg4[%c0_7, %c0_8] : memref<2x128xf32, #tpu.memory_space<vmem>>, vector<2x128xf32>
    tpu.vector_store %arg4[%c0_7, %c0_8], %12 {strides = array<i32>} : memref<2x128xf32, #tpu.memory_space<vmem>>, vector<2x128xf32>,
    return
  }
  func.func @transform_0(%arg0: i32) -> (i32, i32) {
    %c0_i32 = arith.constant 0 : i32
    %c0_i32_0 = arith.constant 0 : i32
    return %arg0, %c0_i32 : i32, i32
  }
  func.func @transform_1(%arg0: i32) -> (i32, i32) {
    %c0_i32 = arith.constant 0 : i32
    %c0_i32_0 = arith.constant 0 : i32
    %c0_i32_1 = arith.constant 0 : i32
    return %c0_i32, %c0_i32_0 : i32, i32
  }
  func.func @transform_2(%arg0: i32) -> (i32, i32) {
    %c0_i32 = arith.constant 0 : i32
    %c0_i32_0 = arith.constant 0 : i32
    %c0_i32_1 = arith.constant 0 : i32
    return %c0_i32, %c0_i32_0 : i32, i32
  }
  func.func @transform_3(%arg0: i32) -> (i32, i32) {
    %c0_i32 = arith.constant 0 : i32
    %c0_i32_0 = arith.constant 0 : i32
    return %arg0, %c0_i32 : i32, i32
  }
}

module attributes {stable_mosaic.version = 11 : i64} {
  func.func @_mm1_kernel(%arg0: i32, %arg1: memref<32x576xbf16, #tpu.memory_space<vmem>>, %arg2: memref<576x128xbf16, #tpu.memory_space<vmem>>, %arg3: memref<1x128xf32, #tpu.memory_space<vmem>>, %arg4: memref<32x128xf32, #tpu.memory_space<vmem>>) attributes {dimension_semantics = [#tpu.dimension_semantics<parallel>], iteration_bounds = array<i64: 1>, scalar_prefetch = 0 : i64, scratch_operands = 0 : i64, tpu.core_type = #tpu.core_type<tc>, window_params = [{transform_indices = @transform_0, window_bounds = array<i64: 32, 576>}, {pipeline_mode = #tpu.pipeline_mode<synchronous>, transform_indices = @transform_1, window_bounds = array<i64: 576, 128>}, {pipeline_mode = #tpu.pipeline_mode<synchronous>, transform_indices = @transform_2, window_bounds = array<i64: 1, 128>}, {transform_indices = @transform_3, window_bounds = array<i64: 32, 128>}]} {
    %c0 = arith.constant 0 : index
    %c0_0 = arith.constant 0 : index
    %0 = vector.load %arg1[%c0, %c0_0] : memref<32x576xbf16, #tpu.memory_space<vmem>>, vector<32x576xbf16>
    %c0_1 = arith.constant 0 : index
    %c0_2 = arith.constant 0 : index
    %1 = vector.load %arg2[%c0_1, %c0_2] : memref<576x128xbf16, #tpu.memory_space<vmem>>, vector<576x128xbf16>
    %cst = arith.constant dense<0.000000e+00> : vector<32x128xf32>
    %2 = tpu.matmul %0, %1, %cst {dimension_numbers = #tpu.dot_dimension_numbers<[1], [0], [0], [1], [0, 0, 1, 1], [], []>} : vector<32x576xbf16>, vector<576x128xbf16>, vector<32x128xf32> -> vector<32x128xf32>
    %c0_3 = arith.constant 0 : index
    %c0_4 = arith.constant 0 : index
    %3 = vector.load %arg3[%c0_3, %c0_4] : memref<1x128xf32, #tpu.memory_space<vmem>>, vector<1x128xf32>
    %4 = vector.broadcast %3 : vector<1x128xf32> to vector<32x128xf32>
    %5 = arith.addf %2, %4 : vector<32x128xf32>
    %cst_5 = arith.constant 0.000000e+00 : f32
    %6 = vector.broadcast %cst_5 : f32 to vector<32x128xf32>
    %7 = arith.maximumf %5, %6 : vector<32x128xf32>
    %c0_6 = arith.constant 0 : index
    %c0_7 = arith.constant 0 : index
    %8 = vector.load %arg4[%c0_6, %c0_7] : memref<32x128xf32, #tpu.memory_space<vmem>>, vector<32x128xf32>
    tpu.vector_store %arg4[%c0_6, %c0_7], %7 {strides = array<i32>} : memref<32x128xf32, #tpu.memory_space<vmem>>, vector<32x128xf32>,
    return
  }
  func.func @transform_0(%arg0: i32) -> (i32, i32) {
    %c0_i32 = arith.constant 0 : i32
    %c0_i32_0 = arith.constant 0 : i32
    return %arg0, %c0_i32 : i32, i32
  }
  func.func @transform_1(%arg0: i32) -> (i32, i32) {
    %c0_i32 = arith.constant 0 : i32
    %c0_i32_0 = arith.constant 0 : i32
    %c0_i32_1 = arith.constant 0 : i32
    return %c0_i32, %c0_i32_0 : i32, i32
  }
  func.func @transform_2(%arg0: i32) -> (i32, i32) {
    %c0_i32 = arith.constant 0 : i32
    %c0_i32_0 = arith.constant 0 : i32
    %c0_i32_1 = arith.constant 0 : i32
    return %c0_i32, %c0_i32_0 : i32, i32
  }
  func.func @transform_3(%arg0: i32) -> (i32, i32) {
    %c0_i32 = arith.constant 0 : i32
    %c0_i32_0 = arith.constant 0 : i32
    return %arg0, %c0_i32 : i32, i32
  }
}

module attributes {stable_mosaic.version = 11 : i64} {
  func.func @_mm1_kernel(%arg0: i32, %arg1: memref<2x32xbf16, #tpu.memory_space<vmem>>, %arg2: memref<32x128xbf16, #tpu.memory_space<vmem>>, %arg3: memref<1x128xf32, #tpu.memory_space<vmem>>, %arg4: memref<2x128xf32, #tpu.memory_space<vmem>>) attributes {dimension_semantics = [#tpu.dimension_semantics<parallel>], iteration_bounds = array<i64: 1>, scalar_prefetch = 0 : i64, scratch_operands = 0 : i64, tpu.core_type = #tpu.core_type<tc>, window_params = [{transform_indices = @transform_0, window_bounds = array<i64: 2, 32>}, {pipeline_mode = #tpu.pipeline_mode<synchronous>, transform_indices = @transform_1, window_bounds = array<i64: 32, 128>}, {pipeline_mode = #tpu.pipeline_mode<synchronous>, transform_indices = @transform_2, window_bounds = array<i64: 1, 128>}, {transform_indices = @transform_3, window_bounds = array<i64: 2, 128>}]} {
    %c0 = arith.constant 0 : index
    %c0_0 = arith.constant 0 : index
    %0 = vector.load %arg1[%c0, %c0_0] : memref<2x32xbf16, #tpu.memory_space<vmem>>, vector<2x32xbf16>
    %c0_1 = arith.constant 0 : index
    %c0_2 = arith.constant 0 : index
    %1 = vector.load %arg2[%c0_1, %c0_2] : memref<32x128xbf16, #tpu.memory_space<vmem>>, vector<32x128xbf16>
    %cst = arith.constant dense<0.000000e+00> : vector<2x128xf32>
    %2 = tpu.matmul %0, %1, %cst {dimension_numbers = #tpu.dot_dimension_numbers<[1], [0], [0], [1], [0, 0, 1, 1], [], []>} : vector<2x32xbf16>, vector<32x128xbf16>, vector<2x128xf32> -> vector<2x128xf32>
    %c0_3 = arith.constant 0 : index
    %c0_4 = arith.constant 0 : index
    %3 = vector.load %arg3[%c0_3, %c0_4] : memref<1x128xf32, #tpu.memory_space<vmem>>, vector<1x128xf32>
    %4 = vector.broadcast %3 : vector<1x128xf32> to vector<2x128xf32>
    %5 = arith.addf %2, %4 : vector<2x128xf32>
    %cst_5 = arith.constant 5.000000e-01 : f32
    %6 = vector.broadcast %cst_5 : f32 to vector<2x128xf32>
    %7 = arith.mulf %6, %5 : vector<2x128xf32>
    %8 = arith.negf %7 : vector<2x128xf32>
    %9 = math.exp %8 : vector<2x128xf32>
    %cst_6 = arith.constant 1.000000e+00 : f32
    %10 = vector.broadcast %cst_6 : f32 to vector<2x128xf32>
    %11 = arith.addf %10, %9 : vector<2x128xf32>
    %12 = arith.divf %10, %11 : vector<2x128xf32>
    %c0_7 = arith.constant 0 : index
    %c0_8 = arith.constant 0 : index
    %13 = vector.load %arg4[%c0_7, %c0_8] : memref<2x128xf32, #tpu.memory_space<vmem>>, vector<2x128xf32>
    tpu.vector_store %arg4[%c0_7, %c0_8], %12 {strides = array<i32>} : memref<2x128xf32, #tpu.memory_space<vmem>>, vector<2x128xf32>,
    return
  }
  func.func @transform_0(%arg0: i32) -> (i32, i32) {
    %c0_i32 = arith.constant 0 : i32
    %c0_i32_0 = arith.constant 0 : i32
    return %arg0, %c0_i32 : i32, i32
  }
  func.func @transform_1(%arg0: i32) -> (i32, i32) {
    %c0_i32 = arith.constant 0 : i32
    %c0_i32_0 = arith.constant 0 : i32
    %c0_i32_1 = arith.constant 0 : i32
    return %c0_i32, %c0_i32_0 : i32, i32
  }
  func.func @transform_2(%arg0: i32) -> (i32, i32) {
    %c0_i32 = arith.constant 0 : i32
    %c0_i32_0 = arith.constant 0 : i32
    %c0_i32_1 = arith.constant 0 : i32
    return %c0_i32, %c0_i32_0 : i32, i32
  }
  func.func @transform_3(%arg0: i32) -> (i32, i32) {
    %c0_i32 = arith.constant 0 : i32
    %c0_i32_0 = arith.constant 0 : i32
    return %arg0, %c0_i32 : i32, i32
  }
}

module attributes {stable_mosaic.version = 11 : i64} {
  func.func @_mm1_kernel(%arg0: i32, %arg1: memref<128x288xbf16, #tpu.memory_space<vmem>>, %arg2: memref<288x128xbf16, #tpu.memory_space<vmem>>, %arg3: memref<1x128xf32, #tpu.memory_space<vmem>>, %arg4: memref<128x128xf32, #tpu.memory_space<vmem>>) attributes {dimension_semantics = [#tpu.dimension_semantics<parallel>], iteration_bounds = array<i64: 1>, scalar_prefetch = 0 : i64, scratch_operands = 0 : i64, tpu.core_type = #tpu.core_type<tc>, window_params = [{transform_indices = @transform_0, window_bounds = array<i64: 128, 288>}, {pipeline_mode = #tpu.pipeline_mode<synchronous>, transform_indices = @transform_1, window_bounds = array<i64: 288, 128>}, {pipeline_mode = #tpu.pipeline_mode<synchronous>, transform_indices = @transform_2, window_bounds = array<i64: 1, 128>}, {transform_indices = @transform_3, window_bounds = array<i64: 128, 128>}]} {
    %c0 = arith.constant 0 : index
    %c0_0 = arith.constant 0 : index
    %0 = vector.load %arg1[%c0, %c0_0] : memref<128x288xbf16, #tpu.memory_space<vmem>>, vector<128x288xbf16>
    %c0_1 = arith.constant 0 : index
    %c0_2 = arith.constant 0 : index
    %1 = vector.load %arg2[%c0_1, %c0_2] : memref<288x128xbf16, #tpu.memory_space<vmem>>, vector<288x128xbf16>
    %cst = arith.constant dense<0.000000e+00> : vector<128x128xf32>
    %2 = tpu.matmul %0, %1, %cst {dimension_numbers = #tpu.dot_dimension_numbers<[1], [0], [0], [1], [0, 0, 1, 1], [], []>} : vector<128x288xbf16>, vector<288x128xbf16>, vector<128x128xf32> -> vector<128x128xf32>
    %c0_3 = arith.constant 0 : index
    %c0_4 = arith.constant 0 : index
    %3 = vector.load %arg3[%c0_3, %c0_4] : memref<1x128xf32, #tpu.memory_space<vmem>>, vector<1x128xf32>
    %4 = vector.broadcast %3 : vector<1x128xf32> to vector<128x128xf32>
    %5 = arith.addf %2, %4 : vector<128x128xf32>
    %cst_5 = arith.constant 0.000000e+00 : f32
    %6 = vector.broadcast %cst_5 : f32 to vector<128x128xf32>
    %7 = arith.maximumf %5, %6 : vector<128x128xf32>
    %c0_6 = arith.constant 0 : index
    %c0_7 = arith.constant 0 : index
    %8 = vector.load %arg4[%c0_6, %c0_7] : memref<128x128xf32, #tpu.memory_space<vmem>>, vector<128x128xf32>
    tpu.vector_store %arg4[%c0_6, %c0_7], %7 {strides = array<i32>} : memref<128x128xf32, #tpu.memory_space<vmem>>, vector<128x128xf32>,
    return
  }
  func.func @transform_0(%arg0: i32) -> (i32, i32) {
    %c0_i32 = arith.constant 0 : i32
    %c0_i32_0 = arith.constant 0 : i32
    return %arg0, %c0_i32 : i32, i32
  }
  func.func @transform_1(%arg0: i32) -> (i32, i32) {
    %c0_i32 = arith.constant 0 : i32
    %c0_i32_0 = arith.constant 0 : i32
    %c0_i32_1 = arith.constant 0 : i32
    return %c0_i32, %c0_i32_0 : i32, i32
  }
  func.func @transform_2(%arg0: i32) -> (i32, i32) {
    %c0_i32 = arith.constant 0 : i32
    %c0_i32_0 = arith.constant 0 : i32
    %c0_i32_1 = arith.constant 0 : i32
    return %c0_i32, %c0_i32_0 : i32, i32
  }
  func.func @transform_3(%arg0: i32) -> (i32, i32) {
    %c0_i32 = arith.constant 0 : i32
    %c0_i32_0 = arith.constant 0 : i32
    return %arg0, %c0_i32 : i32, i32
  }
}

module attributes {stable_mosaic.version = 11 : i64} {
  func.func @_mm1_kernel(%arg0: i32, %arg1: memref<2x16xbf16, #tpu.memory_space<vmem>>, %arg2: memref<16x128xbf16, #tpu.memory_space<vmem>>, %arg3: memref<1x128xf32, #tpu.memory_space<vmem>>, %arg4: memref<2x128xf32, #tpu.memory_space<vmem>>) attributes {dimension_semantics = [#tpu.dimension_semantics<parallel>], iteration_bounds = array<i64: 1>, scalar_prefetch = 0 : i64, scratch_operands = 0 : i64, tpu.core_type = #tpu.core_type<tc>, window_params = [{transform_indices = @transform_0, window_bounds = array<i64: 2, 16>}, {pipeline_mode = #tpu.pipeline_mode<synchronous>, transform_indices = @transform_1, window_bounds = array<i64: 16, 128>}, {pipeline_mode = #tpu.pipeline_mode<synchronous>, transform_indices = @transform_2, window_bounds = array<i64: 1, 128>}, {transform_indices = @transform_3, window_bounds = array<i64: 2, 128>}]} {
    %c0 = arith.constant 0 : index
    %c0_0 = arith.constant 0 : index
    %0 = vector.load %arg1[%c0, %c0_0] : memref<2x16xbf16, #tpu.memory_space<vmem>>, vector<2x16xbf16>
    %c0_1 = arith.constant 0 : index
    %c0_2 = arith.constant 0 : index
    %1 = vector.load %arg2[%c0_1, %c0_2] : memref<16x128xbf16, #tpu.memory_space<vmem>>, vector<16x128xbf16>
    %cst = arith.constant dense<0.000000e+00> : vector<2x128xf32>
    %2 = tpu.matmul %0, %1, %cst {dimension_numbers = #tpu.dot_dimension_numbers<[1], [0], [0], [1], [0, 0, 1, 1], [], []>} : vector<2x16xbf16>, vector<16x128xbf16>, vector<2x128xf32> -> vector<2x128xf32>
    %c0_3 = arith.constant 0 : index
    %c0_4 = arith.constant 0 : index
    %3 = vector.load %arg3[%c0_3, %c0_4] : memref<1x128xf32, #tpu.memory_space<vmem>>, vector<1x128xf32>
    %4 = vector.broadcast %3 : vector<1x128xf32> to vector<2x128xf32>
    %5 = arith.addf %2, %4 : vector<2x128xf32>
    %cst_5 = arith.constant 5.000000e-01 : f32
    %6 = vector.broadcast %cst_5 : f32 to vector<2x128xf32>
    %7 = arith.mulf %6, %5 : vector<2x128xf32>
    %8 = arith.negf %7 : vector<2x128xf32>
    %9 = math.exp %8 : vector<2x128xf32>
    %cst_6 = arith.constant 1.000000e+00 : f32
    %10 = vector.broadcast %cst_6 : f32 to vector<2x128xf32>
    %11 = arith.addf %10, %9 : vector<2x128xf32>
    %12 = arith.divf %10, %11 : vector<2x128xf32>
    %c0_7 = arith.constant 0 : index
    %c0_8 = arith.constant 0 : index
    %13 = vector.load %arg4[%c0_7, %c0_8] : memref<2x128xf32, #tpu.memory_space<vmem>>, vector<2x128xf32>
    tpu.vector_store %arg4[%c0_7, %c0_8], %12 {strides = array<i32>} : memref<2x128xf32, #tpu.memory_space<vmem>>, vector<2x128xf32>,
    return
  }
  func.func @transform_0(%arg0: i32) -> (i32, i32) {
    %c0_i32 = arith.constant 0 : i32
    %c0_i32_0 = arith.constant 0 : i32
    return %arg0, %c0_i32 : i32, i32
  }
  func.func @transform_1(%arg0: i32) -> (i32, i32) {
    %c0_i32 = arith.constant 0 : i32
    %c0_i32_0 = arith.constant 0 : i32
    %c0_i32_1 = arith.constant 0 : i32
    return %c0_i32, %c0_i32_0 : i32, i32
  }
  func.func @transform_2(%arg0: i32) -> (i32, i32) {
    %c0_i32 = arith.constant 0 : i32
    %c0_i32_0 = arith.constant 0 : i32
    %c0_i32_1 = arith.constant 0 : i32
    return %c0_i32, %c0_i32_0 : i32, i32
  }
  func.func @transform_3(%arg0: i32) -> (i32, i32) {
    %c0_i32 = arith.constant 0 : i32
    %c0_i32_0 = arith.constant 0 : i32
    return %arg0, %c0_i32 : i32, i32
  }
}

module attributes {stable_mosaic.version = 11 : i64} {
  func.func @_mm1_kernel(%arg0: i32, %arg1: memref<256x144xbf16, #tpu.memory_space<vmem>>, %arg2: memref<144x128xbf16, #tpu.memory_space<vmem>>, %arg3: memref<1x128xf32, #tpu.memory_space<vmem>>, %arg4: memref<256x128xf32, #tpu.memory_space<vmem>>) attributes {dimension_semantics = [#tpu.dimension_semantics<parallel>], iteration_bounds = array<i64: 2>, scalar_prefetch = 0 : i64, scratch_operands = 0 : i64, tpu.core_type = #tpu.core_type<tc>, window_params = [{transform_indices = @transform_0, window_bounds = array<i64: 256, 144>}, {pipeline_mode = #tpu.pipeline_mode<synchronous>, transform_indices = @transform_1, window_bounds = array<i64: 144, 128>}, {pipeline_mode = #tpu.pipeline_mode<synchronous>, transform_indices = @transform_2, window_bounds = array<i64: 1, 128>}, {transform_indices = @transform_3, window_bounds = array<i64: 256, 128>}]} {
    %c0 = arith.constant 0 : index
    %c0_0 = arith.constant 0 : index
    %0 = vector.load %arg1[%c0, %c0_0] : memref<256x144xbf16, #tpu.memory_space<vmem>>, vector<256x144xbf16>
    %c0_1 = arith.constant 0 : index
    %c0_2 = arith.constant 0 : index
    %1 = vector.load %arg2[%c0_1, %c0_2] : memref<144x128xbf16, #tpu.memory_space<vmem>>, vector<144x128xbf16>
    %cst = arith.constant dense<0.000000e+00> : vector<256x128xf32>
    %2 = tpu.matmul %0, %1, %cst {dimension_numbers = #tpu.dot_dimension_numbers<[1], [0], [0], [1], [0, 0, 1, 1], [], []>} : vector<256x144xbf16>, vector<144x128xbf16>, vector<256x128xf32> -> vector<256x128xf32>
    %c0_3 = arith.constant 0 : index
    %c0_4 = arith.constant 0 : index
    %3 = vector.load %arg3[%c0_3, %c0_4] : memref<1x128xf32, #tpu.memory_space<vmem>>, vector<1x128xf32>
    %4 = vector.broadcast %3 : vector<1x128xf32> to vector<256x128xf32>
    %5 = arith.addf %2, %4 : vector<256x128xf32>
    %cst_5 = arith.constant 0.000000e+00 : f32
    %6 = vector.broadcast %cst_5 : f32 to vector<256x128xf32>
    %7 = arith.maximumf %5, %6 : vector<256x128xf32>
    %c0_6 = arith.constant 0 : index
    %c0_7 = arith.constant 0 : index
    %8 = vector.load %arg4[%c0_6, %c0_7] : memref<256x128xf32, #tpu.memory_space<vmem>>, vector<256x128xf32>
    tpu.vector_store %arg4[%c0_6, %c0_7], %7 {strides = array<i32>} : memref<256x128xf32, #tpu.memory_space<vmem>>, vector<256x128xf32>,
    return
  }
  func.func @transform_0(%arg0: i32) -> (i32, i32) {
    %c0_i32 = arith.constant 0 : i32
    %c0_i32_0 = arith.constant 0 : i32
    return %arg0, %c0_i32 : i32, i32
  }
  func.func @transform_1(%arg0: i32) -> (i32, i32) {
    %c0_i32 = arith.constant 0 : i32
    %c0_i32_0 = arith.constant 0 : i32
    %c0_i32_1 = arith.constant 0 : i32
    return %c0_i32, %c0_i32_0 : i32, i32
  }
  func.func @transform_2(%arg0: i32) -> (i32, i32) {
    %c0_i32 = arith.constant 0 : i32
    %c0_i32_0 = arith.constant 0 : i32
    %c0_i32_1 = arith.constant 0 : i32
    return %c0_i32, %c0_i32_0 : i32, i32
  }
  func.func @transform_3(%arg0: i32) -> (i32, i32) {
    %c0_i32 = arith.constant 0 : i32
    %c0_i32_0 = arith.constant 0 : i32
    return %arg0, %c0_i32 : i32, i32
  }
}

module attributes {stable_mosaic.version = 11 : i64} {
  func.func @_mm2_kernel(%arg0: i32, %arg1: memref<256x72xbf16, #tpu.memory_space<vmem>>, %arg2: memref<72x128xbf16, #tpu.memory_space<vmem>>, %arg3: memref<1x128xf32, #tpu.memory_space<vmem>>, %arg4: memref<128x128xbf16, #tpu.memory_space<vmem>>, %arg5: memref<1x128xf32, #tpu.memory_space<vmem>>, %arg6: memref<256x128xf32, #tpu.memory_space<vmem>>) attributes {dimension_semantics = [#tpu.dimension_semantics<parallel>], iteration_bounds = array<i64: 2>, scalar_prefetch = 0 : i64, scratch_operands = 0 : i64, tpu.core_type = #tpu.core_type<tc>, window_params = [{transform_indices = @transform_0, window_bounds = array<i64: 256, 72>}, {pipeline_mode = #tpu.pipeline_mode<synchronous>, transform_indices = @transform_1, window_bounds = array<i64: 72, 128>}, {pipeline_mode = #tpu.pipeline_mode<synchronous>, transform_indices = @transform_2, window_bounds = array<i64: 1, 128>}, {pipeline_mode = #tpu.pipeline_mode<synchronous>, transform_indices = @transform_3, window_bounds = array<i64: 128, 128>}, {pipeline_mode = #tpu.pipeline_mode<synchronous>, transform_indices = @transform_4, window_bounds = array<i64: 1, 128>}, {transform_indices = @transform_5, window_bounds = array<i64: 256, 128>}]} {
    %c0 = arith.constant 0 : index
    %c0_0 = arith.constant 0 : index
    %0 = vector.load %arg1[%c0, %c0_0] : memref<256x72xbf16, #tpu.memory_space<vmem>>, vector<256x72xbf16>
    %c0_1 = arith.constant 0 : index
    %c0_2 = arith.constant 0 : index
    %1 = vector.load %arg2[%c0_1, %c0_2] : memref<72x128xbf16, #tpu.memory_space<vmem>>, vector<72x128xbf16>
    %cst = arith.constant dense<0.000000e+00> : vector<256x128xf32>
    %2 = tpu.matmul %0, %1, %cst {dimension_numbers = #tpu.dot_dimension_numbers<[1], [0], [0], [1], [0, 0, 1, 1], [], []>} : vector<256x72xbf16>, vector<72x128xbf16>, vector<256x128xf32> -> vector<256x128xf32>
    %c0_3 = arith.constant 0 : index
    %c0_4 = arith.constant 0 : index
    %3 = vector.load %arg3[%c0_3, %c0_4] : memref<1x128xf32, #tpu.memory_space<vmem>>, vector<1x128xf32>
    %4 = vector.broadcast %3 : vector<1x128xf32> to vector<256x128xf32>
    %5 = arith.addf %2, %4 : vector<256x128xf32>
    %cst_5 = arith.constant 0.000000e+00 : f32
    %6 = vector.broadcast %cst_5 : f32 to vector<256x128xf32>
    %7 = arith.maximumf %5, %6 : vector<256x128xf32>
    %8 = arith.truncf %7 : vector<256x128xf32> to vector<256x128xbf16>
    %c0_6 = arith.constant 0 : index
    %c0_7 = arith.constant 0 : index
    %9 = vector.load %arg4[%c0_6, %c0_7] : memref<128x128xbf16, #tpu.memory_space<vmem>>, vector<128x128xbf16>
    %cst_8 = arith.constant dense<0.000000e+00> : vector<256x128xf32>
    %10 = tpu.matmul %8, %9, %cst_8 {dimension_numbers = #tpu.dot_dimension_numbers<[1], [0], [0], [1], [0, 0, 1, 1], [], []>} : vector<256x128xbf16>, vector<128x128xbf16>, vector<256x128xf32> -> vector<256x128xf32>
    %c0_9 = arith.constant 0 : index
    %c0_10 = arith.constant 0 : index
    %11 = vector.load %arg5[%c0_9, %c0_10] : memref<1x128xf32, #tpu.memory_space<vmem>>, vector<1x128xf32>
    %12 = vector.broadcast %11 : vector<1x128xf32> to vector<256x128xf32>
    %13 = arith.addf %10, %12 : vector<256x128xf32>
    %14 = arith.negf %13 : vector<256x128xf32>
    %15 = math.exp %14 : vector<256x128xf32>
    %cst_11 = arith.constant 1.000000e+00 : f32
    %16 = vector.broadcast %cst_11 : f32 to vector<256x128xf32>
    %17 = arith.addf %16, %15 : vector<256x128xf32>
    %18 = arith.divf %16, %17 : vector<256x128xf32>
    %c0_12 = arith.constant 0 : index
    %c0_13 = arith.constant 0 : index
    %19 = vector.load %arg6[%c0_12, %c0_13] : memref<256x128xf32, #tpu.memory_space<vmem>>, vector<256x128xf32>
    tpu.vector_store %arg6[%c0_12, %c0_13], %18 {strides = array<i32>} : memref<256x128xf32, #tpu.memory_space<vmem>>, vector<256x128xf32>,
    return
  }
  func.func @transform_0(%arg0: i32) -> (i32, i32) {
    %c0_i32 = arith.constant 0 : i32
    %c0_i32_0 = arith.constant 0 : i32
    return %arg0, %c0_i32 : i32, i32
  }
  func.func @transform_1(%arg0: i32) -> (i32, i32) {
    %c0_i32 = arith.constant 0 : i32
    %c0_i32_0 = arith.constant 0 : i32
    %c0_i32_1 = arith.constant 0 : i32
    return %c0_i32, %c0_i32_0 : i32, i32
  }
  func.func @transform_2(%arg0: i32) -> (i32, i32) {
    %c0_i32 = arith.constant 0 : i32
    %c0_i32_0 = arith.constant 0 : i32
    %c0_i32_1 = arith.constant 0 : i32
    return %c0_i32, %c0_i32_0 : i32, i32
  }
  func.func @transform_3(%arg0: i32) -> (i32, i32) {
    %c0_i32 = arith.constant 0 : i32
    %c0_i32_0 = arith.constant 0 : i32
    %c0_i32_1 = arith.constant 0 : i32
    return %c0_i32, %c0_i32_0 : i32, i32
  }
  func.func @transform_4(%arg0: i32) -> (i32, i32) {
    %c0_i32 = arith.constant 0 : i32
    %c0_i32_0 = arith.constant 0 : i32
    %c0_i32_1 = arith.constant 0 : i32
    return %c0_i32, %c0_i32_0 : i32, i32
  }
  func.func @transform_5(%arg0: i32) -> (i32, i32) {
    %c0_i32 = arith.constant 0 : i32
    %c0_i32_0 = arith.constant 0 : i32
    return %arg0, %c0_i32 : i32, i32
  }
}

</mosaic_0001>

<llo_original>
// kernel: maunet_forward.22
$region0: #{maunet_forward.22}
  #allocation0 [shape = 'u32[]', space=smem, size = 0x4, offset = 0x4, fixed_abs, tag = 'smem constant byte address 0x4 - core index']
  #allocation1 [shape = 'u32[144,128]{1,0:T(1,128)}', space=vmem, size = 0x12000, scoped, tag = 'internal scratch']
  %s0 = inlined_call_operand.vmem [shape: bf16[512,72], index: 0, kind: input, shape index: {}]
  %s1 = inlined_call_operand.vmem [shape: bf16[72,128], index: 1, kind: input, shape index: {}]
  %s2 = inlined_call_operand.vmem [shape: f32[1,128], index: 2, kind: input, shape index: {}]
  %s3 = inlined_call_operand.vmem [shape: f32[512,128], index: 3, kind: output, shape index: {}]
  %s4 = sld [smem:[#allocation0]]
  $region45: #{maunet_forward.22} parent=0
    _
  %s6 = ssub.s32 1, %s4
  %s7 = scalar_select 0, %s6, %s4
  loop: start=0, step=1, limit=4
  $region2: #{maunet_forward.22} parent=0 // loop_pre_header
    _
  $region3: #{maunet_forward.22} parent=0 // loop_header
    %s9 = sphi 0, %s13
    %p10 = scmp.ge.s32.totalorder %s9, 4
    %s19 = sphi 0, %s21
    %s22 = sphi 0, %s19
    %s23 = sphi 0, %s22
    %s39 = sphi 0, %s23
    %s43 = sphi 0, %s43
    %s45 = sphi 0, %s43
    %s46 = sphi 0, %s45
    %s60 = sphi 0, %s46
    %s64 = sphi 0, %s64
    %s66 = sphi 0, %s64
    %s67 = sphi 0, %s66
    %s81 = sphi 0, %s67
    %s87 = sphi 0, %s89
    %s90 = sphi 0, %s87
    %s91 = sphi 0, %s90
    %s107 = sphi 0, %s91
  $region4: #{maunet_forward.22} parent=0 // loop_header_branch
    %12 = sbr.rel (%p10) target = $region8
  $region5: #{maunet_forward.22} parent=0 // loop_body
    %s14 = ssub.s32 %s9, 1
    %s15 = ssub.s32 %s9, 2
    %s16 = sadd.s32 %s9, 1
    %s17 = ssub.s32 %s9, %s16
    %p18 = scmp.eq.s32.totalorder %s17, 0
    %s20 = sadd.s32 %s19, 1
    %s21 = scalar_select %p18, %s19, %s20
    %p24 = pneg %p18
    %p25 = scmp.eq.s32.totalorder %s9, 1
    %p26 = por %p24, %p25
    %p27 = scmp.ne.s32.totalorder %s19, %s22
    %p28 = scmp.eq.s32.totalorder %s9, 0
    %p29 = por %p27, %p28
    %p30 = scmp.ne.s32.totalorder %s19, %s22
    %p31 = scmp.eq.s32.totalorder %s14, 1
    %p32 = por %p30, %p31
    %p33 = scmp.ne.s32.totalorder %s22, %s23
    %p34 = scmp.eq.s32.totalorder %s14, 0
    %p35 = por %p33, %p34
    %p36 = scmp.ne.s32.totalorder %s22, %s23
    %p37 = scmp.eq.s32.totalorder %s15, 1
    %p38 = por %p36, %p37
    %p40 = scmp.ne.s32.totalorder %s23, %s39
    %p41 = scmp.eq.s32.totalorder %s15, 0
    %p42 = por %p40, %p41
    %s44 = sadd.s32 %s43, 1
    %p47 = scmp.eq.s32.totalorder %s9, 1
    %p48 = scmp.ne.s32.totalorder %s43, %s45
    %p49 = scmp.eq.s32.totalorder %s9, 0
    %p50 = por %p48, %p49
    %p51 = scmp.ne.s32.totalorder %s43, %s45
    %p52 = scmp.eq.s32.totalorder %s14, 1
    %p53 = por %p51, %p52
    %p54 = scmp.ne.s32.totalorder %s45, %s46
    %p55 = scmp.eq.s32.totalorder %s14, 0
    %p56 = por %p54, %p55
    %p57 = scmp.ne.s32.totalorder %s45, %s46
    %p58 = scmp.eq.s32.totalorder %s15, 1
    %p59 = por %p57, %p58
    %p61 = scmp.ne.s32.totalorder %s46, %s60
    %p62 = scmp.eq.s32.totalorder %s15, 0
    %p63 = por %p61, %p62
    %s65 = sadd.s32 %s64, 1
    %p68 = scmp.eq.s32.totalorder %s9, 1
    %p69 = scmp.ne.s32.totalorder %s64, %s66
    %p70 = scmp.eq.s32.totalorder %s9, 0
    %p71 = por %p69, %p70
    %p72 = scmp.ne.s32.totalorder %s64, %s66
    %p73 = scmp.eq.s32.totalorder %s14, 1
    %p74 = por %p72, %p73
    %p75 = scmp.ne.s32.totalorder %s66, %s67
    %p76 = scmp.eq.s32.totalorder %s14, 0
    %p77 = por %p75, %p76
    %p78 = scmp.ne.s32.totalorder %s66, %s67
    %p79 = scmp.eq.s32.totalorder %s15, 1
    %p80 = por %p78, %p79
    %p82 = scmp.ne.s32.totalorder %s67, %s81
    %p83 = scmp.eq.s32.totalorder %s15, 0
    %p84 = por %p82, %p83
    %s85 = ssub.s32 %s9, %s16
    %p86 = scmp.eq.s32.totalorder %s85, 0
    %s88 = sadd.s32 %s87, 1
    %s89 = scalar_select %p86, %s87, %s88
    %p92 = pneg %p86
    %p93 = scmp.eq.s32.totalorder %s9, 1
    %p94 = por %p92, %p93
    %p95 = scmp.ne.s32.totalorder %s87, %s90
    %p96 = scmp.eq.s32.totalorder %s9, 0
    %p97 = por %p95, %p96
    %p98 = scmp.ne.s32.totalorder %s87, %s90
    %p99 = scmp.eq.s32.totalorder %s14, 1
    %p100 = por %p98, %p99
    %p101 = scmp.ne.s32.totalorder %s90, %s91
    %p102 = scmp.eq.s32.totalorder %s14, 0
    %p103 = por %p101, %p102
    %p104 = scmp.ne.s32.totalorder %s90, %s91
    %p105 = scmp.eq.s32.totalorder %s15, 1
    %p106 = por %p104, %p105
    %p108 = scmp.ne.s32.totalorder %s91, %s107
    %p109 = scmp.eq.s32.totalorder %s15, 0
    %p110 = por %p108, %p109
    %p111 = scmp.le.s32.totalorder 1, %s9
    %p112 = scmp.lt.s32.totalorder %s9, 3
    %p113 = pnand %p111, %p112
    %p114 = pneg %p113
    // Predicated region
    $region9: #{maunet_forward.22} parent=5 // pred_check
      _
    $region10: #{maunet_forward.22} parent=5 // pred_check_branch
      %116 = sbr.rel (%p113) target = $region12
    $region11: #{maunet_forward.22} parent=5 // pred_region
      %s117 = ssub.s32 %s9, 1
      // Predicated region
      $region13: #{maunet_forward.22} parent=11 // pred_check
        %p118 = pneg %p56
      $region14: #{maunet_forward.22} parent=11 // pred_check_branch
        %120 = sbr.rel (%p118) target = $region16
      $region15: #{maunet_forward.22} parent=11 // pred_region
        _
      $region16: #{maunet_forward.22} parent=11 // pred_fallthru
        _
      // Predicated region
      $region17: #{maunet_forward.22} parent=11 // pred_check
        %p121 = pneg %p77
      $region18: #{maunet_forward.22} parent=11 // pred_check_branch
        %123 = sbr.rel (%p121) target = $region20
      $region19: #{maunet_forward.22} parent=11 // pred_region
        _
      $region20: #{maunet_forward.22} parent=11 // pred_fallthru
        _
    $region12: #{maunet_forward.22} parent=5 // pred_fallthru
      _
    %p124 = scmp.lt.s32.totalorder %s9, 2
    // Predicated region
    $region21: #{maunet_forward.22} parent=5 // pred_check
      %p125 = pneg %p124
    $region22: #{maunet_forward.22} parent=5 // pred_check_branch
      %127 = sbr.rel (%p125) target = $region24
    $region23: #{maunet_forward.22} parent=5 // pred_region
      // Predicated region
      $region25: #{maunet_forward.22} parent=23 // pred_check
        %p128 = pneg %p29
      $region26: #{maunet_forward.22} parent=23 // pred_check_branch
        %130 = sbr.rel (%p128) target = $region28
      $region27: #{maunet_forward.22} parent=23 // pred_region
        %s131 = smul.u32 32, %s9
        %p132 = scmp.lt.s32.totalorder %s131, 63
        %s133 = scalar_select %p132, %s131, 63
        %s134 = smul.addr %s133, 4
        %s135 = scalar_lea.vmem %s0, %s134
        %s136 = smul.u32 32, %s9
      $region28: #{maunet_forward.22} parent=23 // pred_fallthru
        _
    $region24: #{maunet_forward.22} parent=5 // pred_fallthru
      _
    %p137 = scmp.le.s32.totalorder 1, %s9
    %p138 = scmp.lt.s32.totalorder %s9, 3
    %p139 = pnand %p137, %p138
    %p140 = pneg %p139
    // Predicated region
    $region29: #{maunet_forward.22} parent=5 // pred_check
      _
    $region30: #{maunet_forward.22} parent=5 // pred_check_branch
      %142 = sbr.rel (%p139) target = $region32
    $region31: #{maunet_forward.22} parent=5 // pred_region
      %s143 = ssub.s32 %s9, 1
      %s144 = smul.u32 32, %s14
      %p145 = scmp.lt.s32.totalorder %s144, 63
      %s146 = scalar_select %p145, %s144, 63
      %s147 = smul.addr %s146, 4
      %s148 = scalar_lea.vmem %s0, %s147
      %p149 = pneg %p35
      %p150 = pneg %p32
      %p151 = pneg %p56
      %p152 = pneg %p53
      %p153 = pneg %p77
      %p154 = pneg %p74
      %p155 = pneg %p103
      %p156 = pneg %p100
      %s157 = smul.u32 32, %s14
      %p158 = scmp.lt.s32.totalorder %s157, 63
      %s159 = scalar_select %p158, %s157, 63
      %s160 = smul.addr %s159, 8
      %s161 = scalar_lea.vmem %s3, %s160
      %s162 = smul.u32 32, %s14
      %p163 = scmp.lt.s32.totalorder %s162, 63
      %s164 = scalar_select %p163, %s162, 63
      %s165 = smul.addr %s164, 4
      %s166 = scalar_lea.vmem %s0, %s165
      %s167 = smul.u32 32, %s14
      %s168 = smul.u32 32, %s14
      %p169 = scmp.lt.s32.totalorder %s168, 63
      %s170 = scalar_select %p169, %s168, 63
      %s171 = smul.addr %s170, 8
      %s172 = scalar_lea.vmem %s3, %s171
      %s173 = smul.u32 32, %s14
      %v175 = vld [vmem:[%s166] sm:$0xf]
      %v176 = vld [vmem:[%s166 + $0x4] sm:$0xf]
      %v177 = vld [vmem:[%s166 + $0x8] sm:$0xf]
      %v178 = vld [vmem:[%s166 + $0xc] sm:$0xf]
      %v179 = vld [vmem:[%s166 + $0x10] sm:$0xf]
      %v180 = vld [vmem:[%s166 + $0x14] sm:$0xf]
      %v181 = vld [vmem:[%s166 + $0x18] sm:$0xf]
      %v182 = vld [vmem:[%s166 + $0x1c] sm:$0xf]
      %v183 = vld [vmem:[%s166 + $0x20] sm:$0xf]
      %v184 = vld [vmem:[%s166 + $0x24] sm:$0xf]
      %v185 = vld [vmem:[%s166 + $0x28] sm:$0xf]
      %v186 = vld [vmem:[%s166 + $0x2c] sm:$0xf]
      %v187 = vld [vmem:[%s166 + $0x30] sm:$0xf]
      %v188 = vld [vmem:[%s166 + $0x34] sm:$0xf]
      %v189 = vld [vmem:[%s166 + $0x38] sm:$0xf]
      %v190 = vld [vmem:[%s166 + $0x3c] sm:$0xf]
      %v191 = vld [vmem:[%s166 + $0x40] sm:$0xf]
      %v192 = vld [vmem:[%s166 + $0x44] sm:$0xf]
      %v193 = vld [vmem:[%s166 + $0x48] sm:$0xf]
      %v194 = vld [vmem:[%s166 + $0x4c] sm:$0xf]
      %v195 = vld [vmem:[%s166 + $0x50] sm:$0xf]
      %v196 = vld [vmem:[%s166 + $0x54] sm:$0xf]
      %v197 = vld [vmem:[%s166 + $0x58] sm:$0xf]
      %v198 = vld [vmem:[%s166 + $0x5c] sm:$0xf]
      %v199 = vld [vmem:[%s166 + $0x60] sm:$0xf]
      %v200 = vld [vmem:[%s166 + $0x64] sm:$0xf]
      %v201 = vld [vmem:[%s166 + $0x68] sm:$0xf]
      %v202 = vld [vmem:[%s166 + $0x6c] sm:$0xf]
      %v203 = vld [vmem:[%s166 + $0x70] sm:$0xf]
      %v204 = vld [vmem:[%s166 + $0x74] sm:$0xf]
      %v205 = vld [vmem:[%s166 + $0x78] sm:$0xf]
      %v206 = vld [vmem:[%s166 + $0x7c] sm:$0xf]
      %v207 = vld [vmem:[%s1] sm:$0xf]
      %v208 = vld [vmem:[%s1 + $0x4] sm:$0xf]
      %v209 = vld [vmem:[%s1 + $0x8] sm:$0xf]
      %v210 = vld [vmem:[%s1 + $0xc] sm:$0xf]
      %v211 = vld [vmem:[%s1 + $0x10] sm:$0xf]
      %v212 = vld [vmem:[%s1 + $0x14] sm:$0xf]
      %v213 = vld [vmem:[%s1 + $0x18] sm:$0xf]
      %v214 = vld [vmem:[%s1 + $0x1c] sm:$0xf]
      %v215 = vld [vmem:[%s1 + $0x20] sm:$0xf]
      %v216 = vld [vmem:[%s2] sm:$0x1]
      %v218 = vlaneseq
      %v219 = vshrl.u32 %v218, 7
      %v220 = vsub.s32 0, %v219
      %v221 = vrot.slane %v216, %v220
      %v255 = vunpack.c.l.b16 %v175
      %v256 = vunpack.c.l.b16 %v176
      %v257 = vunpack.c.l.b16 %v177
      %v258 = vunpack.c.l.b16 %v178
      %v259 = vunpack.c.l.b16 %v179
      %v260 = vunpack.c.l.b16 %v180
      %v261 = vunpack.c.l.b16 %v181
      %v262 = vunpack.c.l.b16 %v182
      %v263 = vunpack.c.l.b16 %v183
      %v264 = vunpack.c.l.b16 %v184
      %v265 = vunpack.c.l.b16 %v185
      %v266 = vunpack.c.l.b16 %v186
      %v267 = vunpack.c.l.b16 %v187
      %v268 = vunpack.c.l.b16 %v188
      %v269 = vunpack.c.l.b16 %v189
      %v270 = vunpack.c.l.b16 %v190
      %v271 = vunpack.c.l.b16 %v191
      %v272 = vunpack.c.l.b16 %v192
      %v273 = vunpack.c.l.b16 %v193
      %v274 = vunpack.c.l.b16 %v194
      %v275 = vunpack.c.l.b16 %v195
      %v276 = vunpack.c.l.b16 %v196
      %v277 = vunpack.c.l.b16 %v197
      %v278 = vunpack.c.l.b16 %v198
      %v279 = vunpack.c.l.b16 %v199
      %v280 = vunpack.c.l.b16 %v200
      %v281 = vunpack.c.l.b16 %v201
      %v282 = vunpack.c.l.b16 %v202
      %v283 = vunpack.c.l.b16 %v203
      %v284 = vunpack.c.l.b16 %v204
      %v285 = vunpack.c.l.b16 %v205
      %v286 = vunpack.c.l.b16 %v206
      %v287 = vpack.c.b16 %v256, %v255
      %v288 = vpack.c.b16 %v258, %v257
      %v289 = vpack.c.b16 %v260, %v259
      %v290 = vpack.c.b16 %v262, %v261
      %v291 = vpack.c.b16 %v264, %v263
      %v292 = vpack.c.b16 %v266, %v265
      %v293 = vpack.c.b16 %v268, %v267
      %v294 = vpack.c.b16 %v270, %v269
      %v295 = vpack.c.b16 %v272, %v271
      %v296 = vpack.c.b16 %v274, %v273
      %v297 = vpack.c.b16 %v276, %v275
      %v298 = vpack.c.b16 %v278, %v277
      %v299 = vpack.c.b16 %v280, %v279
      %v300 = vpack.c.b16 %v282, %v281
      %v301 = vpack.c.b16 %v284, %v283
      %v302 = vpack.c.b16 %v286, %v285
      %v312 = vunpack.c.l.b16 %v207
      %v313 = vunpack.c.l.b16 %v208
      %v314 = vunpack.c.l.b16 %v209
      %v315 = vunpack.c.l.b16 %v210
      %v316 = vunpack.c.l.b16 %v211
      %v317 = vunpack.c.l.b16 %v212
      %v318 = vunpack.c.l.b16 %v213
      %v319 = vunpack.c.l.b16 %v214
      %v320 = vunpack.c.l.b16 %v215
      %v321 = vpack.c.b16 %v313, %v312
      %v322 = vpack.c.b16 %v315, %v314
      %v323 = vpack.c.b16 %v317, %v316
      %v324 = vpack.c.b16 %v319, %v318
      %v325 = vpack.c.b16 %v320, %v320
      %vm330 = vcmask 588800
      %v332 = vsel %vm330, %v287, 0
      %v335 = vsel %vm330, %v288, 0
      %v338 = vsel %vm330, %v289, 0
      %v341 = vsel %vm330, %v290, 0
      %v344 = vsel %vm330, %v291, 0
      %v347 = vsel %vm330, %v292, 0
      %v350 = vsel %vm330, %v293, 0
      %v353 = vsel %vm330, %v294, 0
      %v356 = vsel %vm330, %v295, 0
      %v359 = vsel %vm330, %v296, 0
      %v362 = vsel %vm330, %v297, 0
      %v365 = vsel %vm330, %v298, 0
      %v368 = vsel %vm330, %v299, 0
      %v371 = vsel %vm330, %v300, 0
      %v374 = vsel %vm330, %v301, 0
      %v377 = vsel %vm330, %v302, 0
      %vm379 = vcmask 1043456
      %v381 = vsel %vm379, %v325, 0
      %383 = vmatprep.subr.bf16.mxu0 0
      %384 = vmatpush1.bf16.msra.mxu0 %v321
      %385 = vmatprep.subr.bf16.mxu0 0
      %386 = vmatpush1.bf16.msra.mxu0 %v322
      %387 = vmatprep.subr.bf16.mxu0 0
      %388 = vmatpush1.bf16.msra.mxu0 %v323
      %389 = vmatprep.subr.bf16.mxu0 0
      %390 = vmatpush1.bf16.msra.mxu0 %v324
      %391 = vmatprep.subr.bf16.mxu0 0
      %392 = vmatpush1.bf16.msra.mxu0 %v381
      %393 = vmatprep.subr.bf16.mxu0 0
      %394 = vmatpush1.bf16.msra.mxu0 0
      %395 = vmatprep.subr.bf16.mxu0 0
      %396 = vmatpush1.bf16.msra.mxu0 0
      %397 = vmatprep.subr.bf16.mxu0 0
      %398 = vmatpush1.bf16.msra.mxu0 0
      %399 = vmatprep.subr.bf16.mxu0 0
      %400 = vmatpush1.bf16.msra.mxu0 0
      %401 = vmatprep.subr.bf16.mxu0 0
      %402 = vmatpush1.bf16.msra.mxu0 0
      %403 = vmatprep.subr.bf16.mxu0 0
      %404 = vmatpush1.bf16.msra.mxu0 0
      %405 = vmatprep.subr.bf16.mxu0 0
      %406 = vmatpush1.bf16.msra.mxu0 0
      %407 = vmatprep.subr.bf16.mxu0 0
      %408 = vmatpush1.bf16.msra.mxu0 0
      %409 = vmatprep.subr.bf16.mxu0 0
      %410 = vmatpush1.bf16.msra.mxu0 0
      %411 = vmatprep.subr.bf16.mxu0 0
      %412 = vmatpush1.bf16.msra.mxu0 0
      %413 = vmatprep.subr.bf16.mxu0 0
      %414 = vmatpush1.bf16.msra.mxu0 0
      %415 = vmatprep.mubr.bf16.mxu0 0
      %416 = vmatmul.mubr.bf16.gmra.mrb[0].mxu0 %v332
      %v417 = vpop.f32.mrb[0].mxu0
      %v418 = vadd.f32 %v221, %v417
      %v419 = vpop.f32.mrb[0].mxu0
      %v420 = vpop.f32.mrb[0].mxu0
      %v421 = vadd.f32 %v221, %v420
      %v422 = vpop.f32.mrb[0].mxu0
      %423 = vmatprep.mubr.bf16.mxu0 0
      %424 = vmatmul.mubr.bf16.gmra.mrb[0].mxu0 %v335
      %v425 = vpop.f32.mrb[0].mxu0
      %v426 = vadd.f32 %v221, %v425
      %v427 = vpop.f32.mrb[0].mxu0
      %v428 = vpop.f32.mrb[0].mxu0
      %v429 = vadd.f32 %v221, %v428
      %v430 = vpop.f32.mrb[0].mxu0
      %431 = vmatprep.mubr.bf16.mxu0 0
      %432 = vmatmul.mubr.bf16.gmra.mrb[0].mxu0 %v338
      %v433 = vpop.f32.mrb[0].mxu0
      %v434 = vadd.f32 %v221, %v433
      %v435 = vpop.f32.mrb[0].mxu0
      %v436 = vpop.f32.mrb[0].mxu0
      %v437 = vadd.f32 %v221, %v436
      %v438 = vpop.f32.mrb[0].mxu0
      %439 = vmatprep.mubr.bf16.mxu0 0
      %440 = vmatmul.mubr.bf16.gmra.mrb[0].mxu0 %v341
      %v441 = vpop.f32.mrb[0].mxu0
      %v442 = vadd.f32 %v221, %v441
      %v443 = vpop.f32.mrb[0].mxu0
      %v444 = vpop.f32.mrb[0].mxu0
      %v445 = vadd.f32 %v221, %v444
      %v446 = vpop.f32.mrb[0].mxu0
      %447 = vmatprep.mubr.bf16.mxu0 0
      %448 = vmatmul.mubr.bf16.gmra.mrb[0].mxu0 %v344
      %v449 = vpop.f32.mrb[0].mxu0
      %v450 = vadd.f32 %v221, %v449
      %v451 = vpop.f32.mrb[0].mxu0
      %v452 = vpop.f32.mrb[0].mxu0
      %v453 = vadd.f32 %v221, %v452
      %v454 = vpop.f32.mrb[0].mxu0
      %455 = vmatprep.mubr.bf16.mxu0 0
      %456 = vmatmul.mubr.bf16.gmra.mrb[0].mxu0 %v347
      %v457 = vpop.f32.mrb[0].mxu0
      %v458 = vadd.f32 %v221, %v457
      %v459 = vpop.f32.mrb[0].mxu0
      %v460 = vpop.f32.mrb[0].mxu0
      %v461 = vadd.f32 %v221, %v460
      %v462 = vpop.f32.mrb[0].mxu0
      %463 = vmatprep.mubr.bf16.mxu0 0
      %464 = vmatmul.mubr.bf16.gmra.mrb[0].mxu0 %v350
      %v465 = vpop.f32.mrb[0].mxu0
      %v466 = vadd.f32 %v221, %v465
      %v467 = vpop.f32.mrb[0].mxu0
      %v468 = vpop.f32.mrb[0].mxu0
      %v469 = vadd.f32 %v221, %v468
      %v470 = vpop.f32.mrb[0].mxu0
      %471 = vmatprep.mubr.bf16.mxu0 0
      %472 = vmatmul.mubr.bf16.gmra.mrb[0].mxu0 %v353
      %v473 = vpop.f32.mrb[0].mxu0
      %v474 = vadd.f32 %v221, %v473
      %v475 = vpop.f32.mrb[0].mxu0
      %v476 = vpop.f32.mrb[0].mxu0
      %v477 = vadd.f32 %v221, %v476
      %v478 = vpop.f32.mrb[0].mxu0
      %479 = vmatprep.mubr.bf16.mxu0 0
      %480 = vmatmul.mubr.bf16.gmra.mrb[0].mxu0 %v356
      %v481 = vpop.f32.mrb[0].mxu0
      %v482 = vadd.f32 %v221, %v481
      %v483 = vpop.f32.mrb[0].mxu0
      %v484 = vpop.f32.mrb[0].mxu0
      %v485 = vadd.f32 %v221, %v484
      %v486 = vpop.f32.mrb[0].mxu0
      %487 = vmatprep.mubr.bf16.mxu0 0
      %488 = vmatmul.mubr.bf16.gmra.mrb[0].mxu0 %v359
      %v489 = vpop.f32.mrb[0].mxu0
      %v490 = vadd.f32 %v221, %v489
      %v491 = vpop.f32.mrb[0].mxu0
      %v492 = vpop.f32.mrb[0].mxu0
      %v493 = vadd.f32 %v221, %v492
      %v494 = vpop.f32.mrb[0].mxu0
      %495 = vmatprep.mubr.bf16.mxu0 0
      %496 = vmatmul.mubr.bf16.gmra.mrb[0].mxu0 %v362
      %v497 = vpop.f32.mrb[0].mxu0
      %v498 = vadd.f32 %v221, %v497
      %v499 = vpop.f32.mrb[0].mxu0
      %v500 = vpop.f32.mrb[0].mxu0
      %v501 = vadd.f32 %v221, %v500
      %v502 = vpop.f32.mrb[0].mxu0
      %503 = vmatprep.mubr.bf16.mxu0 0
      %504 = vmatmul.mubr.bf16.gmra.mrb[0].mxu0 %v365
      %v505 = vpop.f32.mrb[0].mxu0
      %v506 = vadd.f32 %v221, %v505
      %v507 = vpop.f32.mrb[0].mxu0
      %v508 = vpop.f32.mrb[0].mxu0
      %v509 = vadd.f32 %v221, %v508
      %v510 = vpop.f32.mrb[0].mxu0
      %511 = vmatprep.mubr.bf16.mxu0 0
      %512 = vmatmul.mubr.bf16.gmra.mrb[0].mxu0 %v368
      %v513 = vpop.f32.mrb[0].mxu0
      %v514 = vadd.f32 %v221, %v513
      %v515 = vpop.f32.mrb[0].mxu0
      %v516 = vpop.f32.mrb[0].mxu0
      %v517 = vadd.f32 %v221, %v516
      %v518 = vpop.f32.mrb[0].mxu0
      %519 = vmatprep.mubr.bf16.mxu0 0
      %520 = vmatmul.mubr.bf16.gmra.mrb[0].mxu0 %v371
      %v521 = vpop.f32.mrb[0].mxu0
      %v522 = vadd.f32 %v221, %v521
      %v523 = vpop.f32.mrb[0].mxu0
      %v524 = vpop.f32.mrb[0].mxu0
      %v525 = vadd.f32 %v221, %v524
      %v526 = vpop.f32.mrb[0].mxu0
      %527 = vmatprep.mubr.bf16.mxu0 0
      %528 = vmatmul.mubr.bf16.gmra.mrb[0].mxu0 %v374
      %v529 = vpop.f32.mrb[0].mxu0
      %v530 = vadd.f32 %v221, %v529
      %v531 = vpop.f32.mrb[0].mxu0
      %v532 = vpop.f32.mrb[0].mxu0
      %v533 = vadd.f32 %v221, %v532
      %v534 = vpop.f32.mrb[0].mxu0
      %535 = vmatprep.mubr.bf16.mxu0 0
      %536 = vmatmul.mubr.bf16.gmra.mrb[0].mxu0 %v377
      %v537 = vpop.f32.mrb[0].mxu0
      %v538 = vadd.f32 %v221, %v537
      %v539 = vpop.f32.mrb[0].mxu0
      %v540 = vpop.f32.mrb[0].mxu0
      %v541 = vadd.f32 %v221, %v540
      %v542 = vpop.f32.mrb[0].mxu0
      %543 = vdwg.mxu0
      %v544 = vmax.f32 %v418, 0.0
      %v545 = vmax.f32 %v421, 0.0
      %v546 = vmax.f32 %v426, 0.0
      %v547 = vmax.f32 %v429, 0.0
      %v548 = vmax.f32 %v434, 0.0
      %v549 = vmax.f32 %v437, 0.0
      %v550 = vmax.f32 %v442, 0.0
      %v551 = vmax.f32 %v445, 0.0
      %v552 = vmax.f32 %v450, 0.0
      %v553 = vmax.f32 %v453, 0.0
      %v554 = vmax.f32 %v458, 0.0
      %v555 = vmax.f32 %v461, 0.0
      %v556 = vmax.f32 %v466, 0.0
      %v557 = vmax.f32 %v469, 0.0
      %v558 = vmax.f32 %v474, 0.0
      %v559 = vmax.f32 %v477, 0.0
      %v560 = vmax.f32 %v482, 0.0
      %v561 = vmax.f32 %v485, 0.0
      %v562 = vmax.f32 %v490, 0.0
      %v563 = vmax.f32 %v493, 0.0
      %v564 = vmax.f32 %v498, 0.0
      %v565 = vmax.f32 %v501, 0.0
      %v566 = vmax.f32 %v506, 0.0
      %v567 = vmax.f32 %v509, 0.0
      %v568 = vmax.f32 %v514, 0.0
      %v569 = vmax.f32 %v517, 0.0
      %v570 = vmax.f32 %v522, 0.0
      %v571 = vmax.f32 %v525, 0.0
      %v572 = vmax.f32 %v530, 0.0
      %v573 = vmax.f32 %v533, 0.0
      %v574 = vmax.f32 %v538, 0.0
      %v575 = vmax.f32 %v541, 0.0
      %576 = vst [vmem:[%s172] sm:$0xff] %v544
      %577 = vst [vmem:[%s172 + $0x8] sm:$0xff] %v545
      %578 = vst [vmem:[%s172 + $0x10] sm:$0xff] %v546
      %579 = vst [vmem:[%s172 + $0x18] sm:$0xff] %v547
      %580 = vst [vmem:[%s172 + $0x20] sm:$0xff] %v548
      %581 = vst [vmem:[%s172 + $0x28] sm:$0xff] %v549
      %582 = vst [vmem:[%s172 + $0x30] sm:$0xff] %v550
      %583 = vst [vmem:[%s172 + $0x38] sm:$0xff] %v551
      %584 = vst [vmem:[%s172 + $0x40] sm:$0xff] %v552
      %585 = vst [vmem:[%s172 + $0x48] sm:$0xff] %v553
      %586 = vst [vmem:[%s172 + $0x50] sm:$0xff] %v554
      %587 = vst [vmem:[%s172 + $0x58] sm:$0xff] %v555
      %588 = vst [vmem:[%s172 + $0x60] sm:$0xff] %v556
      %589 = vst [vmem:[%s172 + $0x68] sm:$0xff] %v557
      %590 = vst [vmem:[%s172 + $0x70] sm:$0xff] %v558
      %591 = vst [vmem:[%s172 + $0x78] sm:$0xff] %v559
      %592 = vst [vmem:[%s172 + $0x80] sm:$0xff] %v560
      %593 = vst [vmem:[%s172 + $0x88] sm:$0xff] %v561
      %594 = vst [vmem:[%s172 + $0x90] sm:$0xff] %v562
      %595 = vst [vmem:[%s172 + $0x98] sm:$0xff] %v563
      %596 = vst [vmem:[%s172 + $0xa0] sm:$0xff] %v564
      %597 = vst [vmem:[%s172 + $0xa8] sm:$0xff] %v565
      %598 = vst [vmem:[%s172 + $0xb0] sm:$0xff] %v566
      %599 = vst [vmem:[%s172 + $0xb8] sm:$0xff] %v567
      %600 = vst [vmem:[%s172 + $0xc0] sm:$0xff] %v568
      %601 = vst [vmem:[%s172 + $0xc8] sm:$0xff] %v569
      %602 = vst [vmem:[%s172 + $0xd0] sm:$0xff] %v570
      %603 = vst [vmem:[%s172 + $0xd8] sm:$0xff] %v571
      %604 = vst [vmem:[%s172 + $0xe0] sm:$0xff] %v572
      %605 = vst [vmem:[%s172 + $0xe8] sm:$0xff] %v573
      %606 = vst [vmem:[%s172 + $0xf0] sm:$0xff] %v574
      %607 = vst [vmem:[%s172 + $0xf8] sm:$0xff] %v575
      %s608 = smul.u32 32, %s14
      %p609 = scmp.lt.s32.totalorder %s608, 63
      %s610 = scalar_select %p609, %s608, 63
      %s611 = smul.addr %s610, 8
      %s612 = scalar_lea.vmem %s3, %s611
      // Predicated region
      $region33: #{maunet_forward.22} parent=31 // pred_check
        %p613 = pneg %p100
      $region34: #{maunet_forward.22} parent=31 // pred_check_branch
        %615 = sbr.rel (%p613) target = $region36
      $region35: #{maunet_forward.22} parent=31 // pred_region
        %s616 = smul.u32 32, %s14
      $region36: #{maunet_forward.22} parent=31 // pred_fallthru
        _
    $region32: #{maunet_forward.22} parent=5 // pred_fallthru
      _
    %p617 = scmp.le.s32.totalorder 2, %s9
    // Predicated region
    $region37: #{maunet_forward.22} parent=5 // pred_check
      %p618 = pneg %p617
    $region38: #{maunet_forward.22} parent=5 // pred_check_branch
      %620 = sbr.rel (%p618) target = $region40
    $region39: #{maunet_forward.22} parent=5 // pred_region
      %s621 = ssub.s32 %s9, 2
      // Predicated region
      $region41: #{maunet_forward.22} parent=39 // pred_check
        %p622 = pneg %p106
      $region42: #{maunet_forward.22} parent=39 // pred_check_branch
        %624 = sbr.rel (%p622) target = $region44
      $region43: #{maunet_forward.22} parent=39 // pred_region
        %s625 = smul.u32 32, %s15
        %p626 = scmp.lt.s32.totalorder %s625, 63
        %s627 = scalar_select %p626, %s625, 63
        %s628 = smul.addr %s627, 8
        %s629 = scalar_lea.vmem %s3, %s628
      $region44: #{maunet_forward.22} parent=39 // pred_fallthru
        _
    $region40: #{maunet_forward.22} parent=5 // pred_fallthru
      _
  $region6: #{maunet_forward.22} parent=0 // loop_footer
    %s13 = sadd.s32 1, %s9
  $region7: #{maunet_forward.22} parent=0 // loop_footer_branch
    %8 = sbr.rel target = $region3
  $region8: #{maunet_forward.22} parent=0 // loop_exit
    _

// kernel: maunet_forward.23
$region0: #{maunet_forward.23}
  #allocation0 [shape = 'u32[]', space=smem, size = 0x4, offset = 0x4, fixed_abs, tag = 'smem constant byte address 0x4 - core index']
  #allocation1 [shape = 'u32[144,128]{1,0:T(1,128)}', space=vmem, size = 0x12000, scoped, tag = 'internal scratch']
  %s0 = inlined_call_operand.vmem [shape: bf16[64,8], index: 0, kind: input, shape index: {}]
  %s1 = inlined_call_operand.vmem [shape: bf16[8,128], index: 1, kind: input, shape index: {}]
  %s2 = inlined_call_operand.vmem [shape: f32[1,128], index: 2, kind: input, shape index: {}]
  %s3 = inlined_call_operand.vmem [shape: bf16[128,256], index: 3, kind: input, shape index: {}]
  %s4 = inlined_call_operand.vmem [shape: f32[1,256], index: 4, kind: input, shape index: {}]
  %s5 = inlined_call_operand.vmem [shape: f32[64,256], index: 5, kind: output, shape index: {}]
  %s6 = sld [smem:[#allocation0]]
  $region30: #{maunet_forward.23} parent=0
    _
  %s8 = ssub.s32 1, %s6
  %s9 = scalar_select 0, %s8, %s6
  // Predicated region
  $region2: #{maunet_forward.23} parent=0 // pred_check
    _
  $region3: #{maunet_forward.23} parent=0 // pred_check_branch
    %11 = sbr.rel (0) target = $region5
  $region4: #{maunet_forward.23} parent=0 // pred_region
    _
  $region5: #{maunet_forward.23} parent=0 // pred_fallthru
    _
  // Predicated region
  $region6: #{maunet_forward.23} parent=0 // pred_check
    _
  $region7: #{maunet_forward.23} parent=0 // pred_check_branch
    %13 = sbr.rel (0) target = $region9
  $region8: #{maunet_forward.23} parent=0 // pred_region
    _
  $region9: #{maunet_forward.23} parent=0 // pred_fallthru
    _
  // Predicated region
  $region10: #{maunet_forward.23} parent=0 // pred_check
    _
  $region11: #{maunet_forward.23} parent=0 // pred_check_branch
    %15 = sbr.rel (0) target = $region13
  $region12: #{maunet_forward.23} parent=0 // pred_region
    _
  $region13: #{maunet_forward.23} parent=0 // pred_fallthru
    _
  // Predicated region
  $region14: #{maunet_forward.23} parent=0 // pred_check
    _
  $region15: #{maunet_forward.23} parent=0 // pred_check_branch
    %17 = sbr.rel (0) target = $region17
  $region16: #{maunet_forward.23} parent=0 // pred_region
    _
  $region17: #{maunet_forward.23} parent=0 // pred_fallthru
    _
  // Predicated region
  $region18: #{maunet_forward.23} parent=0 // pred_check
    _
  $region19: #{maunet_forward.23} parent=0 // pred_check_branch
    %19 = sbr.rel (0) target = $region21
  $region20: #{maunet_forward.23} parent=0 // pred_region
    _
  $region21: #{maunet_forward.23} parent=0 // pred_fallthru
    _
  %v21 = vld [vmem:[%s0] sm:$0xf]
  %v22 = vld [vmem:[%s0 + $0x4] sm:$0xf]
  %v23 = vld [vmem:[%s0 + $0x8] sm:$0xf]
  %v24 = vld [vmem:[%s0 + $0xc] sm:$0xf]
  %v25 = vld [vmem:[%s0 + $0x10] sm:$0xf]
  %v26 = vld [vmem:[%s0 + $0x14] sm:$0xf]
  %v27 = vld [vmem:[%s0 + $0x18] sm:$0xf]
  %v28 = vld [vmem:[%s0 + $0x1c] sm:$0xf]
  %v29 = vld [vmem:[%s1] sm:$0xf]
  %v30 = vld [vmem:[%s2] sm:$0x1]
  %v32 = vlaneseq
  %v33 = vshrl.u32 %v32, 7
  %v34 = vsub.s32 0, %v33
  %v35 = vrot.slane %v30, %v34
  %v45 = vunpack.c.l.b16 %v21
  %v46 = vunpack.c.l.b16 %v22
  %v47 = vunpack.c.l.b16 %v23
  %v48 = vunpack.c.l.b16 %v24
  %v49 = vunpack.c.l.b16 %v25
  %v50 = vunpack.c.l.b16 %v26
  %v51 = vunpack.c.l.b16 %v27
  %v52 = vunpack.c.l.b16 %v28
  %v53 = vpack.c.b16 %v46, %v45
  %v54 = vpack.c.b16 %v48, %v47
  %v55 = vpack.c.b16 %v50, %v49
  %v56 = vpack.c.b16 %v52, %v51
  %vm57 = vcmask 64512
  %v59 = vsel %vm57, %v53, 0
  %v62 = vsel %vm57, %v54, 0
  %v65 = vsel %vm57, %v55, 0
  %v68 = vsel %vm57, %v56, 0
  %vm70 = vcmask 1043456
  %v72 = vsel %vm70, %v29, 0
  %74 = vmatprep.subr.bf16.mxu0 0
  %75 = vmatpush1.bf16.msra.mxu0 %v72
  %76 = vmatprep.subr.bf16.mxu0 0
  %77 = vmatpush1.bf16.msra.mxu0 0
  %78 = vmatprep.subr.bf16.mxu0 0
  %79 = vmatpush1.bf16.msra.mxu0 0
  %80 = vmatprep.subr.bf16.mxu0 0
  %81 = vmatpush1.bf16.msra.mxu0 0
  %82 = vmatprep.subr.bf16.mxu0 0
  %83 = vmatpush1.bf16.msra.mxu0 0
  %84 = vmatprep.subr.bf16.mxu0 0
  %85 = vmatpush1.bf16.msra.mxu0 0
  %86 = vmatprep.subr.bf16.mxu0 0
  %87 = vmatpush1.bf16.msra.mxu0 0
  %88 = vmatprep.subr.bf16.mxu0 0
  %89 = vmatpush1.bf16.msra.mxu0 0
  %90 = vmatprep.subr.bf16.mxu0 0
  %91 = vmatpush1.bf16.msra.mxu0 0
  %92 = vmatprep.subr.bf16.mxu0 0
  %93 = vmatpush1.bf16.msra.mxu0 0
  %94 = vmatprep.subr.bf16.mxu0 0
  %95 = vmatpush1.bf16.msra.mxu0 0
  %96 = vmatprep.subr.bf16.mxu0 0
  %97 = vmatpush1.bf16.msra.mxu0 0
  %98 = vmatprep.subr.bf16.mxu0 0
  %99 = vmatpush1.bf16.msra.mxu0 0
  %100 = vmatprep.subr.bf16.mxu0 0
  %101 = vmatpush1.bf16.msra.mxu0 0
  %102 = vmatprep.subr.bf16.mxu0 0
  %103 = vmatpush1.bf16.msra.mxu0 0
  %104 = vmatprep.subr.bf16.mxu0 0
  %105 = vmatpush1.bf16.msra.mxu0 0
  %106 = vmatprep.mubr.bf16.mxu0 0
  %107 = vmatmul.mubr.bf16.gmra.mrb[0].mxu0 %v59
  %v108 = vpop.f32.mrb[0].mxu0
  %v109 = vadd.f32 %v35, %v108
  %v110 = vpop.f32.mrb[0].mxu0
  %v111 = vpop.f32.mrb[0].mxu0
  %v112 = vadd.f32 %v35, %v111
  %v113 = vpop.f32.mrb[0].mxu0
  %114 = vmatprep.mubr.bf16.mxu0 0
  %115 = vmatmul.mubr.bf16.gmra.mrb[0].mxu0 %v62
  %v116 = vpop.f32.mrb[0].mxu0
  %v117 = vadd.f32 %v35, %v116
  %v118 = vpop.f32.mrb[0].mxu0
  %v119 = vpop.f32.mrb[0].mxu0
  %v120 = vadd.f32 %v35, %v119
  %v121 = vpop.f32.mrb[0].mxu0
  %122 = vmatprep.mubr.bf16.mxu0 0
  %123 = vmatmul.mubr.bf16.gmra.mrb[0].mxu0 %v65
  %v124 = vpop.f32.mrb[0].mxu0
  %v125 = vadd.f32 %v35, %v124
  %v126 = vpop.f32.mrb[0].mxu0
  %v127 = vpop.f32.mrb[0].mxu0
  %v128 = vadd.f32 %v35, %v127
  %v129 = vpop.f32.mrb[0].mxu0
  %130 = vmatprep.mubr.bf16.mxu0 0
  %131 = vmatmul.mubr.bf16.gmra.mrb[0].mxu0 %v68
  %v132 = vpop.f32.mrb[0].mxu0
  %v133 = vadd.f32 %v35, %v132
  %v134 = vpop.f32.mrb[0].mxu0
  %v135 = vpop.f32.mrb[0].mxu0
  %v136 = vadd.f32 %v35, %v135
  %v137 = vpop.f32.mrb[0].mxu0
  %138 = vdwg.mxu0
  %v139 = vadd.f32 %v109, 3.0
  %v140 = vadd.f32 %v112, 3.0
  %v141 = vadd.f32 %v117, 3.0
  %v142 = vadd.f32 %v120, 3.0
  %v143 = vadd.f32 %v125, 3.0
  %v144 = vadd.f32 %v128, 3.0
  %v145 = vadd.f32 %v133, 3.0
  %v146 = vadd.f32 %v136, 3.0
  %v147 = vmax.f32 %v139, 0.0
  %v148 = vmax.f32 %v140, 0.0
  %v149 = vmax.f32 %v141, 0.0
  %v150 = vmax.f32 %v142, 0.0
  %v151 = vmax.f32 %v143, 0.0
  %v152 = vmax.f32 %v144, 0.0
  %v153 = vmax.f32 %v145, 0.0
  %v154 = vmax.f32 %v146, 0.0
  %v155 = vmin.f32 %v147, 6.0
  %v156 = vmin.f32 %v148, 6.0
  %v157 = vmin.f32 %v149, 6.0
  %v158 = vmin.f32 %v150, 6.0
  %v159 = vmin.f32 %v151, 6.0
  %v160 = vmin.f32 %v152, 6.0
  %v161 = vmin.f32 %v153, 6.0
  %v162 = vmin.f32 %v154, 6.0
  %v163 = vmul.f32 %v109, %v155
  %v164 = vmul.f32 %v112, %v156
  %v165 = vmul.f32 %v117, %v157
  %v166 = vmul.f32 %v120, %v158
  %v167 = vmul.f32 %v125, %v159
  %v168 = vmul.f32 %v128, %v160
  %v169 = vmul.f32 %v133, %v161
  %v170 = vmul.f32 %v136, %v162
  %v171 = vmul.f32 %v163, 0.16666667
  %v172 = vmul.f32 %v164, 0.16666667
  %v173 = vmul.f32 %v165, 0.16666667
  %v174 = vmul.f32 %v166, 0.16666667
  %v175 = vmul.f32 %v167, 0.16666667
  %v176 = vmul.f32 %v168, 0.16666667
  %v177 = vmul.f32 %v169, 0.16666667
  %v178 = vmul.f32 %v170, 0.16666667
  %v179 = vpack.c.bf16 %v172, %v171
  %v180 = vpack.c.bf16 %v174, %v173
  %v181 = vpack.c.bf16 %v176, %v175
  %v182 = vpack.c.bf16 %v178, %v177
  %v183 = vld [vmem:[%s3] sm:$0xff]
  %v184 = vld [vmem:[%s3 + $0x8] sm:$0xff]
  %v185 = vld [vmem:[%s3 + $0x10] sm:$0xff]
  %v186 = vld [vmem:[%s3 + $0x18] sm:$0xff]
  %v187 = vld [vmem:[%s3 + $0x20] sm:$0xff]
  %v188 = vld [vmem:[%s3 + $0x28] sm:$0xff]
  %v189 = vld [vmem:[%s3 + $0x30] sm:$0xff]
  %v190 = vld [vmem:[%s3 + $0x38] sm:$0xff]
  %v191 = vld [vmem:[%s3 + $0x40] sm:$0xff]
  %v192 = vld [vmem:[%s3 + $0x48] sm:$0xff]
  %v193 = vld [vmem:[%s3 + $0x50] sm:$0xff]
  %v194 = vld [vmem:[%s3 + $0x58] sm:$0xff]
  %v195 = vld [vmem:[%s3 + $0x60] sm:$0xff]
  %v196 = vld [vmem:[%s3 + $0x68] sm:$0xff]
  %v197 = vld [vmem:[%s3 + $0x70] sm:$0xff]
  %v198 = vld [vmem:[%s3 + $0x78] sm:$0xff]
  %v199 = vld [vmem:[%s4] sm:$0x3]
  %v201 = vlaneseq
  %v202 = vshrl.u32 %v201, 7
  %v203 = vsub.s32 0, %v202
  %v204 = vrot.slane %v199, %v203
  %v205 = vlaneseq
  %v206 = vshrl.u32 %v205, 7
  %v207 = vsub.s32 1, %v206
  %v208 = vrot.slane %v199, %v207
  %v227 = vunpack.c.l.b16 %v183
  %v228 = vunpack.c.h.b16 %v183
  %v229 = vunpack.c.l.b16 %v184
  %v230 = vunpack.c.h.b16 %v184
  %v231 = vunpack.c.l.b16 %v185
  %v232 = vunpack.c.h.b16 %v185
  %v233 = vunpack.c.l.b16 %v186
  %v234 = vunpack.c.h.b16 %v186
  %v235 = vunpack.c.l.b16 %v187
  %v236 = vunpack.c.h.b16 %v187
  %v237 = vunpack.c.l.b16 %v188
  %v238 = vunpack.c.h.b16 %v188
  %v239 = vunpack.c.l.b16 %v189
  %v240 = vunpack.c.h.b16 %v189
  %v241 = vunpack.c.l.b16 %v190
  %v242 = vunpack.c.h.b16 %v190
  %v243 = vunpack.c.l.b16 %v191
  %v244 = vunpack.c.h.b16 %v191
  %v245 = vunpack.c.l.b16 %v192
  %v246 = vunpack.c.h.b16 %v192
  %v247 = vunpack.c.l.b16 %v193
  %v248 = vunpack.c.h.b16 %v193
  %v249 = vunpack.c.l.b16 %v194
  %v250 = vunpack.c.h.b16 %v194
  %v251 = vunpack.c.l.b16 %v195
  %v252 = vunpack.c.h.b16 %v195
  %v253 = vunpack.c.l.b16 %v196
  %v254 = vunpack.c.h.b16 %v196
  %v255 = vunpack.c.l.b16 %v197
  %v256 = vunpack.c.h.b16 %v197
  %v257 = vunpack.c.l.b16 %v198
  %v258 = vunpack.c.h.b16 %v198
  %v259 = vpack.c.b16 %v229, %v227
  %v260 = vpack.c.b16 %v230, %v228
  %v261 = vpack.c.b16 %v233, %v231
  %v262 = vpack.c.b16 %v234, %v232
  %v263 = vpack.c.b16 %v237, %v235
  %v264 = vpack.c.b16 %v238, %v236
  %v265 = vpack.c.b16 %v241, %v239
  %v266 = vpack.c.b16 %v242, %v240
  %v267 = vpack.c.b16 %v245, %v243
  %v268 = vpack.c.b16 %v246, %v244
  %v269 = vpack.c.b16 %v249, %v247
  %v270 = vpack.c.b16 %v250, %v248
  %v271 = vpack.c.b16 %v253, %v251
  %v272 = vpack.c.b16 %v254, %v252
  %v273 = vpack.c.b16 %v257, %v255
  %v274 = vpack.c.b16 %v258, %v256
  %291 = vmatprep.subr.bf16.mxu0 %v260
  %292 = vmatpush1.bf16.msra.mxu0 %v259
  %293 = vmatprep.subr.bf16.mxu0 %v262
  %294 = vmatpush1.bf16.msra.mxu0 %v261
  %295 = vmatprep.subr.bf16.mxu0 %v264
  %296 = vmatpush1.bf16.msra.mxu0 %v263
  %297 = vmatprep.subr.bf16.mxu0 %v266
  %298 = vmatpush1.bf16.msra.mxu0 %v265
  %299 = vmatprep.subr.bf16.mxu0 %v268
  %300 = vmatpush1.bf16.msra.mxu0 %v267
  %301 = vmatprep.subr.bf16.mxu0 %v270
  %302 = vmatpush1.bf16.msra.mxu0 %v269
  %303 = vmatprep.subr.bf16.mxu0 %v272
  %304 = vmatpush1.bf16.msra.mxu0 %v271
  %305 = vmatprep.subr.bf16.mxu0 %v274
  %306 = vmatpush1.bf16.msra.mxu0 %v273
  %307 = vmatprep.subr.bf16.mxu0 0
  %308 = vmatpush1.bf16.msra.mxu0 0
  %309 = vmatprep.subr.bf16.mxu0 0
  %310 = vmatpush1.bf16.msra.mxu0 0
  %311 = vmatprep.subr.bf16.mxu0 0
  %312 = vmatpush1.bf16.msra.mxu0 0
  %313 = vmatprep.subr.bf16.mxu0 0
  %314 = vmatpush1.bf16.msra.mxu0 0
  %315 = vmatprep.subr.bf16.mxu0 0
  %316 = vmatpush1.bf16.msra.mxu0 0
  %317 = vmatprep.subr.bf16.mxu0 0
  %318 = vmatpush1.bf16.msra.mxu0 0
  %319 = vmatprep.subr.bf16.mxu0 0
  %320 = vmatpush1.bf16.msra.mxu0 0
  %321 = vmatprep.subr.bf16.mxu0 0
  %322 = vmatpush1.bf16.msra.mxu0 0
  %323 = vmatprep.mubr.bf16.mxu0 0
  %324 = vmatmul.mubr.bf16.gmra.mrb[0].mxu0 %v179
  %v325 = vpop.f32.mrb[0].mxu0
  %v326 = vadd.f32 %v204, %v325
  %v327 = vpop.f32.mrb[0].mxu0
  %v328 = vadd.f32 %v208, %v327
  %v329 = vpop.f32.mrb[0].mxu0
  %v330 = vadd.f32 %v204, %v329
  %v331 = vpop.f32.mrb[0].mxu0
  %v332 = vadd.f32 %v208, %v331
  %333 = vmatprep.mubr.bf16.mxu0 0
  %334 = vmatmul.mubr.bf16.gmra.mrb[0].mxu0 %v180
  %v335 = vpop.f32.mrb[0].mxu0
  %v336 = vadd.f32 %v204, %v335
  %v337 = vpop.f32.mrb[0].mxu0
  %v338 = vadd.f32 %v208, %v337
  %v339 = vpop.f32.mrb[0].mxu0
  %v340 = vadd.f32 %v204, %v339
  %v341 = vpop.f32.mrb[0].mxu0
  %v342 = vadd.f32 %v208, %v341
  %343 = vmatprep.mubr.bf16.mxu0 0
  %344 = vmatmul.mubr.bf16.gmra.mrb[0].mxu0 %v181
  %v345 = vpop.f32.mrb[0].mxu0
  %v346 = vadd.f32 %v204, %v345
  %v347 = vpop.f32.mrb[0].mxu0
  %v348 = vadd.f32 %v208, %v347
  %v349 = vpop.f32.mrb[0].mxu0
  %v350 = vadd.f32 %v204, %v349
  %v351 = vpop.f32.mrb[0].mxu0
  %v352 = vadd.f32 %v208, %v351
  %353 = vmatprep.mubr.bf16.mxu0 0
  %354 = vmatmul.mubr.bf16.gmra.mrb[0].mxu0 %v182
  %v355 = vpop.f32.mrb[0].mxu0
  %v356 = vadd.f32 %v204, %v355
  %v357 = vpop.f32.mrb[0].mxu0
  %v358 = vadd.f32 %v208, %v357
  %v359 = vpop.f32.mrb[0].mxu0
  %v360 = vadd.f32 %v204, %v359
  %v361 = vpop.f32.mrb[0].mxu0
  %v362 = vadd.f32 %v208, %v361
  %363 = vdwg.mxu0
  %v364 = vxor.u32 %v326, 2147483648
  %v365 = vxor.u32 %v328, 2147483648
  %v366 = vxor.u32 %v330, 2147483648
  %v367 = vxor.u32 %v332, 2147483648
  %v368 = vxor.u32 %v336, 2147483648
  %v369 = vxor.u32 %v338, 2147483648
  %v370 = vxor.u32 %v340, 2147483648
  %v371 = vxor.u32 %v342, 2147483648
  %v372 = vxor.u32 %v346, 2147483648
  %v373 = vxor.u32 %v348, 2147483648
  %v374 = vxor.u32 %v350, 2147483648
  %v375 = vxor.u32 %v352, 2147483648
  %v376 = vxor.u32 %v356, 2147483648
  %v377 = vxor.u32 %v358, 2147483648
  %v378 = vxor.u32 %v360, 2147483648
  %v379 = vxor.u32 %v362, 2147483648
  %v380 = vmul.f32 %v364, 1.442695
  %v381 = vpow.pop %v380
  %v382 = vmul.f32 %v365, 1.442695
  %v383 = vpow.pop %v382
  %v384 = vmul.f32 %v366, 1.442695
  %v385 = vpow.pop %v384
  %v386 = vmul.f32 %v367, 1.442695
  %v387 = vpow.pop %v386
  %v388 = vmul.f32 %v368, 1.442695
  %v389 = vpow.pop %v388
  %v390 = vmul.f32 %v369, 1.442695
  %v391 = vpow.pop %v390
  %v392 = vmul.f32 %v370, 1.442695
  %v393 = vpow.pop %v392
  %v394 = vmul.f32 %v371, 1.442695
  %v395 = vpow.pop %v394
  %v396 = vmul.f32 %v372, 1.442695
  %v397 = vpow.pop %v396
  %v398 = vmul.f32 %v373, 1.442695
  %v399 = vpow.pop %v398
  %v400 = vmul.f32 %v374, 1.442695
  %v401 = vpow.pop %v400
  %v402 = vmul.f32 %v375, 1.442695
  %v403 = vpow.pop %v402
  %v404 = vmul.f32 %v376, 1.442695
  %v405 = vpow.pop %v404
  %v406 = vmul.f32 %v377, 1.442695
  %v407 = vpow.pop %v406
  %v408 = vmul.f32 %v378, 1.442695
  %v409 = vpow.pop %v408
  %v410 = vmul.f32 %v379, 1.442695
  %v411 = vpow.pop %v410
  %v412 = vadd.f32 %v381, 1.0
  %v413 = vadd.f32 %v383, 1.0
  %v414 = vadd.f32 %v385, 1.0
  %v415 = vadd.f32 %v387, 1.0
  %v416 = vadd.f32 %v389, 1.0
  %v417 = vadd.f32 %v391, 1.0
  %v418 = vadd.f32 %v393, 1.0
  %v419 = vadd.f32 %v395, 1.0
  %v420 = vadd.f32 %v397, 1.0
  %v421 = vadd.f32 %v399, 1.0
  %v422 = vadd.f32 %v401, 1.0
  %v423 = vadd.f32 %v403, 1.0
  %v424 = vadd.f32 %v405, 1.0
  %v425 = vadd.f32 %v407, 1.0
  %v426 = vadd.f32 %v409, 1.0
  %v427 = vadd.f32 %v411, 1.0
  %v428 = vrcp.pop %v412
  %v429 = vmul.f32 1.0, %v428
  %v430 = vrcp.pop %v413
  %v431 = vmul.f32 1.0, %v430
  %v432 = vrcp.pop %v414
  %v433 = vmul.f32 1.0, %v432
  %v434 = vrcp.pop %v415
  %v435 = vmul.f32 1.0, %v434
  %v436 = vrcp.pop %v416
  %v437 = vmul.f32 1.0, %v436
  %v438 = vrcp.pop %v417
  %v439 = vmul.f32 1.0, %v438
  %v440 = vrcp.pop %v418
  %v441 = vmul.f32 1.0, %v440
  %v442 = vrcp.pop %v419
  %v443 = vmul.f32 1.0, %v442
  %v444 = vrcp.pop %v420
  %v445 = vmul.f32 1.0, %v444
  %v446 = vrcp.pop %v421
  %v447 = vmul.f32 1.0, %v446
  %v448 = vrcp.pop %v422
  %v449 = vmul.f32 1.0, %v448
  %v450 = vrcp.pop %v423
  %v451 = vmul.f32 1.0, %v450
  %v452 = vrcp.pop %v424
  %v453 = vmul.f32 1.0, %v452
  %v454 = vrcp.pop %v425
  %v455 = vmul.f32 1.0, %v454
  %v456 = vrcp.pop %v426
  %v457 = vmul.f32 1.0, %v456
  %v458 = vrcp.pop %v427
  %v459 = vmul.f32 1.0, %v458
  %460 = vst [vmem:[%s5] sm:$0xff] %v429
  %461 = vst [vmem:[%s5 + $0x8] sm:$0xff] %v431
  %462 = vst [vmem:[%s5 + $0x10] sm:$0xff] %v433
  %463 = vst [vmem:[%s5 + $0x18] sm:$0xff] %v435
  %464 = vst [vmem:[%s5 + $0x20] sm:$0xff] %v437
  %465 = vst [vmem:[%s5 + $0x28] sm:$0xff] %v439
  %466 = vst [vmem:[%s5 + $0x30] sm:$0xff] %v441
  %467 = vst [vmem:[%s5 + $0x38] sm:$0xff] %v443
  %468 = vst [vmem:[%s5 + $0x40] sm:$0xff] %v445
  %469 = vst [vmem:[%s5 + $0x48] sm:$0xff] %v447
  %470 = vst [vmem:[%s5 + $0x50] sm:$0xff] %v449
  %471 = vst [vmem:[%s5 + $0x58] sm:$0xff] %v451
  %472 = vst [vmem:[%s5 + $0x60] sm:$0xff] %v453
  %473 = vst [vmem:[%s5 + $0x68] sm:$0xff] %v455
  %474 = vst [vmem:[%s5 + $0x70] sm:$0xff] %v457
  %475 = vst [vmem:[%s5 + $0x78] sm:$0xff] %v459
  // Predicated region
  $region22: #{maunet_forward.23} parent=0 // pred_check
    _
  $region23: #{maunet_forward.23} parent=0 // pred_check_branch
    %477 = sbr.rel (0) target = $region25
  $region24: #{maunet_forward.23} parent=0 // pred_region
    _
  $region25: #{maunet_forward.23} parent=0 // pred_fallthru
    _
  // Predicated region
  $region26: #{maunet_forward.23} parent=0 // pred_check
    _
  $region27: #{maunet_forward.23} parent=0 // pred_check_branch
    %479 = sbr.rel (0) target = $region29
  $region28: #{maunet_forward.23} parent=0 // pred_region
    _
  $region29: #{maunet_forward.23} parent=0 // pred_fallthru
    _

// kernel: maunet_forward.24
$region0: #{maunet_forward.24}
  #allocation0 [shape = 'u32[]', space=smem, size = 0x4, offset = 0x4, fixed_abs, tag = 'smem constant byte address 0x4 - core index']
  #allocation1 [shape = 'u32[144,128]{1,0:T(1,128)}', space=vmem, size = 0x12000, scoped, tag = 'internal scratch']
  %s0 = inlined_call_operand.vmem [shape: bf16[128,72], index: 0, kind: input, shape index: {}]
  %s1 = inlined_call_operand.vmem [shape: bf16[72,128], index: 1, kind: input, shape index: {}]
  %s2 = inlined_call_operand.vmem [shape: f32[1,128], index: 2, kind: input, shape index: {}]
  %s3 = inlined_call_operand.vmem [shape: f32[128,128], index: 3, kind: output, shape index: {}]
  %s4 = sld [smem:[#allocation0]]
  $region22: #{maunet_forward.24} parent=0
    _
  %s6 = ssub.s32 1, %s4
  %s7 = scalar_select 0, %s6, %s4
  // Predicated region
  $region2: #{maunet_forward.24} parent=0 // pred_check
    _
  $region3: #{maunet_forward.24} parent=0 // pred_check_branch
    %9 = sbr.rel (0) target = $region5
  $region4: #{maunet_forward.24} parent=0 // pred_region
    _
  $region5: #{maunet_forward.24} parent=0 // pred_fallthru
    _
  // Predicated region
  $region6: #{maunet_forward.24} parent=0 // pred_check
    _
  $region7: #{maunet_forward.24} parent=0 // pred_check_branch
    %11 = sbr.rel (0) target = $region9
  $region8: #{maunet_forward.24} parent=0 // pred_region
    _
  $region9: #{maunet_forward.24} parent=0 // pred_fallthru
    _
  // Predicated region
  $region10: #{maunet_forward.24} parent=0 // pred_check
    _
  $region11: #{maunet_forward.24} parent=0 // pred_check_branch
    %13 = sbr.rel (0) target = $region13
  $region12: #{maunet_forward.24} parent=0 // pred_region
    _
  $region13: #{maunet_forward.24} parent=0 // pred_fallthru
    _
  %v15 = vld [vmem:[%s0] sm:$0xf]
  %v16 = vld [vmem:[%s0 + $0x4] sm:$0xf]
  %v17 = vld [vmem:[%s0 + $0x8] sm:$0xf]
  %v18 = vld [vmem:[%s0 + $0xc] sm:$0xf]
  %v19 = vld [vmem:[%s0 + $0x10] sm:$0xf]
  %v20 = vld [vmem:[%s0 + $0x14] sm:$0xf]
  %v21 = vld [vmem:[%s0 + $0x18] sm:$0xf]
  %v22 = vld [vmem:[%s0 + $0x1c] sm:$0xf]
  %v23 = vld [vmem:[%s0 + $0x20] sm:$0xf]
  %v24 = vld [vmem:[%s0 + $0x24] sm:$0xf]
  %v25 = vld [vmem:[%s0 + $0x28] sm:$0xf]
  %v26 = vld [vmem:[%s0 + $0x2c] sm:$0xf]
  %v27 = vld [vmem:[%s0 + $0x30] sm:$0xf]
  %v28 = vld [vmem:[%s0 + $0x34] sm:$0xf]
  %v29 = vld [vmem:[%s0 + $0x38] sm:$0xf]
  %v30 = vld [vmem:[%s0 + $0x3c] sm:$0xf]
  %v31 = vld [vmem:[%s1] sm:$0xf]
  %v32 = vld [vmem:[%s1 + $0x4] sm:$0xf]
  %v33 = vld [vmem:[%s1 + $0x8] sm:$0xf]
  %v34 = vld [vmem:[%s1 + $0xc] sm:$0xf]
  %v35 = vld [vmem:[%s1 + $0x10] sm:$0xf]
  %v36 = vld [vmem:[%s1 + $0x14] sm:$0xf]
  %v37 = vld [vmem:[%s1 + $0x18] sm:$0xf]
  %v38 = vld [vmem:[%s1 + $0x1c] sm:$0xf]
  %v39 = vld [vmem:[%s1 + $0x20] sm:$0xf]
  %v40 = vld [vmem:[%s2] sm:$0x1]
  %v42 = vlaneseq
  %v43 = vshrl.u32 %v42, 7
  %v44 = vsub.s32 0, %v43
  %v45 = vrot.slane %v40, %v44
  %v63 = vunpack.c.l.b16 %v15
  %v64 = vunpack.c.l.b16 %v16
  %v65 = vunpack.c.l.b16 %v17
  %v66 = vunpack.c.l.b16 %v18
  %v67 = vunpack.c.l.b16 %v19
  %v68 = vunpack.c.l.b16 %v20
  %v69 = vunpack.c.l.b16 %v21
  %v70 = vunpack.c.l.b16 %v22
  %v71 = vunpack.c.l.b16 %v23
  %v72 = vunpack.c.l.b16 %v24
  %v73 = vunpack.c.l.b16 %v25
  %v74 = vunpack.c.l.b16 %v26
  %v75 = vunpack.c.l.b16 %v27
  %v76 = vunpack.c.l.b16 %v28
  %v77 = vunpack.c.l.b16 %v29
  %v78 = vunpack.c.l.b16 %v30
  %v79 = vpack.c.b16 %v64, %v63
  %v80 = vpack.c.b16 %v66, %v65
  %v81 = vpack.c.b16 %v68, %v67
  %v82 = vpack.c.b16 %v70, %v69
  %v83 = vpack.c.b16 %v72, %v71
  %v84 = vpack.c.b16 %v74, %v73
  %v85 = vpack.c.b16 %v76, %v75
  %v86 = vpack.c.b16 %v78, %v77
  %v96 = vunpack.c.l.b16 %v31
  %v97 = vunpack.c.l.b16 %v32
  %v98 = vunpack.c.l.b16 %v33
  %v99 = vunpack.c.l.b16 %v34
  %v100 = vunpack.c.l.b16 %v35
  %v101 = vunpack.c.l.b16 %v36
  %v102 = vunpack.c.l.b16 %v37
  %v103 = vunpack.c.l.b16 %v38
  %v104 = vunpack.c.l.b16 %v39
  %v105 = vpack.c.b16 %v97, %v96
  %v106 = vpack.c.b16 %v99, %v98
  %v107 = vpack.c.b16 %v101, %v100
  %v108 = vpack.c.b16 %v103, %v102
  %v109 = vpack.c.b16 %v104, %v104
  %vm114 = vcmask 588800
  %v116 = vsel %vm114, %v79, 0
  %v119 = vsel %vm114, %v80, 0
  %v122 = vsel %vm114, %v81, 0
  %v125 = vsel %vm114, %v82, 0
  %v128 = vsel %vm114, %v83, 0
  %v131 = vsel %vm114, %v84, 0
  %v134 = vsel %vm114, %v85, 0
  %v137 = vsel %vm114, %v86, 0
  %vm139 = vcmask 1043456
  %v141 = vsel %vm139, %v109, 0
  %143 = vmatprep.subr.bf16.mxu0 0
  %144 = vmatpush1.bf16.msra.mxu0 %v105
  %145 = vmatprep.subr.bf16.mxu0 0
  %146 = vmatpush1.bf16.msra.mxu0 %v106
  %147 = vmatprep.subr.bf16.mxu0 0
  %148 = vmatpush1.bf16.msra.mxu0 %v107
  %149 = vmatprep.subr.bf16.mxu0 0
  %150 = vmatpush1.bf16.msra.mxu0 %v108
  %151 = vmatprep.subr.bf16.mxu0 0
  %152 = vmatpush1.bf16.msra.mxu0 %v141
  %153 = vmatprep.subr.bf16.mxu0 0
  %154 = vmatpush1.bf16.msra.mxu0 0
  %155 = vmatprep.subr.bf16.mxu0 0
  %156 = vmatpush1.bf16.msra.mxu0 0
  %157 = vmatprep.subr.bf16.mxu0 0
  %158 = vmatpush1.bf16.msra.mxu0 0
  %159 = vmatprep.subr.bf16.mxu0 0
  %160 = vmatpush1.bf16.msra.mxu0 0
  %161 = vmatprep.subr.bf16.mxu0 0
  %162 = vmatpush1.bf16.msra.mxu0 0
  %163 = vmatprep.subr.bf16.mxu0 0
  %164 = vmatpush1.bf16.msra.mxu0 0
  %165 = vmatprep.subr.bf16.mxu0 0
  %166 = vmatpush1.bf16.msra.mxu0 0
  %167 = vmatprep.subr.bf16.mxu0 0
  %168 = vmatpush1.bf16.msra.mxu0 0
  %169 = vmatprep.subr.bf16.mxu0 0
  %170 = vmatpush1.bf16.msra.mxu0 0
  %171 = vmatprep.subr.bf16.mxu0 0
  %172 = vmatpush1.bf16.msra.mxu0 0
  %173 = vmatprep.subr.bf16.mxu0 0
  %174 = vmatpush1.bf16.msra.mxu0 0
  %175 = vmatprep.mubr.bf16.mxu0 0
  %176 = vmatmul.mubr.bf16.gmra.mrb[0].mxu0 %v116
  %v177 = vpop.f32.mrb[0].mxu0
  %v178 = vadd.f32 %v45, %v177
  %v179 = vpop.f32.mrb[0].mxu0
  %v180 = vpop.f32.mrb[0].mxu0
  %v181 = vadd.f32 %v45, %v180
  %v182 = vpop.f32.mrb[0].mxu0
  %183 = vmatprep.mubr.bf16.mxu0 0
  %184 = vmatmul.mubr.bf16.gmra.mrb[0].mxu0 %v119
  %v185 = vpop.f32.mrb[0].mxu0
  %v186 = vadd.f32 %v45, %v185
  %v187 = vpop.f32.mrb[0].mxu0
  %v188 = vpop.f32.mrb[0].mxu0
  %v189 = vadd.f32 %v45, %v188
  %v190 = vpop.f32.mrb[0].mxu0
  %191 = vmatprep.mubr.bf16.mxu0 0
  %192 = vmatmul.mubr.bf16.gmra.mrb[0].mxu0 %v122
  %v193 = vpop.f32.mrb[0].mxu0
  %v194 = vadd.f32 %v45, %v193
  %v195 = vpop.f32.mrb[0].mxu0
  %v196 = vpop.f32.mrb[0].mxu0
  %v197 = vadd.f32 %v45, %v196
  %v198 = vpop.f32.mrb[0].mxu0
  %199 = vmatprep.mubr.bf16.mxu0 0
  %200 = vmatmul.mubr.bf16.gmra.mrb[0].mxu0 %v125
  %v201 = vpop.f32.mrb[0].mxu0
  %v202 = vadd.f32 %v45, %v201
  %v203 = vpop.f32.mrb[0].mxu0
  %v204 = vpop.f32.mrb[0].mxu0
  %v205 = vadd.f32 %v45, %v204
  %v206 = vpop.f32.mrb[0].mxu0
  %207 = vmatprep.mubr.bf16.mxu0 0
  %208 = vmatmul.mubr.bf16.gmra.mrb[0].mxu0 %v128
  %v209 = vpop.f32.mrb[0].mxu0
  %v210 = vadd.f32 %v45, %v209
  %v211 = vpop.f32.mrb[0].mxu0
  %v212 = vpop.f32.mrb[0].mxu0
  %v213 = vadd.f32 %v45, %v212
  %v214 = vpop.f32.mrb[0].mxu0
  %215 = vmatprep.mubr.bf16.mxu0 0
  %216 = vmatmul.mubr.bf16.gmra.mrb[0].mxu0 %v131
  %v217 = vpop.f32.mrb[0].mxu0
  %v218 = vadd.f32 %v45, %v217
  %v219 = vpop.f32.mrb[0].mxu0
  %v220 = vpop.f32.mrb[0].mxu0
  %v221 = vadd.f32 %v45, %v220
  %v222 = vpop.f32.mrb[0].mxu0
  %223 = vmatprep.mubr.bf16.mxu0 0
  %224 = vmatmul.mubr.bf16.gmra.mrb[0].mxu0 %v134
  %v225 = vpop.f32.mrb[0].mxu0
  %v226 = vadd.f32 %v45, %v225
  %v227 = vpop.f32.mrb[0].mxu0
  %v228 = vpop.f32.mrb[0].mxu0
  %v229 = vadd.f32 %v45, %v228
  %v230 = vpop.f32.mrb[0].mxu0
  %231 = vmatprep.mubr.bf16.mxu0 0
  %232 = vmatmul.mubr.bf16.gmra.mrb[0].mxu0 %v137
  %v233 = vpop.f32.mrb[0].mxu0
  %v234 = vadd.f32 %v45, %v233
  %v235 = vpop.f32.mrb[0].mxu0
  %v236 = vpop.f32.mrb[0].mxu0
  %v237 = vadd.f32 %v45, %v236
  %v238 = vpop.f32.mrb[0].mxu0
  %239 = vdwg.mxu0
  %v240 = vmax.f32 %v178, 0.0
  %v241 = vmax.f32 %v181, 0.0
  %v242 = vmax.f32 %v186, 0.0
  %v243 = vmax.f32 %v189, 0.0
  %v244 = vmax.f32 %v194, 0.0
  %v245 = vmax.f32 %v197, 0.0
  %v246 = vmax.f32 %v202, 0.0
  %v247 = vmax.f32 %v205, 0.0
  %v248 = vmax.f32 %v210, 0.0
  %v249 = vmax.f32 %v213, 0.0
  %v250 = vmax.f32 %v218, 0.0
  %v251 = vmax.f32 %v221, 0.0
  %v252 = vmax.f32 %v226, 0.0
  %v253 = vmax.f32 %v229, 0.0
  %v254 = vmax.f32 %v234, 0.0
  %v255 = vmax.f32 %v237, 0.0
  %256 = vst [vmem:[%s3] sm:$0xff] %v240
  %257 = vst [vmem:[%s3 + $0x8] sm:$0xff] %v241
  %258 = vst [vmem:[%s3 + $0x10] sm:$0xff] %v242
  %259 = vst [vmem:[%s3 + $0x18] sm:$0xff] %v243
  %260 = vst [vmem:[%s3 + $0x20] sm:$0xff] %v244
  %261 = vst [vmem:[%s3 + $0x28] sm:$0xff] %v245
  %262 = vst [vmem:[%s3 + $0x30] sm:$0xff] %v246
  %263 = vst [vmem:[%s3 + $0x38] sm:$0xff] %v247
  %264 = vst [vmem:[%s3 + $0x40] sm:$0xff] %v248
  %265 = vst [vmem:[%s3 + $0x48] sm:$0xff] %v249
  %266 = vst [vmem:[%s3 + $0x50] sm:$0xff] %v250
  %267 = vst [vmem:[%s3 + $0x58] sm:$0xff] %v251
  %268 = vst [vmem:[%s3 + $0x60] sm:$0xff] %v252
  %269 = vst [vmem:[%s3 + $0x68] sm:$0xff] %v253
  %270 = vst [vmem:[%s3 + $0x70] sm:$0xff] %v254
  %271 = vst [vmem:[%s3 + $0x78] sm:$0xff] %v255
  // Predicated region
  $region14: #{maunet_forward.24} parent=0 // pred_check
    _
  $region15: #{maunet_forward.24} parent=0 // pred_check_branch
    %273 = sbr.rel (0) target = $region17
  $region16: #{maunet_forward.24} parent=0 // pred_region
    _
  $region17: #{maunet_forward.24} parent=0 // pred_fallthru
    _
  // Predicated region
  $region18: #{maunet_forward.24} parent=0 // pred_check
    _
  $region19: #{maunet_forward.24} parent=0 // pred_check_branch
    %275 = sbr.rel (0) target = $region21
  $region20: #{maunet_forward.24} parent=0 // pred_region
    _
  $region21: #{maunet_forward.24} parent=0 // pred_fallthru
    _

// kernel: mul.89
$region0: #{mul.89}
  %s0 = inlined_call_operand.vmem [shape: f32[128], index: 0, kind: input, shape index: {}]
  %s1 = inlined_call_operand.vmem [shape: f32[2,8,8], index: 1, kind: output, shape index: {}]
  $region1: #{mul.89} parent=0
    #allocation0 [shape = 'u8[4096]{0}', space=vmem, size = 0x1000, scoped, tag = 'scoped mem for input reshape']
    %s3 = sshllo.u32 0, 1
    %v4 = vld [vmem:[%s0] sm:%s3]
    %5 = vst [vmem:[#allocation0] sm:%s3] %v4
    %v6 = vld [vmem:[#allocation0] sm:$0x1]
    %vm7 = vcmask 64512
    %8 = vst.msk [vmem:[%s1] sm:$0x1] %vm7, %v6
    %v9 = vld [vmem:[#allocation0] sm:$0x1]
    %10 = vrot.lane.b32.xlu0 %v9, 120
    %v11 = vpop.permute.xlu0 %10
    %vm12 = vcmask 64512
    %s13 = scalar_lea.vmem %s1, 1
    %14 = vst.msk [vmem:[%s13] sm:$0x1] %vm12, %v11
    %v15 = vld [vmem:[#allocation0] sm:$0x1]
    %16 = vrot.lane.b32.xlu0 %v15, 112
    %v17 = vpop.permute.xlu0 %16
    %vm18 = vcmask 64512
    %s19 = scalar_lea.vmem %s1, 2
    %20 = vst.msk [vmem:[%s19] sm:$0x1] %vm18, %v17
    %v21 = vld [vmem:[#allocation0] sm:$0x1]
    %22 = vrot.lane.b32.xlu0 %v21, 104
    %v23 = vpop.permute.xlu0 %22
    %vm24 = vcmask 64512
    %s25 = scalar_lea.vmem %s1, 3
    %26 = vst.msk [vmem:[%s25] sm:$0x1] %vm24, %v23
    %v27 = vld [vmem:[#allocation0] sm:$0x1]
    %28 = vrot.lane.b32.xlu0 %v27, 96
    %v29 = vpop.permute.xlu0 %28
    %vm30 = vcmask 64512
    %s31 = scalar_lea.vmem %s1, 4
    %32 = vst.msk [vmem:[%s31] sm:$0x1] %vm30, %v29
    %v33 = vld [vmem:[#allocation0] sm:$0x1]
    %34 = vrot.lane.b32.xlu0 %v33, 88
    %v35 = vpop.permute.xlu0 %34
    %vm36 = vcmask 64512
    %s37 = scalar_lea.vmem %s1, 5
    %38 = vst.msk [vmem:[%s37] sm:$0x1] %vm36, %v35
    %v39 = vld [vmem:[#allocation0] sm:$0x1]
    %40 = vrot.lane.b32.xlu0 %v39, 80
    %v41 = vpop.permute.xlu0 %40
    %vm42 = vcmask 64512
    %s43 = scalar_lea.vmem %s1, 6
    %44 = vst.msk [vmem:[%s43] sm:$0x1] %vm42, %v41
    %v45 = vld [vmem:[#allocation0] sm:$0x1]
    %46 = vrot.lane.b32.xlu0 %v45, 72
    %v47 = vpop.permute.xlu0 %46
    %vm48 = vcmask 64512
    %s49 = scalar_lea.vmem %s1, 7
    %50 = vst.msk [vmem:[%s49] sm:$0x1] %vm48, %v47
    %v51 = vld [vmem:[#allocation0] sm:$0x1]
    %52 = vrot.lane.b32.xlu0 %v51, 64
    %v53 = vpop.permute.xlu0 %52
    %vm54 = vcmask 64512
    %s55 = scalar_lea.vmem %s1, 8
    %56 = vst.msk [vmem:[%s55] sm:$0x1] %vm54, %v53
    %v57 = vld [vmem:[#allocation0] sm:$0x1]
    %58 = vrot.lane.b32.xlu0 %v57, 56
    %v59 = vpop.permute.xlu0 %58
    %vm60 = vcmask 64512
    %s61 = scalar_lea.vmem %s1, 9
    %62 = vst.msk [vmem:[%s61] sm:$0x1] %vm60, %v59
    %v63 = vld [vmem:[#allocation0] sm:$0x1]
    %64 = vrot.lane.b32.xlu0 %v63, 48
    %v65 = vpop.permute.xlu0 %64
    %vm66 = vcmask 64512
    %s67 = scalar_lea.vmem %s1, 10
    %68 = vst.msk [vmem:[%s67] sm:$0x1] %vm66, %v65
    %v69 = vld [vmem:[#allocation0] sm:$0x1]
    %70 = vrot.lane.b32.xlu0 %v69, 40
    %v71 = vpop.permute.xlu0 %70
    %vm72 = vcmask 64512
    %s73 = scalar_lea.vmem %s1, 11
    %74 = vst.msk [vmem:[%s73] sm:$0x1] %vm72, %v71
    %v75 = vld [vmem:[#allocation0] sm:$0x1]
    %76 = vrot.lane.b32.xlu0 %v75, 32
    %v77 = vpop.permute.xlu0 %76
    %vm78 = vcmask 64512
    %s79 = scalar_lea.vmem %s1, 12
    %80 = vst.msk [vmem:[%s79] sm:$0x1] %vm78, %v77
    %v81 = vld [vmem:[#allocation0] sm:$0x1]
    %82 = vrot.lane.b32.xlu0 %v81, 24
    %v83 = vpop.permute.xlu0 %82
    %vm84 = vcmask 64512
    %s85 = scalar_lea.vmem %s1, 13
    %86 = vst.msk [vmem:[%s85] sm:$0x1] %vm84, %v83
    %v87 = vld [vmem:[#allocation0] sm:$0x1]
    %88 = vrot.lane.b32.xlu0 %v87, 16
    %v89 = vpop.permute.xlu0 %88
    %vm90 = vcmask 64512
    %s91 = scalar_lea.vmem %s1, 14
    %92 = vst.msk [vmem:[%s91] sm:$0x1] %vm90, %v89
    %v93 = vld [vmem:[#allocation0] sm:$0x1]
    %94 = vrot.lane.b32.xlu0 %v93, 8
    %v95 = vpop.permute.xlu0 %94
    %vm96 = vcmask 64512
    %s97 = scalar_lea.vmem %s1, 15
    %98 = vst.msk [vmem:[%s97] sm:$0x1] %vm96, %v95

// kernel: maunet_forward.25
$region0: #{maunet_forward.25}
  #allocation0 [shape = 'u32[]', space=smem, size = 0x4, offset = 0x4, fixed_abs, tag = 'smem constant byte address 0x4 - core index']
  #allocation1 [shape = 'u32[144,128]{1,0:T(1,128)}', space=vmem, size = 0x12000, scoped, tag = 'internal scratch']
  %s0 = inlined_call_operand.vmem [shape: bf16[128,144], index: 0, kind: input, shape index: {}]
  %s1 = inlined_call_operand.vmem [shape: bf16[144,128], index: 1, kind: input, shape index: {}]
  %s2 = inlined_call_operand.vmem [shape: f32[1,128], index: 2, kind: input, shape index: {}]
  %s3 = inlined_call_operand.vmem [shape: f32[128,128], index: 3, kind: output, shape index: {}]
  %s4 = sld [smem:[#allocation0]]
  $region22: #{maunet_forward.25} parent=0
    _
  %s6 = ssub.s32 1, %s4
  %s7 = scalar_select 0, %s6, %s4
  // Predicated region
  $region2: #{maunet_forward.25} parent=0 // pred_check
    _
  $region3: #{maunet_forward.25} parent=0 // pred_check_branch
    %9 = sbr.rel (0) target = $region5
  $region4: #{maunet_forward.25} parent=0 // pred_region
    _
  $region5: #{maunet_forward.25} parent=0 // pred_fallthru
    _
  // Predicated region
  $region6: #{maunet_forward.25} parent=0 // pred_check
    _
  $region7: #{maunet_forward.25} parent=0 // pred_check_branch
    %11 = sbr.rel (0) target = $region9
  $region8: #{maunet_forward.25} parent=0 // pred_region
    _
  $region9: #{maunet_forward.25} parent=0 // pred_fallthru
    _
  // Predicated region
  $region10: #{maunet_forward.25} parent=0 // pred_check
    _
  $region11: #{maunet_forward.25} parent=0 // pred_check_branch
    %13 = sbr.rel (0) target = $region13
  $region12: #{maunet_forward.25} parent=0 // pred_region
    _
  $region13: #{maunet_forward.25} parent=0 // pred_fallthru
    _
  %v15 = vld [vmem:[%s0] sm:$0xff]
  %v16 = vld [vmem:[%s0 + $0x8] sm:$0xff]
  %v17 = vld [vmem:[%s0 + $0x10] sm:$0xff]
  %v18 = vld [vmem:[%s0 + $0x18] sm:$0xff]
  %v19 = vld [vmem:[%s0 + $0x20] sm:$0xff]
  %v20 = vld [vmem:[%s0 + $0x28] sm:$0xff]
  %v21 = vld [vmem:[%s0 + $0x30] sm:$0xff]
  %v22 = vld [vmem:[%s0 + $0x38] sm:$0xff]
  %v23 = vld [vmem:[%s0 + $0x40] sm:$0xff]
  %v24 = vld [vmem:[%s0 + $0x48] sm:$0xff]
  %v25 = vld [vmem:[%s0 + $0x50] sm:$0xff]
  %v26 = vld [vmem:[%s0 + $0x58] sm:$0xff]
  %v27 = vld [vmem:[%s0 + $0x60] sm:$0xff]
  %v28 = vld [vmem:[%s0 + $0x68] sm:$0xff]
  %v29 = vld [vmem:[%s0 + $0x70] sm:$0xff]
  %v30 = vld [vmem:[%s0 + $0x78] sm:$0xff]
  %v31 = vld [vmem:[%s1] sm:$0xf]
  %v32 = vld [vmem:[%s1 + $0x4] sm:$0xf]
  %v33 = vld [vmem:[%s1 + $0x8] sm:$0xf]
  %v34 = vld [vmem:[%s1 + $0xc] sm:$0xf]
  %v35 = vld [vmem:[%s1 + $0x10] sm:$0xf]
  %v36 = vld [vmem:[%s1 + $0x14] sm:$0xf]
  %v37 = vld [vmem:[%s1 + $0x18] sm:$0xf]
  %v38 = vld [vmem:[%s1 + $0x1c] sm:$0xf]
  %v39 = vld [vmem:[%s1 + $0x20] sm:$0xf]
  %v40 = vld [vmem:[%s1 + $0x24] sm:$0xf]
  %v41 = vld [vmem:[%s1 + $0x28] sm:$0xf]
  %v42 = vld [vmem:[%s1 + $0x2c] sm:$0xf]
  %v43 = vld [vmem:[%s1 + $0x30] sm:$0xf]
  %v44 = vld [vmem:[%s1 + $0x34] sm:$0xf]
  %v45 = vld [vmem:[%s1 + $0x38] sm:$0xf]
  %v46 = vld [vmem:[%s1 + $0x3c] sm:$0xf]
  %v47 = vld [vmem:[%s1 + $0x40] sm:$0xf]
  %v48 = vld [vmem:[%s1 + $0x44] sm:$0xf]
  %v49 = vld [vmem:[%s2] sm:$0x1]
  %v51 = vlaneseq
  %v52 = vshrl.u32 %v51, 7
  %v53 = vsub.s32 0, %v52
  %v54 = vrot.slane %v49, %v53
  %v72 = vunpack.c.l.b16 %v15
  %v73 = vunpack.c.h.b16 %v15
  %v74 = vunpack.c.l.b16 %v16
  %v75 = vunpack.c.h.b16 %v16
  %v76 = vunpack.c.l.b16 %v17
  %v77 = vunpack.c.h.b16 %v17
  %v78 = vunpack.c.l.b16 %v18
  %v79 = vunpack.c.h.b16 %v18
  %v80 = vunpack.c.l.b16 %v19
  %v81 = vunpack.c.h.b16 %v19
  %v82 = vunpack.c.l.b16 %v20
  %v83 = vunpack.c.h.b16 %v20
  %v84 = vunpack.c.l.b16 %v21
  %v85 = vunpack.c.h.b16 %v21
  %v86 = vunpack.c.l.b16 %v22
  %v87 = vunpack.c.h.b16 %v22
  %v88 = vunpack.c.l.b16 %v23
  %v89 = vunpack.c.h.b16 %v23
  %v90 = vunpack.c.l.b16 %v24
  %v91 = vunpack.c.h.b16 %v24
  %v92 = vunpack.c.l.b16 %v25
  %v93 = vunpack.c.h.b16 %v25
  %v94 = vunpack.c.l.b16 %v26
  %v95 = vunpack.c.h.b16 %v26
  %v96 = vunpack.c.l.b16 %v27
  %v97 = vunpack.c.h.b16 %v27
  %v98 = vunpack.c.l.b16 %v28
  %v99 = vunpack.c.h.b16 %v28
  %v100 = vunpack.c.l.b16 %v29
  %v101 = vunpack.c.h.b16 %v29
  %v102 = vunpack.c.l.b16 %v30
  %v103 = vunpack.c.h.b16 %v30
  %v104 = vpack.c.b16 %v74, %v72
  %v105 = vpack.c.b16 %v75, %v73
  %v106 = vpack.c.b16 %v78, %v76
  %v107 = vpack.c.b16 %v79, %v77
  %v108 = vpack.c.b16 %v82, %v80
  %v109 = vpack.c.b16 %v83, %v81
  %v110 = vpack.c.b16 %v86, %v84
  %v111 = vpack.c.b16 %v87, %v85
  %v112 = vpack.c.b16 %v90, %v88
  %v113 = vpack.c.b16 %v91, %v89
  %v114 = vpack.c.b16 %v94, %v92
  %v115 = vpack.c.b16 %v95, %v93
  %v116 = vpack.c.b16 %v98, %v96
  %v117 = vpack.c.b16 %v99, %v97
  %v118 = vpack.c.b16 %v102, %v100
  %v119 = vpack.c.b16 %v103, %v101
  %v146 = vunpack.c.l.b16 %v31
  %v147 = vunpack.c.l.b16 %v32
  %v148 = vunpack.c.l.b16 %v33
  %v149 = vunpack.c.l.b16 %v34
  %v150 = vunpack.c.l.b16 %v35
  %v151 = vunpack.c.l.b16 %v36
  %v152 = vunpack.c.l.b16 %v37
  %v153 = vunpack.c.l.b16 %v38
  %v154 = vunpack.c.l.b16 %v39
  %v155 = vunpack.c.l.b16 %v40
  %v156 = vunpack.c.l.b16 %v41
  %v157 = vunpack.c.l.b16 %v42
  %v158 = vunpack.c.l.b16 %v43
  %v159 = vunpack.c.l.b16 %v44
  %v160 = vunpack.c.l.b16 %v45
  %v161 = vunpack.c.l.b16 %v46
  %v162 = vunpack.c.l.b16 %v47
  %v163 = vunpack.c.l.b16 %v48
  %v164 = vpack.c.b16 %v147, %v146
  %v165 = vpack.c.b16 %v149, %v148
  %v166 = vpack.c.b16 %v151, %v150
  %v167 = vpack.c.b16 %v153, %v152
  %v168 = vpack.c.b16 %v155, %v154
  %v169 = vpack.c.b16 %v157, %v156
  %v170 = vpack.c.b16 %v159, %v158
  %v171 = vpack.c.b16 %v161, %v160
  %v172 = vpack.c.b16 %v163, %v162
  %vm182 = vcmask 130048
  %v184 = vsel %vm182, %v105, 0
  %v187 = vsel %vm182, %v107, 0
  %v190 = vsel %vm182, %v109, 0
  %v193 = vsel %vm182, %v111, 0
  %v196 = vsel %vm182, %v113, 0
  %v199 = vsel %vm182, %v115, 0
  %v202 = vsel %vm182, %v117, 0
  %v205 = vsel %vm182, %v119, 0
  %207 = vmatprep.subr.bf16.mxu0 0
  %208 = vmatpush1.bf16.msra.mxu0 %v164
  %209 = vmatprep.subr.bf16.mxu0 0
  %210 = vmatpush1.bf16.msra.mxu0 %v165
  %211 = vmatprep.subr.bf16.mxu0 0
  %212 = vmatpush1.bf16.msra.mxu0 %v166
  %213 = vmatprep.subr.bf16.mxu0 0
  %214 = vmatpush1.bf16.msra.mxu0 %v167
  %215 = vmatprep.subr.bf16.mxu0 0
  %216 = vmatpush1.bf16.msra.mxu0 %v168
  %217 = vmatprep.subr.bf16.mxu0 0
  %218 = vmatpush1.bf16.msra.mxu0 %v169
  %219 = vmatprep.subr.bf16.mxu0 0
  %220 = vmatpush1.bf16.msra.mxu0 %v170
  %221 = vmatprep.subr.bf16.mxu0 0
  %222 = vmatpush1.bf16.msra.mxu0 %v171
  %223 = vmatprep.subr.bf16.mxu0 0
  %224 = vmatpush1.bf16.msra.mxu0 %v172
  %225 = vmatprep.subr.bf16.mxu0 0
  %226 = vmatpush1.bf16.msra.mxu0 0
  %227 = vmatprep.subr.bf16.mxu0 0
  %228 = vmatpush1.bf16.msra.mxu0 0
  %229 = vmatprep.subr.bf16.mxu0 0
  %230 = vmatpush1.bf16.msra.mxu0 0
  %231 = vmatprep.subr.bf16.mxu0 0
  %232 = vmatpush1.bf16.msra.mxu0 0
  %233 = vmatprep.subr.bf16.mxu0 0
  %234 = vmatpush1.bf16.msra.mxu0 0
  %235 = vmatprep.subr.bf16.mxu0 0
  %236 = vmatpush1.bf16.msra.mxu0 0
  %237 = vmatprep.subr.bf16.mxu0 0
  %238 = vmatpush1.bf16.msra.mxu0 0
  %239 = vmatprep.mubr.bf16.mxu0 %v184
  %240 = vmatmul.mubr.bf16.gmra.mrb[0].mxu0 %v104
  %v241 = vpop.f32.mrb[0].mxu0
  %v242 = vadd.f32 %v54, %v241
  %v243 = vpop.f32.mrb[0].mxu0
  %v244 = vpop.f32.mrb[0].mxu0
  %v245 = vadd.f32 %v54, %v244
  %v246 = vpop.f32.mrb[0].mxu0
  %247 = vmatprep.mubr.bf16.mxu0 %v187
  %248 = vmatmul.mubr.bf16.gmra.mrb[0].mxu0 %v106
  %v249 = vpop.f32.mrb[0].mxu0
  %v250 = vadd.f32 %v54, %v249
  %v251 = vpop.f32.mrb[0].mxu0
  %v252 = vpop.f32.mrb[0].mxu0
  %v253 = vadd.f32 %v54, %v252
  %v254 = vpop.f32.mrb[0].mxu0
  %255 = vmatprep.mubr.bf16.mxu0 %v190
  %256 = vmatmul.mubr.bf16.gmra.mrb[0].mxu0 %v108
  %v257 = vpop.f32.mrb[0].mxu0
  %v258 = vadd.f32 %v54, %v257
  %v259 = vpop.f32.mrb[0].mxu0
  %v260 = vpop.f32.mrb[0].mxu0
  %v261 = vadd.f32 %v54, %v260
  %v262 = vpop.f32.mrb[0].mxu0
  %263 = vmatprep.mubr.bf16.mxu0 %v193
  %264 = vmatmul.mubr.bf16.gmra.mrb[0].mxu0 %v110
  %v265 = vpop.f32.mrb[0].mxu0
  %v266 = vadd.f32 %v54, %v265
  %v267 = vpop.f32.mrb[0].mxu0
  %v268 = vpop.f32.mrb[0].mxu0
  %v269 = vadd.f32 %v54, %v268
  %v270 = vpop.f32.mrb[0].mxu0
  %271 = vmatprep.mubr.bf16.mxu0 %v196
  %272 = vmatmul.mubr.bf16.gmra.mrb[0].mxu0 %v112
  %v273 = vpop.f32.mrb[0].mxu0
  %v274 = vadd.f32 %v54, %v273
  %v275 = vpop.f32.mrb[0].mxu0
  %v276 = vpop.f32.mrb[0].mxu0
  %v277 = vadd.f32 %v54, %v276
  %v278 = vpop.f32.mrb[0].mxu0
  %279 = vmatprep.mubr.bf16.mxu0 %v199
  %280 = vmatmul.mubr.bf16.gmra.mrb[0].mxu0 %v114
  %v281 = vpop.f32.mrb[0].mxu0
  %v282 = vadd.f32 %v54, %v281
  %v283 = vpop.f32.mrb[0].mxu0
  %v284 = vpop.f32.mrb[0].mxu0
  %v285 = vadd.f32 %v54, %v284
  %v286 = vpop.f32.mrb[0].mxu0
  %287 = vmatprep.mubr.bf16.mxu0 %v202
  %288 = vmatmul.mubr.bf16.gmra.mrb[0].mxu0 %v116
  %v289 = vpop.f32.mrb[0].mxu0
  %v290 = vadd.f32 %v54, %v289
  %v291 = vpop.f32.mrb[0].mxu0
  %v292 = vpop.f32.mrb[0].mxu0
  %v293 = vadd.f32 %v54, %v292
  %v294 = vpop.f32.mrb[0].mxu0
  %295 = vmatprep.mubr.bf16.mxu0 %v205
  %296 = vmatmul.mubr.bf16.gmra.mrb[0].mxu0 %v118
  %v297 = vpop.f32.mrb[0].mxu0
  %v298 = vadd.f32 %v54, %v297
  %v299 = vpop.f32.mrb[0].mxu0
  %v300 = vpop.f32.mrb[0].mxu0
  %v301 = vadd.f32 %v54, %v300
  %v302 = vpop.f32.mrb[0].mxu0
  %303 = vdwg.mxu0
  %v304 = vmax.f32 %v242, 0.0
  %v305 = vmax.f32 %v245, 0.0
  %v306 = vmax.f32 %v250, 0.0
  %v307 = vmax.f32 %v253, 0.0
  %v308 = vmax.f32 %v258, 0.0
  %v309 = vmax.f32 %v261, 0.0
  %v310 = vmax.f32 %v266, 0.0
  %v311 = vmax.f32 %v269, 0.0
  %v312 = vmax.f32 %v274, 0.0
  %v313 = vmax.f32 %v277, 0.0
  %v314 = vmax.f32 %v282, 0.0
  %v315 = vmax.f32 %v285, 0.0
  %v316 = vmax.f32 %v290, 0.0
  %v317 = vmax.f32 %v293, 0.0
  %v318 = vmax.f32 %v298, 0.0
  %v319 = vmax.f32 %v301, 0.0
  %320 = vst [vmem:[%s3] sm:$0xff] %v304
  %321 = vst [vmem:[%s3 + $0x8] sm:$0xff] %v305
  %322 = vst [vmem:[%s3 + $0x10] sm:$0xff] %v306
  %323 = vst [vmem:[%s3 + $0x18] sm:$0xff] %v307
  %324 = vst [vmem:[%s3 + $0x20] sm:$0xff] %v308
  %325 = vst [vmem:[%s3 + $0x28] sm:$0xff] %v309
  %326 = vst [vmem:[%s3 + $0x30] sm:$0xff] %v310
  %327 = vst [vmem:[%s3 + $0x38] sm:$0xff] %v311
  %328 = vst [vmem:[%s3 + $0x40] sm:$0xff] %v312
  %329 = vst [vmem:[%s3 + $0x48] sm:$0xff] %v313
  %330 = vst [vmem:[%s3 + $0x50] sm:$0xff] %v314
  %331 = vst [vmem:[%s3 + $0x58] sm:$0xff] %v315
  %332 = vst [vmem:[%s3 + $0x60] sm:$0xff] %v316
  %333 = vst [vmem:[%s3 + $0x68] sm:$0xff] %v317
  %334 = vst [vmem:[%s3 + $0x70] sm:$0xff] %v318
  %335 = vst [vmem:[%s3 + $0x78] sm:$0xff] %v319
  // Predicated region
  $region14: #{maunet_forward.25} parent=0 // pred_check
    _
  $region15: #{maunet_forward.25} parent=0 // pred_check_branch
    %337 = sbr.rel (0) target = $region17
  $region16: #{maunet_forward.25} parent=0 // pred_region
    _
  $region17: #{maunet_forward.25} parent=0 // pred_fallthru
    _
  // Predicated region
  $region18: #{maunet_forward.25} parent=0 // pred_check
    _
  $region19: #{maunet_forward.25} parent=0 // pred_check_branch
    %339 = sbr.rel (0) target = $region21
  $region20: #{maunet_forward.25} parent=0 // pred_region
    _
  $region21: #{maunet_forward.25} parent=0 // pred_fallthru
    _

// kernel: mul.77
$region0: #{mul.77}
  %s0 = inlined_call_operand.vmem [shape: f32[32], index: 0, kind: input, shape index: {}]
  %s1 = inlined_call_operand.vmem [shape: f32[2,4,4], index: 1, kind: output, shape index: {}]
  $region1: #{mul.77} parent=0
    #allocation0 [shape = 'u8[8192]{0}', space=vmem, size = 0x2000, scoped, tag = 'scoped mem for output reshape']
    #allocation1 [shape = 'u8[4096]{0}', space=vmem, size = 0x1000, scoped, tag = 'scoped mem for input reshape']
    %s3 = sshllo.u32 0, 1
    %v4 = vld [vmem:[%s0] sm:%s3]
    %5 = vst [vmem:[#allocation1] sm:%s3] %v4
    %v6 = vld [vmem:[#allocation1] sm:$0x1]
    %vm7 = vcmask 31744
    %8 = vst.msk [vmem:[#allocation0] sm:$0x1] %vm7, %v6
    %v9 = vld [vmem:[#allocation1] sm:$0x1]
    %10 = vrot.lane.b32.xlu0 %v9, 124
    %v11 = vpop.permute.xlu0 %10
    %vm12 = vcmask 31744
    %s13 = scalar_lea.vmem [#allocation0], 1
    %14 = vst.msk [vmem:[%s13] sm:$0x1] %vm12, %v11
    %v15 = vld [vmem:[#allocation1] sm:$0x1]
    %16 = vrot.lane.b32.xlu0 %v15, 120
    %v17 = vpop.permute.xlu0 %16
    %vm18 = vcmask 31744
    %s19 = scalar_lea.vmem [#allocation0], 2
    %20 = vst.msk [vmem:[%s19] sm:$0x1] %vm18, %v17
    %v21 = vld [vmem:[#allocation1] sm:$0x1]
    %22 = vrot.lane.b32.xlu0 %v21, 116
    %v23 = vpop.permute.xlu0 %22
    %vm24 = vcmask 31744
    %s25 = scalar_lea.vmem [#allocation0], 3
    %26 = vst.msk [vmem:[%s25] sm:$0x1] %vm24, %v23
    %v27 = vld [vmem:[#allocation1] sm:$0x1]
    %28 = vrot.lane.b32.xlu0 %v27, 112
    %v29 = vpop.permute.xlu0 %28
    %vm30 = vcmask 31744
    %s31 = scalar_lea.vmem [#allocation0], 8
    %32 = vst.msk [vmem:[%s31] sm:$0x1] %vm30, %v29
    %v33 = vld [vmem:[#allocation1] sm:$0x1]
    %34 = vrot.lane.b32.xlu0 %v33, 108
    %v35 = vpop.permute.xlu0 %34
    %vm36 = vcmask 31744
    %s37 = scalar_lea.vmem [#allocation0], 9
    %38 = vst.msk [vmem:[%s37] sm:$0x1] %vm36, %v35
    %v39 = vld [vmem:[#allocation1] sm:$0x1]
    %40 = vrot.lane.b32.xlu0 %v39, 104
    %v41 = vpop.permute.xlu0 %40
    %vm42 = vcmask 31744
    %s43 = scalar_lea.vmem [#allocation0], 10
    %44 = vst.msk [vmem:[%s43] sm:$0x1] %vm42, %v41
    %v45 = vld [vmem:[#allocation1] sm:$0x1]
    %46 = vrot.lane.b32.xlu0 %v45, 100
    %v47 = vpop.permute.xlu0 %46
    %vm48 = vcmask 31744
    %s49 = scalar_lea.vmem [#allocation0], 11
    %50 = vst.msk [vmem:[%s49] sm:$0x1] %vm48, %v47
    %s52 = sshllo.u32 0, 4
    %v54 = vld [vmem:[#allocation0] sm:%s52]
    %s55 = sshllo.u32 0, 4
    %56 = vst [vmem:[%s1] sm:%s55] %v54
    %s57 = scalar_lea.vmem [#allocation0], 8
    %v58 = vld [vmem:[%s57] sm:%s52]
    %s59 = sshllo.u32 0, 4
    %s60 = scalar_lea.vmem %s1, 4
    %61 = vst [vmem:[%s60] sm:%s59] %v58

// kernel: maunet_forward.26
$region0: #{maunet_forward.26}
  #allocation0 [shape = 'u32[]', space=smem, size = 0x4, offset = 0x4, fixed_abs, tag = 'smem constant byte address 0x4 - core index']
  #allocation1 [shape = 'u32[144,128]{1,0:T(1,128)}', space=vmem, size = 0x12000, scoped, tag = 'internal scratch']
  %s0 = inlined_call_operand.vmem [shape: bf16[32,144], index: 0, kind: input, shape index: {}]
  %s1 = inlined_call_operand.vmem [shape: bf16[144,128], index: 1, kind: input, shape index: {}]
  %s2 = inlined_call_operand.vmem [shape: f32[1,128], index: 2, kind: input, shape index: {}]
  %s3 = inlined_call_operand.vmem [shape: f32[32,128], index: 3, kind: output, shape index: {}]
  %s4 = sld [smem:[#allocation0]]
  $region22: #{maunet_forward.26} parent=0
    _
  %s6 = ssub.s32 1, %s4
  %s7 = scalar_select 0, %s6, %s4
  // Predicated region
  $region2: #{maunet_forward.26} parent=0 // pred_check
    _
  $region3: #{maunet_forward.26} parent=0 // pred_check_branch
    %9 = sbr.rel (0) target = $region5
  $region4: #{maunet_forward.26} parent=0 // pred_region
    _
  $region5: #{maunet_forward.26} parent=0 // pred_fallthru
    _
  // Predicated region
  $region6: #{maunet_forward.26} parent=0 // pred_check
    _
  $region7: #{maunet_forward.26} parent=0 // pred_check_branch
    %11 = sbr.rel (0) target = $region9
  $region8: #{maunet_forward.26} parent=0 // pred_region
    _
  $region9: #{maunet_forward.26} parent=0 // pred_fallthru
    _
  // Predicated region
  $region10: #{maunet_forward.26} parent=0 // pred_check
    _
  $region11: #{maunet_forward.26} parent=0 // pred_check_branch
    %13 = sbr.rel (0) target = $region13
  $region12: #{maunet_forward.26} parent=0 // pred_region
    _
  $region13: #{maunet_forward.26} parent=0 // pred_fallthru
    _
  %v15 = vld [vmem:[%s0] sm:$0xff]
  %v16 = vld [vmem:[%s0 + $0x8] sm:$0xff]
  %v17 = vld [vmem:[%s0 + $0x10] sm:$0xff]
  %v18 = vld [vmem:[%s0 + $0x18] sm:$0xff]
  %v19 = vld [vmem:[%s1] sm:$0xf]
  %v20 = vld [vmem:[%s1 + $0x4] sm:$0xf]
  %v21 = vld [vmem:[%s1 + $0x8] sm:$0xf]
  %v22 = vld [vmem:[%s1 + $0xc] sm:$0xf]
  %v23 = vld [vmem:[%s1 + $0x10] sm:$0xf]
  %v24 = vld [vmem:[%s1 + $0x14] sm:$0xf]
  %v25 = vld [vmem:[%s1 + $0x18] sm:$0xf]
  %v26 = vld [vmem:[%s1 + $0x1c] sm:$0xf]
  %v27 = vld [vmem:[%s1 + $0x20] sm:$0xf]
  %v28 = vld [vmem:[%s1 + $0x24] sm:$0xf]
  %v29 = vld [vmem:[%s1 + $0x28] sm:$0xf]
  %v30 = vld [vmem:[%s1 + $0x2c] sm:$0xf]
  %v31 = vld [vmem:[%s1 + $0x30] sm:$0xf]
  %v32 = vld [vmem:[%s1 + $0x34] sm:$0xf]
  %v33 = vld [vmem:[%s1 + $0x38] sm:$0xf]
  %v34 = vld [vmem:[%s1 + $0x3c] sm:$0xf]
  %v35 = vld [vmem:[%s1 + $0x40] sm:$0xf]
  %v36 = vld [vmem:[%s1 + $0x44] sm:$0xf]
  %v37 = vld [vmem:[%s2] sm:$0x1]
  %v39 = vlaneseq
  %v40 = vshrl.u32 %v39, 7
  %v41 = vsub.s32 0, %v40
  %v42 = vrot.slane %v37, %v41
  %v48 = vunpack.c.l.b16 %v15
  %v49 = vunpack.c.h.b16 %v15
  %v50 = vunpack.c.l.b16 %v16
  %v51 = vunpack.c.h.b16 %v16
  %v52 = vunpack.c.l.b16 %v17
  %v53 = vunpack.c.h.b16 %v17
  %v54 = vunpack.c.l.b16 %v18
  %v55 = vunpack.c.h.b16 %v18
  %v56 = vpack.c.b16 %v50, %v48
  %v57 = vpack.c.b16 %v51, %v49
  %v58 = vpack.c.b16 %v54, %v52
  %v59 = vpack.c.b16 %v55, %v53
  %v80 = vunpack.c.l.b16 %v19
  %v81 = vunpack.c.l.b16 %v20
  %v82 = vunpack.c.l.b16 %v21
  %v83 = vunpack.c.l.b16 %v22
  %v84 = vunpack.c.l.b16 %v23
  %v85 = vunpack.c.l.b16 %v24
  %v86 = vunpack.c.l.b16 %v25
  %v87 = vunpack.c.l.b16 %v26
  %v88 = vunpack.c.l.b16 %v27
  %v89 = vunpack.c.l.b16 %v28
  %v90 = vunpack.c.l.b16 %v29
  %v91 = vunpack.c.l.b16 %v30
  %v92 = vunpack.c.l.b16 %v31
  %v93 = vunpack.c.l.b16 %v32
  %v94 = vunpack.c.l.b16 %v33
  %v95 = vunpack.c.l.b16 %v34
  %v96 = vunpack.c.l.b16 %v35
  %v97 = vunpack.c.l.b16 %v36
  %v98 = vpack.c.b16 %v81, %v80
  %v99 = vpack.c.b16 %v83, %v82
  %v100 = vpack.c.b16 %v85, %v84
  %v101 = vpack.c.b16 %v87, %v86
  %v102 = vpack.c.b16 %v89, %v88
  %v103 = vpack.c.b16 %v91, %v90
  %v104 = vpack.c.b16 %v93, %v92
  %v105 = vpack.c.b16 %v95, %v94
  %v106 = vpack.c.b16 %v97, %v96
  %vm116 = vcmask 130048
  %v118 = vsel %vm116, %v57, 0
  %v121 = vsel %vm116, %v59, 0
  %123 = vmatprep.subr.bf16.mxu0 0
  %124 = vmatpush1.bf16.msra.mxu0 %v98
  %125 = vmatprep.subr.bf16.mxu0 0
  %126 = vmatpush1.bf16.msra.mxu0 %v99
  %127 = vmatprep.subr.bf16.mxu0 0
  %128 = vmatpush1.bf16.msra.mxu0 %v100
  %129 = vmatprep.subr.bf16.mxu0 0
  %130 = vmatpush1.bf16.msra.mxu0 %v101
  %131 = vmatprep.subr.bf16.mxu0 0
  %132 = vmatpush1.bf16.msra.mxu0 %v102
  %133 = vmatprep.subr.bf16.mxu0 0
  %134 = vmatpush1.bf16.msra.mxu0 %v103
  %135 = vmatprep.subr.bf16.mxu0 0
  %136 = vmatpush1.bf16.msra.mxu0 %v104
  %137 = vmatprep.subr.bf16.mxu0 0
  %138 = vmatpush1.bf16.msra.mxu0 %v105
  %139 = vmatprep.subr.bf16.mxu0 0
  %140 = vmatpush1.bf16.msra.mxu0 %v106
  %141 = vmatprep.subr.bf16.mxu0 0
  %142 = vmatpush1.bf16.msra.mxu0 0
  %143 = vmatprep.subr.bf16.mxu0 0
  %144 = vmatpush1.bf16.msra.mxu0 0
  %145 = vmatprep.subr.bf16.mxu0 0
  %146 = vmatpush1.bf16.msra.mxu0 0
  %147 = vmatprep.subr.bf16.mxu0 0
  %148 = vmatpush1.bf16.msra.mxu0 0
  %149 = vmatprep.subr.bf16.mxu0 0
  %150 = vmatpush1.bf16.msra.mxu0 0
  %151 = vmatprep.subr.bf16.mxu0 0
  %152 = vmatpush1.bf16.msra.mxu0 0
  %153 = vmatprep.subr.bf16.mxu0 0
  %154 = vmatpush1.bf16.msra.mxu0 0
  %155 = vmatprep.mubr.bf16.mxu0 %v118
  %156 = vmatmul.mubr.bf16.gmra.mrb[0].mxu0 %v56
  %v157 = vpop.f32.mrb[0].mxu0
  %v158 = vadd.f32 %v42, %v157
  %v159 = vpop.f32.mrb[0].mxu0
  %v160 = vpop.f32.mrb[0].mxu0
  %v161 = vadd.f32 %v42, %v160
  %v162 = vpop.f32.mrb[0].mxu0
  %163 = vmatprep.mubr.bf16.mxu0 %v121
  %164 = vmatmul.mubr.bf16.gmra.mrb[0].mxu0 %v58
  %v165 = vpop.f32.mrb[0].mxu0
  %v166 = vadd.f32 %v42, %v165
  %v167 = vpop.f32.mrb[0].mxu0
  %v168 = vpop.f32.mrb[0].mxu0
  %v169 = vadd.f32 %v42, %v168
  %v170 = vpop.f32.mrb[0].mxu0
  %171 = vdwg.mxu0
  %v172 = vmax.f32 %v158, 0.0
  %v173 = vmax.f32 %v161, 0.0
  %v174 = vmax.f32 %v166, 0.0
  %v175 = vmax.f32 %v169, 0.0
  %176 = vst [vmem:[%s3] sm:$0xff] %v172
  %177 = vst [vmem:[%s3 + $0x8] sm:$0xff] %v173
  %178 = vst [vmem:[%s3 + $0x10] sm:$0xff] %v174
  %179 = vst [vmem:[%s3 + $0x18] sm:$0xff] %v175
  // Predicated region
  $region14: #{maunet_forward.26} parent=0 // pred_check
    _
  $region15: #{maunet_forward.26} parent=0 // pred_check_branch
    %181 = sbr.rel (0) target = $region17
  $region16: #{maunet_forward.26} parent=0 // pred_region
    _
  $region17: #{maunet_forward.26} parent=0 // pred_fallthru
    _
  // Predicated region
  $region18: #{maunet_forward.26} parent=0 // pred_check
    _
  $region19: #{maunet_forward.26} parent=0 // pred_check_branch
    %183 = sbr.rel (0) target = $region21
  $region20: #{maunet_forward.26} parent=0 // pred_region
    _
  $region21: #{maunet_forward.26} parent=0 // pred_fallthru
    _

// kernel: maunet_forward.27
$region0: #{maunet_forward.27}
  #allocation0 [shape = 'u32[]', space=smem, size = 0x4, offset = 0x4, fixed_abs, tag = 'smem constant byte address 0x4 - core index']
  #allocation1 [shape = 'u32[144,128]{1,0:T(1,128)}', space=vmem, size = 0x12000, scoped, tag = 'internal scratch']
  %s0 = inlined_call_operand.vmem [shape: bf16[32,288], index: 0, kind: input, shape index: {}]
  %s1 = inlined_call_operand.vmem [shape: bf16[288,128], index: 1, kind: input, shape index: {}]
  %s2 = inlined_call_operand.vmem [shape: f32[1,128], index: 2, kind: input, shape index: {}]
  %s3 = inlined_call_operand.vmem [shape: f32[32,128], index: 3, kind: output, shape index: {}]
  %s4 = sld [smem:[#allocation0]]
  $region22: #{maunet_forward.27} parent=0
    _
  %s6 = ssub.s32 1, %s4
  %s7 = scalar_select 0, %s6, %s4
  // Predicated region
  $region2: #{maunet_forward.27} parent=0 // pred_check
    _
  $region3: #{maunet_forward.27} parent=0 // pred_check_branch
    %9 = sbr.rel (0) target = $region5
  $region4: #{maunet_forward.27} parent=0 // pred_region
    _
  $region5: #{maunet_forward.27} parent=0 // pred_fallthru
    _
  // Predicated region
  $region6: #{maunet_forward.27} parent=0 // pred_check
    _
  $region7: #{maunet_forward.27} parent=0 // pred_check_branch
    %11 = sbr.rel (0) target = $region9
  $region8: #{maunet_forward.27} parent=0 // pred_region
    _
  $region9: #{maunet_forward.27} parent=0 // pred_fallthru
    _
  // Predicated region
  $region10: #{maunet_forward.27} parent=0 // pred_check
    _
  $region11: #{maunet_forward.27} parent=0 // pred_check_branch
    %13 = sbr.rel (0) target = $region13
  $region12: #{maunet_forward.27} parent=0 // pred_region
    _
  $region13: #{maunet_forward.27} parent=0 // pred_fallthru
    _
  %v15 = vld [vmem:[%s0] sm:$0xff]
  %v16 = vld [vmem:[%s0 + $0x8] sm:$0xf]
  %v17 = vld [vmem:[%s0 + $0xc] sm:$0xff]
  %v18 = vld [vmem:[%s0 + $0x14] sm:$0xf]
  %v19 = vld [vmem:[%s0 + $0x18] sm:$0xff]
  %v20 = vld [vmem:[%s0 + $0x20] sm:$0xf]
  %v21 = vld [vmem:[%s0 + $0x24] sm:$0xff]
  %v22 = vld [vmem:[%s0 + $0x2c] sm:$0xf]
  %v23 = vld [vmem:[%s1] sm:$0xf]
  %v24 = vld [vmem:[%s1 + $0x4] sm:$0xf]
  %v25 = vld [vmem:[%s1 + $0x8] sm:$0xf]
  %v26 = vld [vmem:[%s1 + $0xc] sm:$0xf]
  %v27 = vld [vmem:[%s1 + $0x10] sm:$0xf]
  %v28 = vld [vmem:[%s1 + $0x14] sm:$0xf]
  %v29 = vld [vmem:[%s1 + $0x18] sm:$0xf]
  %v30 = vld [vmem:[%s1 + $0x1c] sm:$0xf]
  %v31 = vld [vmem:[%s1 + $0x20] sm:$0xf]
  %v32 = vld [vmem:[%s1 + $0x24] sm:$0xf]
  %v33 = vld [vmem:[%s1 + $0x28] sm:$0xf]
  %v34 = vld [vmem:[%s1 + $0x2c] sm:$0xf]
  %v35 = vld [vmem:[%s1 + $0x30] sm:$0xf]
  %v36 = vld [vmem:[%s1 + $0x34] sm:$0xf]
  %v37 = vld [vmem:[%s1 + $0x38] sm:$0xf]
  %v38 = vld [vmem:[%s1 + $0x3c] sm:$0xf]
  %v39 = vld [vmem:[%s1 + $0x40] sm:$0xf]
  %v40 = vld [vmem:[%s1 + $0x44] sm:$0xf]
  %v41 = vld [vmem:[%s1 + $0x48] sm:$0xf]
  %v42 = vld [vmem:[%s1 + $0x4c] sm:$0xf]
  %v43 = vld [vmem:[%s1 + $0x50] sm:$0xf]
  %v44 = vld [vmem:[%s1 + $0x54] sm:$0xf]
  %v45 = vld [vmem:[%s1 + $0x58] sm:$0xf]
  %v46 = vld [vmem:[%s1 + $0x5c] sm:$0xf]
  %v47 = vld [vmem:[%s1 + $0x60] sm:$0xf]
  %v48 = vld [vmem:[%s1 + $0x64] sm:$0xf]
  %v49 = vld [vmem:[%s1 + $0x68] sm:$0xf]
  %v50 = vld [vmem:[%s1 + $0x6c] sm:$0xf]
  %v51 = vld [vmem:[%s1 + $0x70] sm:$0xf]
  %v52 = vld [vmem:[%s1 + $0x74] sm:$0xf]
  %v53 = vld [vmem:[%s1 + $0x78] sm:$0xf]
  %v54 = vld [vmem:[%s1 + $0x7c] sm:$0xf]
  %v55 = vld [vmem:[%s1 + $0x80] sm:$0xf]
  %v56 = vld [vmem:[%s1 + $0x84] sm:$0xf]
  %v57 = vld [vmem:[%s1 + $0x88] sm:$0xf]
  %v58 = vld [vmem:[%s1 + $0x8c] sm:$0xf]
  %v59 = vld [vmem:[%s2] sm:$0x1]
  %v61 = vlaneseq
  %v62 = vshrl.u32 %v61, 7
  %v63 = vsub.s32 0, %v62
  %v64 = vrot.slane %v59, %v63
  %v74 = vunpack.c.l.b16 %v15
  %v75 = vunpack.c.h.b16 %v15
  %v76 = vunpack.c.l.b16 %v16
  %v77 = vunpack.c.l.b16 %v17
  %v78 = vunpack.c.h.b16 %v17
  %v79 = vunpack.c.l.b16 %v18
  %v80 = vunpack.c.l.b16 %v19
  %v81 = vunpack.c.h.b16 %v19
  %v82 = vunpack.c.l.b16 %v20
  %v83 = vunpack.c.l.b16 %v21
  %v84 = vunpack.c.h.b16 %v21
  %v85 = vunpack.c.l.b16 %v22
  %v86 = vpack.c.b16 %v77, %v74
  %v87 = vpack.c.b16 %v78, %v75
  %v88 = vpack.c.b16 %v79, %v76
  %v89 = vpack.c.b16 %v83, %v80
  %v90 = vpack.c.b16 %v84, %v81
  %v91 = vpack.c.b16 %v85, %v82
  %v132 = vunpack.c.l.b16 %v23
  %v133 = vunpack.c.l.b16 %v24
  %v134 = vunpack.c.l.b16 %v25
  %v135 = vunpack.c.l.b16 %v26
  %v136 = vunpack.c.l.b16 %v27
  %v137 = vunpack.c.l.b16 %v28
  %v138 = vunpack.c.l.b16 %v29
  %v139 = vunpack.c.l.b16 %v30
  %v140 = vunpack.c.l.b16 %v31
  %v141 = vunpack.c.l.b16 %v32
  %v142 = vunpack.c.l.b16 %v33
  %v143 = vunpack.c.l.b16 %v34
  %v144 = vunpack.c.l.b16 %v35
  %v145 = vunpack.c.l.b16 %v36
  %v146 = vunpack.c.l.b16 %v37
  %v147 = vunpack.c.l.b16 %v38
  %v148 = vunpack.c.l.b16 %v39
  %v149 = vunpack.c.l.b16 %v40
  %v150 = vunpack.c.l.b16 %v41
  %v151 = vunpack.c.l.b16 %v42
  %v152 = vunpack.c.l.b16 %v43
  %v153 = vunpack.c.l.b16 %v44
  %v154 = vunpack.c.l.b16 %v45
  %v155 = vunpack.c.l.b16 %v46
  %v156 = vunpack.c.l.b16 %v47
  %v157 = vunpack.c.l.b16 %v48
  %v158 = vunpack.c.l.b16 %v49
  %v159 = vunpack.c.l.b16 %v50
  %v160 = vunpack.c.l.b16 %v51
  %v161 = vunpack.c.l.b16 %v52
  %v162 = vunpack.c.l.b16 %v53
  %v163 = vunpack.c.l.b16 %v54
  %v164 = vunpack.c.l.b16 %v55
  %v165 = vunpack.c.l.b16 %v56
  %v166 = vunpack.c.l.b16 %v57
  %v167 = vunpack.c.l.b16 %v58
  %v168 = vpack.c.b16 %v133, %v132
  %v169 = vpack.c.b16 %v135, %v134
  %v170 = vpack.c.b16 %v137, %v136
  %v171 = vpack.c.b16 %v139, %v138
  %v172 = vpack.c.b16 %v141, %v140
  %v173 = vpack.c.b16 %v143, %v142
  %v174 = vpack.c.b16 %v145, %v144
  %v175 = vpack.c.b16 %v147, %v146
  %v176 = vpack.c.b16 %v149, %v148
  %v177 = vpack.c.b16 %v151, %v150
  %v178 = vpack.c.b16 %v153, %v152
  %v179 = vpack.c.b16 %v155, %v154
  %v180 = vpack.c.b16 %v157, %v156
  %v181 = vpack.c.b16 %v159, %v158
  %v182 = vpack.c.b16 %v161, %v160
  %v183 = vpack.c.b16 %v163, %v162
  %v184 = vpack.c.b16 %v165, %v164
  %v185 = vpack.c.b16 %v167, %v166
  %vm204 = vcmask 261120
  %v206 = vsel %vm204, %v88, 0
  %v209 = vsel %vm204, %v91, 0
  %211 = vmatprep.subr.bf16.mxu0 0
  %212 = vmatpush1.bf16.msra.mxu0 %v168
  %213 = vmatprep.subr.bf16.mxu0 0
  %214 = vmatpush1.bf16.msra.mxu0 %v169
  %215 = vmatprep.subr.bf16.mxu0 0
  %216 = vmatpush1.bf16.msra.mxu0 %v170
  %217 = vmatprep.subr.bf16.mxu0 0
  %218 = vmatpush1.bf16.msra.mxu0 %v171
  %219 = vmatprep.subr.bf16.mxu0 0
  %220 = vmatpush1.bf16.msra.mxu0 %v172
  %221 = vmatprep.subr.bf16.mxu0 0
  %222 = vmatpush1.bf16.msra.mxu0 %v173
  %223 = vmatprep.subr.bf16.mxu0 0
  %224 = vmatpush1.bf16.msra.mxu0 %v174
  %225 = vmatprep.subr.bf16.mxu0 0
  %226 = vmatpush1.bf16.msra.mxu0 %v175
  %227 = vmatprep.subr.bf16.mxu0 0
  %228 = vmatpush1.bf16.msra.mxu0 %v176
  %229 = vmatprep.subr.bf16.mxu0 0
  %230 = vmatpush1.bf16.msra.mxu0 %v177
  %231 = vmatprep.subr.bf16.mxu0 0
  %232 = vmatpush1.bf16.msra.mxu0 %v178
  %233 = vmatprep.subr.bf16.mxu0 0
  %234 = vmatpush1.bf16.msra.mxu0 %v179
  %235 = vmatprep.subr.bf16.mxu0 0
  %236 = vmatpush1.bf16.msra.mxu0 %v180
  %237 = vmatprep.subr.bf16.mxu0 0
  %238 = vmatpush1.bf16.msra.mxu0 %v181
  %239 = vmatprep.subr.bf16.mxu0 0
  %240 = vmatpush1.bf16.msra.mxu0 %v182
  %241 = vmatprep.subr.bf16.mxu0 0
  %242 = vmatpush1.bf16.msra.mxu0 %v183
  %243 = vmatprep.mubr.bf16.mxu0 %v87
  %244 = vmatmul.mubr.bf16.gmra.mrb[0].mxu0 %v86
  %v245 = vpop.f32.mrb[0].mxu0
  %v246 = vadd.f32 %v64, %v245
  %v247 = vpop.f32.mrb[0].mxu0
  %v248 = vpop.f32.mrb[0].mxu0
  %v249 = vadd.f32 %v64, %v248
  %v250 = vpop.f32.mrb[0].mxu0
  %251 = vmatprep.mubr.bf16.mxu0 %v90
  %252 = vmatmul.mubr.bf16.gmra.mrb[0].mxu0 %v89
  %v253 = vpop.f32.mrb[0].mxu0
  %v254 = vadd.f32 %v64, %v253
  %v255 = vpop.f32.mrb[0].mxu0
  %v256 = vpop.f32.mrb[0].mxu0
  %v257 = vadd.f32 %v64, %v256
  %v258 = vpop.f32.mrb[0].mxu0
  %259 = vdwg.mxu0
  %260 = vmatprep.subr.bf16.mxu0 0
  %261 = vmatpush1.bf16.msra.mxu0 %v184
  %262 = vmatprep.subr.bf16.mxu0 0
  %263 = vmatpush1.bf16.msra.mxu0 %v185
  %264 = vmatprep.subr.bf16.mxu0 0
  %265 = vmatpush1.bf16.msra.mxu0 0
  %266 = vmatprep.subr.bf16.mxu0 0
  %267 = vmatpush1.bf16.msra.mxu0 0
  %268 = vmatprep.subr.bf16.mxu0 0
  %269 = vmatpush1.bf16.msra.mxu0 0
  %270 = vmatprep.subr.bf16.mxu0 0
  %271 = vmatpush1.bf16.msra.mxu0 0
  %272 = vmatprep.subr.bf16.mxu0 0
  %273 = vmatpush1.bf16.msra.mxu0 0
  %274 = vmatprep.subr.bf16.mxu0 0
  %275 = vmatpush1.bf16.msra.mxu0 0
  %276 = vmatprep.subr.bf16.mxu0 0
  %277 = vmatpush1.bf16.msra.mxu0 0
  %278 = vmatprep.subr.bf16.mxu0 0
  %279 = vmatpush1.bf16.msra.mxu0 0
  %280 = vmatprep.subr.bf16.mxu0 0
  %281 = vmatpush1.bf16.msra.mxu0 0
  %282 = vmatprep.subr.bf16.mxu0 0
  %283 = vmatpush1.bf16.msra.mxu0 0
  %284 = vmatprep.subr.bf16.mxu0 0
  %285 = vmatpush1.bf16.msra.mxu0 0
  %286 = vmatprep.subr.bf16.mxu0 0
  %287 = vmatpush1.bf16.msra.mxu0 0
  %288 = vmatprep.subr.bf16.mxu0 0
  %289 = vmatpush1.bf16.msra.mxu0 0
  %290 = vmatprep.subr.bf16.mxu0 0
  %291 = vmatpush1.bf16.msra.mxu0 0
  %292 = vmatprep.mubr.bf16.mxu0 0
  %293 = vmatmul.mubr.bf16.gmra.mrb[0].mxu0 %v206
  %v294 = vpop.f32.mrb[0].mxu0
  %v295 = vadd.f32 %v246, %v294
  %v296 = vpop.f32.mrb[0].mxu0
  %v297 = vpop.f32.mrb[0].mxu0
  %v298 = vadd.f32 %v249, %v297
  %v299 = vpop.f32.mrb[0].mxu0
  %300 = vmatprep.mubr.bf16.mxu0 0
  %301 = vmatmul.mubr.bf16.gmra.mrb[0].mxu0 %v209
  %v302 = vpop.f32.mrb[0].mxu0
  %v303 = vadd.f32 %v254, %v302
  %v304 = vpop.f32.mrb[0].mxu0
  %v305 = vpop.f32.mrb[0].mxu0
  %v306 = vadd.f32 %v257, %v305
  %v307 = vpop.f32.mrb[0].mxu0
  %308 = vdwg.mxu0
  %v309 = vmax.f32 %v295, 0.0
  %v310 = vmax.f32 %v298, 0.0
  %v311 = vmax.f32 %v303, 0.0
  %v312 = vmax.f32 %v306, 0.0
  %313 = vst [vmem:[%s3] sm:$0xff] %v309
  %314 = vst [vmem:[%s3 + $0x8] sm:$0xff] %v310
  %315 = vst [vmem:[%s3 + $0x10] sm:$0xff] %v311
  %316 = vst [vmem:[%s3 + $0x18] sm:$0xff] %v312
  // Predicated region
  $region14: #{maunet_forward.27} parent=0 // pred_check
    _
  $region15: #{maunet_forward.27} parent=0 // pred_check_branch
    %318 = sbr.rel (0) target = $region17
  $region16: #{maunet_forward.27} parent=0 // pred_region
    _
  $region17: #{maunet_forward.27} parent=0 // pred_fallthru
    _
  // Predicated region
  $region18: #{maunet_forward.27} parent=0 // pred_check
    _
  $region19: #{maunet_forward.27} parent=0 // pred_check_branch
    %320 = sbr.rel (0) target = $region21
  $region20: #{maunet_forward.27} parent=0 // pred_region
    _
  $region21: #{maunet_forward.27} parent=0 // pred_fallthru
    _

// kernel: mul.65
$region0: #{mul.65}
  %s0 = inlined_call_operand.vmem [shape: f32[8], index: 0, kind: input, shape index: {}]
  %s1 = inlined_call_operand.vmem [shape: f32[2,2,2], index: 1, kind: output, shape index: {}]
  $region1: #{mul.65} parent=0
    #allocation0 [shape = 'u8[8192]{0}', space=vmem, size = 0x2000, scoped, tag = 'scoped mem for output reshape']
    #allocation1 [shape = 'u8[4096]{0}', space=vmem, size = 0x1000, scoped, tag = 'scoped mem for input reshape']
    %s3 = sshllo.u32 0, 1
    %v4 = vld [vmem:[%s0] sm:%s3]
    %5 = vst [vmem:[#allocation1] sm:%s3] %v4
    %v6 = vld [vmem:[#allocation1] sm:$0x1]
    %vm7 = vcmask 15360
    %8 = vst.msk [vmem:[#allocation0] sm:$0x1] %vm7, %v6
    %v9 = vld [vmem:[#allocation1] sm:$0x1]
    %10 = vrot.lane.b32.xlu0 %v9, 126
    %v11 = vpop.permute.xlu0 %10
    %vm12 = vcmask 15360
    %s13 = scalar_lea.vmem [#allocation0], 1
    %14 = vst.msk [vmem:[%s13] sm:$0x1] %vm12, %v11
    %v15 = vld [vmem:[#allocation1] sm:$0x1]
    %16 = vrot.lane.b32.xlu0 %v15, 124
    %v17 = vpop.permute.xlu0 %16
    %vm18 = vcmask 15360
    %s19 = scalar_lea.vmem [#allocation0], 8
    %20 = vst.msk [vmem:[%s19] sm:$0x1] %vm18, %v17
    %v21 = vld [vmem:[#allocation1] sm:$0x1]
    %22 = vrot.lane.b32.xlu0 %v21, 122
    %v23 = vpop.permute.xlu0 %22
    %vm24 = vcmask 15360
    %s25 = scalar_lea.vmem [#allocation0], 9
    %26 = vst.msk [vmem:[%s25] sm:$0x1] %vm24, %v23
    %s28 = sshllo.u32 0, 2
    %v30 = vld [vmem:[#allocation0] sm:%s28]
    %s31 = sshllo.u32 0, 2
    %32 = vst [vmem:[%s1] sm:%s31] %v30
    %s33 = scalar_lea.vmem [#allocation0], 8
    %v34 = vld [vmem:[%s33] sm:%s28]
    %s35 = sshllo.u32 0, 2
    %s36 = scalar_lea.vmem %s1, 2
    %37 = vst [vmem:[%s36] sm:%s35] %v34

// kernel: maunet_forward.28
$region0: #{maunet_forward.28}
  #allocation0 [shape = 'u32[]', space=smem, size = 0x4, offset = 0x4, fixed_abs, tag = 'smem constant byte address 0x4 - core index']
  #allocation1 [shape = 'u32[144,128]{1,0:T(1,128)}', space=vmem, size = 0x12000, scoped, tag = 'internal scratch']
  %s0 = inlined_call_operand.vmem [shape: bf16[8,288], index: 0, kind: input, shape index: {}]
  %s1 = inlined_call_operand.vmem [shape: bf16[288,128], index: 1, kind: input, shape index: {}]
  %s2 = inlined_call_operand.vmem [shape: f32[1,128], index: 2, kind: input, shape index: {}]
  %s3 = inlined_call_operand.vmem [shape: f32[8,128], index: 3, kind: output, shape index: {}]
  %s4 = sld [smem:[#allocation0]]
  $region22: #{maunet_forward.28} parent=0
    _
  %s6 = ssub.s32 1, %s4
  %s7 = scalar_select 0, %s6, %s4
  // Predicated region
  $region2: #{maunet_forward.28} parent=0 // pred_check
    _
  $region3: #{maunet_forward.28} parent=0 // pred_check_branch
    %9 = sbr.rel (0) target = $region5
  $region4: #{maunet_forward.28} parent=0 // pred_region
    _
  $region5: #{maunet_forward.28} parent=0 // pred_fallthru
    _
  // Predicated region
  $region6: #{maunet_forward.28} parent=0 // pred_check
    _
  $region7: #{maunet_forward.28} parent=0 // pred_check_branch
    %11 = sbr.rel (0) target = $region9
  $region8: #{maunet_forward.28} parent=0 // pred_region
    _
  $region9: #{maunet_forward.28} parent=0 // pred_fallthru
    _
  // Predicated region
  $region10: #{maunet_forward.28} parent=0 // pred_check
    _
  $region11: #{maunet_forward.28} parent=0 // pred_check_branch
    %13 = sbr.rel (0) target = $region13
  $region12: #{maunet_forward.28} parent=0 // pred_region
    _
  $region13: #{maunet_forward.28} parent=0 // pred_fallthru
    _
  %v15 = vld [vmem:[%s0] sm:$0xff]
  %v16 = vld [vmem:[%s0 + $0x8] sm:$0xf]
  %v17 = vld [vmem:[%s1] sm:$0xf]
  %v18 = vld [vmem:[%s1 + $0x4] sm:$0xf]
  %v19 = vld [vmem:[%s1 + $0x8] sm:$0xf]
  %v20 = vld [vmem:[%s1 + $0xc] sm:$0xf]
  %v21 = vld [vmem:[%s1 + $0x10] sm:$0xf]
  %v22 = vld [vmem:[%s1 + $0x14] sm:$0xf]
  %v23 = vld [vmem:[%s1 + $0x18] sm:$0xf]
  %v24 = vld [vmem:[%s1 + $0x1c] sm:$0xf]
  %v25 = vld [vmem:[%s1 + $0x20] sm:$0xf]
  %v26 = vld [vmem:[%s1 + $0x24] sm:$0xf]
  %v27 = vld [vmem:[%s1 + $0x28] sm:$0xf]
  %v28 = vld [vmem:[%s1 + $0x2c] sm:$0xf]
  %v29 = vld [vmem:[%s1 + $0x30] sm:$0xf]
  %v30 = vld [vmem:[%s1 + $0x34] sm:$0xf]
  %v31 = vld [vmem:[%s1 + $0x38] sm:$0xf]
  %v32 = vld [vmem:[%s1 + $0x3c] sm:$0xf]
  %v33 = vld [vmem:[%s1 + $0x40] sm:$0xf]
  %v34 = vld [vmem:[%s1 + $0x44] sm:$0xf]
  %v35 = vld [vmem:[%s1 + $0x48] sm:$0xf]
  %v36 = vld [vmem:[%s1 + $0x4c] sm:$0xf]
  %v37 = vld [vmem:[%s1 + $0x50] sm:$0xf]
  %v38 = vld [vmem:[%s1 + $0x54] sm:$0xf]
  %v39 = vld [vmem:[%s1 + $0x58] sm:$0xf]
  %v40 = vld [vmem:[%s1 + $0x5c] sm:$0xf]
  %v41 = vld [vmem:[%s1 + $0x60] sm:$0xf]
  %v42 = vld [vmem:[%s1 + $0x64] sm:$0xf]
  %v43 = vld [vmem:[%s1 + $0x68] sm:$0xf]
  %v44 = vld [vmem:[%s1 + $0x6c] sm:$0xf]
  %v45 = vld [vmem:[%s1 + $0x70] sm:$0xf]
  %v46 = vld [vmem:[%s1 + $0x74] sm:$0xf]
  %v47 = vld [vmem:[%s1 + $0x78] sm:$0xf]
  %v48 = vld [vmem:[%s1 + $0x7c] sm:$0xf]
  %v49 = vld [vmem:[%s1 + $0x80] sm:$0xf]
  %v50 = vld [vmem:[%s1 + $0x84] sm:$0xf]
  %v51 = vld [vmem:[%s1 + $0x88] sm:$0xf]
  %v52 = vld [vmem:[%s1 + $0x8c] sm:$0xf]
  %v53 = vld [vmem:[%s2] sm:$0x1]
  %v55 = vlaneseq
  %v56 = vshrl.u32 %v55, 7
  %v57 = vsub.s32 0, %v56
  %v58 = vrot.slane %v53, %v57
  %v62 = vunpack.c.l.b16 %v15
  %v63 = vunpack.c.h.b16 %v15
  %v64 = vunpack.c.l.b16 %v16
  %v65 = vpack.c.b16 %v62, %v62
  %v66 = vpack.c.b16 %v63, %v63
  %v67 = vpack.c.b16 %v64, %v64
  %v106 = vunpack.c.l.b16 %v17
  %v107 = vunpack.c.l.b16 %v18
  %v108 = vunpack.c.l.b16 %v19
  %v109 = vunpack.c.l.b16 %v20
  %v110 = vunpack.c.l.b16 %v21
  %v111 = vunpack.c.l.b16 %v22
  %v112 = vunpack.c.l.b16 %v23
  %v113 = vunpack.c.l.b16 %v24
  %v114 = vunpack.c.l.b16 %v25
  %v115 = vunpack.c.l.b16 %v26
  %v116 = vunpack.c.l.b16 %v27
  %v117 = vunpack.c.l.b16 %v28
  %v118 = vunpack.c.l.b16 %v29
  %v119 = vunpack.c.l.b16 %v30
  %v120 = vunpack.c.l.b16 %v31
  %v121 = vunpack.c.l.b16 %v32
  %v122 = vunpack.c.l.b16 %v33
  %v123 = vunpack.c.l.b16 %v34
  %v124 = vunpack.c.l.b16 %v35
  %v125 = vunpack.c.l.b16 %v36
  %v126 = vunpack.c.l.b16 %v37
  %v127 = vunpack.c.l.b16 %v38
  %v128 = vunpack.c.l.b16 %v39
  %v129 = vunpack.c.l.b16 %v40
  %v130 = vunpack.c.l.b16 %v41
  %v131 = vunpack.c.l.b16 %v42
  %v132 = vunpack.c.l.b16 %v43
  %v133 = vunpack.c.l.b16 %v44
  %v134 = vunpack.c.l.b16 %v45
  %v135 = vunpack.c.l.b16 %v46
  %v136 = vunpack.c.l.b16 %v47
  %v137 = vunpack.c.l.b16 %v48
  %v138 = vunpack.c.l.b16 %v49
  %v139 = vunpack.c.l.b16 %v50
  %v140 = vunpack.c.l.b16 %v51
  %v141 = vunpack.c.l.b16 %v52
  %v142 = vpack.c.b16 %v107, %v106
  %v143 = vpack.c.b16 %v109, %v108
  %v144 = vpack.c.b16 %v111, %v110
  %v145 = vpack.c.b16 %v113, %v112
  %v146 = vpack.c.b16 %v115, %v114
  %v147 = vpack.c.b16 %v117, %v116
  %v148 = vpack.c.b16 %v119, %v118
  %v149 = vpack.c.b16 %v121, %v120
  %v150 = vpack.c.b16 %v123, %v122
  %v151 = vpack.c.b16 %v125, %v124
  %v152 = vpack.c.b16 %v127, %v126
  %v153 = vpack.c.b16 %v129, %v128
  %v154 = vpack.c.b16 %v131, %v130
  %v155 = vpack.c.b16 %v133, %v132
  %v156 = vpack.c.b16 %v135, %v134
  %v157 = vpack.c.b16 %v137, %v136
  %v158 = vpack.c.b16 %v139, %v138
  %v159 = vpack.c.b16 %v141, %v140
  %vm178 = vcmask 261120
  %v180 = vsel %vm178, %v67, 0
  %182 = vmatprep.subr.bf16.mxu0 0
  %183 = vmatpush1.bf16.msra.mxu0 %v142
  %184 = vmatprep.subr.bf16.mxu0 0
  %185 = vmatpush1.bf16.msra.mxu0 %v143
  %186 = vmatprep.subr.bf16.mxu0 0
  %187 = vmatpush1.bf16.msra.mxu0 %v144
  %188 = vmatprep.subr.bf16.mxu0 0
  %189 = vmatpush1.bf16.msra.mxu0 %v145
  %190 = vmatprep.subr.bf16.mxu0 0
  %191 = vmatpush1.bf16.msra.mxu0 %v146
  %192 = vmatprep.subr.bf16.mxu0 0
  %193 = vmatpush1.bf16.msra.mxu0 %v147
  %194 = vmatprep.subr.bf16.mxu0 0
  %195 = vmatpush1.bf16.msra.mxu0 %v148
  %196 = vmatprep.subr.bf16.mxu0 0
  %197 = vmatpush1.bf16.msra.mxu0 %v149
  %198 = vmatprep.subr.bf16.mxu0 0
  %199 = vmatpush1.bf16.msra.mxu0 %v150
  %200 = vmatprep.subr.bf16.mxu0 0
  %201 = vmatpush1.bf16.msra.mxu0 %v151
  %202 = vmatprep.subr.bf16.mxu0 0
  %203 = vmatpush1.bf16.msra.mxu0 %v152
  %204 = vmatprep.subr.bf16.mxu0 0
  %205 = vmatpush1.bf16.msra.mxu0 %v153
  %206 = vmatprep.subr.bf16.mxu0 0
  %207 = vmatpush1.bf16.msra.mxu0 %v154
  %208 = vmatprep.subr.bf16.mxu0 0
  %209 = vmatpush1.bf16.msra.mxu0 %v155
  %210 = vmatprep.subr.bf16.mxu0 0
  %211 = vmatpush1.bf16.msra.mxu0 %v156
  %212 = vmatprep.subr.bf16.mxu0 0
  %213 = vmatpush1.bf16.msra.mxu0 %v157
  %214 = vmatprep.mubr.bf16.mxu0 %v66
  %215 = vmatmul.mubr.bf16.gmra.mrb[0].mxu0 %v65
  %v216 = vpop.f32.mrb[0].mxu0
  %v217 = vadd.f32 %v58, %v216
  %v218 = vpop.f32.mrb[0].mxu0
  %v219 = vpop.f32.mrb[0].mxu0
  %v220 = vpop.f32.mrb[0].mxu0
  %221 = vdwg.mxu0
  %222 = vmatprep.subr.bf16.mxu0 0
  %223 = vmatpush1.bf16.msra.mxu0 %v158
  %224 = vmatprep.subr.bf16.mxu0 0
  %225 = vmatpush1.bf16.msra.mxu0 %v159
  %226 = vmatprep.subr.bf16.mxu0 0
  %227 = vmatpush1.bf16.msra.mxu0 0
  %228 = vmatprep.subr.bf16.mxu0 0
  %229 = vmatpush1.bf16.msra.mxu0 0
  %230 = vmatprep.subr.bf16.mxu0 0
  %231 = vmatpush1.bf16.msra.mxu0 0
  %232 = vmatprep.subr.bf16.mxu0 0
  %233 = vmatpush1.bf16.msra.mxu0 0
  %234 = vmatprep.subr.bf16.mxu0 0
  %235 = vmatpush1.bf16.msra.mxu0 0
  %236 = vmatprep.subr.bf16.mxu0 0
  %237 = vmatpush1.bf16.msra.mxu0 0
  %238 = vmatprep.subr.bf16.mxu0 0
  %239 = vmatpush1.bf16.msra.mxu0 0
  %240 = vmatprep.subr.bf16.mxu0 0
  %241 = vmatpush1.bf16.msra.mxu0 0
  %242 = vmatprep.subr.bf16.mxu0 0
  %243 = vmatpush1.bf16.msra.mxu0 0
  %244 = vmatprep.subr.bf16.mxu0 0
  %245 = vmatpush1.bf16.msra.mxu0 0
  %246 = vmatprep.subr.bf16.mxu0 0
  %247 = vmatpush1.bf16.msra.mxu0 0
  %248 = vmatprep.subr.bf16.mxu0 0
  %249 = vmatpush1.bf16.msra.mxu0 0
  %250 = vmatprep.subr.bf16.mxu0 0
  %251 = vmatpush1.bf16.msra.mxu0 0
  %252 = vmatprep.subr.bf16.mxu0 0
  %253 = vmatpush1.bf16.msra.mxu0 0
  %254 = vmatprep.mubr.bf16.mxu0 0
  %255 = vmatmul.mubr.bf16.gmra.mrb[0].mxu0 %v180
  %v256 = vpop.f32.mrb[0].mxu0
  %v257 = vadd.f32 %v217, %v256
  %v258 = vpop.f32.mrb[0].mxu0
  %v259 = vpop.f32.mrb[0].mxu0
  %v260 = vpop.f32.mrb[0].mxu0
  %261 = vdwg.mxu0
  %v262 = vmax.f32 %v257, 0.0
  %263 = vst [vmem:[%s3] sm:$0xff] %v262
  // Predicated region
  $region14: #{maunet_forward.28} parent=0 // pred_check
    _
  $region15: #{maunet_forward.28} parent=0 // pred_check_branch
    %265 = sbr.rel (0) target = $region17
  $region16: #{maunet_forward.28} parent=0 // pred_region
    _
  $region17: #{maunet_forward.28} parent=0 // pred_fallthru
    _
  // Predicated region
  $region18: #{maunet_forward.28} parent=0 // pred_check
    _
  $region19: #{maunet_forward.28} parent=0 // pred_check_branch
    %267 = sbr.rel (0) target = $region21
  $region20: #{maunet_forward.28} parent=0 // pred_region
    _
  $region21: #{maunet_forward.28} parent=0 // pred_fallthru
    _

// kernel: maunet_forward.29
$region0: #{maunet_forward.29}
  #allocation0 [shape = 'u32[]', space=smem, size = 0x4, offset = 0x4, fixed_abs, tag = 'smem constant byte address 0x4 - core index']
  #allocation1 [shape = 'u32[144,128]{1,0:T(1,128)}', space=vmem, size = 0x12000, scoped, tag = 'internal scratch']
  %s0 = inlined_call_operand.vmem [shape: bf16[8,576], index: 0, kind: input, shape index: {}]
  %s1 = inlined_call_operand.vmem [shape: bf16[576,128], index: 1, kind: input, shape index: {}]
  %s2 = inlined_call_operand.vmem [shape: f32[1,128], index: 2, kind: input, shape index: {}]
  %s3 = inlined_call_operand.vmem [shape: f32[8,128], index: 3, kind: output, shape index: {}]
  %s4 = sld [smem:[#allocation0]]
  $region22: #{maunet_forward.29} parent=0
    _
  %s6 = ssub.s32 1, %s4
  %s7 = scalar_select 0, %s6, %s4
  // Predicated region
  $region2: #{maunet_forward.29} parent=0 // pred_check
    _
  $region3: #{maunet_forward.29} parent=0 // pred_check_branch
    %9 = sbr.rel (0) target = $region5
  $region4: #{maunet_forward.29} parent=0 // pred_region
    _
  $region5: #{maunet_forward.29} parent=0 // pred_fallthru
    _
  // Predicated region
  $region6: #{maunet_forward.29} parent=0 // pred_check
    _
  $region7: #{maunet_forward.29} parent=0 // pred_check_branch
    %11 = sbr.rel (0) target = $region9
  $region8: #{maunet_forward.29} parent=0 // pred_region
    _
  $region9: #{maunet_forward.29} parent=0 // pred_fallthru
    _
  // Predicated region
  $region10: #{maunet_forward.29} parent=0 // pred_check
    _
  $region11: #{maunet_forward.29} parent=0 // pred_check_branch
    %13 = sbr.rel (0) target = $region13
  $region12: #{maunet_forward.29} parent=0 // pred_region
    _
  $region13: #{maunet_forward.29} parent=0 // pred_fallthru
    _
  %v15 = vld [vmem:[%s0] sm:$0xff]
  %v16 = vld [vmem:[%s0 + $0x8] sm:$0xff]
  %v17 = vld [vmem:[%s0 + $0x10] sm:$0xf]
  %v18 = vld [vmem:[%s1] sm:$0xf]
  %v19 = vld [vmem:[%s1 + $0x4] sm:$0xf]
  %v20 = vld [vmem:[%s1 + $0x8] sm:$0xf]
  %v21 = vld [vmem:[%s1 + $0xc] sm:$0xf]
  %v22 = vld [vmem:[%s1 + $0x10] sm:$0xf]
  %v23 = vld [vmem:[%s1 + $0x14] sm:$0xf]
  %v24 = vld [vmem:[%s1 + $0x18] sm:$0xf]
  %v25 = vld [vmem:[%s1 + $0x1c] sm:$0xf]
  %v26 = vld [vmem:[%s1 + $0x20] sm:$0xf]
  %v27 = vld [vmem:[%s1 + $0x24] sm:$0xf]
  %v28 = vld [vmem:[%s1 + $0x28] sm:$0xf]
  %v29 = vld [vmem:[%s1 + $0x2c] sm:$0xf]
  %v30 = vld [vmem:[%s1 + $0x30] sm:$0xf]
  %v31 = vld [vmem:[%s1 + $0x34] sm:$0xf]
  %v32 = vld [vmem:[%s1 + $0x38] sm:$0xf]
  %v33 = vld [vmem:[%s1 + $0x3c] sm:$0xf]
  %v34 = vld [vmem:[%s1 + $0x40] sm:$0xf]
  %v35 = vld [vmem:[%s1 + $0x44] sm:$0xf]
  %v36 = vld [vmem:[%s1 + $0x48] sm:$0xf]
  %v37 = vld [vmem:[%s1 + $0x4c] sm:$0xf]
  %v38 = vld [vmem:[%s1 + $0x50] sm:$0xf]
  %v39 = vld [vmem:[%s1 + $0x54] sm:$0xf]
  %v40 = vld [vmem:[%s1 + $0x58] sm:$0xf]
  %v41 = vld [vmem:[%s1 + $0x5c] sm:$0xf]
  %v42 = vld [vmem:[%s1 + $0x60] sm:$0xf]
  %v43 = vld [vmem:[%s1 + $0x64] sm:$0xf]
  %v44 = vld [vmem:[%s1 + $0x68] sm:$0xf]
  %v45 = vld [vmem:[%s1 + $0x6c] sm:$0xf]
  %v46 = vld [vmem:[%s1 + $0x70] sm:$0xf]
  %v47 = vld [vmem:[%s1 + $0x74] sm:$0xf]
  %v48 = vld [vmem:[%s1 + $0x78] sm:$0xf]
  %v49 = vld [vmem:[%s1 + $0x7c] sm:$0xf]
  %v50 = vld [vmem:[%s1 + $0x80] sm:$0xf]
  %v51 = vld [vmem:[%s1 + $0x84] sm:$0xf]
  %v52 = vld [vmem:[%s1 + $0x88] sm:$0xf]
  %v53 = vld [vmem:[%s1 + $0x8c] sm:$0xf]
  %v54 = vld [vmem:[%s1 + $0x90] sm:$0xf]
  %v55 = vld [vmem:[%s1 + $0x94] sm:$0xf]
  %v56 = vld [vmem:[%s1 + $0x98] sm:$0xf]
  %v57 = vld [vmem:[%s1 + $0x9c] sm:$0xf]
  %v58 = vld [vmem:[%s1 + $0xa0] sm:$0xf]
  %v59 = vld [vmem:[%s1 + $0xa4] sm:$0xf]
  %v60 = vld [vmem:[%s1 + $0xa8] sm:$0xf]
  %v61 = vld [vmem:[%s1 + $0xac] sm:$0xf]
  %v62 = vld [vmem:[%s1 + $0xb0] sm:$0xf]
  %v63 = vld [vmem:[%s1 + $0xb4] sm:$0xf]
  %v64 = vld [vmem:[%s1 + $0xb8] sm:$0xf]
  %v65 = vld [vmem:[%s1 + $0xbc] sm:$0xf]
  %v66 = vld [vmem:[%s1 + $0xc0] sm:$0xf]
  %v67 = vld [vmem:[%s1 + $0xc4] sm:$0xf]
  %v68 = vld [vmem:[%s1 + $0xc8] sm:$0xf]
  %v69 = vld [vmem:[%s1 + $0xcc] sm:$0xf]
  %v70 = vld [vmem:[%s1 + $0xd0] sm:$0xf]
  %v71 = vld [vmem:[%s1 + $0xd4] sm:$0xf]
  %v72 = vld [vmem:[%s1 + $0xd8] sm:$0xf]
  %v73 = vld [vmem:[%s1 + $0xdc] sm:$0xf]
  %v74 = vld [vmem:[%s1 + $0xe0] sm:$0xf]
  %v75 = vld [vmem:[%s1 + $0xe4] sm:$0xf]
  %v76 = vld [vmem:[%s1 + $0xe8] sm:$0xf]
  %v77 = vld [vmem:[%s1 + $0xec] sm:$0xf]
  %v78 = vld [vmem:[%s1 + $0xf0] sm:$0xf]
  %v79 = vld [vmem:[%s1 + $0xf4] sm:$0xf]
  %v80 = vld [vmem:[%s1 + $0xf8] sm:$0xf]
  %v81 = vld [vmem:[%s1 + $0xfc] sm:$0xf]
  %v82 = vld [vmem:[%s1 + $0x100] sm:$0xf]
  %v83 = vld [vmem:[%s1 + $0x104] sm:$0xf]
  %v84 = vld [vmem:[%s1 + $0x108] sm:$0xf]
  %v85 = vld [vmem:[%s1 + $0x10c] sm:$0xf]
  %v86 = vld [vmem:[%s1 + $0x110] sm:$0xf]
  %v87 = vld [vmem:[%s1 + $0x114] sm:$0xf]
  %v88 = vld [vmem:[%s1 + $0x118] sm:$0xf]
  %v89 = vld [vmem:[%s1 + $0x11c] sm:$0xf]
  %v90 = vld [vmem:[%s2] sm:$0x1]
  %v92 = vlaneseq
  %v93 = vshrl.u32 %v92, 7
  %v94 = vsub.s32 0, %v93
  %v95 = vrot.slane %v90, %v94
  %v100 = vunpack.c.l.b16 %v15
  %v101 = vunpack.c.h.b16 %v15
  %v102 = vunpack.c.l.b16 %v16
  %v103 = vunpack.c.h.b16 %v16
  %v104 = vunpack.c.l.b16 %v17
  %v105 = vpack.c.b16 %v100, %v100
  %v106 = vpack.c.b16 %v101, %v101
  %v107 = vpack.c.b16 %v102, %v102
  %v108 = vpack.c.b16 %v103, %v103
  %v109 = vpack.c.b16 %v104, %v104
  %v186 = vunpack.c.l.b16 %v18
  %v187 = vunpack.c.l.b16 %v19
  %v188 = vunpack.c.l.b16 %v20
  %v189 = vunpack.c.l.b16 %v21
  %v190 = vunpack.c.l.b16 %v22
  %v191 = vunpack.c.l.b16 %v23
  %v192 = vunpack.c.l.b16 %v24
  %v193 = vunpack.c.l.b16 %v25
  %v194 = vunpack.c.l.b16 %v26
  %v195 = vunpack.c.l.b16 %v27
  %v196 = vunpack.c.l.b16 %v28
  %v197 = vunpack.c.l.b16 %v29
  %v198 = vunpack.c.l.b16 %v30
  %v199 = vunpack.c.l.b16 %v31
  %v200 = vunpack.c.l.b16 %v32
  %v201 = vunpack.c.l.b16 %v33
  %v202 = vunpack.c.l.b16 %v34
  %v203 = vunpack.c.l.b16 %v35
  %v204 = vunpack.c.l.b16 %v36
  %v205 = vunpack.c.l.b16 %v37
  %v206 = vunpack.c.l.b16 %v38
  %v207 = vunpack.c.l.b16 %v39
  %v208 = vunpack.c.l.b16 %v40
  %v209 = vunpack.c.l.b16 %v41
  %v210 = vunpack.c.l.b16 %v42
  %v211 = vunpack.c.l.b16 %v43
  %v212 = vunpack.c.l.b16 %v44
  %v213 = vunpack.c.l.b16 %v45
  %v214 = vunpack.c.l.b16 %v46
  %v215 = vunpack.c.l.b16 %v47
  %v216 = vunpack.c.l.b16 %v48
  %v217 = vunpack.c.l.b16 %v49
  %v218 = vunpack.c.l.b16 %v50
  %v219 = vunpack.c.l.b16 %v51
  %v220 = vunpack.c.l.b16 %v52
  %v221 = vunpack.c.l.b16 %v53
  %v222 = vunpack.c.l.b16 %v54
  %v223 = vunpack.c.l.b16 %v55
  %v224 = vunpack.c.l.b16 %v56
  %v225 = vunpack.c.l.b16 %v57
  %v226 = vunpack.c.l.b16 %v58
  %v227 = vunpack.c.l.b16 %v59
  %v228 = vunpack.c.l.b16 %v60
  %v229 = vunpack.c.l.b16 %v61
  %v230 = vunpack.c.l.b16 %v62
  %v231 = vunpack.c.l.b16 %v63
  %v232 = vunpack.c.l.b16 %v64
  %v233 = vunpack.c.l.b16 %v65
  %v234 = vunpack.c.l.b16 %v66
  %v235 = vunpack.c.l.b16 %v67
  %v236 = vunpack.c.l.b16 %v68
  %v237 = vunpack.c.l.b16 %v69
  %v238 = vunpack.c.l.b16 %v70
  %v239 = vunpack.c.l.b16 %v71
  %v240 = vunpack.c.l.b16 %v72
  %v241 = vunpack.c.l.b16 %v73
  %v242 = vunpack.c.l.b16 %v74
  %v243 = vunpack.c.l.b16 %v75
  %v244 = vunpack.c.l.b16 %v76
  %v245 = vunpack.c.l.b16 %v77
  %v246 = vunpack.c.l.b16 %v78
  %v247 = vunpack.c.l.b16 %v79
  %v248 = vunpack.c.l.b16 %v80
  %v249 = vunpack.c.l.b16 %v81
  %v250 = vunpack.c.l.b16 %v82
  %v251 = vunpack.c.l.b16 %v83
  %v252 = vunpack.c.l.b16 %v84
  %v253 = vunpack.c.l.b16 %v85
  %v254 = vunpack.c.l.b16 %v86
  %v255 = vunpack.c.l.b16 %v87
  %v256 = vunpack.c.l.b16 %v88
  %v257 = vunpack.c.l.b16 %v89
  %v258 = vpack.c.b16 %v187, %v186
  %v259 = vpack.c.b16 %v189, %v188
  %v260 = vpack.c.b16 %v191, %v190
  %v261 = vpack.c.b16 %v193, %v192
  %v262 = vpack.c.b16 %v195, %v194
  %v263 = vpack.c.b16 %v197, %v196
  %v264 = vpack.c.b16 %v199, %v198
  %v265 = vpack.c.b16 %v201, %v200
  %v266 = vpack.c.b16 %v203, %v202
  %v267 = vpack.c.b16 %v205, %v204
  %v268 = vpack.c.b16 %v207, %v206
  %v269 = vpack.c.b16 %v209, %v208
  %v270 = vpack.c.b16 %v211, %v210
  %v271 = vpack.c.b16 %v213, %v212
  %v272 = vpack.c.b16 %v215, %v214
  %v273 = vpack.c.b16 %v217, %v216
  %v274 = vpack.c.b16 %v219, %v218
  %v275 = vpack.c.b16 %v221, %v220
  %v276 = vpack.c.b16 %v223, %v222
  %v277 = vpack.c.b16 %v225, %v224
  %v278 = vpack.c.b16 %v227, %v226
  %v279 = vpack.c.b16 %v229, %v228
  %v280 = vpack.c.b16 %v231, %v230
  %v281 = vpack.c.b16 %v233, %v232
  %v282 = vpack.c.b16 %v235, %v234
  %v283 = vpack.c.b16 %v237, %v236
  %v284 = vpack.c.b16 %v239, %v238
  %v285 = vpack.c.b16 %v241, %v240
  %v286 = vpack.c.b16 %v243, %v242
  %v287 = vpack.c.b16 %v245, %v244
  %v288 = vpack.c.b16 %v247, %v246
  %v289 = vpack.c.b16 %v249, %v248
  %v290 = vpack.c.b16 %v251, %v250
  %v291 = vpack.c.b16 %v253, %v252
  %v292 = vpack.c.b16 %v255, %v254
  %v293 = vpack.c.b16 %v257, %v256
  %vm330 = vcmask 523264
  %v332 = vsel %vm330, %v109, 0
  %334 = vmatprep.subr.bf16.mxu0 0
  %335 = vmatpush1.bf16.msra.mxu0 %v258
  %336 = vmatprep.subr.bf16.mxu0 0
  %337 = vmatpush1.bf16.msra.mxu0 %v259
  %338 = vmatprep.subr.bf16.mxu0 0
  %339 = vmatpush1.bf16.msra.mxu0 %v260
  %340 = vmatprep.subr.bf16.mxu0 0
  %341 = vmatpush1.bf16.msra.mxu0 %v261
  %342 = vmatprep.subr.bf16.mxu0 0
  %343 = vmatpush1.bf16.msra.mxu0 %v262
  %344 = vmatprep.subr.bf16.mxu0 0
  %345 = vmatpush1.bf16.msra.mxu0 %v263
  %346 = vmatprep.subr.bf16.mxu0 0
  %347 = vmatpush1.bf16.msra.mxu0 %v264
  %348 = vmatprep.subr.bf16.mxu0 0
  %349 = vmatpush1.bf16.msra.mxu0 %v265
  %350 = vmatprep.subr.bf16.mxu0 0
  %351 = vmatpush1.bf16.msra.mxu0 %v266
  %352 = vmatprep.subr.bf16.mxu0 0
  %353 = vmatpush1.bf16.msra.mxu0 %v267
  %354 = vmatprep.subr.bf16.mxu0 0
  %355 = vmatpush1.bf16.msra.mxu0 %v268
  %356 = vmatprep.subr.bf16.mxu0 0
  %357 = vmatpush1.bf16.msra.mxu0 %v269
  %358 = vmatprep.subr.bf16.mxu0 0
  %359 = vmatpush1.bf16.msra.mxu0 %v270
  %360 = vmatprep.subr.bf16.mxu0 0
  %361 = vmatpush1.bf16.msra.mxu0 %v271
  %362 = vmatprep.subr.bf16.mxu0 0
  %363 = vmatpush1.bf16.msra.mxu0 %v272
  %364 = vmatprep.subr.bf16.mxu0 0
  %365 = vmatpush1.bf16.msra.mxu0 %v273
  %366 = vmatprep.mubr.bf16.mxu0 %v106
  %367 = vmatmul.mubr.bf16.gmra.mrb[0].mxu0 %v105
  %v368 = vpop.f32.mrb[0].mxu0
  %v369 = vadd.f32 %v95, %v368
  %v370 = vpop.f32.mrb[0].mxu0
  %v371 = vpop.f32.mrb[0].mxu0
  %v372 = vpop.f32.mrb[0].mxu0
  %373 = vdwg.mxu0
  %374 = vmatprep.subr.bf16.mxu0 0
  %375 = vmatpush1.bf16.msra.mxu0 %v274
  %376 = vmatprep.subr.bf16.mxu0 0
  %377 = vmatpush1.bf16.msra.mxu0 %v275
  %378 = vmatprep.subr.bf16.mxu0 0
  %379 = vmatpush1.bf16.msra.mxu0 %v276
  %380 = vmatprep.subr.bf16.mxu0 0
  %381 = vmatpush1.bf16.msra.mxu0 %v277
  %382 = vmatprep.subr.bf16.mxu0 0
  %383 = vmatpush1.bf16.msra.mxu0 %v278
  %384 = vmatprep.subr.bf16.mxu0 0
  %385 = vmatpush1.bf16.msra.mxu0 %v279
  %386 = vmatprep.subr.bf16.mxu0 0
  %387 = vmatpush1.bf16.msra.mxu0 %v280
  %388 = vmatprep.subr.bf16.mxu0 0
  %389 = vmatpush1.bf16.msra.mxu0 %v281
  %390 = vmatprep.subr.bf16.mxu0 0
  %391 = vmatpush1.bf16.msra.mxu0 %v282
  %392 = vmatprep.subr.bf16.mxu0 0
  %393 = vmatpush1.bf16.msra.mxu0 %v283
  %394 = vmatprep.subr.bf16.mxu0 0
  %395 = vmatpush1.bf16.msra.mxu0 %v284
  %396 = vmatprep.subr.bf16.mxu0 0
  %397 = vmatpush1.bf16.msra.mxu0 %v285
  %398 = vmatprep.subr.bf16.mxu0 0
  %399 = vmatpush1.bf16.msra.mxu0 %v286
  %400 = vmatprep.subr.bf16.mxu0 0
  %401 = vmatpush1.bf16.msra.mxu0 %v287
  %402 = vmatprep.subr.bf16.mxu0 0
  %403 = vmatpush1.bf16.msra.mxu0 %v288
  %404 = vmatprep.subr.bf16.mxu0 0
  %405 = vmatpush1.bf16.msra.mxu0 %v289
  %406 = vmatprep.mubr.bf16.mxu0 %v108
  %407 = vmatmul.mubr.bf16.gmra.mrb[0].mxu0 %v107
  %v408 = vpop.f32.mrb[0].mxu0
  %v409 = vadd.f32 %v369, %v408
  %v410 = vpop.f32.mrb[0].mxu0
  %v411 = vpop.f32.mrb[0].mxu0
  %v412 = vpop.f32.mrb[0].mxu0
  %413 = vdwg.mxu0
  %414 = vmatprep.subr.bf16.mxu0 0
  %415 = vmatpush1.bf16.msra.mxu0 %v290
  %416 = vmatprep.subr.bf16.mxu0 0
  %417 = vmatpush1.bf16.msra.mxu0 %v291
  %418 = vmatprep.subr.bf16.mxu0 0
  %419 = vmatpush1.bf16.msra.mxu0 %v292
  %420 = vmatprep.subr.bf16.mxu0 0
  %421 = vmatpush1.bf16.msra.mxu0 %v293
  %422 = vmatprep.subr.bf16.mxu0 0
  %423 = vmatpush1.bf16.msra.mxu0 0
  %424 = vmatprep.subr.bf16.mxu0 0
  %425 = vmatpush1.bf16.msra.mxu0 0
  %426 = vmatprep.subr.bf16.mxu0 0
  %427 = vmatpush1.bf16.msra.mxu0 0
  %428 = vmatprep.subr.bf16.mxu0 0
  %429 = vmatpush1.bf16.msra.mxu0 0
  %430 = vmatprep.subr.bf16.mxu0 0
  %431 = vmatpush1.bf16.msra.mxu0 0
  %432 = vmatprep.subr.bf16.mxu0 0
  %433 = vmatpush1.bf16.msra.mxu0 0
  %434 = vmatprep.subr.bf16.mxu0 0
  %435 = vmatpush1.bf16.msra.mxu0 0
  %436 = vmatprep.subr.bf16.mxu0 0
  %437 = vmatpush1.bf16.msra.mxu0 0
  %438 = vmatprep.subr.bf16.mxu0 0
  %439 = vmatpush1.bf16.msra.mxu0 0
  %440 = vmatprep.subr.bf16.mxu0 0
  %441 = vmatpush1.bf16.msra.mxu0 0
  %442 = vmatprep.subr.bf16.mxu0 0
  %443 = vmatpush1.bf16.msra.mxu0 0
  %444 = vmatprep.subr.bf16.mxu0 0
  %445 = vmatpush1.bf16.msra.mxu0 0
  %446 = vmatprep.mubr.bf16.mxu0 0
  %447 = vmatmul.mubr.bf16.gmra.mrb[0].mxu0 %v332
  %v448 = vpop.f32.mrb[0].mxu0
  %v449 = vadd.f32 %v409, %v448
  %v450 = vpop.f32.mrb[0].mxu0
  %v451 = vpop.f32.mrb[0].mxu0
  %v452 = vpop.f32.mrb[0].mxu0
  %453 = vdwg.mxu0
  %v454 = vmax.f32 %v449, 0.0
  %455 = vst [vmem:[%s3] sm:$0xff] %v454
  // Predicated region
  $region14: #{maunet_forward.29} parent=0 // pred_check
    _
  $region15: #{maunet_forward.29} parent=0 // pred_check_branch
    %457 = sbr.rel (0) target = $region17
  $region16: #{maunet_forward.29} parent=0 // pred_region
    _
  $region17: #{maunet_forward.29} parent=0 // pred_fallthru
    _
  // Predicated region
  $region18: #{maunet_forward.29} parent=0 // pred_check
    _
  $region19: #{maunet_forward.29} parent=0 // pred_check_branch
    %459 = sbr.rel (0) target = $region21
  $region20: #{maunet_forward.29} parent=0 // pred_region
    _
  $region21: #{maunet_forward.29} parent=0 // pred_fallthru
    _

// kernel: maunet_forward.32
$region0: #{maunet_forward.32}
  #allocation0 [shape = 'u32[]', space=smem, size = 0x4, offset = 0x4, fixed_abs, tag = 'smem constant byte address 0x4 - core index']
  #allocation1 [shape = 'u32[144,128]{1,0:T(1,128)}', space=vmem, size = 0x12000, scoped, tag = 'internal scratch']
  %s0 = inlined_call_operand.vmem [shape: bf16[2,128], index: 0, kind: input, shape index: {}]
  %s1 = inlined_call_operand.vmem [shape: bf16[128,128], index: 1, kind: input, shape index: {}]
  %s2 = inlined_call_operand.vmem [shape: f32[1,128], index: 2, kind: input, shape index: {}]
  %s3 = inlined_call_operand.vmem [shape: f32[2,128], index: 3, kind: output, shape index: {}]
  %s4 = sld [smem:[#allocation0]]
  $region22: #{maunet_forward.32} parent=0
    _
  %s6 = ssub.s32 1, %s4
  %s7 = scalar_select 0, %s6, %s4
  // Predicated region
  $region2: #{maunet_forward.32} parent=0 // pred_check
    _
  $region3: #{maunet_forward.32} parent=0 // pred_check_branch
    %9 = sbr.rel (0) target = $region5
  $region4: #{maunet_forward.32} parent=0 // pred_region
    _
  $region5: #{maunet_forward.32} parent=0 // pred_fallthru
    _
  // Predicated region
  $region6: #{maunet_forward.32} parent=0 // pred_check
    _
  $region7: #{maunet_forward.32} parent=0 // pred_check_branch
    %11 = sbr.rel (0) target = $region9
  $region8: #{maunet_forward.32} parent=0 // pred_region
    _
  $region9: #{maunet_forward.32} parent=0 // pred_fallthru
    _
  // Predicated region
  $region10: #{maunet_forward.32} parent=0 // pred_check
    _
  $region11: #{maunet_forward.32} parent=0 // pred_check_branch
    %13 = sbr.rel (0) target = $region13
  $region12: #{maunet_forward.32} parent=0 // pred_region
    _
  $region13: #{maunet_forward.32} parent=0 // pred_fallthru
    _
  %v15 = vld [vmem:[%s0] sm:$0x1]
  %v16 = vld [vmem:[%s1] sm:$0xf]
  %v17 = vld [vmem:[%s1 + $0x4] sm:$0xf]
  %v18 = vld [vmem:[%s1 + $0x8] sm:$0xf]
  %v19 = vld [vmem:[%s1 + $0xc] sm:$0xf]
  %v20 = vld [vmem:[%s1 + $0x10] sm:$0xf]
  %v21 = vld [vmem:[%s1 + $0x14] sm:$0xf]
  %v22 = vld [vmem:[%s1 + $0x18] sm:$0xf]
  %v23 = vld [vmem:[%s1 + $0x1c] sm:$0xf]
  %v24 = vld [vmem:[%s1 + $0x20] sm:$0xf]
  %v25 = vld [vmem:[%s1 + $0x24] sm:$0xf]
  %v26 = vld [vmem:[%s1 + $0x28] sm:$0xf]
  %v27 = vld [vmem:[%s1 + $0x2c] sm:$0xf]
  %v28 = vld [vmem:[%s1 + $0x30] sm:$0xf]
  %v29 = vld [vmem:[%s1 + $0x34] sm:$0xf]
  %v30 = vld [vmem:[%s1 + $0x38] sm:$0xf]
  %v31 = vld [vmem:[%s1 + $0x3c] sm:$0xf]
  %v32 = vld [vmem:[%s2] sm:$0x1]
  %v34 = vlaneseq
  %v35 = vshrl.u32 %v34, 7
  %v36 = vsub.s32 0, %v35
  %v37 = vrot.slane %v32, %v36
  %v55 = vunpack.c.l.b16 %v16
  %v56 = vunpack.c.l.b16 %v17
  %v57 = vunpack.c.l.b16 %v18
  %v58 = vunpack.c.l.b16 %v19
  %v59 = vunpack.c.l.b16 %v20
  %v60 = vunpack.c.l.b16 %v21
  %v61 = vunpack.c.l.b16 %v22
  %v62 = vunpack.c.l.b16 %v23
  %v63 = vunpack.c.l.b16 %v24
  %v64 = vunpack.c.l.b16 %v25
  %v65 = vunpack.c.l.b16 %v26
  %v66 = vunpack.c.l.b16 %v27
  %v67 = vunpack.c.l.b16 %v28
  %v68 = vunpack.c.l.b16 %v29
  %v69 = vunpack.c.l.b16 %v30
  %v70 = vunpack.c.l.b16 %v31
  %v71 = vpack.c.b16 %v56, %v55
  %v72 = vpack.c.b16 %v58, %v57
  %v73 = vpack.c.b16 %v60, %v59
  %v74 = vpack.c.b16 %v62, %v61
  %v75 = vpack.c.b16 %v64, %v63
  %v76 = vpack.c.b16 %v66, %v65
  %v77 = vpack.c.b16 %v68, %v67
  %v78 = vpack.c.b16 %v70, %v69
  %87 = vmatprep.subr.bf16.mxu0 0
  %88 = vmatpush1.bf16.msra.mxu0 %v71
  %89 = vmatprep.subr.bf16.mxu0 0
  %90 = vmatpush1.bf16.msra.mxu0 %v72
  %91 = vmatprep.subr.bf16.mxu0 0
  %92 = vmatpush1.bf16.msra.mxu0 %v73
  %93 = vmatprep.subr.bf16.mxu0 0
  %94 = vmatpush1.bf16.msra.mxu0 %v74
  %95 = vmatprep.subr.bf16.mxu0 0
  %96 = vmatpush1.bf16.msra.mxu0 %v75
  %97 = vmatprep.subr.bf16.mxu0 0
  %98 = vmatpush1.bf16.msra.mxu0 %v76
  %99 = vmatprep.subr.bf16.mxu0 0
  %100 = vmatpush1.bf16.msra.mxu0 %v77
  %101 = vmatprep.subr.bf16.mxu0 0
  %102 = vmatpush1.bf16.msra.mxu0 %v78
  %103 = vmatprep.subr.bf16.mxu0 0
  %104 = vmatpush1.bf16.msra.mxu0 0
  %105 = vmatprep.subr.bf16.mxu0 0
  %106 = vmatpush1.bf16.msra.mxu0 0
  %107 = vmatprep.subr.bf16.mxu0 0
  %108 = vmatpush1.bf16.msra.mxu0 0
  %109 = vmatprep.subr.bf16.mxu0 0
  %110 = vmatpush1.bf16.msra.mxu0 0
  %111 = vmatprep.subr.bf16.mxu0 0
  %112 = vmatpush1.bf16.msra.mxu0 0
  %113 = vmatprep.subr.bf16.mxu0 0
  %114 = vmatpush1.bf16.msra.mxu0 0
  %115 = vmatprep.subr.bf16.mxu0 0
  %116 = vmatpush1.bf16.msra.mxu0 0
  %117 = vmatprep.subr.bf16.mxu0 0
  %118 = vmatpush1.bf16.msra.mxu0 0
  %119 = vmatprep.mubr.bf16.mxu0 0
  %120 = vmatmul.mubr.bf16.gmra.mrb[0].mxu0 %v15
  %v121 = vpop.f32.mrb[0].mxu0
  %v122 = vadd.f32 %v37, %v121
  %v123 = vpop.f32.mrb[0].mxu0
  %v124 = vpop.f32.mrb[0].mxu0
  %v125 = vpop.f32.mrb[0].mxu0
  %126 = vdwg.mxu0
  %v127 = vmul.f32 %v122, 0.5
  %v128 = vxor.u32 %v127, 2147483648
  %v129 = vmul.f32 %v128, 1.442695
  %v130 = vpow.pop %v129
  %v131 = vadd.f32 %v130, 1.0
  %v132 = vrcp.pop %v131
  %v133 = vmul.f32 1.0, %v132
  %134 = vst [vmem:[%s3] sm:$0x3] %v133
  // Predicated region
  $region14: #{maunet_forward.32} parent=0 // pred_check
    _
  $region15: #{maunet_forward.32} parent=0 // pred_check_branch
    %136 = sbr.rel (0) target = $region17
  $region16: #{maunet_forward.32} parent=0 // pred_region
    _
  $region17: #{maunet_forward.32} parent=0 // pred_fallthru
    _
  // Predicated region
  $region18: #{maunet_forward.32} parent=0 // pred_check
    _
  $region19: #{maunet_forward.32} parent=0 // pred_check_branch
    %138 = sbr.rel (0) target = $region21
  $region20: #{maunet_forward.32} parent=0 // pred_region
    _
  $region21: #{maunet_forward.32} parent=0 // pred_fallthru
    _

// kernel: maunet_forward.30
$region0: #{maunet_forward.30}
  #allocation0 [shape = 'u32[]', space=smem, size = 0x4, offset = 0x4, fixed_abs, tag = 'smem constant byte address 0x4 - core index']
  #allocation1 [shape = 'u32[144,128]{1,0:T(1,128)}', space=vmem, size = 0x12000, scoped, tag = 'internal scratch']
  %s0 = inlined_call_operand.vmem [shape: bf16[2,576], index: 0, kind: input, shape index: {}]
  %s1 = inlined_call_operand.vmem [shape: bf16[576,128], index: 1, kind: input, shape index: {}]
  %s2 = inlined_call_operand.vmem [shape: f32[1,128], index: 2, kind: input, shape index: {}]
  %s3 = inlined_call_operand.vmem [shape: f32[2,128], index: 3, kind: output, shape index: {}]
  %s4 = sld [smem:[#allocation0]]
  $region22: #{maunet_forward.30} parent=0
    _
  %s6 = ssub.s32 1, %s4
  %s7 = scalar_select 0, %s6, %s4
  // Predicated region
  $region2: #{maunet_forward.30} parent=0 // pred_check
    _
  $region3: #{maunet_forward.30} parent=0 // pred_check_branch
    %9 = sbr.rel (0) target = $region5
  $region4: #{maunet_forward.30} parent=0 // pred_region
    _
  $region5: #{maunet_forward.30} parent=0 // pred_fallthru
    _
  // Predicated region
  $region6: #{maunet_forward.30} parent=0 // pred_check
    _
  $region7: #{maunet_forward.30} parent=0 // pred_check_branch
    %11 = sbr.rel (0) target = $region9
  $region8: #{maunet_forward.30} parent=0 // pred_region
    _
  $region9: #{maunet_forward.30} parent=0 // pred_fallthru
    _
  // Predicated region
  $region10: #{maunet_forward.30} parent=0 // pred_check
    _
  $region11: #{maunet_forward.30} parent=0 // pred_check_branch
    %13 = sbr.rel (0) target = $region13
  $region12: #{maunet_forward.30} parent=0 // pred_region
    _
  $region13: #{maunet_forward.30} parent=0 // pred_fallthru
    _
  %v15 = vld [vmem:[%s0] sm:$0x1f]
  %v16 = vld [vmem:[%s1] sm:$0xf]
  %v17 = vld [vmem:[%s1 + $0x4] sm:$0xf]
  %v18 = vld [vmem:[%s1 + $0x8] sm:$0xf]
  %v19 = vld [vmem:[%s1 + $0xc] sm:$0xf]
  %v20 = vld [vmem:[%s1 + $0x10] sm:$0xf]
  %v21 = vld [vmem:[%s1 + $0x14] sm:$0xf]
  %v22 = vld [vmem:[%s1 + $0x18] sm:$0xf]
  %v23 = vld [vmem:[%s1 + $0x1c] sm:$0xf]
  %v24 = vld [vmem:[%s1 + $0x20] sm:$0xf]
  %v25 = vld [vmem:[%s1 + $0x24] sm:$0xf]
  %v26 = vld [vmem:[%s1 + $0x28] sm:$0xf]
  %v27 = vld [vmem:[%s1 + $0x2c] sm:$0xf]
  %v28 = vld [vmem:[%s1 + $0x30] sm:$0xf]
  %v29 = vld [vmem:[%s1 + $0x34] sm:$0xf]
  %v30 = vld [vmem:[%s1 + $0x38] sm:$0xf]
  %v31 = vld [vmem:[%s1 + $0x3c] sm:$0xf]
  %v32 = vld [vmem:[%s1 + $0x40] sm:$0xf]
  %v33 = vld [vmem:[%s1 + $0x44] sm:$0xf]
  %v34 = vld [vmem:[%s1 + $0x48] sm:$0xf]
  %v35 = vld [vmem:[%s1 + $0x4c] sm:$0xf]
  %v36 = vld [vmem:[%s1 + $0x50] sm:$0xf]
  %v37 = vld [vmem:[%s1 + $0x54] sm:$0xf]
  %v38 = vld [vmem:[%s1 + $0x58] sm:$0xf]
  %v39 = vld [vmem:[%s1 + $0x5c] sm:$0xf]
  %v40 = vld [vmem:[%s1 + $0x60] sm:$0xf]
  %v41 = vld [vmem:[%s1 + $0x64] sm:$0xf]
  %v42 = vld [vmem:[%s1 + $0x68] sm:$0xf]
  %v43 = vld [vmem:[%s1 + $0x6c] sm:$0xf]
  %v44 = vld [vmem:[%s1 + $0x70] sm:$0xf]
  %v45 = vld [vmem:[%s1 + $0x74] sm:$0xf]
  %v46 = vld [vmem:[%s1 + $0x78] sm:$0xf]
  %v47 = vld [vmem:[%s1 + $0x7c] sm:$0xf]
  %v48 = vld [vmem:[%s1 + $0x80] sm:$0xf]
  %v49 = vld [vmem:[%s1 + $0x84] sm:$0xf]
  %v50 = vld [vmem:[%s1 + $0x88] sm:$0xf]
  %v51 = vld [vmem:[%s1 + $0x8c] sm:$0xf]
  %v52 = vld [vmem:[%s1 + $0x90] sm:$0xf]
  %v53 = vld [vmem:[%s1 + $0x94] sm:$0xf]
  %v54 = vld [vmem:[%s1 + $0x98] sm:$0xf]
  %v55 = vld [vmem:[%s1 + $0x9c] sm:$0xf]
  %v56 = vld [vmem:[%s1 + $0xa0] sm:$0xf]
  %v57 = vld [vmem:[%s1 + $0xa4] sm:$0xf]
  %v58 = vld [vmem:[%s1 + $0xa8] sm:$0xf]
  %v59 = vld [vmem:[%s1 + $0xac] sm:$0xf]
  %v60 = vld [vmem:[%s1 + $0xb0] sm:$0xf]
  %v61 = vld [vmem:[%s1 + $0xb4] sm:$0xf]
  %v62 = vld [vmem:[%s1 + $0xb8] sm:$0xf]
  %v63 = vld [vmem:[%s1 + $0xbc] sm:$0xf]
  %v64 = vld [vmem:[%s1 + $0xc0] sm:$0xf]
  %v65 = vld [vmem:[%s1 + $0xc4] sm:$0xf]
  %v66 = vld [vmem:[%s1 + $0xc8] sm:$0xf]
  %v67 = vld [vmem:[%s1 + $0xcc] sm:$0xf]
  %v68 = vld [vmem:[%s1 + $0xd0] sm:$0xf]
  %v69 = vld [vmem:[%s1 + $0xd4] sm:$0xf]
  %v70 = vld [vmem:[%s1 + $0xd8] sm:$0xf]
  %v71 = vld [vmem:[%s1 + $0xdc] sm:$0xf]
  %v72 = vld [vmem:[%s1 + $0xe0] sm:$0xf]
  %v73 = vld [vmem:[%s1 + $0xe4] sm:$0xf]
  %v74 = vld [vmem:[%s1 + $0xe8] sm:$0xf]
  %v75 = vld [vmem:[%s1 + $0xec] sm:$0xf]
  %v76 = vld [vmem:[%s1 + $0xf0] sm:$0xf]
  %v77 = vld [vmem:[%s1 + $0xf4] sm:$0xf]
  %v78 = vld [vmem:[%s1 + $0xf8] sm:$0xf]
  %v79 = vld [vmem:[%s1 + $0xfc] sm:$0xf]
  %v80 = vld [vmem:[%s1 + $0x100] sm:$0xf]
  %v81 = vld [vmem:[%s1 + $0x104] sm:$0xf]
  %v82 = vld [vmem:[%s1 + $0x108] sm:$0xf]
  %v83 = vld [vmem:[%s1 + $0x10c] sm:$0xf]
  %v84 = vld [vmem:[%s1 + $0x110] sm:$0xf]
  %v85 = vld [vmem:[%s1 + $0x114] sm:$0xf]
  %v86 = vld [vmem:[%s1 + $0x118] sm:$0xf]
  %v87 = vld [vmem:[%s1 + $0x11c] sm:$0xf]
  %v88 = vld [vmem:[%s2] sm:$0x1]
  %v90 = vlaneseq
  %v91 = vshrl.u32 %v90, 7
  %v92 = vsub.s32 0, %v91
  %v93 = vrot.slane %v88, %v92
  %v96 = vcombine.high %v15, %v15
  %v98 = vunpack.c.l.s4 1966171168
  %v99 = vunpack.c.0.s8 %v98
  %v100 = vlaneseq
  %v101 = vshrl.u32 %v100, 7
  %v102 = vsub.s32 %v99, %v101
  %v103 = vrot.slane %v15, %v102
  %v105 = vunpack.c.l.s4 1966171168
  %v106 = vunpack.c.0.s8 %v105
  %v107 = vlaneseq
  %v108 = vshrl.u32 %v107, 7
  %v109 = vsub.s32 %v106, %v108
  %v110 = vrot.slane %v96, %v109
  %v111 = vcombine.high %v103, %v103
  %v113 = vunpack.c.l.s4 1966171168
  %v114 = vunpack.c.0.s8 %v113
  %v115 = vlaneseq
  %v116 = vshrl.u32 %v115, 7
  %v117 = vsub.s32 %v114, %v116
  %v118 = vrot.slane %v103, %v117
  %v120 = vunpack.c.l.s4 1966171168
  %v121 = vunpack.c.0.s8 %v120
  %v122 = vlaneseq
  %v123 = vshrl.u32 %v122, 7
  %v124 = vsub.s32 %v121, %v123
  %v125 = vrot.slane %v110, %v124
  %v127 = vunpack.c.l.s4 1966171168
  %v128 = vunpack.c.0.s8 %v127
  %v129 = vlaneseq
  %v130 = vshrl.u32 %v129, 7
  %v131 = vsub.s32 %v128, %v130
  %v132 = vrot.slane %v111, %v131
  %v133 = vcombine.high %v118, %v118
  %v134 = vcombine.high %v132, %v132
  %v211 = vunpack.c.l.b16 %v16
  %v212 = vunpack.c.l.b16 %v17
  %v213 = vunpack.c.l.b16 %v18
  %v214 = vunpack.c.l.b16 %v19
  %v215 = vunpack.c.l.b16 %v20
  %v216 = vunpack.c.l.b16 %v21
  %v217 = vunpack.c.l.b16 %v22
  %v218 = vunpack.c.l.b16 %v23
  %v219 = vunpack.c.l.b16 %v24
  %v220 = vunpack.c.l.b16 %v25
  %v221 = vunpack.c.l.b16 %v26
  %v222 = vunpack.c.l.b16 %v27
  %v223 = vunpack.c.l.b16 %v28
  %v224 = vunpack.c.l.b16 %v29
  %v225 = vunpack.c.l.b16 %v30
  %v226 = vunpack.c.l.b16 %v31
  %v227 = vunpack.c.l.b16 %v32
  %v228 = vunpack.c.l.b16 %v33
  %v229 = vunpack.c.l.b16 %v34
  %v230 = vunpack.c.l.b16 %v35
  %v231 = vunpack.c.l.b16 %v36
  %v232 = vunpack.c.l.b16 %v37
  %v233 = vunpack.c.l.b16 %v38
  %v234 = vunpack.c.l.b16 %v39
  %v235 = vunpack.c.l.b16 %v40
  %v236 = vunpack.c.l.b16 %v41
  %v237 = vunpack.c.l.b16 %v42
  %v238 = vunpack.c.l.b16 %v43
  %v239 = vunpack.c.l.b16 %v44
  %v240 = vunpack.c.l.b16 %v45
  %v241 = vunpack.c.l.b16 %v46
  %v242 = vunpack.c.l.b16 %v47
  %v243 = vunpack.c.l.b16 %v48
  %v244 = vunpack.c.l.b16 %v49
  %v245 = vunpack.c.l.b16 %v50
  %v246 = vunpack.c.l.b16 %v51
  %v247 = vunpack.c.l.b16 %v52
  %v248 = vunpack.c.l.b16 %v53
  %v249 = vunpack.c.l.b16 %v54
  %v250 = vunpack.c.l.b16 %v55
  %v251 = vunpack.c.l.b16 %v56
  %v252 = vunpack.c.l.b16 %v57
  %v253 = vunpack.c.l.b16 %v58
  %v254 = vunpack.c.l.b16 %v59
  %v255 = vunpack.c.l.b16 %v60
  %v256 = vunpack.c.l.b16 %v61
  %v257 = vunpack.c.l.b16 %v62
  %v258 = vunpack.c.l.b16 %v63
  %v259 = vunpack.c.l.b16 %v64
  %v260 = vunpack.c.l.b16 %v65
  %v261 = vunpack.c.l.b16 %v66
  %v262 = vunpack.c.l.b16 %v67
  %v263 = vunpack.c.l.b16 %v68
  %v264 = vunpack.c.l.b16 %v69
  %v265 = vunpack.c.l.b16 %v70
  %v266 = vunpack.c.l.b16 %v71
  %v267 = vunpack.c.l.b16 %v72
  %v268 = vunpack.c.l.b16 %v73
  %v269 = vunpack.c.l.b16 %v74
  %v270 = vunpack.c.l.b16 %v75
  %v271 = vunpack.c.l.b16 %v76
  %v272 = vunpack.c.l.b16 %v77
  %v273 = vunpack.c.l.b16 %v78
  %v274 = vunpack.c.l.b16 %v79
  %v275 = vunpack.c.l.b16 %v80
  %v276 = vunpack.c.l.b16 %v81
  %v277 = vunpack.c.l.b16 %v82
  %v278 = vunpack.c.l.b16 %v83
  %v279 = vunpack.c.l.b16 %v84
  %v280 = vunpack.c.l.b16 %v85
  %v281 = vunpack.c.l.b16 %v86
  %v282 = vunpack.c.l.b16 %v87
  %v283 = vpack.c.b16 %v212, %v211
  %v284 = vpack.c.b16 %v214, %v213
  %v285 = vpack.c.b16 %v216, %v215
  %v286 = vpack.c.b16 %v218, %v217
  %v287 = vpack.c.b16 %v220, %v219
  %v288 = vpack.c.b16 %v222, %v221
  %v289 = vpack.c.b16 %v224, %v223
  %v290 = vpack.c.b16 %v226, %v225
  %v291 = vpack.c.b16 %v228, %v227
  %v292 = vpack.c.b16 %v230, %v229
  %v293 = vpack.c.b16 %v232, %v231
  %v294 = vpack.c.b16 %v234, %v233
  %v295 = vpack.c.b16 %v236, %v235
  %v296 = vpack.c.b16 %v238, %v237
  %v297 = vpack.c.b16 %v240, %v239
  %v298 = vpack.c.b16 %v242, %v241
  %v299 = vpack.c.b16 %v244, %v243
  %v300 = vpack.c.b16 %v246, %v245
  %v301 = vpack.c.b16 %v248, %v247
  %v302 = vpack.c.b16 %v250, %v249
  %v303 = vpack.c.b16 %v252, %v251
  %v304 = vpack.c.b16 %v254, %v253
  %v305 = vpack.c.b16 %v256, %v255
  %v306 = vpack.c.b16 %v258, %v257
  %v307 = vpack.c.b16 %v260, %v259
  %v308 = vpack.c.b16 %v262, %v261
  %v309 = vpack.c.b16 %v264, %v263
  %v310 = vpack.c.b16 %v266, %v265
  %v311 = vpack.c.b16 %v268, %v267
  %v312 = vpack.c.b16 %v270, %v269
  %v313 = vpack.c.b16 %v272, %v271
  %v314 = vpack.c.b16 %v274, %v273
  %v315 = vpack.c.b16 %v276, %v275
  %v316 = vpack.c.b16 %v278, %v277
  %v317 = vpack.c.b16 %v280, %v279
  %v318 = vpack.c.b16 %v282, %v281
  %vm355 = vcmask 523264
  %v357 = vsel %vm355, %v125, 0
  %359 = vmatprep.subr.bf16.mxu0 0
  %360 = vmatpush1.bf16.msra.mxu0 %v283
  %361 = vmatprep.subr.bf16.mxu0 0
  %362 = vmatpush1.bf16.msra.mxu0 %v284
  %363 = vmatprep.subr.bf16.mxu0 0
  %364 = vmatpush1.bf16.msra.mxu0 %v285
  %365 = vmatprep.subr.bf16.mxu0 0
  %366 = vmatpush1.bf16.msra.mxu0 %v286
  %367 = vmatprep.subr.bf16.mxu0 0
  %368 = vmatpush1.bf16.msra.mxu0 %v287
  %369 = vmatprep.subr.bf16.mxu0 0
  %370 = vmatpush1.bf16.msra.mxu0 %v288
  %371 = vmatprep.subr.bf16.mxu0 0
  %372 = vmatpush1.bf16.msra.mxu0 %v289
  %373 = vmatprep.subr.bf16.mxu0 0
  %374 = vmatpush1.bf16.msra.mxu0 %v290
  %375 = vmatprep.subr.bf16.mxu0 0
  %376 = vmatpush1.bf16.msra.mxu0 %v291
  %377 = vmatprep.subr.bf16.mxu0 0
  %378 = vmatpush1.bf16.msra.mxu0 %v292
  %379 = vmatprep.subr.bf16.mxu0 0
  %380 = vmatpush1.bf16.msra.mxu0 %v293
  %381 = vmatprep.subr.bf16.mxu0 0
  %382 = vmatpush1.bf16.msra.mxu0 %v294
  %383 = vmatprep.subr.bf16.mxu0 0
  %384 = vmatpush1.bf16.msra.mxu0 %v295
  %385 = vmatprep.subr.bf16.mxu0 0
  %386 = vmatpush1.bf16.msra.mxu0 %v296
  %387 = vmatprep.subr.bf16.mxu0 0
  %388 = vmatpush1.bf16.msra.mxu0 %v297
  %389 = vmatprep.subr.bf16.mxu0 0
  %390 = vmatpush1.bf16.msra.mxu0 %v298
  %391 = vmatprep.mubr.bf16.mxu0 %v132
  %392 = vmatmul.mubr.bf16.gmra.mrb[0].mxu0 %v118
  %v393 = vpop.f32.mrb[0].mxu0
  %v394 = vadd.f32 %v93, %v393
  %v395 = vpop.f32.mrb[0].mxu0
  %v396 = vpop.f32.mrb[0].mxu0
  %v397 = vpop.f32.mrb[0].mxu0
  %398 = vdwg.mxu0
  %399 = vmatprep.subr.bf16.mxu0 0
  %400 = vmatpush1.bf16.msra.mxu0 %v299
  %401 = vmatprep.subr.bf16.mxu0 0
  %402 = vmatpush1.bf16.msra.mxu0 %v300
  %403 = vmatprep.subr.bf16.mxu0 0
  %404 = vmatpush1.bf16.msra.mxu0 %v301
  %405 = vmatprep.subr.bf16.mxu0 0
  %406 = vmatpush1.bf16.msra.mxu0 %v302
  %407 = vmatprep.subr.bf16.mxu0 0
  %408 = vmatpush1.bf16.msra.mxu0 %v303
  %409 = vmatprep.subr.bf16.mxu0 0
  %410 = vmatpush1.bf16.msra.mxu0 %v304
  %411 = vmatprep.subr.bf16.mxu0 0
  %412 = vmatpush1.bf16.msra.mxu0 %v305
  %413 = vmatprep.subr.bf16.mxu0 0
  %414 = vmatpush1.bf16.msra.mxu0 %v306
  %415 = vmatprep.subr.bf16.mxu0 0
  %416 = vmatpush1.bf16.msra.mxu0 %v307
  %417 = vmatprep.subr.bf16.mxu0 0
  %418 = vmatpush1.bf16.msra.mxu0 %v308
  %419 = vmatprep.subr.bf16.mxu0 0
  %420 = vmatpush1.bf16.msra.mxu0 %v309
  %421 = vmatprep.subr.bf16.mxu0 0
  %422 = vmatpush1.bf16.msra.mxu0 %v310
  %423 = vmatprep.subr.bf16.mxu0 0
  %424 = vmatpush1.bf16.msra.mxu0 %v311
  %425 = vmatprep.subr.bf16.mxu0 0
  %426 = vmatpush1.bf16.msra.mxu0 %v312
  %427 = vmatprep.subr.bf16.mxu0 0
  %428 = vmatpush1.bf16.msra.mxu0 %v313
  %429 = vmatprep.subr.bf16.mxu0 0
  %430 = vmatpush1.bf16.msra.mxu0 %v314
  %431 = vmatprep.mubr.bf16.mxu0 %v134
  %432 = vmatmul.mubr.bf16.gmra.mrb[0].mxu0 %v133
  %v433 = vpop.f32.mrb[0].mxu0
  %v434 = vadd.f32 %v394, %v433
  %v435 = vpop.f32.mrb[0].mxu0
  %v436 = vpop.f32.mrb[0].mxu0
  %v437 = vpop.f32.mrb[0].mxu0
  %438 = vdwg.mxu0
  %439 = vmatprep.subr.bf16.mxu0 0
  %440 = vmatpush1.bf16.msra.mxu0 %v315
  %441 = vmatprep.subr.bf16.mxu0 0
  %442 = vmatpush1.bf16.msra.mxu0 %v316
  %443 = vmatprep.subr.bf16.mxu0 0
  %444 = vmatpush1.bf16.msra.mxu0 %v317
  %445 = vmatprep.subr.bf16.mxu0 0
  %446 = vmatpush1.bf16.msra.mxu0 %v318
  %447 = vmatprep.subr.bf16.mxu0 0
  %448 = vmatpush1.bf16.msra.mxu0 0
  %449 = vmatprep.subr.bf16.mxu0 0
  %450 = vmatpush1.bf16.msra.mxu0 0
  %451 = vmatprep.subr.bf16.mxu0 0
  %452 = vmatpush1.bf16.msra.mxu0 0
  %453 = vmatprep.subr.bf16.mxu0 0
  %454 = vmatpush1.bf16.msra.mxu0 0
  %455 = vmatprep.subr.bf16.mxu0 0
  %456 = vmatpush1.bf16.msra.mxu0 0
  %457 = vmatprep.subr.bf16.mxu0 0
  %458 = vmatpush1.bf16.msra.mxu0 0
  %459 = vmatprep.subr.bf16.mxu0 0
  %460 = vmatpush1.bf16.msra.mxu0 0
  %461 = vmatprep.subr.bf16.mxu0 0
  %462 = vmatpush1.bf16.msra.mxu0 0
  %463 = vmatprep.subr.bf16.mxu0 0
  %464 = vmatpush1.bf16.msra.mxu0 0
  %465 = vmatprep.subr.bf16.mxu0 0
  %466 = vmatpush1.bf16.msra.mxu0 0
  %467 = vmatprep.subr.bf16.mxu0 0
  %468 = vmatpush1.bf16.msra.mxu0 0
  %469 = vmatprep.subr.bf16.mxu0 0
  %470 = vmatpush1.bf16.msra.mxu0 0
  %471 = vmatprep.mubr.bf16.mxu0 0
  %472 = vmatmul.mubr.bf16.gmra.mrb[0].mxu0 %v357
  %v473 = vpop.f32.mrb[0].mxu0
  %v474 = vadd.f32 %v434, %v473
  %v475 = vpop.f32.mrb[0].mxu0
  %v476 = vpop.f32.mrb[0].mxu0
  %v477 = vpop.f32.mrb[0].mxu0
  %478 = vdwg.mxu0
  %v479 = vmax.f32 %v474, 0.0
  %480 = vst [vmem:[%s3] sm:$0x3] %v479
  // Predicated region
  $region14: #{maunet_forward.30} parent=0 // pred_check
    _
  $region15: #{maunet_forward.30} parent=0 // pred_check_branch
    %482 = sbr.rel (0) target = $region17
  $region16: #{maunet_forward.30} parent=0 // pred_region
    _
  $region17: #{maunet_forward.30} parent=0 // pred_fallthru
    _
  // Predicated region
  $region18: #{maunet_forward.30} parent=0 // pred_check
    _
  $region19: #{maunet_forward.30} parent=0 // pred_check_branch
    %484 = sbr.rel (0) target = $region21
  $region20: #{maunet_forward.30} parent=0 // pred_region
    _
  $region21: #{maunet_forward.30} parent=0 // pred_fallthru
    _

// kernel: mul.86
$region0: #{mul.86}
  #allocation0 [shape = 's32[1]{0}', space=sflag, size = 0x4, scoped, tag = 'scoped memory for mul.86']
  %s0 = inlined_call_operand.vmem [shape: f32[2,32], index: 0, kind: input, shape index: {}]
  %s1 = inlined_call_operand.vmem [shape: f32[2,4,4,32], index: 1, kind: output, shape index: {}]
  // Predicated region
  $region2: #{mul.86} parent=0 // pred_check
    _
  $region3: #{mul.86} parent=0 // pred_check_branch
    %3 = sbr.rel (0) target = $region5
  $region4: #{mul.86} parent=0 // pred_region
    _
  $region5: #{mul.86} parent=0 // pred_fallthru
    _
  %v4 = vld [vmem:[%s0] ss:$0 sm:$0xff]
  %5 = vst [vmem:[%s1] sm:$0xf] %v4
  %s6 = scalar_lea.vmem %s0, 1
  %v7 = vld [vmem:[%s6] ss:$0 sm:$0xff]
  %s8 = scalar_lea.vmem %s1, 16
  %9 = vst [vmem:[%s8] sm:$0xf] %v7
  %s10 = scalar_lea.vmem %s1, 4
  %11 = vst [vmem:[%s10] sm:$0xf] %v4
  %s12 = scalar_lea.vmem %s1, 20
  %13 = vst [vmem:[%s12] sm:$0xf] %v7
  %s14 = scalar_lea.vmem %s1, 8
  %15 = vst [vmem:[%s14] sm:$0xf] %v4
  %s16 = scalar_lea.vmem %s1, 24
  %17 = vst [vmem:[%s16] sm:$0xf] %v7
  %s18 = scalar_lea.vmem %s1, 12
  %19 = vst [vmem:[%s18] sm:$0xf] %v4
  %s20 = scalar_lea.vmem %s1, 28
  %21 = vst [vmem:[%s20] sm:$0xf] %v7

// kernel: maunet_forward.33
$region0: #{maunet_forward.33}
  #allocation0 [shape = 'u32[]', space=smem, size = 0x4, offset = 0x4, fixed_abs, tag = 'smem constant byte address 0x4 - core index']
  #allocation1 [shape = 'u32[144,128]{1,0:T(1,128)}', space=vmem, size = 0x12000, scoped, tag = 'internal scratch']
  %s0 = inlined_call_operand.vmem [shape: bf16[8,1152], index: 0, kind: input, shape index: {}]
  %s1 = inlined_call_operand.vmem [shape: bf16[1152,128], index: 1, kind: input, shape index: {}]
  %s2 = inlined_call_operand.vmem [shape: f32[1,128], index: 2, kind: input, shape index: {}]
  %s3 = inlined_call_operand.vmem [shape: f32[8,128], index: 3, kind: output, shape index: {}]
  %s4 = sld [smem:[#allocation0]]
  $region22: #{maunet_forward.33} parent=0
    _
  %s6 = ssub.s32 1, %s4
  %s7 = scalar_select 0, %s6, %s4
  // Predicated region
  $region2: #{maunet_forward.33} parent=0 // pred_check
    _
  $region3: #{maunet_forward.33} parent=0 // pred_check_branch
    %9 = sbr.rel (0) target = $region5
  $region4: #{maunet_forward.33} parent=0 // pred_region
    _
  $region5: #{maunet_forward.33} parent=0 // pred_fallthru
    _
  // Predicated region
  $region6: #{maunet_forward.33} parent=0 // pred_check
    _
  $region7: #{maunet_forward.33} parent=0 // pred_check_branch
    %11 = sbr.rel (0) target = $region9
  $region8: #{maunet_forward.33} parent=0 // pred_region
    _
  $region9: #{maunet_forward.33} parent=0 // pred_fallthru
    _
  // Predicated region
  $region10: #{maunet_forward.33} parent=0 // pred_check
    _
  $region11: #{maunet_forward.33} parent=0 // pred_check_branch
    %13 = sbr.rel (0) target = $region13
  $region12: #{maunet_forward.33} parent=0 // pred_region
    _
  $region13: #{maunet_forward.33} parent=0 // pred_fallthru
    _
  %v15 = vld [vmem:[%s0] sm:$0xff]
  %v16 = vld [vmem:[%s0 + $0x8] sm:$0xff]
  %v17 = vld [vmem:[%s0 + $0x10] sm:$0xff]
  %v18 = vld [vmem:[%s0 + $0x18] sm:$0xff]
  %v19 = vld [vmem:[%s0 + $0x20] sm:$0xf]
  %v20 = vld [vmem:[%s1] sm:$0xf]
  %v21 = vld [vmem:[%s1 + $0x4] sm:$0xf]
  %v22 = vld [vmem:[%s1 + $0x8] sm:$0xf]
  %v23 = vld [vmem:[%s1 + $0xc] sm:$0xf]
  %v24 = vld [vmem:[%s1 + $0x10] sm:$0xf]
  %v25 = vld [vmem:[%s1 + $0x14] sm:$0xf]
  %v26 = vld [vmem:[%s1 + $0x18] sm:$0xf]
  %v27 = vld [vmem:[%s1 + $0x1c] sm:$0xf]
  %v28 = vld [vmem:[%s1 + $0x20] sm:$0xf]
  %v29 = vld [vmem:[%s1 + $0x24] sm:$0xf]
  %v30 = vld [vmem:[%s1 + $0x28] sm:$0xf]
  %v31 = vld [vmem:[%s1 + $0x2c] sm:$0xf]
  %v32 = vld [vmem:[%s1 + $0x30] sm:$0xf]
  %v33 = vld [vmem:[%s1 + $0x34] sm:$0xf]
  %v34 = vld [vmem:[%s1 + $0x38] sm:$0xf]
  %v35 = vld [vmem:[%s1 + $0x3c] sm:$0xf]
  %v36 = vld [vmem:[%s1 + $0x40] sm:$0xf]
  %v37 = vld [vmem:[%s1 + $0x44] sm:$0xf]
  %v38 = vld [vmem:[%s1 + $0x48] sm:$0xf]
  %v39 = vld [vmem:[%s1 + $0x4c] sm:$0xf]
  %v40 = vld [vmem:[%s1 + $0x50] sm:$0xf]
  %v41 = vld [vmem:[%s1 + $0x54] sm:$0xf]
  %v42 = vld [vmem:[%s1 + $0x58] sm:$0xf]
  %v43 = vld [vmem:[%s1 + $0x5c] sm:$0xf]
  %v44 = vld [vmem:[%s1 + $0x60] sm:$0xf]
  %v45 = vld [vmem:[%s1 + $0x64] sm:$0xf]
  %v46 = vld [vmem:[%s1 + $0x68] sm:$0xf]
  %v47 = vld [vmem:[%s1 + $0x6c] sm:$0xf]
  %v48 = vld [vmem:[%s1 + $0x70] sm:$0xf]
  %v49 = vld [vmem:[%s1 + $0x74] sm:$0xf]
  %v50 = vld [vmem:[%s1 + $0x78] sm:$0xf]
  %v51 = vld [vmem:[%s1 + $0x7c] sm:$0xf]
  %v52 = vld [vmem:[%s1 + $0x80] sm:$0xf]
  %v53 = vld [vmem:[%s1 + $0x84] sm:$0xf]
  %v54 = vld [vmem:[%s1 + $0x88] sm:$0xf]
  %v55 = vld [vmem:[%s1 + $0x8c] sm:$0xf]
  %v56 = vld [vmem:[%s1 + $0x90] sm:$0xf]
  %v57 = vld [vmem:[%s1 + $0x94] sm:$0xf]
  %v58 = vld [vmem:[%s1 + $0x98] sm:$0xf]
  %v59 = vld [vmem:[%s1 + $0x9c] sm:$0xf]
  %v60 = vld [vmem:[%s1 + $0xa0] sm:$0xf]
  %v61 = vld [vmem:[%s1 + $0xa4] sm:$0xf]
  %v62 = vld [vmem:[%s1 + $0xa8] sm:$0xf]
  %v63 = vld [vmem:[%s1 + $0xac] sm:$0xf]
  %v64 = vld [vmem:[%s1 + $0xb0] sm:$0xf]
  %v65 = vld [vmem:[%s1 + $0xb4] sm:$0xf]
  %v66 = vld [vmem:[%s1 + $0xb8] sm:$0xf]
  %v67 = vld [vmem:[%s1 + $0xbc] sm:$0xf]
  %v68 = vld [vmem:[%s1 + $0xc0] sm:$0xf]
  %v69 = vld [vmem:[%s1 + $0xc4] sm:$0xf]
  %v70 = vld [vmem:[%s1 + $0xc8] sm:$0xf]
  %v71 = vld [vmem:[%s1 + $0xcc] sm:$0xf]
  %v72 = vld [vmem:[%s1 + $0xd0] sm:$0xf]
  %v73 = vld [vmem:[%s1 + $0xd4] sm:$0xf]
  %v74 = vld [vmem:[%s1 + $0xd8] sm:$0xf]
  %v75 = vld [vmem:[%s1 + $0xdc] sm:$0xf]
  %v76 = vld [vmem:[%s1 + $0xe0] sm:$0xf]
  %v77 = vld [vmem:[%s1 + $0xe4] sm:$0xf]
  %v78 = vld [vmem:[%s1 + $0xe8] sm:$0xf]
  %v79 = vld [vmem:[%s1 + $0xec] sm:$0xf]
  %v80 = vld [vmem:[%s1 + $0xf0] sm:$0xf]
  %v81 = vld [vmem:[%s1 + $0xf4] sm:$0xf]
  %v82 = vld [vmem:[%s1 + $0xf8] sm:$0xf]
  %v83 = vld [vmem:[%s1 + $0xfc] sm:$0xf]
  %v84 = vld [vmem:[%s1 + $0x100] sm:$0xf]
  %v85 = vld [vmem:[%s1 + $0x104] sm:$0xf]
  %v86 = vld [vmem:[%s1 + $0x108] sm:$0xf]
  %v87 = vld [vmem:[%s1 + $0x10c] sm:$0xf]
  %v88 = vld [vmem:[%s1 + $0x110] sm:$0xf]
  %v89 = vld [vmem:[%s1 + $0x114] sm:$0xf]
  %v90 = vld [vmem:[%s1 + $0x118] sm:$0xf]
  %v91 = vld [vmem:[%s1 + $0x11c] sm:$0xf]
  %v92 = vld [vmem:[%s1 + $0x120] sm:$0xf]
  %v93 = vld [vmem:[%s1 + $0x124] sm:$0xf]
  %v94 = vld [vmem:[%s1 + $0x128] sm:$0xf]
  %v95 = vld [vmem:[%s1 + $0x12c] sm:$0xf]
  %v96 = vld [vmem:[%s1 + $0x130] sm:$0xf]
  %v97 = vld [vmem:[%s1 + $0x134] sm:$0xf]
  %v98 = vld [vmem:[%s1 + $0x138] sm:$0xf]
  %v99 = vld [vmem:[%s1 + $0x13c] sm:$0xf]
  %v100 = vld [vmem:[%s1 + $0x140] sm:$0xf]
  %v101 = vld [vmem:[%s1 + $0x144] sm:$0xf]
  %v102 = vld [vmem:[%s1 + $0x148] sm:$0xf]
  %v103 = vld [vmem:[%s1 + $0x14c] sm:$0xf]
  %v104 = vld [vmem:[%s1 + $0x150] sm:$0xf]
  %v105 = vld [vmem:[%s1 + $0x154] sm:$0xf]
  %v106 = vld [vmem:[%s1 + $0x158] sm:$0xf]
  %v107 = vld [vmem:[%s1 + $0x15c] sm:$0xf]
  %v108 = vld [vmem:[%s1 + $0x160] sm:$0xf]
  %v109 = vld [vmem:[%s1 + $0x164] sm:$0xf]
  %v110 = vld [vmem:[%s1 + $0x168] sm:$0xf]
  %v111 = vld [vmem:[%s1 + $0x16c] sm:$0xf]
  %v112 = vld [vmem:[%s1 + $0x170] sm:$0xf]
  %v113 = vld [vmem:[%s1 + $0x174] sm:$0xf]
  %v114 = vld [vmem:[%s1 + $0x178] sm:$0xf]
  %v115 = vld [vmem:[%s1 + $0x17c] sm:$0xf]
  %v116 = vld [vmem:[%s1 + $0x180] sm:$0xf]
  %v117 = vld [vmem:[%s1 + $0x184] sm:$0xf]
  %v118 = vld [vmem:[%s1 + $0x188] sm:$0xf]
  %v119 = vld [vmem:[%s1 + $0x18c] sm:$0xf]
  %v120 = vld [vmem:[%s1 + $0x190] sm:$0xf]
  %v121 = vld [vmem:[%s1 + $0x194] sm:$0xf]
  %v122 = vld [vmem:[%s1 + $0x198] sm:$0xf]
  %v123 = vld [vmem:[%s1 + $0x19c] sm:$0xf]
  %v124 = vld [vmem:[%s1 + $0x1a0] sm:$0xf]
  %v125 = vld [vmem:[%s1 + $0x1a4] sm:$0xf]
  %v126 = vld [vmem:[%s1 + $0x1a8] sm:$0xf]
  %v127 = vld [vmem:[%s1 + $0x1ac] sm:$0xf]
  %v128 = vld [vmem:[%s1 + $0x1b0] sm:$0xf]
  %v129 = vld [vmem:[%s1 + $0x1b4] sm:$0xf]
  %v130 = vld [vmem:[%s1 + $0x1b8] sm:$0xf]
  %v131 = vld [vmem:[%s1 + $0x1bc] sm:$0xf]
  %v132 = vld [vmem:[%s1 + $0x1c0] sm:$0xf]
  %v133 = vld [vmem:[%s1 + $0x1c4] sm:$0xf]
  %v134 = vld [vmem:[%s1 + $0x1c8] sm:$0xf]
  %v135 = vld [vmem:[%s1 + $0x1cc] sm:$0xf]
  %v136 = vld [vmem:[%s1 + $0x1d0] sm:$0xf]
  %v137 = vld [vmem:[%s1 + $0x1d4] sm:$0xf]
  %v138 = vld [vmem:[%s1 + $0x1d8] sm:$0xf]
  %v139 = vld [vmem:[%s1 + $0x1dc] sm:$0xf]
  %v140 = vld [vmem:[%s1 + $0x1e0] sm:$0xf]
  %v141 = vld [vmem:[%s1 + $0x1e4] sm:$0xf]
  %v142 = vld [vmem:[%s1 + $0x1e8] sm:$0xf]
  %v143 = vld [vmem:[%s1 + $0x1ec] sm:$0xf]
  %v144 = vld [vmem:[%s1 + $0x1f0] sm:$0xf]
  %v145 = vld [vmem:[%s1 + $0x1f4] sm:$0xf]
  %v146 = vld [vmem:[%s1 + $0x1f8] sm:$0xf]
  %v147 = vld [vmem:[%s1 + $0x1fc] sm:$0xf]
  %v148 = vld [vmem:[%s1 + $0x200] sm:$0xf]
  %v149 = vld [vmem:[%s1 + $0x204] sm:$0xf]
  %v150 = vld [vmem:[%s1 + $0x208] sm:$0xf]
  %v151 = vld [vmem:[%s1 + $0x20c] sm:$0xf]
  %v152 = vld [vmem:[%s1 + $0x210] sm:$0xf]
  %v153 = vld [vmem:[%s1 + $0x214] sm:$0xf]
  %v154 = vld [vmem:[%s1 + $0x218] sm:$0xf]
  %v155 = vld [vmem:[%s1 + $0x21c] sm:$0xf]
  %v156 = vld [vmem:[%s1 + $0x220] sm:$0xf]
  %v157 = vld [vmem:[%s1 + $0x224] sm:$0xf]
  %v158 = vld [vmem:[%s1 + $0x228] sm:$0xf]
  %v159 = vld [vmem:[%s1 + $0x22c] sm:$0xf]
  %v160 = vld [vmem:[%s1 + $0x230] sm:$0xf]
  %v161 = vld [vmem:[%s1 + $0x234] sm:$0xf]
  %v162 = vld [vmem:[%s1 + $0x238] sm:$0xf]
  %v163 = vld [vmem:[%s1 + $0x23c] sm:$0xf]
  %v164 = vld [vmem:[%s2] sm:$0x1]
  %v166 = vlaneseq
  %v167 = vshrl.u32 %v166, 7
  %v168 = vsub.s32 0, %v167
  %v169 = vrot.slane %v164, %v168
  %v176 = vunpack.c.l.b16 %v15
  %v177 = vunpack.c.h.b16 %v15
  %v178 = vunpack.c.l.b16 %v16
  %v179 = vunpack.c.h.b16 %v16
  %v180 = vunpack.c.l.b16 %v17
  %v181 = vunpack.c.h.b16 %v17
  %v182 = vunpack.c.l.b16 %v18
  %v183 = vunpack.c.h.b16 %v18
  %v184 = vunpack.c.l.b16 %v19
  %v185 = vpack.c.b16 %v176, %v176
  %v186 = vpack.c.b16 %v177, %v177
  %v187 = vpack.c.b16 %v178, %v178
  %v188 = vpack.c.b16 %v179, %v179
  %v189 = vpack.c.b16 %v180, %v180
  %v190 = vpack.c.b16 %v181, %v181
  %v191 = vpack.c.b16 %v182, %v182
  %v192 = vpack.c.b16 %v183, %v183
  %v193 = vpack.c.b16 %v184, %v184
  %v347 = vunpack.c.l.b16 %v20
  %v348 = vunpack.c.l.b16 %v21
  %v349 = vunpack.c.l.b16 %v22
  %v350 = vunpack.c.l.b16 %v23
  %v351 = vunpack.c.l.b16 %v24
  %v352 = vunpack.c.l.b16 %v25
  %v353 = vunpack.c.l.b16 %v26
  %v354 = vunpack.c.l.b16 %v27
  %v355 = vunpack.c.l.b16 %v28
  %v356 = vunpack.c.l.b16 %v29
  %v357 = vunpack.c.l.b16 %v30
  %v358 = vunpack.c.l.b16 %v31
  %v359 = vunpack.c.l.b16 %v32
  %v360 = vunpack.c.l.b16 %v33
  %v361 = vunpack.c.l.b16 %v34
  %v362 = vunpack.c.l.b16 %v35
  %v363 = vunpack.c.l.b16 %v36
  %v364 = vunpack.c.l.b16 %v37
  %v365 = vunpack.c.l.b16 %v38
  %v366 = vunpack.c.l.b16 %v39
  %v367 = vunpack.c.l.b16 %v40
  %v368 = vunpack.c.l.b16 %v41
  %v369 = vunpack.c.l.b16 %v42
  %v370 = vunpack.c.l.b16 %v43
  %v371 = vunpack.c.l.b16 %v44
  %v372 = vunpack.c.l.b16 %v45
  %v373 = vunpack.c.l.b16 %v46
  %v374 = vunpack.c.l.b16 %v47
  %v375 = vunpack.c.l.b16 %v48
  %v376 = vunpack.c.l.b16 %v49
  %v377 = vunpack.c.l.b16 %v50
  %v378 = vunpack.c.l.b16 %v51
  %v379 = vunpack.c.l.b16 %v52
  %v380 = vunpack.c.l.b16 %v53
  %v381 = vunpack.c.l.b16 %v54
  %v382 = vunpack.c.l.b16 %v55
  %v383 = vunpack.c.l.b16 %v56
  %v384 = vunpack.c.l.b16 %v57
  %v385 = vunpack.c.l.b16 %v58
  %v386 = vunpack.c.l.b16 %v59
  %v387 = vunpack.c.l.b16 %v60
  %v388 = vunpack.c.l.b16 %v61
  %v389 = vunpack.c.l.b16 %v62
  %v390 = vunpack.c.l.b16 %v63
  %v391 = vunpack.c.l.b16 %v64
  %v392 = vunpack.c.l.b16 %v65
  %v393 = vunpack.c.l.b16 %v66
  %v394 = vunpack.c.l.b16 %v67
  %v395 = vunpack.c.l.b16 %v68
  %v396 = vunpack.c.l.b16 %v69
  %v397 = vunpack.c.l.b16 %v70
  %v398 = vunpack.c.l.b16 %v71
  %v399 = vunpack.c.l.b16 %v72
  %v400 = vunpack.c.l.b16 %v73
  %v401 = vunpack.c.l.b16 %v74
  %v402 = vunpack.c.l.b16 %v75
  %v403 = vunpack.c.l.b16 %v76
  %v404 = vunpack.c.l.b16 %v77
  %v405 = vunpack.c.l.b16 %v78
  %v406 = vunpack.c.l.b16 %v79
  %v407 = vunpack.c.l.b16 %v80
  %v408 = vunpack.c.l.b16 %v81
  %v409 = vunpack.c.l.b16 %v82
  %v410 = vunpack.c.l.b16 %v83
  %v411 = vunpack.c.l.b16 %v84
  %v412 = vunpack.c.l.b16 %v85
  %v413 = vunpack.c.l.b16 %v86
  %v414 = vunpack.c.l.b16 %v87
  %v415 = vunpack.c.l.b16 %v88
  %v416 = vunpack.c.l.b16 %v89
  %v417 = vunpack.c.l.b16 %v90
  %v418 = vunpack.c.l.b16 %v91
  %v419 = vunpack.c.l.b16 %v92
  %v420 = vunpack.c.l.b16 %v93
  %v421 = vunpack.c.l.b16 %v94
  %v422 = vunpack.c.l.b16 %v95
  %v423 = vunpack.c.l.b16 %v96
  %v424 = vunpack.c.l.b16 %v97
  %v425 = vunpack.c.l.b16 %v98
  %v426 = vunpack.c.l.b16 %v99
  %v427 = vunpack.c.l.b16 %v100
  %v428 = vunpack.c.l.b16 %v101
  %v429 = vunpack.c.l.b16 %v102
  %v430 = vunpack.c.l.b16 %v103
  %v431 = vunpack.c.l.b16 %v104
  %v432 = vunpack.c.l.b16 %v105
  %v433 = vunpack.c.l.b16 %v106
  %v434 = vunpack.c.l.b16 %v107
  %v435 = vunpack.c.l.b16 %v108
  %v436 = vunpack.c.l.b16 %v109
  %v437 = vunpack.c.l.b16 %v110
  %v438 = vunpack.c.l.b16 %v111
  %v439 = vunpack.c.l.b16 %v112
  %v440 = vunpack.c.l.b16 %v113
  %v441 = vunpack.c.l.b16 %v114
  %v442 = vunpack.c.l.b16 %v115
  %v443 = vunpack.c.l.b16 %v116
  %v444 = vunpack.c.l.b16 %v117
  %v445 = vunpack.c.l.b16 %v118
  %v446 = vunpack.c.l.b16 %v119
  %v447 = vunpack.c.l.b16 %v120
  %v448 = vunpack.c.l.b16 %v121
  %v449 = vunpack.c.l.b16 %v122
  %v450 = vunpack.c.l.b16 %v123
  %v451 = vunpack.c.l.b16 %v124
  %v452 = vunpack.c.l.b16 %v125
  %v453 = vunpack.c.l.b16 %v126
  %v454 = vunpack.c.l.b16 %v127
  %v455 = vunpack.c.l.b16 %v128
  %v456 = vunpack.c.l.b16 %v129
  %v457 = vunpack.c.l.b16 %v130
  %v458 = vunpack.c.l.b16 %v131
  %v459 = vunpack.c.l.b16 %v132
  %v460 = vunpack.c.l.b16 %v133
  %v461 = vunpack.c.l.b16 %v134
  %v462 = vunpack.c.l.b16 %v135
  %v463 = vunpack.c.l.b16 %v136
  %v464 = vunpack.c.l.b16 %v137
  %v465 = vunpack.c.l.b16 %v138
  %v466 = vunpack.c.l.b16 %v139
  %v467 = vunpack.c.l.b16 %v140
  %v468 = vunpack.c.l.b16 %v141
  %v469 = vunpack.c.l.b16 %v142
  %v470 = vunpack.c.l.b16 %v143
  %v471 = vunpack.c.l.b16 %v144
  %v472 = vunpack.c.l.b16 %v145
  %v473 = vunpack.c.l.b16 %v146
  %v474 = vunpack.c.l.b16 %v147
  %v475 = vunpack.c.l.b16 %v148
  %v476 = vunpack.c.l.b16 %v149
  %v477 = vunpack.c.l.b16 %v150
  %v478 = vunpack.c.l.b16 %v151
  %v479 = vunpack.c.l.b16 %v152
  %v480 = vunpack.c.l.b16 %v153
  %v481 = vunpack.c.l.b16 %v154
  %v482 = vunpack.c.l.b16 %v155
  %v483 = vunpack.c.l.b16 %v156
  %v484 = vunpack.c.l.b16 %v157
  %v485 = vunpack.c.l.b16 %v158
  %v486 = vunpack.c.l.b16 %v159
  %v487 = vunpack.c.l.b16 %v160
  %v488 = vunpack.c.l.b16 %v161
  %v489 = vunpack.c.l.b16 %v162
  %v490 = vunpack.c.l.b16 %v163
  %v491 = vpack.c.b16 %v348, %v347
  %v492 = vpack.c.b16 %v350, %v349
  %v493 = vpack.c.b16 %v352, %v351
  %v494 = vpack.c.b16 %v354, %v353
  %v495 = vpack.c.b16 %v356, %v355
  %v496 = vpack.c.b16 %v358, %v357
  %v497 = vpack.c.b16 %v360, %v359
  %v498 = vpack.c.b16 %v362, %v361
  %v499 = vpack.c.b16 %v364, %v363
  %v500 = vpack.c.b16 %v366, %v365
  %v501 = vpack.c.b16 %v368, %v367
  %v502 = vpack.c.b16 %v370, %v369
  %v503 = vpack.c.b16 %v372, %v371
  %v504 = vpack.c.b16 %v374, %v373
  %v505 = vpack.c.b16 %v376, %v375
  %v506 = vpack.c.b16 %v378, %v377
  %v507 = vpack.c.b16 %v380, %v379
  %v508 = vpack.c.b16 %v382, %v381
  %v509 = vpack.c.b16 %v384, %v383
  %v510 = vpack.c.b16 %v386, %v385
  %v511 = vpack.c.b16 %v388, %v387
  %v512 = vpack.c.b16 %v390, %v389
  %v513 = vpack.c.b16 %v392, %v391
  %v514 = vpack.c.b16 %v394, %v393
  %v515 = vpack.c.b16 %v396, %v395
  %v516 = vpack.c.b16 %v398, %v397
  %v517 = vpack.c.b16 %v400, %v399
  %v518 = vpack.c.b16 %v402, %v401
  %v519 = vpack.c.b16 %v404, %v403
  %v520 = vpack.c.b16 %v406, %v405
  %v521 = vpack.c.b16 %v408, %v407
  %v522 = vpack.c.b16 %v410, %v409
  %v523 = vpack.c.b16 %v412, %v411
  %v524 = vpack.c.b16 %v414, %v413
  %v525 = vpack.c.b16 %v416, %v415
  %v526 = vpack.c.b16 %v418, %v417
  %v527 = vpack.c.b16 %v420, %v419
  %v528 = vpack.c.b16 %v422, %v421
  %v529 = vpack.c.b16 %v424, %v423
  %v530 = vpack.c.b16 %v426, %v425
  %v531 = vpack.c.b16 %v428, %v427
  %v532 = vpack.c.b16 %v430, %v429
  %v533 = vpack.c.b16 %v432, %v431
  %v534 = vpack.c.b16 %v434, %v433
  %v535 = vpack.c.b16 %v436, %v435
  %v536 = vpack.c.b16 %v438, %v437
  %v537 = vpack.c.b16 %v440, %v439
  %v538 = vpack.c.b16 %v442, %v441
  %v539 = vpack.c.b16 %v444, %v443
  %v540 = vpack.c.b16 %v446, %v445
  %v541 = vpack.c.b16 %v448, %v447
  %v542 = vpack.c.b16 %v450, %v449
  %v543 = vpack.c.b16 %v452, %v451
  %v544 = vpack.c.b16 %v454, %v453
  %v545 = vpack.c.b16 %v456, %v455
  %v546 = vpack.c.b16 %v458, %v457
  %v547 = vpack.c.b16 %v460, %v459
  %v548 = vpack.c.b16 %v462, %v461
  %v549 = vpack.c.b16 %v464, %v463
  %v550 = vpack.c.b16 %v466, %v465
  %v551 = vpack.c.b16 %v468, %v467
  %v552 = vpack.c.b16 %v470, %v469
  %v553 = vpack.c.b16 %v472, %v471
  %v554 = vpack.c.b16 %v474, %v473
  %v555 = vpack.c.b16 %v476, %v475
  %v556 = vpack.c.b16 %v478, %v477
  %v557 = vpack.c.b16 %v480, %v479
  %v558 = vpack.c.b16 %v482, %v481
  %v559 = vpack.c.b16 %v484, %v483
  %v560 = vpack.c.b16 %v486, %v485
  %v561 = vpack.c.b16 %v488, %v487
  %v562 = vpack.c.b16 %v490, %v489
  %635 = vmatprep.subr.bf16.mxu0 0
  %636 = vmatpush1.bf16.msra.mxu0 %v491
  %637 = vmatprep.subr.bf16.mxu0 0
  %638 = vmatpush1.bf16.msra.mxu0 %v492
  %639 = vmatprep.subr.bf16.mxu0 0
  %640 = vmatpush1.bf16.msra.mxu0 %v493
  %641 = vmatprep.subr.bf16.mxu0 0
  %642 = vmatpush1.bf16.msra.mxu0 %v494
  %643 = vmatprep.subr.bf16.mxu0 0
  %644 = vmatpush1.bf16.msra.mxu0 %v495
  %645 = vmatprep.subr.bf16.mxu0 0
  %646 = vmatpush1.bf16.msra.mxu0 %v496
  %647 = vmatprep.subr.bf16.mxu0 0
  %648 = vmatpush1.bf16.msra.mxu0 %v497
  %649 = vmatprep.subr.bf16.mxu0 0
  %650 = vmatpush1.bf16.msra.mxu0 %v498
  %651 = vmatprep.subr.bf16.mxu0 0
  %652 = vmatpush1.bf16.msra.mxu0 %v499
  %653 = vmatprep.subr.bf16.mxu0 0
  %654 = vmatpush1.bf16.msra.mxu0 %v500
  %655 = vmatprep.subr.bf16.mxu0 0
  %656 = vmatpush1.bf16.msra.mxu0 %v501
  %657 = vmatprep.subr.bf16.mxu0 0
  %658 = vmatpush1.bf16.msra.mxu0 %v502
  %659 = vmatprep.subr.bf16.mxu0 0
  %660 = vmatpush1.bf16.msra.mxu0 %v503
  %661 = vmatprep.subr.bf16.mxu0 0
  %662 = vmatpush1.bf16.msra.mxu0 %v504
  %663 = vmatprep.subr.bf16.mxu0 0
  %664 = vmatpush1.bf16.msra.mxu0 %v505
  %665 = vmatprep.subr.bf16.mxu0 0
  %666 = vmatpush1.bf16.msra.mxu0 %v506
  %667 = vmatprep.mubr.bf16.mxu0 %v186
  %668 = vmatmul.mubr.bf16.gmra.mrb[0].mxu0 %v185
  %v669 = vpop.f32.mrb[0].mxu0
  %v670 = vadd.f32 %v169, %v669
  %v671 = vpop.f32.mrb[0].mxu0
  %v672 = vpop.f32.mrb[0].mxu0
  %v673 = vpop.f32.mrb[0].mxu0
  %674 = vdwg.mxu0
  %675 = vmatprep.subr.bf16.mxu0 0
  %676 = vmatpush1.bf16.msra.mxu0 %v507
  %677 = vmatprep.subr.bf16.mxu0 0
  %678 = vmatpush1.bf16.msra.mxu0 %v508
  %679 = vmatprep.subr.bf16.mxu0 0
  %680 = vmatpush1.bf16.msra.mxu0 %v509
  %681 = vmatprep.subr.bf16.mxu0 0
  %682 = vmatpush1.bf16.msra.mxu0 %v510
  %683 = vmatprep.subr.bf16.mxu0 0
  %684 = vmatpush1.bf16.msra.mxu0 %v511
  %685 = vmatprep.subr.bf16.mxu0 0
  %686 = vmatpush1.bf16.msra.mxu0 %v512
  %687 = vmatprep.subr.bf16.mxu0 0
  %688 = vmatpush1.bf16.msra.mxu0 %v513
  %689 = vmatprep.subr.bf16.mxu0 0
  %690 = vmatpush1.bf16.msra.mxu0 %v514
  %691 = vmatprep.subr.bf16.mxu0 0
  %692 = vmatpush1.bf16.msra.mxu0 %v515
  %693 = vmatprep.subr.bf16.mxu0 0
  %694 = vmatpush1.bf16.msra.mxu0 %v516
  %695 = vmatprep.subr.bf16.mxu0 0
  %696 = vmatpush1.bf16.msra.mxu0 %v517
  %697 = vmatprep.subr.bf16.mxu0 0
  %698 = vmatpush1.bf16.msra.mxu0 %v518
  %699 = vmatprep.subr.bf16.mxu0 0
  %700 = vmatpush1.bf16.msra.mxu0 %v519
  %701 = vmatprep.subr.bf16.mxu0 0
  %702 = vmatpush1.bf16.msra.mxu0 %v520
  %703 = vmatprep.subr.bf16.mxu0 0
  %704 = vmatpush1.bf16.msra.mxu0 %v521
  %705 = vmatprep.subr.bf16.mxu0 0
  %706 = vmatpush1.bf16.msra.mxu0 %v522
  %707 = vmatprep.mubr.bf16.mxu0 %v188
  %708 = vmatmul.mubr.bf16.gmra.mrb[0].mxu0 %v187
  %v709 = vpop.f32.mrb[0].mxu0
  %v710 = vadd.f32 %v670, %v709
  %v711 = vpop.f32.mrb[0].mxu0
  %v712 = vpop.f32.mrb[0].mxu0
  %v713 = vpop.f32.mrb[0].mxu0
  %714 = vdwg.mxu0
  %715 = vmatprep.subr.bf16.mxu0 0
  %716 = vmatpush1.bf16.msra.mxu0 %v523
  %717 = vmatprep.subr.bf16.mxu0 0
  %718 = vmatpush1.bf16.msra.mxu0 %v524
  %719 = vmatprep.subr.bf16.mxu0 0
  %720 = vmatpush1.bf16.msra.mxu0 %v525
  %721 = vmatprep.subr.bf16.mxu0 0
  %722 = vmatpush1.bf16.msra.mxu0 %v526
  %723 = vmatprep.subr.bf16.mxu0 0
  %724 = vmatpush1.bf16.msra.mxu0 %v527
  %725 = vmatprep.subr.bf16.mxu0 0
  %726 = vmatpush1.bf16.msra.mxu0 %v528
  %727 = vmatprep.subr.bf16.mxu0 0
  %728 = vmatpush1.bf16.msra.mxu0 %v529
  %729 = vmatprep.subr.bf16.mxu0 0
  %730 = vmatpush1.bf16.msra.mxu0 %v530
  %731 = vmatprep.subr.bf16.mxu0 0
  %732 = vmatpush1.bf16.msra.mxu0 %v531
  %733 = vmatprep.subr.bf16.mxu0 0
  %734 = vmatpush1.bf16.msra.mxu0 %v532
  %735 = vmatprep.subr.bf16.mxu0 0
  %736 = vmatpush1.bf16.msra.mxu0 %v533
  %737 = vmatprep.subr.bf16.mxu0 0
  %738 = vmatpush1.bf16.msra.mxu0 %v534
  %739 = vmatprep.subr.bf16.mxu0 0
  %740 = vmatpush1.bf16.msra.mxu0 %v535
  %741 = vmatprep.subr.bf16.mxu0 0
  %742 = vmatpush1.bf16.msra.mxu0 %v536
  %743 = vmatprep.subr.bf16.mxu0 0
  %744 = vmatpush1.bf16.msra.mxu0 %v537
  %745 = vmatprep.subr.bf16.mxu0 0
  %746 = vmatpush1.bf16.msra.mxu0 %v538
  %747 = vmatprep.mubr.bf16.mxu0 %v190
  %748 = vmatmul.mubr.bf16.gmra.mrb[0].mxu0 %v189
  %v749 = vpop.f32.mrb[0].mxu0
  %v750 = vadd.f32 %v710, %v749
  %v751 = vpop.f32.mrb[0].mxu0
  %v752 = vpop.f32.mrb[0].mxu0
  %v753 = vpop.f32.mrb[0].mxu0
  %754 = vdwg.mxu0
  %755 = vmatprep.subr.bf16.mxu0 0
  %756 = vmatpush1.bf16.msra.mxu0 %v539
  %757 = vmatprep.subr.bf16.mxu0 0
  %758 = vmatpush1.bf16.msra.mxu0 %v540
  %759 = vmatprep.subr.bf16.mxu0 0
  %760 = vmatpush1.bf16.msra.mxu0 %v541
  %761 = vmatprep.subr.bf16.mxu0 0
  %762 = vmatpush1.bf16.msra.mxu0 %v542
  %763 = vmatprep.subr.bf16.mxu0 0
  %764 = vmatpush1.bf16.msra.mxu0 %v543
  %765 = vmatprep.subr.bf16.mxu0 0
  %766 = vmatpush1.bf16.msra.mxu0 %v544
  %767 = vmatprep.subr.bf16.mxu0 0
  %768 = vmatpush1.bf16.msra.mxu0 %v545
  %769 = vmatprep.subr.bf16.mxu0 0
  %770 = vmatpush1.bf16.msra.mxu0 %v546
  %771 = vmatprep.subr.bf16.mxu0 0
  %772 = vmatpush1.bf16.msra.mxu0 %v547
  %773 = vmatprep.subr.bf16.mxu0 0
  %774 = vmatpush1.bf16.msra.mxu0 %v548
  %775 = vmatprep.subr.bf16.mxu0 0
  %776 = vmatpush1.bf16.msra.mxu0 %v549
  %777 = vmatprep.subr.bf16.mxu0 0
  %778 = vmatpush1.bf16.msra.mxu0 %v550
  %779 = vmatprep.subr.bf16.mxu0 0
  %780 = vmatpush1.bf16.msra.mxu0 %v551
  %781 = vmatprep.subr.bf16.mxu0 0
  %782 = vmatpush1.bf16.msra.mxu0 %v552
  %783 = vmatprep.subr.bf16.mxu0 0
  %784 = vmatpush1.bf16.msra.mxu0 %v553
  %785 = vmatprep.subr.bf16.mxu0 0
  %786 = vmatpush1.bf16.msra.mxu0 %v554
  %787 = vmatprep.mubr.bf16.mxu0 %v192
  %788 = vmatmul.mubr.bf16.gmra.mrb[0].mxu0 %v191
  %v789 = vpop.f32.mrb[0].mxu0
  %v790 = vadd.f32 %v750, %v789
  %v791 = vpop.f32.mrb[0].mxu0
  %v792 = vpop.f32.mrb[0].mxu0
  %v793 = vpop.f32.mrb[0].mxu0
  %794 = vdwg.mxu0
  %795 = vmatprep.subr.bf16.mxu0 0
  %796 = vmatpush1.bf16.msra.mxu0 %v555
  %797 = vmatprep.subr.bf16.mxu0 0
  %798 = vmatpush1.bf16.msra.mxu0 %v556
  %799 = vmatprep.subr.bf16.mxu0 0
  %800 = vmatpush1.bf16.msra.mxu0 %v557
  %801 = vmatprep.subr.bf16.mxu0 0
  %802 = vmatpush1.bf16.msra.mxu0 %v558
  %803 = vmatprep.subr.bf16.mxu0 0
  %804 = vmatpush1.bf16.msra.mxu0 %v559
  %805 = vmatprep.subr.bf16.mxu0 0
  %806 = vmatpush1.bf16.msra.mxu0 %v560
  %807 = vmatprep.subr.bf16.mxu0 0
  %808 = vmatpush1.bf16.msra.mxu0 %v561
  %809 = vmatprep.subr.bf16.mxu0 0
  %810 = vmatpush1.bf16.msra.mxu0 %v562
  %811 = vmatprep.subr.bf16.mxu0 0
  %812 = vmatpush1.bf16.msra.mxu0 0
  %813 = vmatprep.subr.bf16.mxu0 0
  %814 = vmatpush1.bf16.msra.mxu0 0
  %815 = vmatprep.subr.bf16.mxu0 0
  %816 = vmatpush1.bf16.msra.mxu0 0
  %817 = vmatprep.subr.bf16.mxu0 0
  %818 = vmatpush1.bf16.msra.mxu0 0
  %819 = vmatprep.subr.bf16.mxu0 0
  %820 = vmatpush1.bf16.msra.mxu0 0
  %821 = vmatprep.subr.bf16.mxu0 0
  %822 = vmatpush1.bf16.msra.mxu0 0
  %823 = vmatprep.subr.bf16.mxu0 0
  %824 = vmatpush1.bf16.msra.mxu0 0
  %825 = vmatprep.subr.bf16.mxu0 0
  %826 = vmatpush1.bf16.msra.mxu0 0
  %827 = vmatprep.mubr.bf16.mxu0 0
  %828 = vmatmul.mubr.bf16.gmra.mrb[0].mxu0 %v193
  %v829 = vpop.f32.mrb[0].mxu0
  %v830 = vadd.f32 %v790, %v829
  %v831 = vpop.f32.mrb[0].mxu0
  %v832 = vpop.f32.mrb[0].mxu0
  %v833 = vpop.f32.mrb[0].mxu0
  %834 = vdwg.mxu0
  %v835 = vmax.f32 %v830, 0.0
  %836 = vst [vmem:[%s3] sm:$0xff] %v835
  // Predicated region
  $region14: #{maunet_forward.33} parent=0 // pred_check
    _
  $region15: #{maunet_forward.33} parent=0 // pred_check_branch
    %838 = sbr.rel (0) target = $region17
  $region16: #{maunet_forward.33} parent=0 // pred_region
    _
  $region17: #{maunet_forward.33} parent=0 // pred_fallthru
    _
  // Predicated region
  $region18: #{maunet_forward.33} parent=0 // pred_check
    _
  $region19: #{maunet_forward.33} parent=0 // pred_check_branch
    %840 = sbr.rel (0) target = $region21
  $region20: #{maunet_forward.33} parent=0 // pred_region
    _
  $region21: #{maunet_forward.33} parent=0 // pred_fallthru
    _

// kernel: maunet_forward.35
$region0: #{maunet_forward.35}
  #allocation0 [shape = 'u32[]', space=smem, size = 0x4, offset = 0x4, fixed_abs, tag = 'smem constant byte address 0x4 - core index']
  #allocation1 [shape = 'u32[144,128]{1,0:T(1,128)}', space=vmem, size = 0x12000, scoped, tag = 'internal scratch']
  %s0 = inlined_call_operand.vmem [shape: bf16[2,64], index: 0, kind: input, shape index: {}]
  %s1 = inlined_call_operand.vmem [shape: bf16[64,128], index: 1, kind: input, shape index: {}]
  %s2 = inlined_call_operand.vmem [shape: f32[1,128], index: 2, kind: input, shape index: {}]
  %s3 = inlined_call_operand.vmem [shape: f32[2,128], index: 3, kind: output, shape index: {}]
  %s4 = sld [smem:[#allocation0]]
  $region22: #{maunet_forward.35} parent=0
    _
  %s6 = ssub.s32 1, %s4
  %s7 = scalar_select 0, %s6, %s4
  // Predicated region
  $region2: #{maunet_forward.35} parent=0 // pred_check
    _
  $region3: #{maunet_forward.35} parent=0 // pred_check_branch
    %9 = sbr.rel (0) target = $region5
  $region4: #{maunet_forward.35} parent=0 // pred_region
    _
  $region5: #{maunet_forward.35} parent=0 // pred_fallthru
    _
  // Predicated region
  $region6: #{maunet_forward.35} parent=0 // pred_check
    _
  $region7: #{maunet_forward.35} parent=0 // pred_check_branch
    %11 = sbr.rel (0) target = $region9
  $region8: #{maunet_forward.35} parent=0 // pred_region
    _
  $region9: #{maunet_forward.35} parent=0 // pred_fallthru
    _
  // Predicated region
  $region10: #{maunet_forward.35} parent=0 // pred_check
    _
  $region11: #{maunet_forward.35} parent=0 // pred_check_branch
    %13 = sbr.rel (0) target = $region13
  $region12: #{maunet_forward.35} parent=0 // pred_region
    _
  $region13: #{maunet_forward.35} parent=0 // pred_fallthru
    _
  %v15 = vld [vmem:[%s0] sm:$0x1]
  %v16 = vld [vmem:[%s1] sm:$0xf]
  %v17 = vld [vmem:[%s1 + $0x4] sm:$0xf]
  %v18 = vld [vmem:[%s1 + $0x8] sm:$0xf]
  %v19 = vld [vmem:[%s1 + $0xc] sm:$0xf]
  %v20 = vld [vmem:[%s1 + $0x10] sm:$0xf]
  %v21 = vld [vmem:[%s1 + $0x14] sm:$0xf]
  %v22 = vld [vmem:[%s1 + $0x18] sm:$0xf]
  %v23 = vld [vmem:[%s1 + $0x1c] sm:$0xf]
  %v24 = vld [vmem:[%s2] sm:$0x1]
  %v26 = vlaneseq
  %v27 = vshrl.u32 %v26, 7
  %v28 = vsub.s32 0, %v27
  %v29 = vrot.slane %v24, %v28
  %v39 = vunpack.c.l.b16 %v16
  %v40 = vunpack.c.l.b16 %v17
  %v41 = vunpack.c.l.b16 %v18
  %v42 = vunpack.c.l.b16 %v19
  %v43 = vunpack.c.l.b16 %v20
  %v44 = vunpack.c.l.b16 %v21
  %v45 = vunpack.c.l.b16 %v22
  %v46 = vunpack.c.l.b16 %v23
  %v47 = vpack.c.b16 %v40, %v39
  %v48 = vpack.c.b16 %v42, %v41
  %v49 = vpack.c.b16 %v44, %v43
  %v50 = vpack.c.b16 %v46, %v45
  %vm55 = vcmask 523264
  %v57 = vsel %vm55, %v15, 0
  %59 = vmatprep.subr.bf16.mxu0 0
  %60 = vmatpush1.bf16.msra.mxu0 %v47
  %61 = vmatprep.subr.bf16.mxu0 0
  %62 = vmatpush1.bf16.msra.mxu0 %v48
  %63 = vmatprep.subr.bf16.mxu0 0
  %64 = vmatpush1.bf16.msra.mxu0 %v49
  %65 = vmatprep.subr.bf16.mxu0 0
  %66 = vmatpush1.bf16.msra.mxu0 %v50
  %67 = vmatprep.subr.bf16.mxu0 0
  %68 = vmatpush1.bf16.msra.mxu0 0
  %69 = vmatprep.subr.bf16.mxu0 0
  %70 = vmatpush1.bf16.msra.mxu0 0
  %71 = vmatprep.subr.bf16.mxu0 0
  %72 = vmatpush1.bf16.msra.mxu0 0
  %73 = vmatprep.subr.bf16.mxu0 0
  %74 = vmatpush1.bf16.msra.mxu0 0
  %75 = vmatprep.subr.bf16.mxu0 0
  %76 = vmatpush1.bf16.msra.mxu0 0
  %77 = vmatprep.subr.bf16.mxu0 0
  %78 = vmatpush1.bf16.msra.mxu0 0
  %79 = vmatprep.subr.bf16.mxu0 0
  %80 = vmatpush1.bf16.msra.mxu0 0
  %81 = vmatprep.subr.bf16.mxu0 0
  %82 = vmatpush1.bf16.msra.mxu0 0
  %83 = vmatprep.subr.bf16.mxu0 0
  %84 = vmatpush1.bf16.msra.mxu0 0
  %85 = vmatprep.subr.bf16.mxu0 0
  %86 = vmatpush1.bf16.msra.mxu0 0
  %87 = vmatprep.subr.bf16.mxu0 0
  %88 = vmatpush1.bf16.msra.mxu0 0
  %89 = vmatprep.subr.bf16.mxu0 0
  %90 = vmatpush1.bf16.msra.mxu0 0
  %91 = vmatprep.mubr.bf16.mxu0 0
  %92 = vmatmul.mubr.bf16.gmra.mrb[0].mxu0 %v57
  %v93 = vpop.f32.mrb[0].mxu0
  %v94 = vadd.f32 %v29, %v93
  %v95 = vpop.f32.mrb[0].mxu0
  %v96 = vpop.f32.mrb[0].mxu0
  %v97 = vpop.f32.mrb[0].mxu0
  %98 = vdwg.mxu0
  %v99 = vmul.f32 %v94, 0.5
  %v100 = vxor.u32 %v99, 2147483648
  %v101 = vmul.f32 %v100, 1.442695
  %v102 = vpow.pop %v101
  %v103 = vadd.f32 %v102, 1.0
  %v104 = vrcp.pop %v103
  %v105 = vmul.f32 1.0, %v104
  %106 = vst [vmem:[%s3] sm:$0x3] %v105
  // Predicated region
  $region14: #{maunet_forward.35} parent=0 // pred_check
    _
  $region15: #{maunet_forward.35} parent=0 // pred_check_branch
    %108 = sbr.rel (0) target = $region17
  $region16: #{maunet_forward.35} parent=0 // pred_region
    _
  $region17: #{maunet_forward.35} parent=0 // pred_fallthru
    _
  // Predicated region
  $region18: #{maunet_forward.35} parent=0 // pred_check
    _
  $region19: #{maunet_forward.35} parent=0 // pred_check_branch
    %110 = sbr.rel (0) target = $region21
  $region20: #{maunet_forward.35} parent=0 // pred_region
    _
  $region21: #{maunet_forward.35} parent=0 // pred_fallthru
    _

// kernel: mul.98
$region0: #{mul.98}
  #allocation0 [shape = 's32[1]{0}', space=sflag, size = 0x4, scoped, tag = 'scoped memory for mul.98']
  %s0 = inlined_call_operand.vmem [shape: f32[2,16], index: 0, kind: input, shape index: {}]
  %s1 = inlined_call_operand.vmem [shape: f32[2,8,8,16], index: 1, kind: output, shape index: {}]
  // Predicated region
  $region2: #{mul.98} parent=0 // pred_check
    _
  $region3: #{mul.98} parent=0 // pred_check_branch
    %3 = sbr.rel (0) target = $region5
  $region4: #{mul.98} parent=0 // pred_region
    _
  $region5: #{mul.98} parent=0 // pred_fallthru
    _
  %v4 = vld [vmem:[%s0] ss:$0 sm:$0xff]
  %5 = vst [vmem:[%s1] sm:$0xff] %v4
  %s6 = scalar_lea.vmem %s0, 1
  %v7 = vld [vmem:[%s6] ss:$0 sm:$0xff]
  %s8 = scalar_lea.vmem %s1, 64
  %9 = vst [vmem:[%s8] sm:$0xff] %v7
  %s10 = scalar_lea.vmem %s1, 8
  %11 = vst [vmem:[%s10] sm:$0xff] %v4
  %s12 = scalar_lea.vmem %s1, 72
  %13 = vst [vmem:[%s12] sm:$0xff] %v7
  %s14 = scalar_lea.vmem %s1, 16
  %15 = vst [vmem:[%s14] sm:$0xff] %v4
  %s16 = scalar_lea.vmem %s1, 80
  %17 = vst [vmem:[%s16] sm:$0xff] %v7
  %s18 = scalar_lea.vmem %s1, 24
  %19 = vst [vmem:[%s18] sm:$0xff] %v4
  %s20 = scalar_lea.vmem %s1, 88
  %21 = vst [vmem:[%s20] sm:$0xff] %v7
  %s22 = scalar_lea.vmem %s1, 32
  %23 = vst [vmem:[%s22] sm:$0xff] %v4
  %s24 = scalar_lea.vmem %s1, 96
  %25 = vst [vmem:[%s24] sm:$0xff] %v7
  %s26 = scalar_lea.vmem %s1, 40
  %27 = vst [vmem:[%s26] sm:$0xff] %v4
  %s28 = scalar_lea.vmem %s1, 104
  %29 = vst [vmem:[%s28] sm:$0xff] %v7
  %s30 = scalar_lea.vmem %s1, 48
  %31 = vst [vmem:[%s30] sm:$0xff] %v4
  %s32 = scalar_lea.vmem %s1, 112
  %33 = vst [vmem:[%s32] sm:$0xff] %v7
  %s34 = scalar_lea.vmem %s1, 56
  %35 = vst [vmem:[%s34] sm:$0xff] %v4
  %s36 = scalar_lea.vmem %s1, 120
  %37 = vst [vmem:[%s36] sm:$0xff] %v7

// kernel: maunet_forward.36
$region0: #{maunet_forward.36}
  #allocation0 [shape = 'u32[]', space=smem, size = 0x4, offset = 0x4, fixed_abs, tag = 'smem constant byte address 0x4 - core index']
  #allocation1 [shape = 'u32[144,128]{1,0:T(1,128)}', space=vmem, size = 0x12000, scoped, tag = 'internal scratch']
  %s0 = inlined_call_operand.vmem [shape: bf16[32,576], index: 0, kind: input, shape index: {}]
  %s1 = inlined_call_operand.vmem [shape: bf16[576,128], index: 1, kind: input, shape index: {}]
  %s2 = inlined_call_operand.vmem [shape: f32[1,128], index: 2, kind: input, shape index: {}]
  %s3 = inlined_call_operand.vmem [shape: f32[32,128], index: 3, kind: output, shape index: {}]
  %s4 = sld [smem:[#allocation0]]
  $region22: #{maunet_forward.36} parent=0
    _
  %s6 = ssub.s32 1, %s4
  %s7 = scalar_select 0, %s6, %s4
  // Predicated region
  $region2: #{maunet_forward.36} parent=0 // pred_check
    _
  $region3: #{maunet_forward.36} parent=0 // pred_check_branch
    %9 = sbr.rel (0) target = $region5
  $region4: #{maunet_forward.36} parent=0 // pred_region
    _
  $region5: #{maunet_forward.36} parent=0 // pred_fallthru
    _
  // Predicated region
  $region6: #{maunet_forward.36} parent=0 // pred_check
    _
  $region7: #{maunet_forward.36} parent=0 // pred_check_branch
    %11 = sbr.rel (0) target = $region9
  $region8: #{maunet_forward.36} parent=0 // pred_region
    _
  $region9: #{maunet_forward.36} parent=0 // pred_fallthru
    _
  // Predicated region
  $region10: #{maunet_forward.36} parent=0 // pred_check
    _
  $region11: #{maunet_forward.36} parent=0 // pred_check_branch
    %13 = sbr.rel (0) target = $region13
  $region12: #{maunet_forward.36} parent=0 // pred_region
    _
  $region13: #{maunet_forward.36} parent=0 // pred_fallthru
    _
  %v15 = vld [vmem:[%s0] sm:$0xff]
  %v16 = vld [vmem:[%s0 + $0x8] sm:$0xff]
  %v17 = vld [vmem:[%s0 + $0x10] sm:$0xf]
  %v18 = vld [vmem:[%s0 + $0x14] sm:$0xff]
  %v19 = vld [vmem:[%s0 + $0x1c] sm:$0xff]
  %v20 = vld [vmem:[%s0 + $0x24] sm:$0xf]
  %v21 = vld [vmem:[%s0 + $0x28] sm:$0xff]
  %v22 = vld [vmem:[%s0 + $0x30] sm:$0xff]
  %v23 = vld [vmem:[%s0 + $0x38] sm:$0xf]
  %v24 = vld [vmem:[%s0 + $0x3c] sm:$0xff]
  %v25 = vld [vmem:[%s0 + $0x44] sm:$0xff]
  %v26 = vld [vmem:[%s0 + $0x4c] sm:$0xf]
  %v27 = vld [vmem:[%s1] sm:$0xf]
  %v28 = vld [vmem:[%s1 + $0x4] sm:$0xf]
  %v29 = vld [vmem:[%s1 + $0x8] sm:$0xf]
  %v30 = vld [vmem:[%s1 + $0xc] sm:$0xf]
  %v31 = vld [vmem:[%s1 + $0x10] sm:$0xf]
  %v32 = vld [vmem:[%s1 + $0x14] sm:$0xf]
  %v33 = vld [vmem:[%s1 + $0x18] sm:$0xf]
  %v34 = vld [vmem:[%s1 + $0x1c] sm:$0xf]
  %v35 = vld [vmem:[%s1 + $0x20] sm:$0xf]
  %v36 = vld [vmem:[%s1 + $0x24] sm:$0xf]
  %v37 = vld [vmem:[%s1 + $0x28] sm:$0xf]
  %v38 = vld [vmem:[%s1 + $0x2c] sm:$0xf]
  %v39 = vld [vmem:[%s1 + $0x30] sm:$0xf]
  %v40 = vld [vmem:[%s1 + $0x34] sm:$0xf]
  %v41 = vld [vmem:[%s1 + $0x38] sm:$0xf]
  %v42 = vld [vmem:[%s1 + $0x3c] sm:$0xf]
  %v43 = vld [vmem:[%s1 + $0x40] sm:$0xf]
  %v44 = vld [vmem:[%s1 + $0x44] sm:$0xf]
  %v45 = vld [vmem:[%s1 + $0x48] sm:$0xf]
  %v46 = vld [vmem:[%s1 + $0x4c] sm:$0xf]
  %v47 = vld [vmem:[%s1 + $0x50] sm:$0xf]
  %v48 = vld [vmem:[%s1 + $0x54] sm:$0xf]
  %v49 = vld [vmem:[%s1 + $0x58] sm:$0xf]
  %v50 = vld [vmem:[%s1 + $0x5c] sm:$0xf]
  %v51 = vld [vmem:[%s1 + $0x60] sm:$0xf]
  %v52 = vld [vmem:[%s1 + $0x64] sm:$0xf]
  %v53 = vld [vmem:[%s1 + $0x68] sm:$0xf]
  %v54 = vld [vmem:[%s1 + $0x6c] sm:$0xf]
  %v55 = vld [vmem:[%s1 + $0x70] sm:$0xf]
  %v56 = vld [vmem:[%s1 + $0x74] sm:$0xf]
  %v57 = vld [vmem:[%s1 + $0x78] sm:$0xf]
  %v58 = vld [vmem:[%s1 + $0x7c] sm:$0xf]
  %v59 = vld [vmem:[%s1 + $0x80] sm:$0xf]
  %v60 = vld [vmem:[%s1 + $0x84] sm:$0xf]
  %v61 = vld [vmem:[%s1 + $0x88] sm:$0xf]
  %v62 = vld [vmem:[%s1 + $0x8c] sm:$0xf]
  %v63 = vld [vmem:[%s1 + $0x90] sm:$0xf]
  %v64 = vld [vmem:[%s1 + $0x94] sm:$0xf]
  %v65 = vld [vmem:[%s1 + $0x98] sm:$0xf]
  %v66 = vld [vmem:[%s1 + $0x9c] sm:$0xf]
  %v67 = vld [vmem:[%s1 + $0xa0] sm:$0xf]
  %v68 = vld [vmem:[%s1 + $0xa4] sm:$0xf]
  %v69 = vld [vmem:[%s1 + $0xa8] sm:$0xf]
  %v70 = vld [vmem:[%s1 + $0xac] sm:$0xf]
  %v71 = vld [vmem:[%s1 + $0xb0] sm:$0xf]
  %v72 = vld [vmem:[%s1 + $0xb4] sm:$0xf]
  %v73 = vld [vmem:[%s1 + $0xb8] sm:$0xf]
  %v74 = vld [vmem:[%s1 + $0xbc] sm:$0xf]
  %v75 = vld [vmem:[%s1 + $0xc0] sm:$0xf]
  %v76 = vld [vmem:[%s1 + $0xc4] sm:$0xf]
  %v77 = vld [vmem:[%s1 + $0xc8] sm:$0xf]
  %v78 = vld [vmem:[%s1 + $0xcc] sm:$0xf]
  %v79 = vld [vmem:[%s1 + $0xd0] sm:$0xf]
  %v80 = vld [vmem:[%s1 + $0xd4] sm:$0xf]
  %v81 = vld [vmem:[%s1 + $0xd8] sm:$0xf]
  %v82 = vld [vmem:[%s1 + $0xdc] sm:$0xf]
  %v83 = vld [vmem:[%s1 + $0xe0] sm:$0xf]
  %v84 = vld [vmem:[%s1 + $0xe4] sm:$0xf]
  %v85 = vld [vmem:[%s1 + $0xe8] sm:$0xf]
  %v86 = vld [vmem:[%s1 + $0xec] sm:$0xf]
  %v87 = vld [vmem:[%s1 + $0xf0] sm:$0xf]
  %v88 = vld [vmem:[%s1 + $0xf4] sm:$0xf]
  %v89 = vld [vmem:[%s1 + $0xf8] sm:$0xf]
  %v90 = vld [vmem:[%s1 + $0xfc] sm:$0xf]
  %v91 = vld [vmem:[%s1 + $0x100] sm:$0xf]
  %v92 = vld [vmem:[%s1 + $0x104] sm:$0xf]
  %v93 = vld [vmem:[%s1 + $0x108] sm:$0xf]
  %v94 = vld [vmem:[%s1 + $0x10c] sm:$0xf]
  %v95 = vld [vmem:[%s1 + $0x110] sm:$0xf]
  %v96 = vld [vmem:[%s1 + $0x114] sm:$0xf]
  %v97 = vld [vmem:[%s1 + $0x118] sm:$0xf]
  %v98 = vld [vmem:[%s1 + $0x11c] sm:$0xf]
  %v99 = vld [vmem:[%s2] sm:$0x1]
  %v101 = vlaneseq
  %v102 = vshrl.u32 %v101, 7
  %v103 = vsub.s32 0, %v102
  %v104 = vrot.slane %v99, %v103
  %v118 = vunpack.c.l.b16 %v15
  %v119 = vunpack.c.h.b16 %v15
  %v120 = vunpack.c.l.b16 %v16
  %v121 = vunpack.c.h.b16 %v16
  %v122 = vunpack.c.l.b16 %v17
  %v123 = vunpack.c.l.b16 %v18
  %v124 = vunpack.c.h.b16 %v18
  %v125 = vunpack.c.l.b16 %v19
  %v126 = vunpack.c.h.b16 %v19
  %v127 = vunpack.c.l.b16 %v20
  %v128 = vunpack.c.l.b16 %v21
  %v129 = vunpack.c.h.b16 %v21
  %v130 = vunpack.c.l.b16 %v22
  %v131 = vunpack.c.h.b16 %v22
  %v132 = vunpack.c.l.b16 %v23
  %v133 = vunpack.c.l.b16 %v24
  %v134 = vunpack.c.h.b16 %v24
  %v135 = vunpack.c.l.b16 %v25
  %v136 = vunpack.c.h.b16 %v25
  %v137 = vunpack.c.l.b16 %v26
  %v138 = vpack.c.b16 %v123, %v118
  %v139 = vpack.c.b16 %v124, %v119
  %v140 = vpack.c.b16 %v125, %v120
  %v141 = vpack.c.b16 %v126, %v121
  %v142 = vpack.c.b16 %v127, %v122
  %v143 = vpack.c.b16 %v133, %v128
  %v144 = vpack.c.b16 %v134, %v129
  %v145 = vpack.c.b16 %v135, %v130
  %v146 = vpack.c.b16 %v136, %v131
  %v147 = vpack.c.b16 %v137, %v132
  %v228 = vunpack.c.l.b16 %v27
  %v229 = vunpack.c.l.b16 %v28
  %v230 = vunpack.c.l.b16 %v29
  %v231 = vunpack.c.l.b16 %v30
  %v232 = vunpack.c.l.b16 %v31
  %v233 = vunpack.c.l.b16 %v32
  %v234 = vunpack.c.l.b16 %v33
  %v235 = vunpack.c.l.b16 %v34
  %v236 = vunpack.c.l.b16 %v35
  %v237 = vunpack.c.l.b16 %v36
  %v238 = vunpack.c.l.b16 %v37
  %v239 = vunpack.c.l.b16 %v38
  %v240 = vunpack.c.l.b16 %v39
  %v241 = vunpack.c.l.b16 %v40
  %v242 = vunpack.c.l.b16 %v41
  %v243 = vunpack.c.l.b16 %v42
  %v244 = vunpack.c.l.b16 %v43
  %v245 = vunpack.c.l.b16 %v44
  %v246 = vunpack.c.l.b16 %v45
  %v247 = vunpack.c.l.b16 %v46
  %v248 = vunpack.c.l.b16 %v47
  %v249 = vunpack.c.l.b16 %v48
  %v250 = vunpack.c.l.b16 %v49
  %v251 = vunpack.c.l.b16 %v50
  %v252 = vunpack.c.l.b16 %v51
  %v253 = vunpack.c.l.b16 %v52
  %v254 = vunpack.c.l.b16 %v53
  %v255 = vunpack.c.l.b16 %v54
  %v256 = vunpack.c.l.b16 %v55
  %v257 = vunpack.c.l.b16 %v56
  %v258 = vunpack.c.l.b16 %v57
  %v259 = vunpack.c.l.b16 %v58
  %v260 = vunpack.c.l.b16 %v59
  %v261 = vunpack.c.l.b16 %v60
  %v262 = vunpack.c.l.b16 %v61
  %v263 = vunpack.c.l.b16 %v62
  %v264 = vunpack.c.l.b16 %v63
  %v265 = vunpack.c.l.b16 %v64
  %v266 = vunpack.c.l.b16 %v65
  %v267 = vunpack.c.l.b16 %v66
  %v268 = vunpack.c.l.b16 %v67
  %v269 = vunpack.c.l.b16 %v68
  %v270 = vunpack.c.l.b16 %v69
  %v271 = vunpack.c.l.b16 %v70
  %v272 = vunpack.c.l.b16 %v71
  %v273 = vunpack.c.l.b16 %v72
  %v274 = vunpack.c.l.b16 %v73
  %v275 = vunpack.c.l.b16 %v74
  %v276 = vunpack.c.l.b16 %v75
  %v277 = vunpack.c.l.b16 %v76
  %v278 = vunpack.c.l.b16 %v77
  %v279 = vunpack.c.l.b16 %v78
  %v280 = vunpack.c.l.b16 %v79
  %v281 = vunpack.c.l.b16 %v80
  %v282 = vunpack.c.l.b16 %v81
  %v283 = vunpack.c.l.b16 %v82
  %v284 = vunpack.c.l.b16 %v83
  %v285 = vunpack.c.l.b16 %v84
  %v286 = vunpack.c.l.b16 %v85
  %v287 = vunpack.c.l.b16 %v86
  %v288 = vunpack.c.l.b16 %v87
  %v289 = vunpack.c.l.b16 %v88
  %v290 = vunpack.c.l.b16 %v89
  %v291 = vunpack.c.l.b16 %v90
  %v292 = vunpack.c.l.b16 %v91
  %v293 = vunpack.c.l.b16 %v92
  %v294 = vunpack.c.l.b16 %v93
  %v295 = vunpack.c.l.b16 %v94
  %v296 = vunpack.c.l.b16 %v95
  %v297 = vunpack.c.l.b16 %v96
  %v298 = vunpack.c.l.b16 %v97
  %v299 = vunpack.c.l.b16 %v98
  %v300 = vpack.c.b16 %v229, %v228
  %v301 = vpack.c.b16 %v231, %v230
  %v302 = vpack.c.b16 %v233, %v232
  %v303 = vpack.c.b16 %v235, %v234
  %v304 = vpack.c.b16 %v237, %v236
  %v305 = vpack.c.b16 %v239, %v238
  %v306 = vpack.c.b16 %v241, %v240
  %v307 = vpack.c.b16 %v243, %v242
  %v308 = vpack.c.b16 %v245, %v244
  %v309 = vpack.c.b16 %v247, %v246
  %v310 = vpack.c.b16 %v249, %v248
  %v311 = vpack.c.b16 %v251, %v250
  %v312 = vpack.c.b16 %v253, %v252
  %v313 = vpack.c.b16 %v255, %v254
  %v314 = vpack.c.b16 %v257, %v256
  %v315 = vpack.c.b16 %v259, %v258
  %v316 = vpack.c.b16 %v261, %v260
  %v317 = vpack.c.b16 %v263, %v262
  %v318 = vpack.c.b16 %v265, %v264
  %v319 = vpack.c.b16 %v267, %v266
  %v320 = vpack.c.b16 %v269, %v268
  %v321 = vpack.c.b16 %v271, %v270
  %v322 = vpack.c.b16 %v273, %v272
  %v323 = vpack.c.b16 %v275, %v274
  %v324 = vpack.c.b16 %v277, %v276
  %v325 = vpack.c.b16 %v279, %v278
  %v326 = vpack.c.b16 %v281, %v280
  %v327 = vpack.c.b16 %v283, %v282
  %v328 = vpack.c.b16 %v285, %v284
  %v329 = vpack.c.b16 %v287, %v286
  %v330 = vpack.c.b16 %v289, %v288
  %v331 = vpack.c.b16 %v291, %v290
  %v332 = vpack.c.b16 %v293, %v292
  %v333 = vpack.c.b16 %v295, %v294
  %v334 = vpack.c.b16 %v297, %v296
  %v335 = vpack.c.b16 %v299, %v298
  %vm372 = vcmask 523264
  %v374 = vsel %vm372, %v142, 0
  %v377 = vsel %vm372, %v147, 0
  %379 = vmatprep.subr.bf16.mxu0 0
  %380 = vmatpush1.bf16.msra.mxu0 %v300
  %381 = vmatprep.subr.bf16.mxu0 0
  %382 = vmatpush1.bf16.msra.mxu0 %v301
  %383 = vmatprep.subr.bf16.mxu0 0
  %384 = vmatpush1.bf16.msra.mxu0 %v302
  %385 = vmatprep.subr.bf16.mxu0 0
  %386 = vmatpush1.bf16.msra.mxu0 %v303
  %387 = vmatprep.subr.bf16.mxu0 0
  %388 = vmatpush1.bf16.msra.mxu0 %v304
  %389 = vmatprep.subr.bf16.mxu0 0
  %390 = vmatpush1.bf16.msra.mxu0 %v305
  %391 = vmatprep.subr.bf16.mxu0 0
  %392 = vmatpush1.bf16.msra.mxu0 %v306
  %393 = vmatprep.subr.bf16.mxu0 0
  %394 = vmatpush1.bf16.msra.mxu0 %v307
  %395 = vmatprep.subr.bf16.mxu0 0
  %396 = vmatpush1.bf16.msra.mxu0 %v308
  %397 = vmatprep.subr.bf16.mxu0 0
  %398 = vmatpush1.bf16.msra.mxu0 %v309
  %399 = vmatprep.subr.bf16.mxu0 0
  %400 = vmatpush1.bf16.msra.mxu0 %v310
  %401 = vmatprep.subr.bf16.mxu0 0
  %402 = vmatpush1.bf16.msra.mxu0 %v311
  %403 = vmatprep.subr.bf16.mxu0 0
  %404 = vmatpush1.bf16.msra.mxu0 %v312
  %405 = vmatprep.subr.bf16.mxu0 0
  %406 = vmatpush1.bf16.msra.mxu0 %v313
  %407 = vmatprep.subr.bf16.mxu0 0
  %408 = vmatpush1.bf16.msra.mxu0 %v314
  %409 = vmatprep.subr.bf16.mxu0 0
  %410 = vmatpush1.bf16.msra.mxu0 %v315
  %411 = vmatprep.mubr.bf16.mxu0 %v139
  %412 = vmatmul.mubr.bf16.gmra.mrb[0].mxu0 %v138
  %v413 = vpop.f32.mrb[0].mxu0
  %v414 = vadd.f32 %v104, %v413
  %v415 = vpop.f32.mrb[0].mxu0
  %v416 = vpop.f32.mrb[0].mxu0
  %v417 = vadd.f32 %v104, %v416
  %v418 = vpop.f32.mrb[0].mxu0
  %419 = vmatprep.mubr.bf16.mxu0 %v144
  %420 = vmatmul.mubr.bf16.gmra.mrb[0].mxu0 %v143
  %v421 = vpop.f32.mrb[0].mxu0
  %v422 = vadd.f32 %v104, %v421
  %v423 = vpop.f32.mrb[0].mxu0
  %v424 = vpop.f32.mrb[0].mxu0
  %v425 = vadd.f32 %v104, %v424
  %v426 = vpop.f32.mrb[0].mxu0
  %427 = vdwg.mxu0
  %428 = vmatprep.subr.bf16.mxu0 0
  %429 = vmatpush1.bf16.msra.mxu0 %v316
  %430 = vmatprep.subr.bf16.mxu0 0
  %431 = vmatpush1.bf16.msra.mxu0 %v317
  %432 = vmatprep.subr.bf16.mxu0 0
  %433 = vmatpush1.bf16.msra.mxu0 %v318
  %434 = vmatprep.subr.bf16.mxu0 0
  %435 = vmatpush1.bf16.msra.mxu0 %v319
  %436 = vmatprep.subr.bf16.mxu0 0
  %437 = vmatpush1.bf16.msra.mxu0 %v320
  %438 = vmatprep.subr.bf16.mxu0 0
  %439 = vmatpush1.bf16.msra.mxu0 %v321
  %440 = vmatprep.subr.bf16.mxu0 0
  %441 = vmatpush1.bf16.msra.mxu0 %v322
  %442 = vmatprep.subr.bf16.mxu0 0
  %443 = vmatpush1.bf16.msra.mxu0 %v323
  %444 = vmatprep.subr.bf16.mxu0 0
  %445 = vmatpush1.bf16.msra.mxu0 %v324
  %446 = vmatprep.subr.bf16.mxu0 0
  %447 = vmatpush1.bf16.msra.mxu0 %v325
  %448 = vmatprep.subr.bf16.mxu0 0
  %449 = vmatpush1.bf16.msra.mxu0 %v326
  %450 = vmatprep.subr.bf16.mxu0 0
  %451 = vmatpush1.bf16.msra.mxu0 %v327
  %452 = vmatprep.subr.bf16.mxu0 0
  %453 = vmatpush1.bf16.msra.mxu0 %v328
  %454 = vmatprep.subr.bf16.mxu0 0
  %455 = vmatpush1.bf16.msra.mxu0 %v329
  %456 = vmatprep.subr.bf16.mxu0 0
  %457 = vmatpush1.bf16.msra.mxu0 %v330
  %458 = vmatprep.subr.bf16.mxu0 0
  %459 = vmatpush1.bf16.msra.mxu0 %v331
  %460 = vmatprep.mubr.bf16.mxu0 %v141
  %461 = vmatmul.mubr.bf16.gmra.mrb[0].mxu0 %v140
  %v462 = vpop.f32.mrb[0].mxu0
  %v463 = vadd.f32 %v414, %v462
  %v464 = vpop.f32.mrb[0].mxu0
  %v465 = vpop.f32.mrb[0].mxu0
  %v466 = vadd.f32 %v417, %v465
  %v467 = vpop.f32.mrb[0].mxu0
  %468 = vmatprep.mubr.bf16.mxu0 %v146
  %469 = vmatmul.mubr.bf16.gmra.mrb[0].mxu0 %v145
  %v470 = vpop.f32.mrb[0].mxu0
  %v471 = vadd.f32 %v422, %v470
  %v472 = vpop.f32.mrb[0].mxu0
  %v473 = vpop.f32.mrb[0].mxu0
  %v474 = vadd.f32 %v425, %v473
  %v475 = vpop.f32.mrb[0].mxu0
  %476 = vdwg.mxu0
  %477 = vmatprep.subr.bf16.mxu0 0
  %478 = vmatpush1.bf16.msra.mxu0 %v332
  %479 = vmatprep.subr.bf16.mxu0 0
  %480 = vmatpush1.bf16.msra.mxu0 %v333
  %481 = vmatprep.subr.bf16.mxu0 0
  %482 = vmatpush1.bf16.msra.mxu0 %v334
  %483 = vmatprep.subr.bf16.mxu0 0
  %484 = vmatpush1.bf16.msra.mxu0 %v335
  %485 = vmatprep.subr.bf16.mxu0 0
  %486 = vmatpush1.bf16.msra.mxu0 0
  %487 = vmatprep.subr.bf16.mxu0 0
  %488 = vmatpush1.bf16.msra.mxu0 0
  %489 = vmatprep.subr.bf16.mxu0 0
  %490 = vmatpush1.bf16.msra.mxu0 0
  %491 = vmatprep.subr.bf16.mxu0 0
  %492 = vmatpush1.bf16.msra.mxu0 0
  %493 = vmatprep.subr.bf16.mxu0 0
  %494 = vmatpush1.bf16.msra.mxu0 0
  %495 = vmatprep.subr.bf16.mxu0 0
  %496 = vmatpush1.bf16.msra.mxu0 0
  %497 = vmatprep.subr.bf16.mxu0 0
  %498 = vmatpush1.bf16.msra.mxu0 0
  %499 = vmatprep.subr.bf16.mxu0 0
  %500 = vmatpush1.bf16.msra.mxu0 0
  %501 = vmatprep.subr.bf16.mxu0 0
  %502 = vmatpush1.bf16.msra.mxu0 0
  %503 = vmatprep.subr.bf16.mxu0 0
  %504 = vmatpush1.bf16.msra.mxu0 0
  %505 = vmatprep.subr.bf16.mxu0 0
  %506 = vmatpush1.bf16.msra.mxu0 0
  %507 = vmatprep.subr.bf16.mxu0 0
  %508 = vmatpush1.bf16.msra.mxu0 0
  %509 = vmatprep.mubr.bf16.mxu0 0
  %510 = vmatmul.mubr.bf16.gmra.mrb[0].mxu0 %v374
  %v511 = vpop.f32.mrb[0].mxu0
  %v512 = vadd.f32 %v463, %v511
  %v513 = vpop.f32.mrb[0].mxu0
  %v514 = vpop.f32.mrb[0].mxu0
  %v515 = vadd.f32 %v466, %v514
  %v516 = vpop.f32.mrb[0].mxu0
  %517 = vmatprep.mubr.bf16.mxu0 0
  %518 = vmatmul.mubr.bf16.gmra.mrb[0].mxu0 %v377
  %v519 = vpop.f32.mrb[0].mxu0
  %v520 = vadd.f32 %v471, %v519
  %v521 = vpop.f32.mrb[0].mxu0
  %v522 = vpop.f32.mrb[0].mxu0
  %v523 = vadd.f32 %v474, %v522
  %v524 = vpop.f32.mrb[0].mxu0
  %525 = vdwg.mxu0
  %v526 = vmax.f32 %v512, 0.0
  %v527 = vmax.f32 %v515, 0.0
  %v528 = vmax.f32 %v520, 0.0
  %v529 = vmax.f32 %v523, 0.0
  %530 = vst [vmem:[%s3] sm:$0xff] %v526
  %531 = vst [vmem:[%s3 + $0x8] sm:$0xff] %v527
  %532 = vst [vmem:[%s3 + $0x10] sm:$0xff] %v528
  %533 = vst [vmem:[%s3 + $0x18] sm:$0xff] %v529
  // Predicated region
  $region14: #{maunet_forward.36} parent=0 // pred_check
    _
  $region15: #{maunet_forward.36} parent=0 // pred_check_branch
    %535 = sbr.rel (0) target = $region17
  $region16: #{maunet_forward.36} parent=0 // pred_region
    _
  $region17: #{maunet_forward.36} parent=0 // pred_fallthru
    _
  // Predicated region
  $region18: #{maunet_forward.36} parent=0 // pred_check
    _
  $region19: #{maunet_forward.36} parent=0 // pred_check_branch
    %537 = sbr.rel (0) target = $region21
  $region20: #{maunet_forward.36} parent=0 // pred_region
    _
  $region21: #{maunet_forward.36} parent=0 // pred_fallthru
    _

// kernel: maunet_forward.38
$region0: #{maunet_forward.38}
  #allocation0 [shape = 'u32[]', space=smem, size = 0x4, offset = 0x4, fixed_abs, tag = 'smem constant byte address 0x4 - core index']
  #allocation1 [shape = 'u32[144,128]{1,0:T(1,128)}', space=vmem, size = 0x12000, scoped, tag = 'internal scratch']
  %s0 = inlined_call_operand.vmem [shape: bf16[2,32], index: 0, kind: input, shape index: {}]
  %s1 = inlined_call_operand.vmem [shape: bf16[32,128], index: 1, kind: input, shape index: {}]
  %s2 = inlined_call_operand.vmem [shape: f32[1,128], index: 2, kind: input, shape index: {}]
  %s3 = inlined_call_operand.vmem [shape: f32[2,128], index: 3, kind: output, shape index: {}]
  %s4 = sld [smem:[#allocation0]]
  $region22: #{maunet_forward.38} parent=0
    _
  %s6 = ssub.s32 1, %s4
  %s7 = scalar_select 0, %s6, %s4
  // Predicated region
  $region2: #{maunet_forward.38} parent=0 // pred_check
    _
  $region3: #{maunet_forward.38} parent=0 // pred_check_branch
    %9 = sbr.rel (0) target = $region5
  $region4: #{maunet_forward.38} parent=0 // pred_region
    _
  $region5: #{maunet_forward.38} parent=0 // pred_fallthru
    _
  // Predicated region
  $region6: #{maunet_forward.38} parent=0 // pred_check
    _
  $region7: #{maunet_forward.38} parent=0 // pred_check_branch
    %11 = sbr.rel (0) target = $region9
  $region8: #{maunet_forward.38} parent=0 // pred_region
    _
  $region9: #{maunet_forward.38} parent=0 // pred_fallthru
    _
  // Predicated region
  $region10: #{maunet_forward.38} parent=0 // pred_check
    _
  $region11: #{maunet_forward.38} parent=0 // pred_check_branch
    %13 = sbr.rel (0) target = $region13
  $region12: #{maunet_forward.38} parent=0 // pred_region
    _
  $region13: #{maunet_forward.38} parent=0 // pred_fallthru
    _
  %v15 = vld [vmem:[%s0] sm:$0x1]
  %v16 = vld [vmem:[%s1] sm:$0xf]
  %v17 = vld [vmem:[%s1 + $0x4] sm:$0xf]
  %v18 = vld [vmem:[%s1 + $0x8] sm:$0xf]
  %v19 = vld [vmem:[%s1 + $0xc] sm:$0xf]
  %v20 = vld [vmem:[%s2] sm:$0x1]
  %v22 = vlaneseq
  %v23 = vshrl.u32 %v22, 7
  %v24 = vsub.s32 0, %v23
  %v25 = vrot.slane %v20, %v24
  %v31 = vunpack.c.l.b16 %v16
  %v32 = vunpack.c.l.b16 %v17
  %v33 = vunpack.c.l.b16 %v18
  %v34 = vunpack.c.l.b16 %v19
  %v35 = vpack.c.b16 %v32, %v31
  %v36 = vpack.c.b16 %v34, %v33
  %vm39 = vcmask 261120
  %v41 = vsel %vm39, %v15, 0
  %43 = vmatprep.subr.bf16.mxu0 0
  %44 = vmatpush1.bf16.msra.mxu0 %v35
  %45 = vmatprep.subr.bf16.mxu0 0
  %46 = vmatpush1.bf16.msra.mxu0 %v36
  %47 = vmatprep.subr.bf16.mxu0 0
  %48 = vmatpush1.bf16.msra.mxu0 0
  %49 = vmatprep.subr.bf16.mxu0 0
  %50 = vmatpush1.bf16.msra.mxu0 0
  %51 = vmatprep.subr.bf16.mxu0 0
  %52 = vmatpush1.bf16.msra.mxu0 0
  %53 = vmatprep.subr.bf16.mxu0 0
  %54 = vmatpush1.bf16.msra.mxu0 0
  %55 = vmatprep.subr.bf16.mxu0 0
  %56 = vmatpush1.bf16.msra.mxu0 0
  %57 = vmatprep.subr.bf16.mxu0 0
  %58 = vmatpush1.bf16.msra.mxu0 0
  %59 = vmatprep.subr.bf16.mxu0 0
  %60 = vmatpush1.bf16.msra.mxu0 0
  %61 = vmatprep.subr.bf16.mxu0 0
  %62 = vmatpush1.bf16.msra.mxu0 0
  %63 = vmatprep.subr.bf16.mxu0 0
  %64 = vmatpush1.bf16.msra.mxu0 0
  %65 = vmatprep.subr.bf16.mxu0 0
  %66 = vmatpush1.bf16.msra.mxu0 0
  %67 = vmatprep.subr.bf16.mxu0 0
  %68 = vmatpush1.bf16.msra.mxu0 0
  %69 = vmatprep.subr.bf16.mxu0 0
  %70 = vmatpush1.bf16.msra.mxu0 0
  %71 = vmatprep.subr.bf16.mxu0 0
  %72 = vmatpush1.bf16.msra.mxu0 0
  %73 = vmatprep.subr.bf16.mxu0 0
  %74 = vmatpush1.bf16.msra.mxu0 0
  %75 = vmatprep.mubr.bf16.mxu0 0
  %76 = vmatmul.mubr.bf16.gmra.mrb[0].mxu0 %v41
  %v77 = vpop.f32.mrb[0].mxu0
  %v78 = vadd.f32 %v25, %v77
  %v79 = vpop.f32.mrb[0].mxu0
  %v80 = vpop.f32.mrb[0].mxu0
  %v81 = vpop.f32.mrb[0].mxu0
  %82 = vdwg.mxu0
  %v83 = vmul.f32 %v78, 0.5
  %v84 = vxor.u32 %v83, 2147483648
  %v85 = vmul.f32 %v84, 1.442695
  %v86 = vpow.pop %v85
  %v87 = vadd.f32 %v86, 1.0
  %v88 = vrcp.pop %v87
  %v89 = vmul.f32 1.0, %v88
  %90 = vst [vmem:[%s3] sm:$0x3] %v89
  // Predicated region
  $region14: #{maunet_forward.38} parent=0 // pred_check
    _
  $region15: #{maunet_forward.38} parent=0 // pred_check_branch
    %92 = sbr.rel (0) target = $region17
  $region16: #{maunet_forward.38} parent=0 // pred_region
    _
  $region17: #{maunet_forward.38} parent=0 // pred_fallthru
    _
  // Predicated region
  $region18: #{maunet_forward.38} parent=0 // pred_check
    _
  $region19: #{maunet_forward.38} parent=0 // pred_check_branch
    %94 = sbr.rel (0) target = $region21
  $region20: #{maunet_forward.38} parent=0 // pred_region
    _
  $region21: #{maunet_forward.38} parent=0 // pred_fallthru
    _

// kernel: maunet_forward.39
$region0: #{maunet_forward.39}
  #allocation0 [shape = 'u32[]', space=smem, size = 0x4, offset = 0x4, fixed_abs, tag = 'smem constant byte address 0x4 - core index']
  #allocation1 [shape = 'u32[144,128]{1,0:T(1,128)}', space=vmem, size = 0x12000, scoped, tag = 'internal scratch']
  %s0 = inlined_call_operand.vmem [shape: bf16[128,288], index: 0, kind: input, shape index: {}]
  %s1 = inlined_call_operand.vmem [shape: bf16[288,128], index: 1, kind: input, shape index: {}]
  %s2 = inlined_call_operand.vmem [shape: f32[1,128], index: 2, kind: input, shape index: {}]
  %s3 = inlined_call_operand.vmem [shape: f32[128,128], index: 3, kind: output, shape index: {}]
  %s4 = sld [smem:[#allocation0]]
  $region22: #{maunet_forward.39} parent=0
    _
  %s6 = ssub.s32 1, %s4
  %s7 = scalar_select 0, %s6, %s4
  // Predicated region
  $region2: #{maunet_forward.39} parent=0 // pred_check
    _
  $region3: #{maunet_forward.39} parent=0 // pred_check_branch
    %9 = sbr.rel (0) target = $region5
  $region4: #{maunet_forward.39} parent=0 // pred_region
    _
  $region5: #{maunet_forward.39} parent=0 // pred_fallthru
    _
  // Predicated region
  $region6: #{maunet_forward.39} parent=0 // pred_check
    _
  $region7: #{maunet_forward.39} parent=0 // pred_check_branch
    %11 = sbr.rel (0) target = $region9
  $region8: #{maunet_forward.39} parent=0 // pred_region
    _
  $region9: #{maunet_forward.39} parent=0 // pred_fallthru
    _
  // Predicated region
  $region10: #{maunet_forward.39} parent=0 // pred_check
    _
  $region11: #{maunet_forward.39} parent=0 // pred_check_branch
    %13 = sbr.rel (0) target = $region13
  $region12: #{maunet_forward.39} parent=0 // pred_region
    _
  $region13: #{maunet_forward.39} parent=0 // pred_fallthru
    _
  %v15 = vld [vmem:[%s0] sm:$0xff]
  %v16 = vld [vmem:[%s0 + $0x8] sm:$0xf]
  %v17 = vld [vmem:[%s0 + $0xc] sm:$0xff]
  %v18 = vld [vmem:[%s0 + $0x14] sm:$0xf]
  %v19 = vld [vmem:[%s0 + $0x18] sm:$0xff]
  %v20 = vld [vmem:[%s0 + $0x20] sm:$0xf]
  %v21 = vld [vmem:[%s0 + $0x24] sm:$0xff]
  %v22 = vld [vmem:[%s0 + $0x2c] sm:$0xf]
  %v23 = vld [vmem:[%s0 + $0x30] sm:$0xff]
  %v24 = vld [vmem:[%s0 + $0x38] sm:$0xf]
  %v25 = vld [vmem:[%s0 + $0x3c] sm:$0xff]
  %v26 = vld [vmem:[%s0 + $0x44] sm:$0xf]
  %v27 = vld [vmem:[%s0 + $0x48] sm:$0xff]
  %v28 = vld [vmem:[%s0 + $0x50] sm:$0xf]
  %v29 = vld [vmem:[%s0 + $0x54] sm:$0xff]
  %v30 = vld [vmem:[%s0 + $0x5c] sm:$0xf]
  %v31 = vld [vmem:[%s0 + $0x60] sm:$0xff]
  %v32 = vld [vmem:[%s0 + $0x68] sm:$0xf]
  %v33 = vld [vmem:[%s0 + $0x6c] sm:$0xff]
  %v34 = vld [vmem:[%s0 + $0x74] sm:$0xf]
  %v35 = vld [vmem:[%s0 + $0x78] sm:$0xff]
  %v36 = vld [vmem:[%s0 + $0x80] sm:$0xf]
  %v37 = vld [vmem:[%s0 + $0x84] sm:$0xff]
  %v38 = vld [vmem:[%s0 + $0x8c] sm:$0xf]
  %v39 = vld [vmem:[%s0 + $0x90] sm:$0xff]
  %v40 = vld [vmem:[%s0 + $0x98] sm:$0xf]
  %v41 = vld [vmem:[%s0 + $0x9c] sm:$0xff]
  %v42 = vld [vmem:[%s0 + $0xa4] sm:$0xf]
  %v43 = vld [vmem:[%s0 + $0xa8] sm:$0xff]
  %v44 = vld [vmem:[%s0 + $0xb0] sm:$0xf]
  %v45 = vld [vmem:[%s0 + $0xb4] sm:$0xff]
  %v46 = vld [vmem:[%s0 + $0xbc] sm:$0xf]
  %v47 = vld [vmem:[%s1] sm:$0xf]
  %v48 = vld [vmem:[%s1 + $0x4] sm:$0xf]
  %v49 = vld [vmem:[%s1 + $0x8] sm:$0xf]
  %v50 = vld [vmem:[%s1 + $0xc] sm:$0xf]
  %v51 = vld [vmem:[%s1 + $0x10] sm:$0xf]
  %v52 = vld [vmem:[%s1 + $0x14] sm:$0xf]
  %v53 = vld [vmem:[%s1 + $0x18] sm:$0xf]
  %v54 = vld [vmem:[%s1 + $0x1c] sm:$0xf]
  %v55 = vld [vmem:[%s1 + $0x20] sm:$0xf]
  %v56 = vld [vmem:[%s1 + $0x24] sm:$0xf]
  %v57 = vld [vmem:[%s1 + $0x28] sm:$0xf]
  %v58 = vld [vmem:[%s1 + $0x2c] sm:$0xf]
  %v59 = vld [vmem:[%s1 + $0x30] sm:$0xf]
  %v60 = vld [vmem:[%s1 + $0x34] sm:$0xf]
  %v61 = vld [vmem:[%s1 + $0x38] sm:$0xf]
  %v62 = vld [vmem:[%s1 + $0x3c] sm:$0xf]
  %v63 = vld [vmem:[%s1 + $0x40] sm:$0xf]
  %v64 = vld [vmem:[%s1 + $0x44] sm:$0xf]
  %v65 = vld [vmem:[%s1 + $0x48] sm:$0xf]
  %v66 = vld [vmem:[%s1 + $0x4c] sm:$0xf]
  %v67 = vld [vmem:[%s1 + $0x50] sm:$0xf]
  %v68 = vld [vmem:[%s1 + $0x54] sm:$0xf]
  %v69 = vld [vmem:[%s1 + $0x58] sm:$0xf]
  %v70 = vld [vmem:[%s1 + $0x5c] sm:$0xf]
  %v71 = vld [vmem:[%s1 + $0x60] sm:$0xf]
  %v72 = vld [vmem:[%s1 + $0x64] sm:$0xf]
  %v73 = vld [vmem:[%s1 + $0x68] sm:$0xf]
  %v74 = vld [vmem:[%s1 + $0x6c] sm:$0xf]
  %v75 = vld [vmem:[%s1 + $0x70] sm:$0xf]
  %v76 = vld [vmem:[%s1 + $0x74] sm:$0xf]
  %v77 = vld [vmem:[%s1 + $0x78] sm:$0xf]
  %v78 = vld [vmem:[%s1 + $0x7c] sm:$0xf]
  %v79 = vld [vmem:[%s1 + $0x80] sm:$0xf]
  %v80 = vld [vmem:[%s1 + $0x84] sm:$0xf]
  %v81 = vld [vmem:[%s1 + $0x88] sm:$0xf]
  %v82 = vld [vmem:[%s1 + $0x8c] sm:$0xf]
  %v83 = vld [vmem:[%s2] sm:$0x1]
  %v85 = vlaneseq
  %v86 = vshrl.u32 %v85, 7
  %v87 = vsub.s32 0, %v86
  %v88 = vrot.slane %v83, %v87
  %v122 = vunpack.c.l.b16 %v15
  %v123 = vunpack.c.h.b16 %v15
  %v124 = vunpack.c.l.b16 %v16
  %v125 = vunpack.c.l.b16 %v17
  %v126 = vunpack.c.h.b16 %v17
  %v127 = vunpack.c.l.b16 %v18
  %v128 = vunpack.c.l.b16 %v19
  %v129 = vunpack.c.h.b16 %v19
  %v130 = vunpack.c.l.b16 %v20
  %v131 = vunpack.c.l.b16 %v21
  %v132 = vunpack.c.h.b16 %v21
  %v133 = vunpack.c.l.b16 %v22
  %v134 = vunpack.c.l.b16 %v23
  %v135 = vunpack.c.h.b16 %v23
  %v136 = vunpack.c.l.b16 %v24
  %v137 = vunpack.c.l.b16 %v25
  %v138 = vunpack.c.h.b16 %v25
  %v139 = vunpack.c.l.b16 %v26
  %v140 = vunpack.c.l.b16 %v27
  %v141 = vunpack.c.h.b16 %v27
  %v142 = vunpack.c.l.b16 %v28
  %v143 = vunpack.c.l.b16 %v29
  %v144 = vunpack.c.h.b16 %v29
  %v145 = vunpack.c.l.b16 %v30
  %v146 = vunpack.c.l.b16 %v31
  %v147 = vunpack.c.h.b16 %v31
  %v148 = vunpack.c.l.b16 %v32
  %v149 = vunpack.c.l.b16 %v33
  %v150 = vunpack.c.h.b16 %v33
  %v151 = vunpack.c.l.b16 %v34
  %v152 = vunpack.c.l.b16 %v35
  %v153 = vunpack.c.h.b16 %v35
  %v154 = vunpack.c.l.b16 %v36
  %v155 = vunpack.c.l.b16 %v37
  %v156 = vunpack.c.h.b16 %v37
  %v157 = vunpack.c.l.b16 %v38
  %v158 = vunpack.c.l.b16 %v39
  %v159 = vunpack.c.h.b16 %v39
  %v160 = vunpack.c.l.b16 %v40
  %v161 = vunpack.c.l.b16 %v41
  %v162 = vunpack.c.h.b16 %v41
  %v163 = vunpack.c.l.b16 %v42
  %v164 = vunpack.c.l.b16 %v43
  %v165 = vunpack.c.h.b16 %v43
  %v166 = vunpack.c.l.b16 %v44
  %v167 = vunpack.c.l.b16 %v45
  %v168 = vunpack.c.h.b16 %v45
  %v169 = vunpack.c.l.b16 %v46
  %v170 = vpack.c.b16 %v125, %v122
  %v171 = vpack.c.b16 %v126, %v123
  %v172 = vpack.c.b16 %v127, %v124
  %v173 = vpack.c.b16 %v131, %v128
  %v174 = vpack.c.b16 %v132, %v129
  %v175 = vpack.c.b16 %v133, %v130
  %v176 = vpack.c.b16 %v137, %v134
  %v177 = vpack.c.b16 %v138, %v135
  %v178 = vpack.c.b16 %v139, %v136
  %v179 = vpack.c.b16 %v143, %v140
  %v180 = vpack.c.b16 %v144, %v141
  %v181 = vpack.c.b16 %v145, %v142
  %v182 = vpack.c.b16 %v149, %v146
  %v183 = vpack.c.b16 %v150, %v147
  %v184 = vpack.c.b16 %v151, %v148
  %v185 = vpack.c.b16 %v155, %v152
  %v186 = vpack.c.b16 %v156, %v153
  %v187 = vpack.c.b16 %v157, %v154
  %v188 = vpack.c.b16 %v161, %v158
  %v189 = vpack.c.b16 %v162, %v159
  %v190 = vpack.c.b16 %v163, %v160
  %v191 = vpack.c.b16 %v167, %v164
  %v192 = vpack.c.b16 %v168, %v165
  %v193 = vpack.c.b16 %v169, %v166
  %v246 = vunpack.c.l.b16 %v47
  %v247 = vunpack.c.l.b16 %v48
  %v248 = vunpack.c.l.b16 %v49
  %v249 = vunpack.c.l.b16 %v50
  %v250 = vunpack.c.l.b16 %v51
  %v251 = vunpack.c.l.b16 %v52
  %v252 = vunpack.c.l.b16 %v53
  %v253 = vunpack.c.l.b16 %v54
  %v254 = vunpack.c.l.b16 %v55
  %v255 = vunpack.c.l.b16 %v56
  %v256 = vunpack.c.l.b16 %v57
  %v257 = vunpack.c.l.b16 %v58
  %v258 = vunpack.c.l.b16 %v59
  %v259 = vunpack.c.l.b16 %v60
  %v260 = vunpack.c.l.b16 %v61
  %v261 = vunpack.c.l.b16 %v62
  %v262 = vunpack.c.l.b16 %v63
  %v263 = vunpack.c.l.b16 %v64
  %v264 = vunpack.c.l.b16 %v65
  %v265 = vunpack.c.l.b16 %v66
  %v266 = vunpack.c.l.b16 %v67
  %v267 = vunpack.c.l.b16 %v68
  %v268 = vunpack.c.l.b16 %v69
  %v269 = vunpack.c.l.b16 %v70
  %v270 = vunpack.c.l.b16 %v71
  %v271 = vunpack.c.l.b16 %v72
  %v272 = vunpack.c.l.b16 %v73
  %v273 = vunpack.c.l.b16 %v74
  %v274 = vunpack.c.l.b16 %v75
  %v275 = vunpack.c.l.b16 %v76
  %v276 = vunpack.c.l.b16 %v77
  %v277 = vunpack.c.l.b16 %v78
  %v278 = vunpack.c.l.b16 %v79
  %v279 = vunpack.c.l.b16 %v80
  %v280 = vunpack.c.l.b16 %v81
  %v281 = vunpack.c.l.b16 %v82
  %v282 = vpack.c.b16 %v247, %v246
  %v283 = vpack.c.b16 %v249, %v248
  %v284 = vpack.c.b16 %v251, %v250
  %v285 = vpack.c.b16 %v253, %v252
  %v286 = vpack.c.b16 %v255, %v254
  %v287 = vpack.c.b16 %v257, %v256
  %v288 = vpack.c.b16 %v259, %v258
  %v289 = vpack.c.b16 %v261, %v260
  %v290 = vpack.c.b16 %v263, %v262
  %v291 = vpack.c.b16 %v265, %v264
  %v292 = vpack.c.b16 %v267, %v266
  %v293 = vpack.c.b16 %v269, %v268
  %v294 = vpack.c.b16 %v271, %v270
  %v295 = vpack.c.b16 %v273, %v272
  %v296 = vpack.c.b16 %v275, %v274
  %v297 = vpack.c.b16 %v277, %v276
  %v298 = vpack.c.b16 %v279, %v278
  %v299 = vpack.c.b16 %v281, %v280
  %vm318 = vcmask 261120
  %v320 = vsel %vm318, %v172, 0
  %v323 = vsel %vm318, %v175, 0
  %v326 = vsel %vm318, %v178, 0
  %v329 = vsel %vm318, %v181, 0
  %v332 = vsel %vm318, %v184, 0
  %v335 = vsel %vm318, %v187, 0
  %v338 = vsel %vm318, %v190, 0
  %v341 = vsel %vm318, %v193, 0
  %343 = vmatprep.subr.bf16.mxu0 0
  %344 = vmatpush1.bf16.msra.mxu0 %v282
  %345 = vmatprep.subr.bf16.mxu0 0
  %346 = vmatpush1.bf16.msra.mxu0 %v283
  %347 = vmatprep.subr.bf16.mxu0 0
  %348 = vmatpush1.bf16.msra.mxu0 %v284
  %349 = vmatprep.subr.bf16.mxu0 0
  %350 = vmatpush1.bf16.msra.mxu0 %v285
  %351 = vmatprep.subr.bf16.mxu0 0
  %352 = vmatpush1.bf16.msra.mxu0 %v286
  %353 = vmatprep.subr.bf16.mxu0 0
  %354 = vmatpush1.bf16.msra.mxu0 %v287
  %355 = vmatprep.subr.bf16.mxu0 0
  %356 = vmatpush1.bf16.msra.mxu0 %v288
  %357 = vmatprep.subr.bf16.mxu0 0
  %358 = vmatpush1.bf16.msra.mxu0 %v289
  %359 = vmatprep.subr.bf16.mxu0 0
  %360 = vmatpush1.bf16.msra.mxu0 %v290
  %361 = vmatprep.subr.bf16.mxu0 0
  %362 = vmatpush1.bf16.msra.mxu0 %v291
  %363 = vmatprep.subr.bf16.mxu0 0
  %364 = vmatpush1.bf16.msra.mxu0 %v292
  %365 = vmatprep.subr.bf16.mxu0 0
  %366 = vmatpush1.bf16.msra.mxu0 %v293
  %367 = vmatprep.subr.bf16.mxu0 0
  %368 = vmatpush1.bf16.msra.mxu0 %v294
  %369 = vmatprep.subr.bf16.mxu0 0
  %370 = vmatpush1.bf16.msra.mxu0 %v295
  %371 = vmatprep.subr.bf16.mxu0 0
  %372 = vmatpush1.bf16.msra.mxu0 %v296
  %373 = vmatprep.subr.bf16.mxu0 0
  %374 = vmatpush1.bf16.msra.mxu0 %v297
  %375 = vmatprep.mubr.bf16.mxu0 %v171
  %376 = vmatmul.mubr.bf16.gmra.mrb[0].mxu0 %v170
  %v377 = vpop.f32.mrb[0].mxu0
  %v378 = vadd.f32 %v88, %v377
  %v379 = vpop.f32.mrb[0].mxu0
  %v380 = vpop.f32.mrb[0].mxu0
  %v381 = vadd.f32 %v88, %v380
  %v382 = vpop.f32.mrb[0].mxu0
  %383 = vmatprep.mubr.bf16.mxu0 %v174
  %384 = vmatmul.mubr.bf16.gmra.mrb[0].mxu0 %v173
  %v385 = vpop.f32.mrb[0].mxu0
  %v386 = vadd.f32 %v88, %v385
  %v387 = vpop.f32.mrb[0].mxu0
  %v388 = vpop.f32.mrb[0].mxu0
  %v389 = vadd.f32 %v88, %v388
  %v390 = vpop.f32.mrb[0].mxu0
  %391 = vmatprep.mubr.bf16.mxu0 %v177
  %392 = vmatmul.mubr.bf16.gmra.mrb[0].mxu0 %v176
  %v393 = vpop.f32.mrb[0].mxu0
  %v394 = vadd.f32 %v88, %v393
  %v395 = vpop.f32.mrb[0].mxu0
  %v396 = vpop.f32.mrb[0].mxu0
  %v397 = vadd.f32 %v88, %v396
  %v398 = vpop.f32.mrb[0].mxu0
  %399 = vmatprep.mubr.bf16.mxu0 %v180
  %400 = vmatmul.mubr.bf16.gmra.mrb[0].mxu0 %v179
  %v401 = vpop.f32.mrb[0].mxu0
  %v402 = vadd.f32 %v88, %v401
  %v403 = vpop.f32.mrb[0].mxu0
  %v404 = vpop.f32.mrb[0].mxu0
  %v405 = vadd.f32 %v88, %v404
  %v406 = vpop.f32.mrb[0].mxu0
  %407 = vmatprep.mubr.bf16.mxu0 %v183
  %408 = vmatmul.mubr.bf16.gmra.mrb[0].mxu0 %v182
  %v409 = vpop.f32.mrb[0].mxu0
  %v410 = vadd.f32 %v88, %v409
  %v411 = vpop.f32.mrb[0].mxu0
  %v412 = vpop.f32.mrb[0].mxu0
  %v413 = vadd.f32 %v88, %v412
  %v414 = vpop.f32.mrb[0].mxu0
  %415 = vmatprep.mubr.bf16.mxu0 %v186
  %416 = vmatmul.mubr.bf16.gmra.mrb[0].mxu0 %v185
  %v417 = vpop.f32.mrb[0].mxu0
  %v418 = vadd.f32 %v88, %v417
  %v419 = vpop.f32.mrb[0].mxu0
  %v420 = vpop.f32.mrb[0].mxu0
  %v421 = vadd.f32 %v88, %v420
  %v422 = vpop.f32.mrb[0].mxu0
  %423 = vmatprep.mubr.bf16.mxu0 %v189
  %424 = vmatmul.mubr.bf16.gmra.mrb[0].mxu0 %v188
  %v425 = vpop.f32.mrb[0].mxu0
  %v426 = vadd.f32 %v88, %v425
  %v427 = vpop.f32.mrb[0].mxu0
  %v428 = vpop.f32.mrb[0].mxu0
  %v429 = vadd.f32 %v88, %v428
  %v430 = vpop.f32.mrb[0].mxu0
  %431 = vmatprep.mubr.bf16.mxu0 %v192
  %432 = vmatmul.mubr.bf16.gmra.mrb[0].mxu0 %v191
  %v433 = vpop.f32.mrb[0].mxu0
  %v434 = vadd.f32 %v88, %v433
  %v435 = vpop.f32.mrb[0].mxu0
  %v436 = vpop.f32.mrb[0].mxu0
  %v437 = vadd.f32 %v88, %v436
  %v438 = vpop.f32.mrb[0].mxu0
  %439 = vdwg.mxu0
  %440 = vmatprep.subr.bf16.mxu0 0
  %441 = vmatpush1.bf16.msra.mxu0 %v298
  %442 = vmatprep.subr.bf16.mxu0 0
  %443 = vmatpush1.bf16.msra.mxu0 %v299
  %444 = vmatprep.subr.bf16.mxu0 0
  %445 = vmatpush1.bf16.msra.mxu0 0
  %446 = vmatprep.subr.bf16.mxu0 0
  %447 = vmatpush1.bf16.msra.mxu0 0
  %448 = vmatprep.subr.bf16.mxu0 0
  %449 = vmatpush1.bf16.msra.mxu0 0
  %450 = vmatprep.subr.bf16.mxu0 0
  %451 = vmatpush1.bf16.msra.mxu0 0
  %452 = vmatprep.subr.bf16.mxu0 0
  %453 = vmatpush1.bf16.msra.mxu0 0
  %454 = vmatprep.subr.bf16.mxu0 0
  %455 = vmatpush1.bf16.msra.mxu0 0
  %456 = vmatprep.subr.bf16.mxu0 0
  %457 = vmatpush1.bf16.msra.mxu0 0
  %458 = vmatprep.subr.bf16.mxu0 0
  %459 = vmatpush1.bf16.msra.mxu0 0
  %460 = vmatprep.subr.bf16.mxu0 0
  %461 = vmatpush1.bf16.msra.mxu0 0
  %462 = vmatprep.subr.bf16.mxu0 0
  %463 = vmatpush1.bf16.msra.mxu0 0
  %464 = vmatprep.subr.bf16.mxu0 0
  %465 = vmatpush1.bf16.msra.mxu0 0
  %466 = vmatprep.subr.bf16.mxu0 0
  %467 = vmatpush1.bf16.msra.mxu0 0
  %468 = vmatprep.subr.bf16.mxu0 0
  %469 = vmatpush1.bf16.msra.mxu0 0
  %470 = vmatprep.subr.bf16.mxu0 0
  %471 = vmatpush1.bf16.msra.mxu0 0
  %472 = vmatprep.mubr.bf16.mxu0 0
  %473 = vmatmul.mubr.bf16.gmra.mrb[0].mxu0 %v320
  %v474 = vpop.f32.mrb[0].mxu0
  %v475 = vadd.f32 %v378, %v474
  %v476 = vpop.f32.mrb[0].mxu0
  %v477 = vpop.f32.mrb[0].mxu0
  %v478 = vadd.f32 %v381, %v477
  %v479 = vpop.f32.mrb[0].mxu0
  %480 = vmatprep.mubr.bf16.mxu0 0
  %481 = vmatmul.mubr.bf16.gmra.mrb[0].mxu0 %v323
  %v482 = vpop.f32.mrb[0].mxu0
  %v483 = vadd.f32 %v386, %v482
  %v484 = vpop.f32.mrb[0].mxu0
  %v485 = vpop.f32.mrb[0].mxu0
  %v486 = vadd.f32 %v389, %v485
  %v487 = vpop.f32.mrb[0].mxu0
  %488 = vmatprep.mubr.bf16.mxu0 0
  %489 = vmatmul.mubr.bf16.gmra.mrb[0].mxu0 %v326
  %v490 = vpop.f32.mrb[0].mxu0
  %v491 = vadd.f32 %v394, %v490
  %v492 = vpop.f32.mrb[0].mxu0
  %v493 = vpop.f32.mrb[0].mxu0
  %v494 = vadd.f32 %v397, %v493
  %v495 = vpop.f32.mrb[0].mxu0
  %496 = vmatprep.mubr.bf16.mxu0 0
  %497 = vmatmul.mubr.bf16.gmra.mrb[0].mxu0 %v329
  %v498 = vpop.f32.mrb[0].mxu0
  %v499 = vadd.f32 %v402, %v498
  %v500 = vpop.f32.mrb[0].mxu0
  %v501 = vpop.f32.mrb[0].mxu0
  %v502 = vadd.f32 %v405, %v501
  %v503 = vpop.f32.mrb[0].mxu0
  %504 = vmatprep.mubr.bf16.mxu0 0
  %505 = vmatmul.mubr.bf16.gmra.mrb[0].mxu0 %v332
  %v506 = vpop.f32.mrb[0].mxu0
  %v507 = vadd.f32 %v410, %v506
  %v508 = vpop.f32.mrb[0].mxu0
  %v509 = vpop.f32.mrb[0].mxu0
  %v510 = vadd.f32 %v413, %v509
  %v511 = vpop.f32.mrb[0].mxu0
  %512 = vmatprep.mubr.bf16.mxu0 0
  %513 = vmatmul.mubr.bf16.gmra.mrb[0].mxu0 %v335
  %v514 = vpop.f32.mrb[0].mxu0
  %v515 = vadd.f32 %v418, %v514
  %v516 = vpop.f32.mrb[0].mxu0
  %v517 = vpop.f32.mrb[0].mxu0
  %v518 = vadd.f32 %v421, %v517
  %v519 = vpop.f32.mrb[0].mxu0
  %520 = vmatprep.mubr.bf16.mxu0 0
  %521 = vmatmul.mubr.bf16.gmra.mrb[0].mxu0 %v338
  %v522 = vpop.f32.mrb[0].mxu0
  %v523 = vadd.f32 %v426, %v522
  %v524 = vpop.f32.mrb[0].mxu0
  %v525 = vpop.f32.mrb[0].mxu0
  %v526 = vadd.f32 %v429, %v525
  %v527 = vpop.f32.mrb[0].mxu0
  %528 = vmatprep.mubr.bf16.mxu0 0
  %529 = vmatmul.mubr.bf16.gmra.mrb[0].mxu0 %v341
  %v530 = vpop.f32.mrb[0].mxu0
  %v531 = vadd.f32 %v434, %v530
  %v532 = vpop.f32.mrb[0].mxu0
  %v533 = vpop.f32.mrb[0].mxu0
  %v534 = vadd.f32 %v437, %v533
  %v535 = vpop.f32.mrb[0].mxu0
  %536 = vdwg.mxu0
  %v537 = vmax.f32 %v475, 0.0
  %v538 = vmax.f32 %v478, 0.0
  %v539 = vmax.f32 %v483, 0.0
  %v540 = vmax.f32 %v486, 0.0
  %v541 = vmax.f32 %v491, 0.0
  %v542 = vmax.f32 %v494, 0.0
  %v543 = vmax.f32 %v499, 0.0
  %v544 = vmax.f32 %v502, 0.0
  %v545 = vmax.f32 %v507, 0.0
  %v546 = vmax.f32 %v510, 0.0
  %v547 = vmax.f32 %v515, 0.0
  %v548 = vmax.f32 %v518, 0.0
  %v549 = vmax.f32 %v523, 0.0
  %v550 = vmax.f32 %v526, 0.0
  %v551 = vmax.f32 %v531, 0.0
  %v552 = vmax.f32 %v534, 0.0
  %553 = vst [vmem:[%s3] sm:$0xff] %v537
  %554 = vst [vmem:[%s3 + $0x8] sm:$0xff] %v538
  %555 = vst [vmem:[%s3 + $0x10] sm:$0xff] %v539
  %556 = vst [vmem:[%s3 + $0x18] sm:$0xff] %v540
  %557 = vst [vmem:[%s3 + $0x20] sm:$0xff] %v541
  %558 = vst [vmem:[%s3 + $0x28] sm:$0xff] %v542
  %559 = vst [vmem:[%s3 + $0x30] sm:$0xff] %v543
  %560 = vst [vmem:[%s3 + $0x38] sm:$0xff] %v544
  %561 = vst [vmem:[%s3 + $0x40] sm:$0xff] %v545
  %562 = vst [vmem:[%s3 + $0x48] sm:$0xff] %v546
  %563 = vst [vmem:[%s3 + $0x50] sm:$0xff] %v547
  %564 = vst [vmem:[%s3 + $0x58] sm:$0xff] %v548
  %565 = vst [vmem:[%s3 + $0x60] sm:$0xff] %v549
  %566 = vst [vmem:[%s3 + $0x68] sm:$0xff] %v550
  %567 = vst [vmem:[%s3 + $0x70] sm:$0xff] %v551
  %568 = vst [vmem:[%s3 + $0x78] sm:$0xff] %v552
  // Predicated region
  $region14: #{maunet_forward.39} parent=0 // pred_check
    _
  $region15: #{maunet_forward.39} parent=0 // pred_check_branch
    %570 = sbr.rel (0) target = $region17
  $region16: #{maunet_forward.39} parent=0 // pred_region
    _
  $region17: #{maunet_forward.39} parent=0 // pred_fallthru
    _
  // Predicated region
  $region18: #{maunet_forward.39} parent=0 // pred_check
    _
  $region19: #{maunet_forward.39} parent=0 // pred_check_branch
    %572 = sbr.rel (0) target = $region21
  $region20: #{maunet_forward.39} parent=0 // pred_region
    _
  $region21: #{maunet_forward.39} parent=0 // pred_fallthru
    _

// kernel: mul.58
$region0: #{mul.58}
  #allocation0 [shape = 's32[1]{0}', space=sflag, size = 0x4, scoped, tag = 'scoped memory for mul.58']
  %s0 = inlined_call_operand.vmem [shape: f32[2,16,8], index: 0, kind: input, shape index: {}]
  %s1 = inlined_call_operand.vmem [shape: f32[2,16,16,8], index: 1, kind: output, shape index: {}]
  // Predicated region
  $region2: #{mul.58} parent=0 // pred_check
    _
  $region3: #{mul.58} parent=0 // pred_check_branch
    %3 = sbr.rel (0) target = $region5
  $region4: #{mul.58} parent=0 // pred_region
    _
  $region5: #{mul.58} parent=0 // pred_fallthru
    _
  %v4 = vld [vmem:[%s0] sm:$0xff]
  %5 = vst [vmem:[%s1] sm:$0xff] %v4
  %s6 = scalar_lea.vmem %s0, 16
  %v7 = vld [vmem:[%s6] sm:$0xff]
  %s8 = scalar_lea.vmem %s1, 256
  %9 = vst [vmem:[%s8] sm:$0xff] %v7
  %s10 = scalar_lea.vmem %s1, 16
  %11 = vst [vmem:[%s10] sm:$0xff] %v4
  %s12 = scalar_lea.vmem %s1, 272
  %13 = vst [vmem:[%s12] sm:$0xff] %v7
  %s14 = scalar_lea.vmem %s1, 32
  %15 = vst [vmem:[%s14] sm:$0xff] %v4
  %s16 = scalar_lea.vmem %s1, 288
  %17 = vst [vmem:[%s16] sm:$0xff] %v7
  %s18 = scalar_lea.vmem %s1, 48
  %19 = vst [vmem:[%s18] sm:$0xff] %v4
  %s20 = scalar_lea.vmem %s1, 304
  %21 = vst [vmem:[%s20] sm:$0xff] %v7
  %s22 = scalar_lea.vmem %s1, 64
  %23 = vst [vmem:[%s22] sm:$0xff] %v4
  %s24 = scalar_lea.vmem %s1, 320
  %25 = vst [vmem:[%s24] sm:$0xff] %v7
  %s26 = scalar_lea.vmem %s1, 80
  %27 = vst [vmem:[%s26] sm:$0xff] %v4
  %s28 = scalar_lea.vmem %s1, 336
  %29 = vst [vmem:[%s28] sm:$0xff] %v7
  %s30 = scalar_lea.vmem %s1, 96
  %31 = vst [vmem:[%s30] sm:$0xff] %v4
  %s32 = scalar_lea.vmem %s1, 352
  %33 = vst [vmem:[%s32] sm:$0xff] %v7
  %s34 = scalar_lea.vmem %s1, 112
  %35 = vst [vmem:[%s34] sm:$0xff] %v4
  %s36 = scalar_lea.vmem %s1, 368
  %37 = vst [vmem:[%s36] sm:$0xff] %v7
  %s38 = scalar_lea.vmem %s1, 128
  %39 = vst [vmem:[%s38] sm:$0xff] %v4
  %s40 = scalar_lea.vmem %s1, 384
  %41 = vst [vmem:[%s40] sm:$0xff] %v7
  %s42 = scalar_lea.vmem %s1, 144
  %43 = vst [vmem:[%s42] sm:$0xff] %v4
  %s44 = scalar_lea.vmem %s1, 400
  %45 = vst [vmem:[%s44] sm:$0xff] %v7
  %s46 = scalar_lea.vmem %s1, 160
  %47 = vst [vmem:[%s46] sm:$0xff] %v4
  %s48 = scalar_lea.vmem %s1, 416
  %49 = vst [vmem:[%s48] sm:$0xff] %v7
  %s50 = scalar_lea.vmem %s1, 176
  %51 = vst [vmem:[%s50] sm:$0xff] %v4
  %s52 = scalar_lea.vmem %s1, 432
  %53 = vst [vmem:[%s52] sm:$0xff] %v7
  %s54 = scalar_lea.vmem %s1, 192
  %55 = vst [vmem:[%s54] sm:$0xff] %v4
  %s56 = scalar_lea.vmem %s1, 448
  %57 = vst [vmem:[%s56] sm:$0xff] %v7
  %s58 = scalar_lea.vmem %s1, 208
  %59 = vst [vmem:[%s58] sm:$0xff] %v4
  %s60 = scalar_lea.vmem %s1, 464
  %61 = vst [vmem:[%s60] sm:$0xff] %v7
  %s62 = scalar_lea.vmem %s1, 224
  %63 = vst [vmem:[%s62] sm:$0xff] %v4
  %s64 = scalar_lea.vmem %s1, 480
  %65 = vst [vmem:[%s64] sm:$0xff] %v7
  %s66 = scalar_lea.vmem %s1, 240
  %67 = vst [vmem:[%s66] sm:$0xff] %v4
  %s68 = scalar_lea.vmem %s1, 496
  %69 = vst [vmem:[%s68] sm:$0xff] %v7
  %s70 = scalar_lea.vmem %s0, 8
  %v71 = vld [vmem:[%s70] sm:$0xff]
  %s72 = scalar_lea.vmem %s1, 8
  %73 = vst [vmem:[%s72] sm:$0xff] %v71
  %s74 = scalar_lea.vmem %s0, 24
  %v75 = vld [vmem:[%s74] sm:$0xff]
  %s76 = scalar_lea.vmem %s1, 264
  %77 = vst [vmem:[%s76] sm:$0xff] %v75
  %s78 = scalar_lea.vmem %s1, 24
  %79 = vst [vmem:[%s78] sm:$0xff] %v71
  %s80 = scalar_lea.vmem %s1, 280
  %81 = vst [vmem:[%s80] sm:$0xff] %v75
  %s82 = scalar_lea.vmem %s1, 40
  %83 = vst [vmem:[%s82] sm:$0xff] %v71
  %s84 = scalar_lea.vmem %s1, 296
  %85 = vst [vmem:[%s84] sm:$0xff] %v75
  %s86 = scalar_lea.vmem %s1, 56
  %87 = vst [vmem:[%s86] sm:$0xff] %v71
  %s88 = scalar_lea.vmem %s1, 312
  %89 = vst [vmem:[%s88] sm:$0xff] %v75
  %s90 = scalar_lea.vmem %s1, 72
  %91 = vst [vmem:[%s90] sm:$0xff] %v71
  %s92 = scalar_lea.vmem %s1, 328
  %93 = vst [vmem:[%s92] sm:$0xff] %v75
  %s94 = scalar_lea.vmem %s1, 88
  %95 = vst [vmem:[%s94] sm:$0xff] %v71
  %s96 = scalar_lea.vmem %s1, 344
  %97 = vst [vmem:[%s96] sm:$0xff] %v75
  %s98 = scalar_lea.vmem %s1, 104
  %99 = vst [vmem:[%s98] sm:$0xff] %v71
  %s100 = scalar_lea.vmem %s1, 360
  %101 = vst [vmem:[%s100] sm:$0xff] %v75
  %s102 = scalar_lea.vmem %s1, 120
  %103 = vst [vmem:[%s102] sm:$0xff] %v71
  %s104 = scalar_lea.vmem %s1, 376
  %105 = vst [vmem:[%s104] sm:$0xff] %v75
  %s106 = scalar_lea.vmem %s1, 136
  %107 = vst [vmem:[%s106] sm:$0xff] %v71
  %s108 = scalar_lea.vmem %s1, 392
  %109 = vst [vmem:[%s108] sm:$0xff] %v75
  %s110 = scalar_lea.vmem %s1, 152
  %111 = vst [vmem:[%s110] sm:$0xff] %v71
  %s112 = scalar_lea.vmem %s1, 408
  %113 = vst [vmem:[%s112] sm:$0xff] %v75
  %s114 = scalar_lea.vmem %s1, 168
  %115 = vst [vmem:[%s114] sm:$0xff] %v71
  %s116 = scalar_lea.vmem %s1, 424
  %117 = vst [vmem:[%s116] sm:$0xff] %v75
  %s118 = scalar_lea.vmem %s1, 184
  %119 = vst [vmem:[%s118] sm:$0xff] %v71
  %s120 = scalar_lea.vmem %s1, 440
  %121 = vst [vmem:[%s120] sm:$0xff] %v75
  %s122 = scalar_lea.vmem %s1, 200
  %123 = vst [vmem:[%s122] sm:$0xff] %v71
  %s124 = scalar_lea.vmem %s1, 456
  %125 = vst [vmem:[%s124] sm:$0xff] %v75
  %s126 = scalar_lea.vmem %s1, 216
  %127 = vst [vmem:[%s126] sm:$0xff] %v71
  %s128 = scalar_lea.vmem %s1, 472
  %129 = vst [vmem:[%s128] sm:$0xff] %v75
  %s130 = scalar_lea.vmem %s1, 232
  %131 = vst [vmem:[%s130] sm:$0xff] %v71
  %s132 = scalar_lea.vmem %s1, 488
  %133 = vst [vmem:[%s132] sm:$0xff] %v75
  %s134 = scalar_lea.vmem %s1, 248
  %135 = vst [vmem:[%s134] sm:$0xff] %v71
  %s136 = scalar_lea.vmem %s1, 504
  %137 = vst [vmem:[%s136] sm:$0xff] %v75

// kernel: mul.62
$region0: #{mul.62}
  #allocation0 [shape = 's32[1]{0}', space=sflag, size = 0x4, scoped, tag = 'scoped memory for mul.62']
  %s0 = inlined_call_operand.vmem [shape: f32[2,16,8], index: 0, kind: input, shape index: {}]
  %s1 = inlined_call_operand.vmem [shape: f32[2,16,16,8], index: 1, kind: output, shape index: {}]
  // Predicated region
  $region2: #{mul.62} parent=0 // pred_check
    _
  $region3: #{mul.62} parent=0 // pred_check_branch
    %3 = sbr.rel (0) target = $region5
  $region4: #{mul.62} parent=0 // pred_region
    _
  $region5: #{mul.62} parent=0 // pred_fallthru
    _
  %v4 = vld [vmem:[%s0] ss:$0 sm:$0xff]
  %5 = vst [vmem:[%s1] sm:$0xff] %v4
  %s6 = scalar_lea.vmem %s0, 16
  %v7 = vld [vmem:[%s6] ss:$0 sm:$0xff]
  %s8 = scalar_lea.vmem %s1, 256
  %9 = vst [vmem:[%s8] sm:$0xff] %v7
  %s10 = scalar_lea.vmem %s0, 1
  %v11 = vld [vmem:[%s10] ss:$0 sm:$0xff]
  %s12 = scalar_lea.vmem %s1, 16
  %13 = vst [vmem:[%s12] sm:$0xff] %v11
  %s14 = scalar_lea.vmem %s0, 16
  %s15 = scalar_lea.vmem %s14, 1
  %v16 = vld [vmem:[%s15] ss:$0 sm:$0xff]
  %s17 = scalar_lea.vmem %s1, 272
  %18 = vst [vmem:[%s17] sm:$0xff] %v16
  %s19 = scalar_lea.vmem %s0, 2
  %v20 = vld [vmem:[%s19] ss:$0 sm:$0xff]
  %s21 = scalar_lea.vmem %s1, 32
  %22 = vst [vmem:[%s21] sm:$0xff] %v20
  %s23 = scalar_lea.vmem %s0, 16
  %s24 = scalar_lea.vmem %s23, 2
  %v25 = vld [vmem:[%s24] ss:$0 sm:$0xff]
  %s26 = scalar_lea.vmem %s1, 288
  %27 = vst [vmem:[%s26] sm:$0xff] %v25
  %s28 = scalar_lea.vmem %s0, 3
  %v29 = vld [vmem:[%s28] ss:$0 sm:$0xff]
  %s30 = scalar_lea.vmem %s1, 48
  %31 = vst [vmem:[%s30] sm:$0xff] %v29
  %s32 = scalar_lea.vmem %s0, 16
  %s33 = scalar_lea.vmem %s32, 3
  %v34 = vld [vmem:[%s33] ss:$0 sm:$0xff]
  %s35 = scalar_lea.vmem %s1, 304
  %36 = vst [vmem:[%s35] sm:$0xff] %v34
  %s37 = scalar_lea.vmem %s0, 4
  %v38 = vld [vmem:[%s37] ss:$0 sm:$0xff]
  %s39 = scalar_lea.vmem %s1, 64
  %40 = vst [vmem:[%s39] sm:$0xff] %v38
  %s41 = scalar_lea.vmem %s0, 16
  %s42 = scalar_lea.vmem %s41, 4
  %v43 = vld [vmem:[%s42] ss:$0 sm:$0xff]
  %s44 = scalar_lea.vmem %s1, 320
  %45 = vst [vmem:[%s44] sm:$0xff] %v43
  %s46 = scalar_lea.vmem %s0, 5
  %v47 = vld [vmem:[%s46] ss:$0 sm:$0xff]
  %s48 = scalar_lea.vmem %s1, 80
  %49 = vst [vmem:[%s48] sm:$0xff] %v47
  %s50 = scalar_lea.vmem %s0, 16
  %s51 = scalar_lea.vmem %s50, 5
  %v52 = vld [vmem:[%s51] ss:$0 sm:$0xff]
  %s53 = scalar_lea.vmem %s1, 336
  %54 = vst [vmem:[%s53] sm:$0xff] %v52
  %s55 = scalar_lea.vmem %s0, 6
  %v56 = vld [vmem:[%s55] ss:$0 sm:$0xff]
  %s57 = scalar_lea.vmem %s1, 96
  %58 = vst [vmem:[%s57] sm:$0xff] %v56
  %s59 = scalar_lea.vmem %s0, 16
  %s60 = scalar_lea.vmem %s59, 6
  %v61 = vld [vmem:[%s60] ss:$0 sm:$0xff]
  %s62 = scalar_lea.vmem %s1, 352
  %63 = vst [vmem:[%s62] sm:$0xff] %v61
  %s64 = scalar_lea.vmem %s0, 7
  %v65 = vld [vmem:[%s64] ss:$0 sm:$0xff]
  %s66 = scalar_lea.vmem %s1, 112
  %67 = vst [vmem:[%s66] sm:$0xff] %v65
  %s68 = scalar_lea.vmem %s0, 16
  %s69 = scalar_lea.vmem %s68, 7
  %v70 = vld [vmem:[%s69] ss:$0 sm:$0xff]
  %s71 = scalar_lea.vmem %s1, 368
  %72 = vst [vmem:[%s71] sm:$0xff] %v70
  %s73 = scalar_lea.vmem %s0, 8
  %v74 = vld [vmem:[%s73] ss:$0 sm:$0xff]
  %s75 = scalar_lea.vmem %s1, 128
  %76 = vst [vmem:[%s75] sm:$0xff] %v74
  %s77 = scalar_lea.vmem %s0, 24
  %v78 = vld [vmem:[%s77] ss:$0 sm:$0xff]
  %s79 = scalar_lea.vmem %s1, 384
  %80 = vst [vmem:[%s79] sm:$0xff] %v78
  %s81 = scalar_lea.vmem %s0, 8
  %s82 = scalar_lea.vmem %s81, 1
  %v83 = vld [vmem:[%s82] ss:$0 sm:$0xff]
  %s84 = scalar_lea.vmem %s1, 144
  %85 = vst [vmem:[%s84] sm:$0xff] %v83
  %s86 = scalar_lea.vmem %s0, 24
  %s87 = scalar_lea.vmem %s86, 1
  %v88 = vld [vmem:[%s87] ss:$0 sm:$0xff]
  %s89 = scalar_lea.vmem %s1, 400
  %90 = vst [vmem:[%s89] sm:$0xff] %v88
  %s91 = scalar_lea.vmem %s0, 8
  %s92 = scalar_lea.vmem %s91, 2
  %v93 = vld [vmem:[%s92] ss:$0 sm:$0xff]
  %s94 = scalar_lea.vmem %s1, 160
  %95 = vst [vmem:[%s94] sm:$0xff] %v93
  %s96 = scalar_lea.vmem %s0, 24
  %s97 = scalar_lea.vmem %s96, 2
  %v98 = vld [vmem:[%s97] ss:$0 sm:$0xff]
  %s99 = scalar_lea.vmem %s1, 416
  %100 = vst [vmem:[%s99] sm:$0xff] %v98
  %s101 = scalar_lea.vmem %s0, 8
  %s102 = scalar_lea.vmem %s101, 3
  %v103 = vld [vmem:[%s102] ss:$0 sm:$0xff]
  %s104 = scalar_lea.vmem %s1, 176
  %105 = vst [vmem:[%s104] sm:$0xff] %v103
  %s106 = scalar_lea.vmem %s0, 24
  %s107 = scalar_lea.vmem %s106, 3
  %v108 = vld [vmem:[%s107] ss:$0 sm:$0xff]
  %s109 = scalar_lea.vmem %s1, 432
  %110 = vst [vmem:[%s109] sm:$0xff] %v108
  %s111 = scalar_lea.vmem %s0, 8
  %s112 = scalar_lea.vmem %s111, 4
  %v113 = vld [vmem:[%s112] ss:$0 sm:$0xff]
  %s114 = scalar_lea.vmem %s1, 192
  %115 = vst [vmem:[%s114] sm:$0xff] %v113
  %s116 = scalar_lea.vmem %s0, 24
  %s117 = scalar_lea.vmem %s116, 4
  %v118 = vld [vmem:[%s117] ss:$0 sm:$0xff]
  %s119 = scalar_lea.vmem %s1, 448
  %120 = vst [vmem:[%s119] sm:$0xff] %v118
  %s121 = scalar_lea.vmem %s0, 8
  %s122 = scalar_lea.vmem %s121, 5
  %v123 = vld [vmem:[%s122] ss:$0 sm:$0xff]
  %s124 = scalar_lea.vmem %s1, 208
  %125 = vst [vmem:[%s124] sm:$0xff] %v123
  %s126 = scalar_lea.vmem %s0, 24
  %s127 = scalar_lea.vmem %s126, 5
  %v128 = vld [vmem:[%s127] ss:$0 sm:$0xff]
  %s129 = scalar_lea.vmem %s1, 464
  %130 = vst [vmem:[%s129] sm:$0xff] %v128
  %s131 = scalar_lea.vmem %s0, 8
  %s132 = scalar_lea.vmem %s131, 6
  %v133 = vld [vmem:[%s132] ss:$0 sm:$0xff]
  %s134 = scalar_lea.vmem %s1, 224
  %135 = vst [vmem:[%s134] sm:$0xff] %v133
  %s136 = scalar_lea.vmem %s0, 24
  %s137 = scalar_lea.vmem %s136, 6
  %v138 = vld [vmem:[%s137] ss:$0 sm:$0xff]
  %s139 = scalar_lea.vmem %s1, 480
  %140 = vst [vmem:[%s139] sm:$0xff] %v138
  %s141 = scalar_lea.vmem %s0, 8
  %s142 = scalar_lea.vmem %s141, 7
  %v143 = vld [vmem:[%s142] ss:$0 sm:$0xff]
  %s144 = scalar_lea.vmem %s1, 240
  %145 = vst [vmem:[%s144] sm:$0xff] %v143
  %s146 = scalar_lea.vmem %s0, 24
  %s147 = scalar_lea.vmem %s146, 7
  %v148 = vld [vmem:[%s147] ss:$0 sm:$0xff]
  %s149 = scalar_lea.vmem %s1, 496
  %150 = vst [vmem:[%s149] sm:$0xff] %v148
  %s151 = scalar_lea.vmem %s1, 8
  %152 = vst [vmem:[%s151] sm:$0xff] %v4
  %s153 = scalar_lea.vmem %s1, 264
  %154 = vst [vmem:[%s153] sm:$0xff] %v7
  %s155 = scalar_lea.vmem %s1, 24
  %156 = vst [vmem:[%s155] sm:$0xff] %v11
  %s157 = scalar_lea.vmem %s1, 280
  %158 = vst [vmem:[%s157] sm:$0xff] %v16
  %s159 = scalar_lea.vmem %s1, 40
  %160 = vst [vmem:[%s159] sm:$0xff] %v20
  %s161 = scalar_lea.vmem %s1, 296
  %162 = vst [vmem:[%s161] sm:$0xff] %v25
  %s163 = scalar_lea.vmem %s1, 56
  %164 = vst [vmem:[%s163] sm:$0xff] %v29
  %s165 = scalar_lea.vmem %s1, 312
  %166 = vst [vmem:[%s165] sm:$0xff] %v34
  %s167 = scalar_lea.vmem %s1, 72
  %168 = vst [vmem:[%s167] sm:$0xff] %v38
  %s169 = scalar_lea.vmem %s1, 328
  %170 = vst [vmem:[%s169] sm:$0xff] %v43
  %s171 = scalar_lea.vmem %s1, 88
  %172 = vst [vmem:[%s171] sm:$0xff] %v47
  %s173 = scalar_lea.vmem %s1, 344
  %174 = vst [vmem:[%s173] sm:$0xff] %v52
  %s175 = scalar_lea.vmem %s1, 104
  %176 = vst [vmem:[%s175] sm:$0xff] %v56
  %s177 = scalar_lea.vmem %s1, 360
  %178 = vst [vmem:[%s177] sm:$0xff] %v61
  %s179 = scalar_lea.vmem %s1, 120
  %180 = vst [vmem:[%s179] sm:$0xff] %v65
  %s181 = scalar_lea.vmem %s1, 376
  %182 = vst [vmem:[%s181] sm:$0xff] %v70
  %s183 = scalar_lea.vmem %s1, 136
  %184 = vst [vmem:[%s183] sm:$0xff] %v74
  %s185 = scalar_lea.vmem %s1, 392
  %186 = vst [vmem:[%s185] sm:$0xff] %v78
  %s187 = scalar_lea.vmem %s1, 152
  %188 = vst [vmem:[%s187] sm:$0xff] %v83
  %s189 = scalar_lea.vmem %s1, 408
  %190 = vst [vmem:[%s189] sm:$0xff] %v88
  %s191 = scalar_lea.vmem %s1, 168
  %192 = vst [vmem:[%s191] sm:$0xff] %v93
  %s193 = scalar_lea.vmem %s1, 424
  %194 = vst [vmem:[%s193] sm:$0xff] %v98
  %s195 = scalar_lea.vmem %s1, 184
  %196 = vst [vmem:[%s195] sm:$0xff] %v103
  %s197 = scalar_lea.vmem %s1, 440
  %198 = vst [vmem:[%s197] sm:$0xff] %v108
  %s199 = scalar_lea.vmem %s1, 200
  %200 = vst [vmem:[%s199] sm:$0xff] %v113
  %s201 = scalar_lea.vmem %s1, 456
  %202 = vst [vmem:[%s201] sm:$0xff] %v118
  %s203 = scalar_lea.vmem %s1, 216
  %204 = vst [vmem:[%s203] sm:$0xff] %v123
  %s205 = scalar_lea.vmem %s1, 472
  %206 = vst [vmem:[%s205] sm:$0xff] %v128
  %s207 = scalar_lea.vmem %s1, 232
  %208 = vst [vmem:[%s207] sm:$0xff] %v133
  %s209 = scalar_lea.vmem %s1, 488
  %210 = vst [vmem:[%s209] sm:$0xff] %v138
  %s211 = scalar_lea.vmem %s1, 248
  %212 = vst [vmem:[%s211] sm:$0xff] %v143
  %s213 = scalar_lea.vmem %s1, 504
  %214 = vst [vmem:[%s213] sm:$0xff] %v148

// kernel: mul.101
$region0: #{mul.101}
  %s0 = inlined_call_operand.vmem [shape: f32[512], index: 0, kind: input, shape index: {}]
  %s1 = inlined_call_operand.vmem [shape: f32[2,16,16], index: 1, kind: output, shape index: {}]
  $region1: #{mul.101} parent=0
    #allocation0 [shape = 'u8[4096]{0}', space=vmem, size = 0x1000, scoped, tag = 'scoped mem for input reshape']
    %s3 = sshllo.u32 0, 4
    %v4 = vld [vmem:[%s0] sm:%s3]
    %5 = vst [vmem:[#allocation0] sm:%s3] %v4
    %v6 = vld [vmem:[#allocation0] sm:$0xf]
    %vm7 = vcmask 130048
    %8 = vst.msk [vmem:[%s1] ss:$8 sm:$0xf] %vm7, %v6
    %v9 = vld [vmem:[#allocation0] sm:$0xf]
    %10 = vrot.lane.b32.xlu0 %v9, 112
    %v11 = vpop.permute.xlu0 %10
    %vm12 = vcmask 130048
    %s13 = scalar_lea.vmem %s1, 1
    %14 = vst.msk [vmem:[%s13] ss:$8 sm:$0xf] %vm12, %v11
    %v15 = vld [vmem:[#allocation0] sm:$0xf]
    %16 = vrot.lane.b32.xlu0 %v15, 96
    %v17 = vpop.permute.xlu0 %16
    %vm18 = vcmask 130048
    %s19 = scalar_lea.vmem %s1, 2
    %20 = vst.msk [vmem:[%s19] ss:$8 sm:$0xf] %vm18, %v17
    %v21 = vld [vmem:[#allocation0] sm:$0xf]
    %22 = vrot.lane.b32.xlu0 %v21, 80
    %v23 = vpop.permute.xlu0 %22
    %vm24 = vcmask 130048
    %s25 = scalar_lea.vmem %s1, 3
    %26 = vst.msk [vmem:[%s25] ss:$8 sm:$0xf] %vm24, %v23
    %v27 = vld [vmem:[#allocation0] sm:$0xf]
    %28 = vrot.lane.b32.xlu0 %v27, 64
    %v29 = vpop.permute.xlu0 %28
    %vm30 = vcmask 130048
    %s31 = scalar_lea.vmem %s1, 4
    %32 = vst.msk [vmem:[%s31] ss:$8 sm:$0xf] %vm30, %v29
    %v33 = vld [vmem:[#allocation0] sm:$0xf]
    %34 = vrot.lane.b32.xlu0 %v33, 48
    %v35 = vpop.permute.xlu0 %34
    %vm36 = vcmask 130048
    %s37 = scalar_lea.vmem %s1, 5
    %38 = vst.msk [vmem:[%s37] ss:$8 sm:$0xf] %vm36, %v35
    %v39 = vld [vmem:[#allocation0] sm:$0xf]
    %40 = vrot.lane.b32.xlu0 %v39, 32
    %v41 = vpop.permute.xlu0 %40
    %vm42 = vcmask 130048
    %s43 = scalar_lea.vmem %s1, 6
    %44 = vst.msk [vmem:[%s43] ss:$8 sm:$0xf] %vm42, %v41
    %v45 = vld [vmem:[#allocation0] sm:$0xf]
    %46 = vrot.lane.b32.xlu0 %v45, 16
    %v47 = vpop.permute.xlu0 %46
    %vm48 = vcmask 130048
    %s49 = scalar_lea.vmem %s1, 7
    %50 = vst.msk [vmem:[%s49] ss:$8 sm:$0xf] %vm48, %v47

// kernel: mul.110
$region0: #{mul.110}
  #allocation0 [shape = 's32[1]{0}', space=sflag, size = 0x4, scoped, tag = 'scoped memory for mul.110']
  %s0 = inlined_call_operand.vmem [shape: f32[2,8], index: 0, kind: input, shape index: {}]
  %s1 = inlined_call_operand.vmem [shape: f32[2,16,16,8], index: 1, kind: output, shape index: {}]
  // Predicated region
  $region2: #{mul.110} parent=0 // pred_check
    _
  $region3: #{mul.110} parent=0 // pred_check_branch
    %3 = sbr.rel (0) target = $region5
  $region4: #{mul.110} parent=0 // pred_region
    _
  $region5: #{mul.110} parent=0 // pred_fallthru
    _
  %v4 = vld [vmem:[%s0] ss:$0 sm:$0xff]
  %5 = vst [vmem:[%s1] sm:$0xff] %v4
  %s6 = scalar_lea.vmem %s0, 1
  %v7 = vld [vmem:[%s6] ss:$0 sm:$0xff]
  %s8 = scalar_lea.vmem %s1, 256
  %9 = vst [vmem:[%s8] sm:$0xff] %v7
  %s10 = scalar_lea.vmem %s1, 16
  %11 = vst [vmem:[%s10] sm:$0xff] %v4
  %s12 = scalar_lea.vmem %s1, 272
  %13 = vst [vmem:[%s12] sm:$0xff] %v7
  %s14 = scalar_lea.vmem %s1, 32
  %15 = vst [vmem:[%s14] sm:$0xff] %v4
  %s16 = scalar_lea.vmem %s1, 288
  %17 = vst [vmem:[%s16] sm:$0xff] %v7
  %s18 = scalar_lea.vmem %s1, 48
  %19 = vst [vmem:[%s18] sm:$0xff] %v4
  %s20 = scalar_lea.vmem %s1, 304
  %21 = vst [vmem:[%s20] sm:$0xff] %v7
  %s22 = scalar_lea.vmem %s1, 64
  %23 = vst [vmem:[%s22] sm:$0xff] %v4
  %s24 = scalar_lea.vmem %s1, 320
  %25 = vst [vmem:[%s24] sm:$0xff] %v7
  %s26 = scalar_lea.vmem %s1, 80
  %27 = vst [vmem:[%s26] sm:$0xff] %v4
  %s28 = scalar_lea.vmem %s1, 336
  %29 = vst [vmem:[%s28] sm:$0xff] %v7
  %s30 = scalar_lea.vmem %s1, 96
  %31 = vst [vmem:[%s30] sm:$0xff] %v4
  %s32 = scalar_lea.vmem %s1, 352
  %33 = vst [vmem:[%s32] sm:$0xff] %v7
  %s34 = scalar_lea.vmem %s1, 112
  %35 = vst [vmem:[%s34] sm:$0xff] %v4
  %s36 = scalar_lea.vmem %s1, 368
  %37 = vst [vmem:[%s36] sm:$0xff] %v7
  %s38 = scalar_lea.vmem %s1, 128
  %39 = vst [vmem:[%s38] sm:$0xff] %v4
  %s40 = scalar_lea.vmem %s1, 384
  %41 = vst [vmem:[%s40] sm:$0xff] %v7
  %s42 = scalar_lea.vmem %s1, 144
  %43 = vst [vmem:[%s42] sm:$0xff] %v4
  %s44 = scalar_lea.vmem %s1, 400
  %45 = vst [vmem:[%s44] sm:$0xff] %v7
  %s46 = scalar_lea.vmem %s1, 160
  %47 = vst [vmem:[%s46] sm:$0xff] %v4
  %s48 = scalar_lea.vmem %s1, 416
  %49 = vst [vmem:[%s48] sm:$0xff] %v7
  %s50 = scalar_lea.vmem %s1, 176
  %51 = vst [vmem:[%s50] sm:$0xff] %v4
  %s52 = scalar_lea.vmem %s1, 432
  %53 = vst [vmem:[%s52] sm:$0xff] %v7
  %s54 = scalar_lea.vmem %s1, 192
  %55 = vst [vmem:[%s54] sm:$0xff] %v4
  %s56 = scalar_lea.vmem %s1, 448
  %57 = vst [vmem:[%s56] sm:$0xff] %v7
  %s58 = scalar_lea.vmem %s1, 208
  %59 = vst [vmem:[%s58] sm:$0xff] %v4
  %s60 = scalar_lea.vmem %s1, 464
  %61 = vst [vmem:[%s60] sm:$0xff] %v7
  %s62 = scalar_lea.vmem %s1, 224
  %63 = vst [vmem:[%s62] sm:$0xff] %v4
  %s64 = scalar_lea.vmem %s1, 480
  %65 = vst [vmem:[%s64] sm:$0xff] %v7
  %s66 = scalar_lea.vmem %s1, 240
  %67 = vst [vmem:[%s66] sm:$0xff] %v4
  %s68 = scalar_lea.vmem %s1, 496
  %69 = vst [vmem:[%s68] sm:$0xff] %v7
  %s70 = scalar_lea.vmem %s1, 8
  %71 = vst [vmem:[%s70] sm:$0xff] %v4
  %s72 = scalar_lea.vmem %s1, 264
  %73 = vst [vmem:[%s72] sm:$0xff] %v7
  %s74 = scalar_lea.vmem %s1, 24
  %75 = vst [vmem:[%s74] sm:$0xff] %v4
  %s76 = scalar_lea.vmem %s1, 280
  %77 = vst [vmem:[%s76] sm:$0xff] %v7
  %s78 = scalar_lea.vmem %s1, 40
  %79 = vst [vmem:[%s78] sm:$0xff] %v4
  %s80 = scalar_lea.vmem %s1, 296
  %81 = vst [vmem:[%s80] sm:$0xff] %v7
  %s82 = scalar_lea.vmem %s1, 56
  %83 = vst [vmem:[%s82] sm:$0xff] %v4
  %s84 = scalar_lea.vmem %s1, 312
  %85 = vst [vmem:[%s84] sm:$0xff] %v7
  %s86 = scalar_lea.vmem %s1, 72
  %87 = vst [vmem:[%s86] sm:$0xff] %v4
  %s88 = scalar_lea.vmem %s1, 328
  %89 = vst [vmem:[%s88] sm:$0xff] %v7
  %s90 = scalar_lea.vmem %s1, 88
  %91 = vst [vmem:[%s90] sm:$0xff] %v4
  %s92 = scalar_lea.vmem %s1, 344
  %93 = vst [vmem:[%s92] sm:$0xff] %v7
  %s94 = scalar_lea.vmem %s1, 104
  %95 = vst [vmem:[%s94] sm:$0xff] %v4
  %s96 = scalar_lea.vmem %s1, 360
  %97 = vst [vmem:[%s96] sm:$0xff] %v7
  %s98 = scalar_lea.vmem %s1, 120
  %99 = vst [vmem:[%s98] sm:$0xff] %v4
  %s100 = scalar_lea.vmem %s1, 376
  %101 = vst [vmem:[%s100] sm:$0xff] %v7
  %s102 = scalar_lea.vmem %s1, 136
  %103 = vst [vmem:[%s102] sm:$0xff] %v4
  %s104 = scalar_lea.vmem %s1, 392
  %105 = vst [vmem:[%s104] sm:$0xff] %v7
  %s106 = scalar_lea.vmem %s1, 152
  %107 = vst [vmem:[%s106] sm:$0xff] %v4
  %s108 = scalar_lea.vmem %s1, 408
  %109 = vst [vmem:[%s108] sm:$0xff] %v7
  %s110 = scalar_lea.vmem %s1, 168
  %111 = vst [vmem:[%s110] sm:$0xff] %v4
  %s112 = scalar_lea.vmem %s1, 424
  %113 = vst [vmem:[%s112] sm:$0xff] %v7
  %s114 = scalar_lea.vmem %s1, 184
  %115 = vst [vmem:[%s114] sm:$0xff] %v4
  %s116 = scalar_lea.vmem %s1, 440
  %117 = vst [vmem:[%s116] sm:$0xff] %v7
  %s118 = scalar_lea.vmem %s1, 200
  %119 = vst [vmem:[%s118] sm:$0xff] %v4
  %s120 = scalar_lea.vmem %s1, 456
  %121 = vst [vmem:[%s120] sm:$0xff] %v7
  %s122 = scalar_lea.vmem %s1, 216
  %123 = vst [vmem:[%s122] sm:$0xff] %v4
  %s124 = scalar_lea.vmem %s1, 472
  %125 = vst [vmem:[%s124] sm:$0xff] %v7
  %s126 = scalar_lea.vmem %s1, 232
  %127 = vst [vmem:[%s126] sm:$0xff] %v4
  %s128 = scalar_lea.vmem %s1, 488
  %129 = vst [vmem:[%s128] sm:$0xff] %v7
  %s130 = scalar_lea.vmem %s1, 248
  %131 = vst [vmem:[%s130] sm:$0xff] %v4
  %s132 = scalar_lea.vmem %s1, 504
  %133 = vst [vmem:[%s132] sm:$0xff] %v7

// kernel: maunet_forward.41
$region0: #{maunet_forward.41}
  #allocation0 [shape = 'u32[]', space=smem, size = 0x4, offset = 0x4, fixed_abs, tag = 'smem constant byte address 0x4 - core index']
  #allocation1 [shape = 'u32[144,128]{1,0:T(1,128)}', space=vmem, size = 0x12000, scoped, tag = 'internal scratch']
  %s0 = inlined_call_operand.vmem [shape: bf16[2,16], index: 0, kind: input, shape index: {}]
  %s1 = inlined_call_operand.vmem [shape: bf16[16,128], index: 1, kind: input, shape index: {}]
  %s2 = inlined_call_operand.vmem [shape: f32[1,128], index: 2, kind: input, shape index: {}]
  %s3 = inlined_call_operand.vmem [shape: f32[2,128], index: 3, kind: output, shape index: {}]
  %s4 = sld [smem:[#allocation0]]
  $region22: #{maunet_forward.41} parent=0
    _
  %s6 = ssub.s32 1, %s4
  %s7 = scalar_select 0, %s6, %s4
  // Predicated region
  $region2: #{maunet_forward.41} parent=0 // pred_check
    _
  $region3: #{maunet_forward.41} parent=0 // pred_check_branch
    %9 = sbr.rel (0) target = $region5
  $region4: #{maunet_forward.41} parent=0 // pred_region
    _
  $region5: #{maunet_forward.41} parent=0 // pred_fallthru
    _
  // Predicated region
  $region6: #{maunet_forward.41} parent=0 // pred_check
    _
  $region7: #{maunet_forward.41} parent=0 // pred_check_branch
    %11 = sbr.rel (0) target = $region9
  $region8: #{maunet_forward.41} parent=0 // pred_region
    _
  $region9: #{maunet_forward.41} parent=0 // pred_fallthru
    _
  // Predicated region
  $region10: #{maunet_forward.41} parent=0 // pred_check
    _
  $region11: #{maunet_forward.41} parent=0 // pred_check_branch
    %13 = sbr.rel (0) target = $region13
  $region12: #{maunet_forward.41} parent=0 // pred_region
    _
  $region13: #{maunet_forward.41} parent=0 // pred_fallthru
    _
  %v15 = vld [vmem:[%s0] sm:$0x1]
  %v16 = vld [vmem:[%s1] sm:$0xf]
  %v17 = vld [vmem:[%s1 + $0x4] sm:$0xf]
  %v18 = vld [vmem:[%s2] sm:$0x1]
  %v20 = vlaneseq
  %v21 = vshrl.u32 %v20, 7
  %v22 = vsub.s32 0, %v21
  %v23 = vrot.slane %v18, %v22
  %v27 = vunpack.c.l.b16 %v16
  %v28 = vunpack.c.l.b16 %v17
  %v29 = vpack.c.b16 %v28, %v27
  %vm31 = vcmask 130048
  %v33 = vsel %vm31, %v15, 0
  %35 = vmatprep.subr.bf16.mxu0 0
  %36 = vmatpush1.bf16.msra.mxu0 %v29
  %37 = vmatprep.subr.bf16.mxu0 0
  %38 = vmatpush1.bf16.msra.mxu0 0
  %39 = vmatprep.subr.bf16.mxu0 0
  %40 = vmatpush1.bf16.msra.mxu0 0
  %41 = vmatprep.subr.bf16.mxu0 0
  %42 = vmatpush1.bf16.msra.mxu0 0
  %43 = vmatprep.subr.bf16.mxu0 0
  %44 = vmatpush1.bf16.msra.mxu0 0
  %45 = vmatprep.subr.bf16.mxu0 0
  %46 = vmatpush1.bf16.msra.mxu0 0
  %47 = vmatprep.subr.bf16.mxu0 0
  %48 = vmatpush1.bf16.msra.mxu0 0
  %49 = vmatprep.subr.bf16.mxu0 0
  %50 = vmatpush1.bf16.msra.mxu0 0
  %51 = vmatprep.subr.bf16.mxu0 0
  %52 = vmatpush1.bf16.msra.mxu0 0
  %53 = vmatprep.subr.bf16.mxu0 0
  %54 = vmatpush1.bf16.msra.mxu0 0
  %55 = vmatprep.subr.bf16.mxu0 0
  %56 = vmatpush1.bf16.msra.mxu0 0
  %57 = vmatprep.subr.bf16.mxu0 0
  %58 = vmatpush1.bf16.msra.mxu0 0
  %59 = vmatprep.subr.bf16.mxu0 0
  %60 = vmatpush1.bf16.msra.mxu0 0
  %61 = vmatprep.subr.bf16.mxu0 0
  %62 = vmatpush1.bf16.msra.mxu0 0
  %63 = vmatprep.subr.bf16.mxu0 0
  %64 = vmatpush1.bf16.msra.mxu0 0
  %65 = vmatprep.subr.bf16.mxu0 0
  %66 = vmatpush1.bf16.msra.mxu0 0
  %67 = vmatprep.mubr.bf16.mxu0 0
  %68 = vmatmul.mubr.bf16.gmra.mrb[0].mxu0 %v33
  %v69 = vpop.f32.mrb[0].mxu0
  %v70 = vadd.f32 %v23, %v69
  %v71 = vpop.f32.mrb[0].mxu0
  %v72 = vpop.f32.mrb[0].mxu0
  %v73 = vpop.f32.mrb[0].mxu0
  %74 = vdwg.mxu0
  %v75 = vmul.f32 %v70, 0.5
  %v76 = vxor.u32 %v75, 2147483648
  %v77 = vmul.f32 %v76, 1.442695
  %v78 = vpow.pop %v77
  %v79 = vadd.f32 %v78, 1.0
  %v80 = vrcp.pop %v79
  %v81 = vmul.f32 1.0, %v80
  %82 = vst [vmem:[%s3] sm:$0x3] %v81
  // Predicated region
  $region14: #{maunet_forward.41} parent=0 // pred_check
    _
  $region15: #{maunet_forward.41} parent=0 // pred_check_branch
    %84 = sbr.rel (0) target = $region17
  $region16: #{maunet_forward.41} parent=0 // pred_region
    _
  $region17: #{maunet_forward.41} parent=0 // pred_fallthru
    _
  // Predicated region
  $region18: #{maunet_forward.41} parent=0 // pred_check
    _
  $region19: #{maunet_forward.41} parent=0 // pred_check_branch
    %86 = sbr.rel (0) target = $region21
  $region20: #{maunet_forward.41} parent=0 // pred_region
    _
  $region21: #{maunet_forward.41} parent=0 // pred_fallthru
    _

// kernel: maunet_forward.42
$region0: #{maunet_forward.42}
  #allocation0 [shape = 'u32[]', space=smem, size = 0x4, offset = 0x4, fixed_abs, tag = 'smem constant byte address 0x4 - core index']
  #allocation1 [shape = 'u32[144,128]{1,0:T(1,128)}', space=vmem, size = 0x12000, scoped, tag = 'internal scratch']
  %s0 = inlined_call_operand.vmem [shape: bf16[512,144], index: 0, kind: input, shape index: {}]
  %s1 = inlined_call_operand.vmem [shape: bf16[144,128], index: 1, kind: input, shape index: {}]
  %s2 = inlined_call_operand.vmem [shape: f32[1,128], index: 2, kind: input, shape index: {}]
  %s3 = inlined_call_operand.vmem [shape: f32[512,128], index: 3, kind: output, shape index: {}]
  %s4 = sld [smem:[#allocation0]]
  $region45: #{maunet_forward.42} parent=0
    _
  %s6 = ssub.s32 1, %s4
  %s7 = scalar_select 0, %s6, %s4
  loop: start=0, step=1, limit=4
  $region2: #{maunet_forward.42} parent=0 // loop_pre_header
    _
  $region3: #{maunet_forward.42} parent=0 // loop_header
    %s9 = sphi 0, %s13
    %p10 = scmp.ge.s32.totalorder %s9, 4
    %s19 = sphi 0, %s21
    %s22 = sphi 0, %s19
    %s23 = sphi 0, %s22
    %s39 = sphi 0, %s23
    %s43 = sphi 0, %s43
    %s45 = sphi 0, %s43
    %s46 = sphi 0, %s45
    %s60 = sphi 0, %s46
    %s64 = sphi 0, %s64
    %s66 = sphi 0, %s64
    %s67 = sphi 0, %s66
    %s81 = sphi 0, %s67
    %s87 = sphi 0, %s89
    %s90 = sphi 0, %s87
    %s91 = sphi 0, %s90
    %s107 = sphi 0, %s91
  $region4: #{maunet_forward.42} parent=0 // loop_header_branch
    %12 = sbr.rel (%p10) target = $region8
  $region5: #{maunet_forward.42} parent=0 // loop_body
    %s14 = ssub.s32 %s9, 1
    %s15 = ssub.s32 %s9, 2
    %s16 = sadd.s32 %s9, 1
    %s17 = ssub.s32 %s9, %s16
    %p18 = scmp.eq.s32.totalorder %s17, 0
    %s20 = sadd.s32 %s19, 1
    %s21 = scalar_select %p18, %s19, %s20
    %p24 = pneg %p18
    %p25 = scmp.eq.s32.totalorder %s9, 1
    %p26 = por %p24, %p25
    %p27 = scmp.ne.s32.totalorder %s19, %s22
    %p28 = scmp.eq.s32.totalorder %s9, 0
    %p29 = por %p27, %p28
    %p30 = scmp.ne.s32.totalorder %s19, %s22
    %p31 = scmp.eq.s32.totalorder %s14, 1
    %p32 = por %p30, %p31
    %p33 = scmp.ne.s32.totalorder %s22, %s23
    %p34 = scmp.eq.s32.totalorder %s14, 0
    %p35 = por %p33, %p34
    %p36 = scmp.ne.s32.totalorder %s22, %s23
    %p37 = scmp.eq.s32.totalorder %s15, 1
    %p38 = por %p36, %p37
    %p40 = scmp.ne.s32.totalorder %s23, %s39
    %p41 = scmp.eq.s32.totalorder %s15, 0
    %p42 = por %p40, %p41
    %s44 = sadd.s32 %s43, 1
    %p47 = scmp.eq.s32.totalorder %s9, 1
    %p48 = scmp.ne.s32.totalorder %s43, %s45
    %p49 = scmp.eq.s32.totalorder %s9, 0
    %p50 = por %p48, %p49
    %p51 = scmp.ne.s32.totalorder %s43, %s45
    %p52 = scmp.eq.s32.totalorder %s14, 1
    %p53 = por %p51, %p52
    %p54 = scmp.ne.s32.totalorder %s45, %s46
    %p55 = scmp.eq.s32.totalorder %s14, 0
    %p56 = por %p54, %p55
    %p57 = scmp.ne.s32.totalorder %s45, %s46
    %p58 = scmp.eq.s32.totalorder %s15, 1
    %p59 = por %p57, %p58
    %p61 = scmp.ne.s32.totalorder %s46, %s60
    %p62 = scmp.eq.s32.totalorder %s15, 0
    %p63 = por %p61, %p62
    %s65 = sadd.s32 %s64, 1
    %p68 = scmp.eq.s32.totalorder %s9, 1
    %p69 = scmp.ne.s32.totalorder %s64, %s66
    %p70 = scmp.eq.s32.totalorder %s9, 0
    %p71 = por %p69, %p70
    %p72 = scmp.ne.s32.totalorder %s64, %s66
    %p73 = scmp.eq.s32.totalorder %s14, 1
    %p74 = por %p72, %p73
    %p75 = scmp.ne.s32.totalorder %s66, %s67
    %p76 = scmp.eq.s32.totalorder %s14, 0
    %p77 = por %p75, %p76
    %p78 = scmp.ne.s32.totalorder %s66, %s67
    %p79 = scmp.eq.s32.totalorder %s15, 1
    %p80 = por %p78, %p79
    %p82 = scmp.ne.s32.totalorder %s67, %s81
    %p83 = scmp.eq.s32.totalorder %s15, 0
    %p84 = por %p82, %p83
    %s85 = ssub.s32 %s9, %s16
    %p86 = scmp.eq.s32.totalorder %s85, 0
    %s88 = sadd.s32 %s87, 1
    %s89 = scalar_select %p86, %s87, %s88
    %p92 = pneg %p86
    %p93 = scmp.eq.s32.totalorder %s9, 1
    %p94 = por %p92, %p93
    %p95 = scmp.ne.s32.totalorder %s87, %s90
    %p96 = scmp.eq.s32.totalorder %s9, 0
    %p97 = por %p95, %p96
    %p98 = scmp.ne.s32.totalorder %s87, %s90
    %p99 = scmp.eq.s32.totalorder %s14, 1
    %p100 = por %p98, %p99
    %p101 = scmp.ne.s32.totalorder %s90, %s91
    %p102 = scmp.eq.s32.totalorder %s14, 0
    %p103 = por %p101, %p102
    %p104 = scmp.ne.s32.totalorder %s90, %s91
    %p105 = scmp.eq.s32.totalorder %s15, 1
    %p106 = por %p104, %p105
    %p108 = scmp.ne.s32.totalorder %s91, %s107
    %p109 = scmp.eq.s32.totalorder %s15, 0
    %p110 = por %p108, %p109
    %p111 = scmp.le.s32.totalorder 1, %s9
    %p112 = scmp.lt.s32.totalorder %s9, 3
    %p113 = pnand %p111, %p112
    %p114 = pneg %p113
    // Predicated region
    $region9: #{maunet_forward.42} parent=5 // pred_check
      _
    $region10: #{maunet_forward.42} parent=5 // pred_check_branch
      %116 = sbr.rel (%p113) target = $region12
    $region11: #{maunet_forward.42} parent=5 // pred_region
      %s117 = ssub.s32 %s9, 1
      // Predicated region
      $region13: #{maunet_forward.42} parent=11 // pred_check
        %p118 = pneg %p56
      $region14: #{maunet_forward.42} parent=11 // pred_check_branch
        %120 = sbr.rel (%p118) target = $region16
      $region15: #{maunet_forward.42} parent=11 // pred_region
        _
      $region16: #{maunet_forward.42} parent=11 // pred_fallthru
        _
      // Predicated region
      $region17: #{maunet_forward.42} parent=11 // pred_check
        %p121 = pneg %p77
      $region18: #{maunet_forward.42} parent=11 // pred_check_branch
        %123 = sbr.rel (%p121) target = $region20
      $region19: #{maunet_forward.42} parent=11 // pred_region
        _
      $region20: #{maunet_forward.42} parent=11 // pred_fallthru
        _
    $region12: #{maunet_forward.42} parent=5 // pred_fallthru
      _
    %p124 = scmp.lt.s32.totalorder %s9, 2
    // Predicated region
    $region21: #{maunet_forward.42} parent=5 // pred_check
      %p125 = pneg %p124
    $region22: #{maunet_forward.42} parent=5 // pred_check_branch
      %127 = sbr.rel (%p125) target = $region24
    $region23: #{maunet_forward.42} parent=5 // pred_region
      // Predicated region
      $region25: #{maunet_forward.42} parent=23 // pred_check
        %p128 = pneg %p29
      $region26: #{maunet_forward.42} parent=23 // pred_check_branch
        %130 = sbr.rel (%p128) target = $region28
      $region27: #{maunet_forward.42} parent=23 // pred_region
        %s131 = smul.u32 32, %s9
        %p132 = scmp.lt.s32.totalorder %s131, 63
        %s133 = scalar_select %p132, %s131, 63
        %s134 = smul.addr %s133, 2
        %s135 = smul.addr %s134, 4
        %s136 = scalar_lea.vmem %s0, %s135
        %s137 = smul.u32 32, %s9
      $region28: #{maunet_forward.42} parent=23 // pred_fallthru
        _
    $region24: #{maunet_forward.42} parent=5 // pred_fallthru
      _
    %p138 = scmp.le.s32.totalorder 1, %s9
    %p139 = scmp.lt.s32.totalorder %s9, 3
    %p140 = pnand %p138, %p139
    %p141 = pneg %p140
    // Predicated region
    $region29: #{maunet_forward.42} parent=5 // pred_check
      _
    $region30: #{maunet_forward.42} parent=5 // pred_check_branch
      %143 = sbr.rel (%p140) target = $region32
    $region31: #{maunet_forward.42} parent=5 // pred_region
      %s144 = ssub.s32 %s9, 1
      %s145 = smul.u32 32, %s14
      %p146 = scmp.lt.s32.totalorder %s145, 63
      %s147 = scalar_select %p146, %s145, 63
      %s148 = smul.addr %s147, 2
      %s149 = smul.addr %s148, 4
      %s150 = scalar_lea.vmem %s0, %s149
      %p151 = pneg %p35
      %p152 = pneg %p32
      %p153 = pneg %p56
      %p154 = pneg %p53
      %p155 = pneg %p77
      %p156 = pneg %p74
      %p157 = pneg %p103
      %p158 = pneg %p100
      %s159 = smul.u32 32, %s14
      %p160 = scmp.lt.s32.totalorder %s159, 63
      %s161 = scalar_select %p160, %s159, 63
      %s162 = smul.addr %s161, 8
      %s163 = scalar_lea.vmem %s3, %s162
      %s164 = smul.u32 32, %s14
      %p165 = scmp.lt.s32.totalorder %s164, 63
      %s166 = scalar_select %p165, %s164, 63
      %s167 = smul.addr %s166, 2
      %s168 = smul.addr %s167, 4
      %s169 = scalar_lea.vmem %s0, %s168
      %s170 = smul.u32 32, %s14
      %s171 = smul.u32 32, %s14
      %p172 = scmp.lt.s32.totalorder %s171, 63
      %s173 = scalar_select %p172, %s171, 63
      %s174 = smul.addr %s173, 8
      %s175 = scalar_lea.vmem %s3, %s174
      %s176 = smul.u32 32, %s14
      %v178 = vld [vmem:[%s169] sm:$0xff]
      %v179 = vld [vmem:[%s169 + $0x8] sm:$0xff]
      %v180 = vld [vmem:[%s169 + $0x10] sm:$0xff]
      %v181 = vld [vmem:[%s169 + $0x18] sm:$0xff]
      %v182 = vld [vmem:[%s169 + $0x20] sm:$0xff]
      %v183 = vld [vmem:[%s169 + $0x28] sm:$0xff]
      %v184 = vld [vmem:[%s169 + $0x30] sm:$0xff]
      %v185 = vld [vmem:[%s169 + $0x38] sm:$0xff]
      %v186 = vld [vmem:[%s169 + $0x40] sm:$0xff]
      %v187 = vld [vmem:[%s169 + $0x48] sm:$0xff]
      %v188 = vld [vmem:[%s169 + $0x50] sm:$0xff]
      %v189 = vld [vmem:[%s169 + $0x58] sm:$0xff]
      %v190 = vld [vmem:[%s169 + $0x60] sm:$0xff]
      %v191 = vld [vmem:[%s169 + $0x68] sm:$0xff]
      %v192 = vld [vmem:[%s169 + $0x70] sm:$0xff]
      %v193 = vld [vmem:[%s169 + $0x78] sm:$0xff]
      %v194 = vld [vmem:[%s169 + $0x80] sm:$0xff]
      %v195 = vld [vmem:[%s169 + $0x88] sm:$0xff]
      %v196 = vld [vmem:[%s169 + $0x90] sm:$0xff]
      %v197 = vld [vmem:[%s169 + $0x98] sm:$0xff]
      %v198 = vld [vmem:[%s169 + $0xa0] sm:$0xff]
      %v199 = vld [vmem:[%s169 + $0xa8] sm:$0xff]
      %v200 = vld [vmem:[%s169 + $0xb0] sm:$0xff]
      %v201 = vld [vmem:[%s169 + $0xb8] sm:$0xff]
      %v202 = vld [vmem:[%s169 + $0xc0] sm:$0xff]
      %v203 = vld [vmem:[%s169 + $0xc8] sm:$0xff]
      %v204 = vld [vmem:[%s169 + $0xd0] sm:$0xff]
      %v205 = vld [vmem:[%s169 + $0xd8] sm:$0xff]
      %v206 = vld [vmem:[%s169 + $0xe0] sm:$0xff]
      %v207 = vld [vmem:[%s169 + $0xe8] sm:$0xff]
      %v208 = vld [vmem:[%s169 + $0xf0] sm:$0xff]
      %v209 = vld [vmem:[%s169 + $0xf8] sm:$0xff]
      %v210 = vld [vmem:[%s1] sm:$0xf]
      %v211 = vld [vmem:[%s1 + $0x4] sm:$0xf]
      %v212 = vld [vmem:[%s1 + $0x8] sm:$0xf]
      %v213 = vld [vmem:[%s1 + $0xc] sm:$0xf]
      %v214 = vld [vmem:[%s1 + $0x10] sm:$0xf]
      %v215 = vld [vmem:[%s1 + $0x14] sm:$0xf]
      %v216 = vld [vmem:[%s1 + $0x18] sm:$0xf]
      %v217 = vld [vmem:[%s1 + $0x1c] sm:$0xf]
      %v218 = vld [vmem:[%s1 + $0x20] sm:$0xf]
      %v219 = vld [vmem:[%s1 + $0x24] sm:$0xf]
      %v220 = vld [vmem:[%s1 + $0x28] sm:$0xf]
      %v221 = vld [vmem:[%s1 + $0x2c] sm:$0xf]
      %v222 = vld [vmem:[%s1 + $0x30] sm:$0xf]
      %v223 = vld [vmem:[%s1 + $0x34] sm:$0xf]
      %v224 = vld [vmem:[%s1 + $0x38] sm:$0xf]
      %v225 = vld [vmem:[%s1 + $0x3c] sm:$0xf]
      %v226 = vld [vmem:[%s1 + $0x40] sm:$0xf]
      %v227 = vld [vmem:[%s1 + $0x44] sm:$0xf]
      %v228 = vld [vmem:[%s2] sm:$0x1]
      %v230 = vlaneseq
      %v231 = vshrl.u32 %v230, 7
      %v232 = vsub.s32 0, %v231
      %v233 = vrot.slane %v228, %v232
      %v267 = vunpack.c.l.b16 %v178
      %v268 = vunpack.c.h.b16 %v178
      %v269 = vunpack.c.l.b16 %v179
      %v270 = vunpack.c.h.b16 %v179
      %v271 = vunpack.c.l.b16 %v180
      %v272 = vunpack.c.h.b16 %v180
      %v273 = vunpack.c.l.b16 %v181
      %v274 = vunpack.c.h.b16 %v181
      %v275 = vunpack.c.l.b16 %v182
      %v276 = vunpack.c.h.b16 %v182
      %v277 = vunpack.c.l.b16 %v183
      %v278 = vunpack.c.h.b16 %v183
      %v279 = vunpack.c.l.b16 %v184
      %v280 = vunpack.c.h.b16 %v184
      %v281 = vunpack.c.l.b16 %v185
      %v282 = vunpack.c.h.b16 %v185
      %v283 = vunpack.c.l.b16 %v186
      %v284 = vunpack.c.h.b16 %v186
      %v285 = vunpack.c.l.b16 %v187
      %v286 = vunpack.c.h.b16 %v187
      %v287 = vunpack.c.l.b16 %v188
      %v288 = vunpack.c.h.b16 %v188
      %v289 = vunpack.c.l.b16 %v189
      %v290 = vunpack.c.h.b16 %v189
      %v291 = vunpack.c.l.b16 %v190
      %v292 = vunpack.c.h.b16 %v190
      %v293 = vunpack.c.l.b16 %v191
      %v294 = vunpack.c.h.b16 %v191
      %v295 = vunpack.c.l.b16 %v192
      %v296 = vunpack.c.h.b16 %v192
      %v297 = vunpack.c.l.b16 %v193
      %v298 = vunpack.c.h.b16 %v193
      %v299 = vunpack.c.l.b16 %v194
      %v300 = vunpack.c.h.b16 %v194
      %v301 = vunpack.c.l.b16 %v195
      %v302 = vunpack.c.h.b16 %v195
      %v303 = vunpack.c.l.b16 %v196
      %v304 = vunpack.c.h.b16 %v196
      %v305 = vunpack.c.l.b16 %v197
      %v306 = vunpack.c.h.b16 %v197
      %v307 = vunpack.c.l.b16 %v198
      %v308 = vunpack.c.h.b16 %v198
      %v309 = vunpack.c.l.b16 %v199
      %v310 = vunpack.c.h.b16 %v199
      %v311 = vunpack.c.l.b16 %v200
      %v312 = vunpack.c.h.b16 %v200
      %v313 = vunpack.c.l.b16 %v201
      %v314 = vunpack.c.h.b16 %v201
      %v315 = vunpack.c.l.b16 %v202
      %v316 = vunpack.c.h.b16 %v202
      %v317 = vunpack.c.l.b16 %v203
      %v318 = vunpack.c.h.b16 %v203
      %v319 = vunpack.c.l.b16 %v204
      %v320 = vunpack.c.h.b16 %v204
      %v321 = vunpack.c.l.b16 %v205
      %v322 = vunpack.c.h.b16 %v205
      %v323 = vunpack.c.l.b16 %v206
      %v324 = vunpack.c.h.b16 %v206
      %v325 = vunpack.c.l.b16 %v207
      %v326 = vunpack.c.h.b16 %v207
      %v327 = vunpack.c.l.b16 %v208
      %v328 = vunpack.c.h.b16 %v208
      %v329 = vunpack.c.l.b16 %v209
      %v330 = vunpack.c.h.b16 %v209
      %v331 = vpack.c.b16 %v269, %v267
      %v332 = vpack.c.b16 %v270, %v268
      %v333 = vpack.c.b16 %v273, %v271
      %v334 = vpack.c.b16 %v274, %v272
      %v335 = vpack.c.b16 %v277, %v275
      %v336 = vpack.c.b16 %v278, %v276
      %v337 = vpack.c.b16 %v281, %v279
      %v338 = vpack.c.b16 %v282, %v280
      %v339 = vpack.c.b16 %v285, %v283
      %v340 = vpack.c.b16 %v286, %v284
      %v341 = vpack.c.b16 %v289, %v287
      %v342 = vpack.c.b16 %v290, %v288
      %v343 = vpack.c.b16 %v293, %v291
      %v344 = vpack.c.b16 %v294, %v292
      %v345 = vpack.c.b16 %v297, %v295
      %v346 = vpack.c.b16 %v298, %v296
      %v347 = vpack.c.b16 %v301, %v299
      %v348 = vpack.c.b16 %v302, %v300
      %v349 = vpack.c.b16 %v305, %v303
      %v350 = vpack.c.b16 %v306, %v304
      %v351 = vpack.c.b16 %v309, %v307
      %v352 = vpack.c.b16 %v310, %v308
      %v353 = vpack.c.b16 %v313, %v311
      %v354 = vpack.c.b16 %v314, %v312
      %v355 = vpack.c.b16 %v317, %v315
      %v356 = vpack.c.b16 %v318, %v316
      %v357 = vpack.c.b16 %v321, %v319
      %v358 = vpack.c.b16 %v322, %v320
      %v359 = vpack.c.b16 %v325, %v323
      %v360 = vpack.c.b16 %v326, %v324
      %v361 = vpack.c.b16 %v329, %v327
      %v362 = vpack.c.b16 %v330, %v328
      %v397 = vunpack.c.l.b16 %v210
      %v398 = vunpack.c.l.b16 %v211
      %v399 = vunpack.c.l.b16 %v212
      %v400 = vunpack.c.l.b16 %v213
      %v401 = vunpack.c.l.b16 %v214
      %v402 = vunpack.c.l.b16 %v215
      %v403 = vunpack.c.l.b16 %v216
      %v404 = vunpack.c.l.b16 %v217
      %v405 = vunpack.c.l.b16 %v218
      %v406 = vunpack.c.l.b16 %v219
      %v407 = vunpack.c.l.b16 %v220
      %v408 = vunpack.c.l.b16 %v221
      %v409 = vunpack.c.l.b16 %v222
      %v410 = vunpack.c.l.b16 %v223
      %v411 = vunpack.c.l.b16 %v224
      %v412 = vunpack.c.l.b16 %v225
      %v413 = vunpack.c.l.b16 %v226
      %v414 = vunpack.c.l.b16 %v227
      %v415 = vpack.c.b16 %v398, %v397
      %v416 = vpack.c.b16 %v400, %v399
      %v417 = vpack.c.b16 %v402, %v401
      %v418 = vpack.c.b16 %v404, %v403
      %v419 = vpack.c.b16 %v406, %v405
      %v420 = vpack.c.b16 %v408, %v407
      %v421 = vpack.c.b16 %v410, %v409
      %v422 = vpack.c.b16 %v412, %v411
      %v423 = vpack.c.b16 %v414, %v413
      %vm433 = vcmask 130048
      %v435 = vsel %vm433, %v332, 0
      %v438 = vsel %vm433, %v334, 0
      %v441 = vsel %vm433, %v336, 0
      %v444 = vsel %vm433, %v338, 0
      %v447 = vsel %vm433, %v340, 0
      %v450 = vsel %vm433, %v342, 0
      %v453 = vsel %vm433, %v344, 0
      %v456 = vsel %vm433, %v346, 0
      %v459 = vsel %vm433, %v348, 0
      %v462 = vsel %vm433, %v350, 0
      %v465 = vsel %vm433, %v352, 0
      %v468 = vsel %vm433, %v354, 0
      %v471 = vsel %vm433, %v356, 0
      %v474 = vsel %vm433, %v358, 0
      %v477 = vsel %vm433, %v360, 0
      %v480 = vsel %vm433, %v362, 0
      %482 = vmatprep.subr.bf16.mxu0 0
      %483 = vmatpush1.bf16.msra.mxu0 %v415
      %484 = vmatprep.subr.bf16.mxu0 0
      %485 = vmatpush1.bf16.msra.mxu0 %v416
      %486 = vmatprep.subr.bf16.mxu0 0
      %487 = vmatpush1.bf16.msra.mxu0 %v417
      %488 = vmatprep.subr.bf16.mxu0 0
      %489 = vmatpush1.bf16.msra.mxu0 %v418
      %490 = vmatprep.subr.bf16.mxu0 0
      %491 = vmatpush1.bf16.msra.mxu0 %v419
      %492 = vmatprep.subr.bf16.mxu0 0
      %493 = vmatpush1.bf16.msra.mxu0 %v420
      %494 = vmatprep.subr.bf16.mxu0 0
      %495 = vmatpush1.bf16.msra.mxu0 %v421
      %496 = vmatprep.subr.bf16.mxu0 0
      %497 = vmatpush1.bf16.msra.mxu0 %v422
      %498 = vmatprep.subr.bf16.mxu0 0
      %499 = vmatpush1.bf16.msra.mxu0 %v423
      %500 = vmatprep.subr.bf16.mxu0 0
      %501 = vmatpush1.bf16.msra.mxu0 0
      %502 = vmatprep.subr.bf16.mxu0 0
      %503 = vmatpush1.bf16.msra.mxu0 0
      %504 = vmatprep.subr.bf16.mxu0 0
      %505 = vmatpush1.bf16.msra.mxu0 0
      %506 = vmatprep.subr.bf16.mxu0 0
      %507 = vmatpush1.bf16.msra.mxu0 0
      %508 = vmatprep.subr.bf16.mxu0 0
      %509 = vmatpush1.bf16.msra.mxu0 0
      %510 = vmatprep.subr.bf16.mxu0 0
      %511 = vmatpush1.bf16.msra.mxu0 0
      %512 = vmatprep.subr.bf16.mxu0 0
      %513 = vmatpush1.bf16.msra.mxu0 0
      %514 = vmatprep.mubr.bf16.mxu0 %v435
      %515 = vmatmul.mubr.bf16.gmra.mrb[0].mxu0 %v331
      %v516 = vpop.f32.mrb[0].mxu0
      %v517 = vadd.f32 %v233, %v516
      %v518 = vpop.f32.mrb[0].mxu0
      %v519 = vpop.f32.mrb[0].mxu0
      %v520 = vadd.f32 %v233, %v519
      %v521 = vpop.f32.mrb[0].mxu0
      %522 = vmatprep.mubr.bf16.mxu0 %v438
      %523 = vmatmul.mubr.bf16.gmra.mrb[0].mxu0 %v333
      %v524 = vpop.f32.mrb[0].mxu0
      %v525 = vadd.f32 %v233, %v524
      %v526 = vpop.f32.mrb[0].mxu0
      %v527 = vpop.f32.mrb[0].mxu0
      %v528 = vadd.f32 %v233, %v527
      %v529 = vpop.f32.mrb[0].mxu0
      %530 = vmatprep.mubr.bf16.mxu0 %v441
      %531 = vmatmul.mubr.bf16.gmra.mrb[0].mxu0 %v335
      %v532 = vpop.f32.mrb[0].mxu0
      %v533 = vadd.f32 %v233, %v532
      %v534 = vpop.f32.mrb[0].mxu0
      %v535 = vpop.f32.mrb[0].mxu0
      %v536 = vadd.f32 %v233, %v535
      %v537 = vpop.f32.mrb[0].mxu0
      %538 = vmatprep.mubr.bf16.mxu0 %v444
      %539 = vmatmul.mubr.bf16.gmra.mrb[0].mxu0 %v337
      %v540 = vpop.f32.mrb[0].mxu0
      %v541 = vadd.f32 %v233, %v540
      %v542 = vpop.f32.mrb[0].mxu0
      %v543 = vpop.f32.mrb[0].mxu0
      %v544 = vadd.f32 %v233, %v543
      %v545 = vpop.f32.mrb[0].mxu0
      %546 = vmatprep.mubr.bf16.mxu0 %v447
      %547 = vmatmul.mubr.bf16.gmra.mrb[0].mxu0 %v339
      %v548 = vpop.f32.mrb[0].mxu0
      %v549 = vadd.f32 %v233, %v548
      %v550 = vpop.f32.mrb[0].mxu0
      %v551 = vpop.f32.mrb[0].mxu0
      %v552 = vadd.f32 %v233, %v551
      %v553 = vpop.f32.mrb[0].mxu0
      %554 = vmatprep.mubr.bf16.mxu0 %v450
      %555 = vmatmul.mubr.bf16.gmra.mrb[0].mxu0 %v341
      %v556 = vpop.f32.mrb[0].mxu0
      %v557 = vadd.f32 %v233, %v556
      %v558 = vpop.f32.mrb[0].mxu0
      %v559 = vpop.f32.mrb[0].mxu0
      %v560 = vadd.f32 %v233, %v559
      %v561 = vpop.f32.mrb[0].mxu0
      %562 = vmatprep.mubr.bf16.mxu0 %v453
      %563 = vmatmul.mubr.bf16.gmra.mrb[0].mxu0 %v343
      %v564 = vpop.f32.mrb[0].mxu0
      %v565 = vadd.f32 %v233, %v564
      %v566 = vpop.f32.mrb[0].mxu0
      %v567 = vpop.f32.mrb[0].mxu0
      %v568 = vadd.f32 %v233, %v567
      %v569 = vpop.f32.mrb[0].mxu0
      %570 = vmatprep.mubr.bf16.mxu0 %v456
      %571 = vmatmul.mubr.bf16.gmra.mrb[0].mxu0 %v345
      %v572 = vpop.f32.mrb[0].mxu0
      %v573 = vadd.f32 %v233, %v572
      %v574 = vpop.f32.mrb[0].mxu0
      %v575 = vpop.f32.mrb[0].mxu0
      %v576 = vadd.f32 %v233, %v575
      %v577 = vpop.f32.mrb[0].mxu0
      %578 = vmatprep.mubr.bf16.mxu0 %v459
      %579 = vmatmul.mubr.bf16.gmra.mrb[0].mxu0 %v347
      %v580 = vpop.f32.mrb[0].mxu0
      %v581 = vadd.f32 %v233, %v580
      %v582 = vpop.f32.mrb[0].mxu0
      %v583 = vpop.f32.mrb[0].mxu0
      %v584 = vadd.f32 %v233, %v583
      %v585 = vpop.f32.mrb[0].mxu0
      %586 = vmatprep.mubr.bf16.mxu0 %v462
      %587 = vmatmul.mubr.bf16.gmra.mrb[0].mxu0 %v349
      %v588 = vpop.f32.mrb[0].mxu0
      %v589 = vadd.f32 %v233, %v588
      %v590 = vpop.f32.mrb[0].mxu0
      %v591 = vpop.f32.mrb[0].mxu0
      %v592 = vadd.f32 %v233, %v591
      %v593 = vpop.f32.mrb[0].mxu0
      %594 = vmatprep.mubr.bf16.mxu0 %v465
      %595 = vmatmul.mubr.bf16.gmra.mrb[0].mxu0 %v351
      %v596 = vpop.f32.mrb[0].mxu0
      %v597 = vadd.f32 %v233, %v596
      %v598 = vpop.f32.mrb[0].mxu0
      %v599 = vpop.f32.mrb[0].mxu0
      %v600 = vadd.f32 %v233, %v599
      %v601 = vpop.f32.mrb[0].mxu0
      %602 = vmatprep.mubr.bf16.mxu0 %v468
      %603 = vmatmul.mubr.bf16.gmra.mrb[0].mxu0 %v353
      %v604 = vpop.f32.mrb[0].mxu0
      %v605 = vadd.f32 %v233, %v604
      %v606 = vpop.f32.mrb[0].mxu0
      %v607 = vpop.f32.mrb[0].mxu0
      %v608 = vadd.f32 %v233, %v607
      %v609 = vpop.f32.mrb[0].mxu0
      %610 = vmatprep.mubr.bf16.mxu0 %v471
      %611 = vmatmul.mubr.bf16.gmra.mrb[0].mxu0 %v355
      %v612 = vpop.f32.mrb[0].mxu0
      %v613 = vadd.f32 %v233, %v612
      %v614 = vpop.f32.mrb[0].mxu0
      %v615 = vpop.f32.mrb[0].mxu0
      %v616 = vadd.f32 %v233, %v615
      %v617 = vpop.f32.mrb[0].mxu0
      %618 = vmatprep.mubr.bf16.mxu0 %v474
      %619 = vmatmul.mubr.bf16.gmra.mrb[0].mxu0 %v357
      %v620 = vpop.f32.mrb[0].mxu0
      %v621 = vadd.f32 %v233, %v620
      %v622 = vpop.f32.mrb[0].mxu0
      %v623 = vpop.f32.mrb[0].mxu0
      %v624 = vadd.f32 %v233, %v623
      %v625 = vpop.f32.mrb[0].mxu0
      %626 = vmatprep.mubr.bf16.mxu0 %v477
      %627 = vmatmul.mubr.bf16.gmra.mrb[0].mxu0 %v359
      %v628 = vpop.f32.mrb[0].mxu0
      %v629 = vadd.f32 %v233, %v628
      %v630 = vpop.f32.mrb[0].mxu0
      %v631 = vpop.f32.mrb[0].mxu0
      %v632 = vadd.f32 %v233, %v631
      %v633 = vpop.f32.mrb[0].mxu0
      %634 = vmatprep.mubr.bf16.mxu0 %v480
      %635 = vmatmul.mubr.bf16.gmra.mrb[0].mxu0 %v361
      %v636 = vpop.f32.mrb[0].mxu0
      %v637 = vadd.f32 %v233, %v636
      %v638 = vpop.f32.mrb[0].mxu0
      %v639 = vpop.f32.mrb[0].mxu0
      %v640 = vadd.f32 %v233, %v639
      %v641 = vpop.f32.mrb[0].mxu0
      %642 = vdwg.mxu0
      %v643 = vmax.f32 %v517, 0.0
      %v644 = vmax.f32 %v520, 0.0
      %v645 = vmax.f32 %v525, 0.0
      %v646 = vmax.f32 %v528, 0.0
      %v647 = vmax.f32 %v533, 0.0
      %v648 = vmax.f32 %v536, 0.0
      %v649 = vmax.f32 %v541, 0.0
      %v650 = vmax.f32 %v544, 0.0
      %v651 = vmax.f32 %v549, 0.0
      %v652 = vmax.f32 %v552, 0.0
      %v653 = vmax.f32 %v557, 0.0
      %v654 = vmax.f32 %v560, 0.0
      %v655 = vmax.f32 %v565, 0.0
      %v656 = vmax.f32 %v568, 0.0
      %v657 = vmax.f32 %v573, 0.0
      %v658 = vmax.f32 %v576, 0.0
      %v659 = vmax.f32 %v581, 0.0
      %v660 = vmax.f32 %v584, 0.0
      %v661 = vmax.f32 %v589, 0.0
      %v662 = vmax.f32 %v592, 0.0
      %v663 = vmax.f32 %v597, 0.0
      %v664 = vmax.f32 %v600, 0.0
      %v665 = vmax.f32 %v605, 0.0
      %v666 = vmax.f32 %v608, 0.0
      %v667 = vmax.f32 %v613, 0.0
      %v668 = vmax.f32 %v616, 0.0
      %v669 = vmax.f32 %v621, 0.0
      %v670 = vmax.f32 %v624, 0.0
      %v671 = vmax.f32 %v629, 0.0
      %v672 = vmax.f32 %v632, 0.0
      %v673 = vmax.f32 %v637, 0.0
      %v674 = vmax.f32 %v640, 0.0
      %675 = vst [vmem:[%s175] sm:$0xff] %v643
      %676 = vst [vmem:[%s175 + $0x8] sm:$0xff] %v644
      %677 = vst [vmem:[%s175 + $0x10] sm:$0xff] %v645
      %678 = vst [vmem:[%s175 + $0x18] sm:$0xff] %v646
      %679 = vst [vmem:[%s175 + $0x20] sm:$0xff] %v647
      %680 = vst [vmem:[%s175 + $0x28] sm:$0xff] %v648
      %681 = vst [vmem:[%s175 + $0x30] sm:$0xff] %v649
      %682 = vst [vmem:[%s175 + $0x38] sm:$0xff] %v650
      %683 = vst [vmem:[%s175 + $0x40] sm:$0xff] %v651
      %684 = vst [vmem:[%s175 + $0x48] sm:$0xff] %v652
      %685 = vst [vmem:[%s175 + $0x50] sm:$0xff] %v653
      %686 = vst [vmem:[%s175 + $0x58] sm:$0xff] %v654
      %687 = vst [vmem:[%s175 + $0x60] sm:$0xff] %v655
      %688 = vst [vmem:[%s175 + $0x68] sm:$0xff] %v656
      %689 = vst [vmem:[%s175 + $0x70] sm:$0xff] %v657
      %690 = vst [vmem:[%s175 + $0x78] sm:$0xff] %v658
      %691 = vst [vmem:[%s175 + $0x80] sm:$0xff] %v659
      %692 = vst [vmem:[%s175 + $0x88] sm:$0xff] %v660
      %693 = vst [vmem:[%s175 + $0x90] sm:$0xff] %v661
      %694 = vst [vmem:[%s175 + $0x98] sm:$0xff] %v662
      %695 = vst [vmem:[%s175 + $0xa0] sm:$0xff] %v663
      %696 = vst [vmem:[%s175 + $0xa8] sm:$0xff] %v664
      %697 = vst [vmem:[%s175 + $0xb0] sm:$0xff] %v665
      %698 = vst [vmem:[%s175 + $0xb8] sm:$0xff] %v666
      %699 = vst [vmem:[%s175 + $0xc0] sm:$0xff] %v667
      %700 = vst [vmem:[%s175 + $0xc8] sm:$0xff] %v668
      %701 = vst [vmem:[%s175 + $0xd0] sm:$0xff] %v669
      %702 = vst [vmem:[%s175 + $0xd8] sm:$0xff] %v670
      %703 = vst [vmem:[%s175 + $0xe0] sm:$0xff] %v671
      %704 = vst [vmem:[%s175 + $0xe8] sm:$0xff] %v672
      %705 = vst [vmem:[%s175 + $0xf0] sm:$0xff] %v673
      %706 = vst [vmem:[%s175 + $0xf8] sm:$0xff] %v674
      %s707 = smul.u32 32, %s14
      %p708 = scmp.lt.s32.totalorder %s707, 63
      %s709 = scalar_select %p708, %s707, 63
      %s710 = smul.addr %s709, 8
      %s711 = scalar_lea.vmem %s3, %s710
      // Predicated region
      $region33: #{maunet_forward.42} parent=31 // pred_check
        %p712 = pneg %p100
      $region34: #{maunet_forward.42} parent=31 // pred_check_branch
        %714 = sbr.rel (%p712) target = $region36
      $region35: #{maunet_forward.42} parent=31 // pred_region
        %s715 = smul.u32 32, %s14
      $region36: #{maunet_forward.42} parent=31 // pred_fallthru
        _
    $region32: #{maunet_forward.42} parent=5 // pred_fallthru
      _
    %p716 = scmp.le.s32.totalorder 2, %s9
    // Predicated region
    $region37: #{maunet_forward.42} parent=5 // pred_check
      %p717 = pneg %p716
    $region38: #{maunet_forward.42} parent=5 // pred_check_branch
      %719 = sbr.rel (%p717) target = $region40
    $region39: #{maunet_forward.42} parent=5 // pred_region
      %s720 = ssub.s32 %s9, 2
      // Predicated region
      $region41: #{maunet_forward.42} parent=39 // pred_check
        %p721 = pneg %p106
      $region42: #{maunet_forward.42} parent=39 // pred_check_branch
        %723 = sbr.rel (%p721) target = $region44
      $region43: #{maunet_forward.42} parent=39 // pred_region
        %s724 = smul.u32 32, %s15
        %p725 = scmp.lt.s32.totalorder %s724, 63
        %s726 = scalar_select %p725, %s724, 63
        %s727 = smul.addr %s726, 8
        %s728 = scalar_lea.vmem %s3, %s727
      $region44: #{maunet_forward.42} parent=39 // pred_fallthru
        _
    $region40: #{maunet_forward.42} parent=5 // pred_fallthru
      _
  $region6: #{maunet_forward.42} parent=0 // loop_footer
    %s13 = sadd.s32 1, %s9
  $region7: #{maunet_forward.42} parent=0 // loop_footer_branch
    %8 = sbr.rel target = $region3
  $region8: #{maunet_forward.42} parent=0 // loop_exit
    _

// kernel: maunet_forward.43
$region0: #{maunet_forward.43}
  #allocation0 [shape = 'u32[]', space=smem, size = 0x4, offset = 0x4, fixed_abs, tag = 'smem constant byte address 0x4 - core index']
  #allocation1 [shape = 'u32[144,128]{1,0:T(1,128)}', space=vmem, size = 0x12000, scoped, tag = 'internal scratch']
  %s0 = inlined_call_operand.vmem [shape: bf16[512,72], index: 0, kind: input, shape index: {}]
  %s1 = inlined_call_operand.vmem [shape: bf16[72,128], index: 1, kind: input, shape index: {}]
  %s2 = inlined_call_operand.vmem [shape: f32[1,128], index: 2, kind: input, shape index: {}]
  %s3 = inlined_call_operand.vmem [shape: bf16[128,128], index: 3, kind: input, shape index: {}]
  %s4 = inlined_call_operand.vmem [shape: f32[1,128], index: 4, kind: input, shape index: {}]
  %s5 = inlined_call_operand.vmem [shape: f32[512,128], index: 5, kind: output, shape index: {}]
  %s6 = sld [smem:[#allocation0]]
  $region53: #{maunet_forward.43} parent=0
    _
  %s8 = ssub.s32 1, %s6
  %s9 = scalar_select 0, %s8, %s6
  loop: start=0, step=1, limit=4
  $region2: #{maunet_forward.43} parent=0 // loop_pre_header
    _
  $region3: #{maunet_forward.43} parent=0 // loop_header
    %s11 = sphi 0, %s15
    %p12 = scmp.ge.s32.totalorder %s11, 4
    %s21 = sphi 0, %s23
    %s24 = sphi 0, %s21
    %s25 = sphi 0, %s24
    %s41 = sphi 0, %s25
    %s45 = sphi 0, %s45
    %s47 = sphi 0, %s45
    %s48 = sphi 0, %s47
    %s62 = sphi 0, %s48
    %s66 = sphi 0, %s66
    %s68 = sphi 0, %s66
    %s69 = sphi 0, %s68
    %s83 = sphi 0, %s69
    %s87 = sphi 0, %s87
    %s89 = sphi 0, %s87
    %s90 = sphi 0, %s89
    %s104 = sphi 0, %s90
    %s108 = sphi 0, %s108
    %s110 = sphi 0, %s108
    %s111 = sphi 0, %s110
    %s125 = sphi 0, %s111
    %s131 = sphi 0, %s133
    %s134 = sphi 0, %s131
    %s135 = sphi 0, %s134
    %s151 = sphi 0, %s135
  $region4: #{maunet_forward.43} parent=0 // loop_header_branch
    %14 = sbr.rel (%p12) target = $region8
  $region5: #{maunet_forward.43} parent=0 // loop_body
    %s16 = ssub.s32 %s11, 1
    %s17 = ssub.s32 %s11, 2
    %s18 = sadd.s32 %s11, 1
    %s19 = ssub.s32 %s11, %s18
    %p20 = scmp.eq.s32.totalorder %s19, 0
    %s22 = sadd.s32 %s21, 1
    %s23 = scalar_select %p20, %s21, %s22
    %p26 = pneg %p20
    %p27 = scmp.eq.s32.totalorder %s11, 1
    %p28 = por %p26, %p27
    %p29 = scmp.ne.s32.totalorder %s21, %s24
    %p30 = scmp.eq.s32.totalorder %s11, 0
    %p31 = por %p29, %p30
    %p32 = scmp.ne.s32.totalorder %s21, %s24
    %p33 = scmp.eq.s32.totalorder %s16, 1
    %p34 = por %p32, %p33
    %p35 = scmp.ne.s32.totalorder %s24, %s25
    %p36 = scmp.eq.s32.totalorder %s16, 0
    %p37 = por %p35, %p36
    %p38 = scmp.ne.s32.totalorder %s24, %s25
    %p39 = scmp.eq.s32.totalorder %s17, 1
    %p40 = por %p38, %p39
    %p42 = scmp.ne.s32.totalorder %s25, %s41
    %p43 = scmp.eq.s32.totalorder %s17, 0
    %p44 = por %p42, %p43
    %s46 = sadd.s32 %s45, 1
    %p49 = scmp.eq.s32.totalorder %s11, 1
    %p50 = scmp.ne.s32.totalorder %s45, %s47
    %p51 = scmp.eq.s32.totalorder %s11, 0
    %p52 = por %p50, %p51
    %p53 = scmp.ne.s32.totalorder %s45, %s47
    %p54 = scmp.eq.s32.totalorder %s16, 1
    %p55 = por %p53, %p54
    %p56 = scmp.ne.s32.totalorder %s47, %s48
    %p57 = scmp.eq.s32.totalorder %s16, 0
    %p58 = por %p56, %p57
    %p59 = scmp.ne.s32.totalorder %s47, %s48
    %p60 = scmp.eq.s32.totalorder %s17, 1
    %p61 = por %p59, %p60
    %p63 = scmp.ne.s32.totalorder %s48, %s62
    %p64 = scmp.eq.s32.totalorder %s17, 0
    %p65 = por %p63, %p64
    %s67 = sadd.s32 %s66, 1
    %p70 = scmp.eq.s32.totalorder %s11, 1
    %p71 = scmp.ne.s32.totalorder %s66, %s68
    %p72 = scmp.eq.s32.totalorder %s11, 0
    %p73 = por %p71, %p72
    %p74 = scmp.ne.s32.totalorder %s66, %s68
    %p75 = scmp.eq.s32.totalorder %s16, 1
    %p76 = por %p74, %p75
    %p77 = scmp.ne.s32.totalorder %s68, %s69
    %p78 = scmp.eq.s32.totalorder %s16, 0
    %p79 = por %p77, %p78
    %p80 = scmp.ne.s32.totalorder %s68, %s69
    %p81 = scmp.eq.s32.totalorder %s17, 1
    %p82 = por %p80, %p81
    %p84 = scmp.ne.s32.totalorder %s69, %s83
    %p85 = scmp.eq.s32.totalorder %s17, 0
    %p86 = por %p84, %p85
    %s88 = sadd.s32 %s87, 1
    %p91 = scmp.eq.s32.totalorder %s11, 1
    %p92 = scmp.ne.s32.totalorder %s87, %s89
    %p93 = scmp.eq.s32.totalorder %s11, 0
    %p94 = por %p92, %p93
    %p95 = scmp.ne.s32.totalorder %s87, %s89
    %p96 = scmp.eq.s32.totalorder %s16, 1
    %p97 = por %p95, %p96
    %p98 = scmp.ne.s32.totalorder %s89, %s90
    %p99 = scmp.eq.s32.totalorder %s16, 0
    %p100 = por %p98, %p99
    %p101 = scmp.ne.s32.totalorder %s89, %s90
    %p102 = scmp.eq.s32.totalorder %s17, 1
    %p103 = por %p101, %p102
    %p105 = scmp.ne.s32.totalorder %s90, %s104
    %p106 = scmp.eq.s32.totalorder %s17, 0
    %p107 = por %p105, %p106
    %s109 = sadd.s32 %s108, 1
    %p112 = scmp.eq.s32.totalorder %s11, 1
    %p113 = scmp.ne.s32.totalorder %s108, %s110
    %p114 = scmp.eq.s32.totalorder %s11, 0
    %p115 = por %p113, %p114
    %p116 = scmp.ne.s32.totalorder %s108, %s110
    %p117 = scmp.eq.s32.totalorder %s16, 1
    %p118 = por %p116, %p117
    %p119 = scmp.ne.s32.totalorder %s110, %s111
    %p120 = scmp.eq.s32.totalorder %s16, 0
    %p121 = por %p119, %p120
    %p122 = scmp.ne.s32.totalorder %s110, %s111
    %p123 = scmp.eq.s32.totalorder %s17, 1
    %p124 = por %p122, %p123
    %p126 = scmp.ne.s32.totalorder %s111, %s125
    %p127 = scmp.eq.s32.totalorder %s17, 0
    %p128 = por %p126, %p127
    %s129 = ssub.s32 %s11, %s18
    %p130 = scmp.eq.s32.totalorder %s129, 0
    %s132 = sadd.s32 %s131, 1
    %s133 = scalar_select %p130, %s131, %s132
    %p136 = pneg %p130
    %p137 = scmp.eq.s32.totalorder %s11, 1
    %p138 = por %p136, %p137
    %p139 = scmp.ne.s32.totalorder %s131, %s134
    %p140 = scmp.eq.s32.totalorder %s11, 0
    %p141 = por %p139, %p140
    %p142 = scmp.ne.s32.totalorder %s131, %s134
    %p143 = scmp.eq.s32.totalorder %s16, 1
    %p144 = por %p142, %p143
    %p145 = scmp.ne.s32.totalorder %s134, %s135
    %p146 = scmp.eq.s32.totalorder %s16, 0
    %p147 = por %p145, %p146
    %p148 = scmp.ne.s32.totalorder %s134, %s135
    %p149 = scmp.eq.s32.totalorder %s17, 1
    %p150 = por %p148, %p149
    %p152 = scmp.ne.s32.totalorder %s135, %s151
    %p153 = scmp.eq.s32.totalorder %s17, 0
    %p154 = por %p152, %p153
    %p155 = scmp.le.s32.totalorder 1, %s11
    %p156 = scmp.lt.s32.totalorder %s11, 3
    %p157 = pnand %p155, %p156
    %p158 = pneg %p157
    // Predicated region
    $region9: #{maunet_forward.43} parent=5 // pred_check
      _
    $region10: #{maunet_forward.43} parent=5 // pred_check_branch
      %160 = sbr.rel (%p157) target = $region12
    $region11: #{maunet_forward.43} parent=5 // pred_region
      %s161 = ssub.s32 %s11, 1
      // Predicated region
      $region13: #{maunet_forward.43} parent=11 // pred_check
        %p162 = pneg %p58
      $region14: #{maunet_forward.43} parent=11 // pred_check_branch
        %164 = sbr.rel (%p162) target = $region16
      $region15: #{maunet_forward.43} parent=11 // pred_region
        _
      $region16: #{maunet_forward.43} parent=11 // pred_fallthru
        _
      // Predicated region
      $region17: #{maunet_forward.43} parent=11 // pred_check
        %p165 = pneg %p79
      $region18: #{maunet_forward.43} parent=11 // pred_check_branch
        %167 = sbr.rel (%p165) target = $region20
      $region19: #{maunet_forward.43} parent=11 // pred_region
        _
      $region20: #{maunet_forward.43} parent=11 // pred_fallthru
        _
      // Predicated region
      $region21: #{maunet_forward.43} parent=11 // pred_check
        %p168 = pneg %p100
      $region22: #{maunet_forward.43} parent=11 // pred_check_branch
        %170 = sbr.rel (%p168) target = $region24
      $region23: #{maunet_forward.43} parent=11 // pred_region
        _
      $region24: #{maunet_forward.43} parent=11 // pred_fallthru
        _
      // Predicated region
      $region25: #{maunet_forward.43} parent=11 // pred_check
        %p171 = pneg %p121
      $region26: #{maunet_forward.43} parent=11 // pred_check_branch
        %173 = sbr.rel (%p171) target = $region28
      $region27: #{maunet_forward.43} parent=11 // pred_region
        _
      $region28: #{maunet_forward.43} parent=11 // pred_fallthru
        _
    $region12: #{maunet_forward.43} parent=5 // pred_fallthru
      _
    %p174 = scmp.lt.s32.totalorder %s11, 2
    // Predicated region
    $region29: #{maunet_forward.43} parent=5 // pred_check
      %p175 = pneg %p174
    $region30: #{maunet_forward.43} parent=5 // pred_check_branch
      %177 = sbr.rel (%p175) target = $region32
    $region31: #{maunet_forward.43} parent=5 // pred_region
      // Predicated region
      $region33: #{maunet_forward.43} parent=31 // pred_check
        %p178 = pneg %p31
      $region34: #{maunet_forward.43} parent=31 // pred_check_branch
        %180 = sbr.rel (%p178) target = $region36
      $region35: #{maunet_forward.43} parent=31 // pred_region
        %s181 = smul.u32 32, %s11
        %p182 = scmp.lt.s32.totalorder %s181, 63
        %s183 = scalar_select %p182, %s181, 63
        %s184 = smul.addr %s183, 4
        %s185 = scalar_lea.vmem %s0, %s184
        %s186 = smul.u32 32, %s11
      $region36: #{maunet_forward.43} parent=31 // pred_fallthru
        _
    $region32: #{maunet_forward.43} parent=5 // pred_fallthru
      _
    %p187 = scmp.le.s32.totalorder 1, %s11
    %p188 = scmp.lt.s32.totalorder %s11, 3
    %p189 = pnand %p187, %p188
    %p190 = pneg %p189
    // Predicated region
    $region37: #{maunet_forward.43} parent=5 // pred_check
      _
    $region38: #{maunet_forward.43} parent=5 // pred_check_branch
      %192 = sbr.rel (%p189) target = $region40
    $region39: #{maunet_forward.43} parent=5 // pred_region
      %s193 = ssub.s32 %s11, 1
      %s194 = smul.u32 32, %s16
      %p195 = scmp.lt.s32.totalorder %s194, 63
      %s196 = scalar_select %p195, %s194, 63
      %s197 = smul.addr %s196, 4
      %s198 = scalar_lea.vmem %s0, %s197
      %p199 = pneg %p37
      %p200 = pneg %p34
      %p201 = pneg %p58
      %p202 = pneg %p55
      %p203 = pneg %p79
      %p204 = pneg %p76
      %p205 = pneg %p100
      %p206 = pneg %p97
      %p207 = pneg %p121
      %p208 = pneg %p118
      %p209 = pneg %p147
      %p210 = pneg %p144
      %s211 = smul.u32 32, %s16
      %p212 = scmp.lt.s32.totalorder %s211, 63
      %s213 = scalar_select %p212, %s211, 63
      %s214 = smul.addr %s213, 8
      %s215 = scalar_lea.vmem %s5, %s214
      %s216 = smul.u32 32, %s16
      %p217 = scmp.lt.s32.totalorder %s216, 63
      %s218 = scalar_select %p217, %s216, 63
      %s219 = smul.addr %s218, 4
      %s220 = scalar_lea.vmem %s0, %s219
      %s221 = smul.u32 32, %s16
      %s222 = smul.u32 32, %s16
      %p223 = scmp.lt.s32.totalorder %s222, 63
      %s224 = scalar_select %p223, %s222, 63
      %s225 = smul.addr %s224, 8
      %s226 = scalar_lea.vmem %s5, %s225
      %s227 = smul.u32 32, %s16
      %v229 = vld [vmem:[%s220] sm:$0xf]
      %v230 = vld [vmem:[%s220 + $0x4] sm:$0xf]
      %v231 = vld [vmem:[%s220 + $0x8] sm:$0xf]
      %v232 = vld [vmem:[%s220 + $0xc] sm:$0xf]
      %v233 = vld [vmem:[%s220 + $0x10] sm:$0xf]
      %v234 = vld [vmem:[%s220 + $0x14] sm:$0xf]
      %v235 = vld [vmem:[%s220 + $0x18] sm:$0xf]
      %v236 = vld [vmem:[%s220 + $0x1c] sm:$0xf]
      %v237 = vld [vmem:[%s220 + $0x20] sm:$0xf]
      %v238 = vld [vmem:[%s220 + $0x24] sm:$0xf]
      %v239 = vld [vmem:[%s220 + $0x28] sm:$0xf]
      %v240 = vld [vmem:[%s220 + $0x2c] sm:$0xf]
      %v241 = vld [vmem:[%s220 + $0x30] sm:$0xf]
      %v242 = vld [vmem:[%s220 + $0x34] sm:$0xf]
      %v243 = vld [vmem:[%s220 + $0x38] sm:$0xf]
      %v244 = vld [vmem:[%s220 + $0x3c] sm:$0xf]
      %v245 = vld [vmem:[%s220 + $0x40] sm:$0xf]
      %v246 = vld [vmem:[%s220 + $0x44] sm:$0xf]
      %v247 = vld [vmem:[%s220 + $0x48] sm:$0xf]
      %v248 = vld [vmem:[%s220 + $0x4c] sm:$0xf]
      %v249 = vld [vmem:[%s220 + $0x50] sm:$0xf]
      %v250 = vld [vmem:[%s220 + $0x54] sm:$0xf]
      %v251 = vld [vmem:[%s220 + $0x58] sm:$0xf]
      %v252 = vld [vmem:[%s220 + $0x5c] sm:$0xf]
      %v253 = vld [vmem:[%s220 + $0x60] sm:$0xf]
      %v254 = vld [vmem:[%s220 + $0x64] sm:$0xf]
      %v255 = vld [vmem:[%s220 + $0x68] sm:$0xf]
      %v256 = vld [vmem:[%s220 + $0x6c] sm:$0xf]
      %v257 = vld [vmem:[%s220 + $0x70] sm:$0xf]
      %v258 = vld [vmem:[%s220 + $0x74] sm:$0xf]
      %v259 = vld [vmem:[%s220 + $0x78] sm:$0xf]
      %v260 = vld [vmem:[%s220 + $0x7c] sm:$0xf]
      %v261 = vld [vmem:[%s1] sm:$0xf]
      %v262 = vld [vmem:[%s1 + $0x4] sm:$0xf]
      %v263 = vld [vmem:[%s1 + $0x8] sm:$0xf]
      %v264 = vld [vmem:[%s1 + $0xc] sm:$0xf]
      %v265 = vld [vmem:[%s1 + $0x10] sm:$0xf]
      %v266 = vld [vmem:[%s1 + $0x14] sm:$0xf]
      %v267 = vld [vmem:[%s1 + $0x18] sm:$0xf]
      %v268 = vld [vmem:[%s1 + $0x1c] sm:$0xf]
      %v269 = vld [vmem:[%s1 + $0x20] sm:$0xf]
      %v270 = vld [vmem:[%s2] sm:$0x1]
      %v272 = vlaneseq
      %v273 = vshrl.u32 %v272, 7
      %v274 = vsub.s32 0, %v273
      %v275 = vrot.slane %v270, %v274
      %v309 = vunpack.c.l.b16 %v229
      %v310 = vunpack.c.l.b16 %v230
      %v311 = vunpack.c.l.b16 %v231
      %v312 = vunpack.c.l.b16 %v232
      %v313 = vunpack.c.l.b16 %v233
      %v314 = vunpack.c.l.b16 %v234
      %v315 = vunpack.c.l.b16 %v235
      %v316 = vunpack.c.l.b16 %v236
      %v317 = vunpack.c.l.b16 %v237
      %v318 = vunpack.c.l.b16 %v238
      %v319 = vunpack.c.l.b16 %v239
      %v320 = vunpack.c.l.b16 %v240
      %v321 = vunpack.c.l.b16 %v241
      %v322 = vunpack.c.l.b16 %v242
      %v323 = vunpack.c.l.b16 %v243
      %v324 = vunpack.c.l.b16 %v244
      %v325 = vunpack.c.l.b16 %v245
      %v326 = vunpack.c.l.b16 %v246
      %v327 = vunpack.c.l.b16 %v247
      %v328 = vunpack.c.l.b16 %v248
      %v329 = vunpack.c.l.b16 %v249
      %v330 = vunpack.c.l.b16 %v250
      %v331 = vunpack.c.l.b16 %v251
      %v332 = vunpack.c.l.b16 %v252
      %v333 = vunpack.c.l.b16 %v253
      %v334 = vunpack.c.l.b16 %v254
      %v335 = vunpack.c.l.b16 %v255
      %v336 = vunpack.c.l.b16 %v256
      %v337 = vunpack.c.l.b16 %v257
      %v338 = vunpack.c.l.b16 %v258
      %v339 = vunpack.c.l.b16 %v259
      %v340 = vunpack.c.l.b16 %v260
      %v341 = vpack.c.b16 %v310, %v309
      %v342 = vpack.c.b16 %v312, %v311
      %v343 = vpack.c.b16 %v314, %v313
      %v344 = vpack.c.b16 %v316, %v315
      %v345 = vpack.c.b16 %v318, %v317
      %v346 = vpack.c.b16 %v320, %v319
      %v347 = vpack.c.b16 %v322, %v321
      %v348 = vpack.c.b16 %v324, %v323
      %v349 = vpack.c.b16 %v326, %v325
      %v350 = vpack.c.b16 %v328, %v327
      %v351 = vpack.c.b16 %v330, %v329
      %v352 = vpack.c.b16 %v332, %v331
      %v353 = vpack.c.b16 %v334, %v333
      %v354 = vpack.c.b16 %v336, %v335
      %v355 = vpack.c.b16 %v338, %v337
      %v356 = vpack.c.b16 %v340, %v339
      %v366 = vunpack.c.l.b16 %v261
      %v367 = vunpack.c.l.b16 %v262
      %v368 = vunpack.c.l.b16 %v263
      %v369 = vunpack.c.l.b16 %v264
      %v370 = vunpack.c.l.b16 %v265
      %v371 = vunpack.c.l.b16 %v266
      %v372 = vunpack.c.l.b16 %v267
      %v373 = vunpack.c.l.b16 %v268
      %v374 = vunpack.c.l.b16 %v269
      %v375 = vpack.c.b16 %v367, %v366
      %v376 = vpack.c.b16 %v369, %v368
      %v377 = vpack.c.b16 %v371, %v370
      %v378 = vpack.c.b16 %v373, %v372
      %v379 = vpack.c.b16 %v374, %v374
      %vm384 = vcmask 588800
      %v386 = vsel %vm384, %v341, 0
      %v389 = vsel %vm384, %v342, 0
      %v392 = vsel %vm384, %v343, 0
      %v395 = vsel %vm384, %v344, 0
      %v398 = vsel %vm384, %v345, 0
      %v401 = vsel %vm384, %v346, 0
      %v404 = vsel %vm384, %v347, 0
      %v407 = vsel %vm384, %v348, 0
      %v410 = vsel %vm384, %v349, 0
      %v413 = vsel %vm384, %v350, 0
      %v416 = vsel %vm384, %v351, 0
      %v419 = vsel %vm384, %v352, 0
      %v422 = vsel %vm384, %v353, 0
      %v425 = vsel %vm384, %v354, 0
      %v428 = vsel %vm384, %v355, 0
      %v431 = vsel %vm384, %v356, 0
      %vm433 = vcmask 1043456
      %v435 = vsel %vm433, %v379, 0
      %437 = vmatprep.subr.bf16.mxu0 0
      %438 = vmatpush1.bf16.msra.mxu0 %v375
      %439 = vmatprep.subr.bf16.mxu0 0
      %440 = vmatpush1.bf16.msra.mxu0 %v376
      %441 = vmatprep.subr.bf16.mxu0 0
      %442 = vmatpush1.bf16.msra.mxu0 %v377
      %443 = vmatprep.subr.bf16.mxu0 0
      %444 = vmatpush1.bf16.msra.mxu0 %v378
      %445 = vmatprep.subr.bf16.mxu0 0
      %446 = vmatpush1.bf16.msra.mxu0 %v435
      %447 = vmatprep.subr.bf16.mxu0 0
      %448 = vmatpush1.bf16.msra.mxu0 0
      %449 = vmatprep.subr.bf16.mxu0 0
      %450 = vmatpush1.bf16.msra.mxu0 0
      %451 = vmatprep.subr.bf16.mxu0 0
      %452 = vmatpush1.bf16.msra.mxu0 0
      %453 = vmatprep.subr.bf16.mxu0 0
      %454 = vmatpush1.bf16.msra.mxu0 0
      %455 = vmatprep.subr.bf16.mxu0 0
      %456 = vmatpush1.bf16.msra.mxu0 0
      %457 = vmatprep.subr.bf16.mxu0 0
      %458 = vmatpush1.bf16.msra.mxu0 0
      %459 = vmatprep.subr.bf16.mxu0 0
      %460 = vmatpush1.bf16.msra.mxu0 0
      %461 = vmatprep.subr.bf16.mxu0 0
      %462 = vmatpush1.bf16.msra.mxu0 0
      %463 = vmatprep.subr.bf16.mxu0 0
      %464 = vmatpush1.bf16.msra.mxu0 0
      %465 = vmatprep.subr.bf16.mxu0 0
      %466 = vmatpush1.bf16.msra.mxu0 0
      %467 = vmatprep.subr.bf16.mxu0 0
      %468 = vmatpush1.bf16.msra.mxu0 0
      %469 = vmatprep.mubr.bf16.mxu0 0
      %470 = vmatmul.mubr.bf16.gmra.mrb[0].mxu0 %v386
      %v471 = vpop.f32.mrb[0].mxu0
      %v472 = vadd.f32 %v275, %v471
      %v473 = vpop.f32.mrb[0].mxu0
      %v474 = vpop.f32.mrb[0].mxu0
      %v475 = vadd.f32 %v275, %v474
      %v476 = vpop.f32.mrb[0].mxu0
      %477 = vmatprep.mubr.bf16.mxu0 0
      %478 = vmatmul.mubr.bf16.gmra.mrb[0].mxu0 %v389
      %v479 = vpop.f32.mrb[0].mxu0
      %v480 = vadd.f32 %v275, %v479
      %v481 = vpop.f32.mrb[0].mxu0
      %v482 = vpop.f32.mrb[0].mxu0
      %v483 = vadd.f32 %v275, %v482
      %v484 = vpop.f32.mrb[0].mxu0
      %485 = vmatprep.mubr.bf16.mxu0 0
      %486 = vmatmul.mubr.bf16.gmra.mrb[0].mxu0 %v392
      %v487 = vpop.f32.mrb[0].mxu0
      %v488 = vadd.f32 %v275, %v487
      %v489 = vpop.f32.mrb[0].mxu0
      %v490 = vpop.f32.mrb[0].mxu0
      %v491 = vadd.f32 %v275, %v490
      %v492 = vpop.f32.mrb[0].mxu0
      %493 = vmatprep.mubr.bf16.mxu0 0
      %494 = vmatmul.mubr.bf16.gmra.mrb[0].mxu0 %v395
      %v495 = vpop.f32.mrb[0].mxu0
      %v496 = vadd.f32 %v275, %v495
      %v497 = vpop.f32.mrb[0].mxu0
      %v498 = vpop.f32.mrb[0].mxu0
      %v499 = vadd.f32 %v275, %v498
      %v500 = vpop.f32.mrb[0].mxu0
      %501 = vmatprep.mubr.bf16.mxu0 0
      %502 = vmatmul.mubr.bf16.gmra.mrb[0].mxu0 %v398
      %v503 = vpop.f32.mrb[0].mxu0
      %v504 = vadd.f32 %v275, %v503
      %v505 = vpop.f32.mrb[0].mxu0
      %v506 = vpop.f32.mrb[0].mxu0
      %v507 = vadd.f32 %v275, %v506
      %v508 = vpop.f32.mrb[0].mxu0
      %509 = vmatprep.mubr.bf16.mxu0 0
      %510 = vmatmul.mubr.bf16.gmra.mrb[0].mxu0 %v401
      %v511 = vpop.f32.mrb[0].mxu0
      %v512 = vadd.f32 %v275, %v511
      %v513 = vpop.f32.mrb[0].mxu0
      %v514 = vpop.f32.mrb[0].mxu0
      %v515 = vadd.f32 %v275, %v514
      %v516 = vpop.f32.mrb[0].mxu0
      %517 = vmatprep.mubr.bf16.mxu0 0
      %518 = vmatmul.mubr.bf16.gmra.mrb[0].mxu0 %v404
      %v519 = vpop.f32.mrb[0].mxu0
      %v520 = vadd.f32 %v275, %v519
      %v521 = vpop.f32.mrb[0].mxu0
      %v522 = vpop.f32.mrb[0].mxu0
      %v523 = vadd.f32 %v275, %v522
      %v524 = vpop.f32.mrb[0].mxu0
      %525 = vmatprep.mubr.bf16.mxu0 0
      %526 = vmatmul.mubr.bf16.gmra.mrb[0].mxu0 %v407
      %v527 = vpop.f32.mrb[0].mxu0
      %v528 = vadd.f32 %v275, %v527
      %v529 = vpop.f32.mrb[0].mxu0
      %v530 = vpop.f32.mrb[0].mxu0
      %v531 = vadd.f32 %v275, %v530
      %v532 = vpop.f32.mrb[0].mxu0
      %533 = vmatprep.mubr.bf16.mxu0 0
      %534 = vmatmul.mubr.bf16.gmra.mrb[0].mxu0 %v410
      %v535 = vpop.f32.mrb[0].mxu0
      %v536 = vadd.f32 %v275, %v535
      %v537 = vpop.f32.mrb[0].mxu0
      %v538 = vpop.f32.mrb[0].mxu0
      %v539 = vadd.f32 %v275, %v538
      %v540 = vpop.f32.mrb[0].mxu0
      %541 = vmatprep.mubr.bf16.mxu0 0
      %542 = vmatmul.mubr.bf16.gmra.mrb[0].mxu0 %v413
      %v543 = vpop.f32.mrb[0].mxu0
      %v544 = vadd.f32 %v275, %v543
      %v545 = vpop.f32.mrb[0].mxu0
      %v546 = vpop.f32.mrb[0].mxu0
      %v547 = vadd.f32 %v275, %v546
      %v548 = vpop.f32.mrb[0].mxu0
      %549 = vmatprep.mubr.bf16.mxu0 0
      %550 = vmatmul.mubr.bf16.gmra.mrb[0].mxu0 %v416
      %v551 = vpop.f32.mrb[0].mxu0
      %v552 = vadd.f32 %v275, %v551
      %v553 = vpop.f32.mrb[0].mxu0
      %v554 = vpop.f32.mrb[0].mxu0
      %v555 = vadd.f32 %v275, %v554
      %v556 = vpop.f32.mrb[0].mxu0
      %557 = vmatprep.mubr.bf16.mxu0 0
      %558 = vmatmul.mubr.bf16.gmra.mrb[0].mxu0 %v419
      %v559 = vpop.f32.mrb[0].mxu0
      %v560 = vadd.f32 %v275, %v559
      %v561 = vpop.f32.mrb[0].mxu0
      %v562 = vpop.f32.mrb[0].mxu0
      %v563 = vadd.f32 %v275, %v562
      %v564 = vpop.f32.mrb[0].mxu0
      %565 = vmatprep.mubr.bf16.mxu0 0
      %566 = vmatmul.mubr.bf16.gmra.mrb[0].mxu0 %v422
      %v567 = vpop.f32.mrb[0].mxu0
      %v568 = vadd.f32 %v275, %v567
      %v569 = vpop.f32.mrb[0].mxu0
      %v570 = vpop.f32.mrb[0].mxu0
      %v571 = vadd.f32 %v275, %v570
      %v572 = vpop.f32.mrb[0].mxu0
      %573 = vmatprep.mubr.bf16.mxu0 0
      %574 = vmatmul.mubr.bf16.gmra.mrb[0].mxu0 %v425
      %v575 = vpop.f32.mrb[0].mxu0
      %v576 = vadd.f32 %v275, %v575
      %v577 = vpop.f32.mrb[0].mxu0
      %v578 = vpop.f32.mrb[0].mxu0
      %v579 = vadd.f32 %v275, %v578
      %v580 = vpop.f32.mrb[0].mxu0
      %581 = vmatprep.mubr.bf16.mxu0 0
      %582 = vmatmul.mubr.bf16.gmra.mrb[0].mxu0 %v428
      %v583 = vpop.f32.mrb[0].mxu0
      %v584 = vadd.f32 %v275, %v583
      %v585 = vpop.f32.mrb[0].mxu0
      %v586 = vpop.f32.mrb[0].mxu0
      %v587 = vadd.f32 %v275, %v586
      %v588 = vpop.f32.mrb[0].mxu0
      %589 = vmatprep.mubr.bf16.mxu0 0
      %590 = vmatmul.mubr.bf16.gmra.mrb[0].mxu0 %v431
      %v591 = vpop.f32.mrb[0].mxu0
      %v592 = vadd.f32 %v275, %v591
      %v593 = vpop.f32.mrb[0].mxu0
      %v594 = vpop.f32.mrb[0].mxu0
      %v595 = vadd.f32 %v275, %v594
      %v596 = vpop.f32.mrb[0].mxu0
      %597 = vdwg.mxu0
      %v598 = vmax.f32 %v472, 0.0
      %v599 = vmax.f32 %v475, 0.0
      %v600 = vmax.f32 %v480, 0.0
      %v601 = vmax.f32 %v483, 0.0
      %v602 = vmax.f32 %v488, 0.0
      %v603 = vmax.f32 %v491, 0.0
      %v604 = vmax.f32 %v496, 0.0
      %v605 = vmax.f32 %v499, 0.0
      %v606 = vmax.f32 %v504, 0.0
      %v607 = vmax.f32 %v507, 0.0
      %v608 = vmax.f32 %v512, 0.0
      %v609 = vmax.f32 %v515, 0.0
      %v610 = vmax.f32 %v520, 0.0
      %v611 = vmax.f32 %v523, 0.0
      %v612 = vmax.f32 %v528, 0.0
      %v613 = vmax.f32 %v531, 0.0
      %v614 = vmax.f32 %v536, 0.0
      %v615 = vmax.f32 %v539, 0.0
      %v616 = vmax.f32 %v544, 0.0
      %v617 = vmax.f32 %v547, 0.0
      %v618 = vmax.f32 %v552, 0.0
      %v619 = vmax.f32 %v555, 0.0
      %v620 = vmax.f32 %v560, 0.0
      %v621 = vmax.f32 %v563, 0.0
      %v622 = vmax.f32 %v568, 0.0
      %v623 = vmax.f32 %v571, 0.0
      %v624 = vmax.f32 %v576, 0.0
      %v625 = vmax.f32 %v579, 0.0
      %v626 = vmax.f32 %v584, 0.0
      %v627 = vmax.f32 %v587, 0.0
      %v628 = vmax.f32 %v592, 0.0
      %v629 = vmax.f32 %v595, 0.0
      %v630 = vpack.c.bf16 %v599, %v598
      %v631 = vpack.c.bf16 %v601, %v600
      %v632 = vpack.c.bf16 %v603, %v602
      %v633 = vpack.c.bf16 %v605, %v604
      %v634 = vpack.c.bf16 %v607, %v606
      %v635 = vpack.c.bf16 %v609, %v608
      %v636 = vpack.c.bf16 %v611, %v610
      %v637 = vpack.c.bf16 %v613, %v612
      %v638 = vpack.c.bf16 %v615, %v614
      %v639 = vpack.c.bf16 %v617, %v616
      %v640 = vpack.c.bf16 %v619, %v618
      %v641 = vpack.c.bf16 %v621, %v620
      %v642 = vpack.c.bf16 %v623, %v622
      %v643 = vpack.c.bf16 %v625, %v624
      %v644 = vpack.c.bf16 %v627, %v626
      %v645 = vpack.c.bf16 %v629, %v628
      %v646 = vld [vmem:[%s3] sm:$0xf]
      %v647 = vld [vmem:[%s3 + $0x4] sm:$0xf]
      %v648 = vld [vmem:[%s3 + $0x8] sm:$0xf]
      %v649 = vld [vmem:[%s3 + $0xc] sm:$0xf]
      %v650 = vld [vmem:[%s3 + $0x10] sm:$0xf]
      %v651 = vld [vmem:[%s3 + $0x14] sm:$0xf]
      %v652 = vld [vmem:[%s3 + $0x18] sm:$0xf]
      %v653 = vld [vmem:[%s3 + $0x1c] sm:$0xf]
      %v654 = vld [vmem:[%s3 + $0x20] sm:$0xf]
      %v655 = vld [vmem:[%s3 + $0x24] sm:$0xf]
      %v656 = vld [vmem:[%s3 + $0x28] sm:$0xf]
      %v657 = vld [vmem:[%s3 + $0x2c] sm:$0xf]
      %v658 = vld [vmem:[%s3 + $0x30] sm:$0xf]
      %v659 = vld [vmem:[%s3 + $0x34] sm:$0xf]
      %v660 = vld [vmem:[%s3 + $0x38] sm:$0xf]
      %v661 = vld [vmem:[%s3 + $0x3c] sm:$0xf]
      %v662 = vld [vmem:[%s4] sm:$0x1]
      %v664 = vlaneseq
      %v665 = vshrl.u32 %v664, 7
      %v666 = vsub.s32 0, %v665
      %v667 = vrot.slane %v662, %v666
      %v685 = vunpack.c.l.b16 %v646
      %v686 = vunpack.c.l.b16 %v647
      %v687 = vunpack.c.l.b16 %v648
      %v688 = vunpack.c.l.b16 %v649
      %v689 = vunpack.c.l.b16 %v650
      %v690 = vunpack.c.l.b16 %v651
      %v691 = vunpack.c.l.b16 %v652
      %v692 = vunpack.c.l.b16 %v653
      %v693 = vunpack.c.l.b16 %v654
      %v694 = vunpack.c.l.b16 %v655
      %v695 = vunpack.c.l.b16 %v656
      %v696 = vunpack.c.l.b16 %v657
      %v697 = vunpack.c.l.b16 %v658
      %v698 = vunpack.c.l.b16 %v659
      %v699 = vunpack.c.l.b16 %v660
      %v700 = vunpack.c.l.b16 %v661
      %v701 = vpack.c.b16 %v686, %v685
      %v702 = vpack.c.b16 %v688, %v687
      %v703 = vpack.c.b16 %v690, %v689
      %v704 = vpack.c.b16 %v692, %v691
      %v705 = vpack.c.b16 %v694, %v693
      %v706 = vpack.c.b16 %v696, %v695
      %v707 = vpack.c.b16 %v698, %v697
      %v708 = vpack.c.b16 %v700, %v699
      %717 = vmatprep.subr.bf16.mxu0 0
      %718 = vmatpush1.bf16.msra.mxu0 %v701
      %719 = vmatprep.subr.bf16.mxu0 0
      %720 = vmatpush1.bf16.msra.mxu0 %v702
      %721 = vmatprep.subr.bf16.mxu0 0
      %722 = vmatpush1.bf16.msra.mxu0 %v703
      %723 = vmatprep.subr.bf16.mxu0 0
      %724 = vmatpush1.bf16.msra.mxu0 %v704
      %725 = vmatprep.subr.bf16.mxu0 0
      %726 = vmatpush1.bf16.msra.mxu0 %v705
      %727 = vmatprep.subr.bf16.mxu0 0
      %728 = vmatpush1.bf16.msra.mxu0 %v706
      %729 = vmatprep.subr.bf16.mxu0 0
      %730 = vmatpush1.bf16.msra.mxu0 %v707
      %731 = vmatprep.subr.bf16.mxu0 0
      %732 = vmatpush1.bf16.msra.mxu0 %v708
      %733 = vmatprep.subr.bf16.mxu0 0
      %734 = vmatpush1.bf16.msra.mxu0 0
      %735 = vmatprep.subr.bf16.mxu0 0
      %736 = vmatpush1.bf16.msra.mxu0 0
      %737 = vmatprep.subr.bf16.mxu0 0
      %738 = vmatpush1.bf16.msra.mxu0 0
      %739 = vmatprep.subr.bf16.mxu0 0
      %740 = vmatpush1.bf16.msra.mxu0 0
      %741 = vmatprep.subr.bf16.mxu0 0
      %742 = vmatpush1.bf16.msra.mxu0 0
      %743 = vmatprep.subr.bf16.mxu0 0
      %744 = vmatpush1.bf16.msra.mxu0 0
      %745 = vmatprep.subr.bf16.mxu0 0
      %746 = vmatpush1.bf16.msra.mxu0 0
      %747 = vmatprep.subr.bf16.mxu0 0
      %748 = vmatpush1.bf16.msra.mxu0 0
      %749 = vmatprep.mubr.bf16.mxu0 0
      %750 = vmatmul.mubr.bf16.gmra.mrb[0].mxu0 %v630
      %v751 = vpop.f32.mrb[0].mxu0
      %v752 = vadd.f32 %v667, %v751
      %v753 = vpop.f32.mrb[0].mxu0
      %v754 = vpop.f32.mrb[0].mxu0
      %v755 = vadd.f32 %v667, %v754
      %v756 = vpop.f32.mrb[0].mxu0
      %757 = vmatprep.mubr.bf16.mxu0 0
      %758 = vmatmul.mubr.bf16.gmra.mrb[0].mxu0 %v631
      %v759 = vpop.f32.mrb[0].mxu0
      %v760 = vadd.f32 %v667, %v759
      %v761 = vpop.f32.mrb[0].mxu0
      %v762 = vpop.f32.mrb[0].mxu0
      %v763 = vadd.f32 %v667, %v762
      %v764 = vpop.f32.mrb[0].mxu0
      %765 = vmatprep.mubr.bf16.mxu0 0
      %766 = vmatmul.mubr.bf16.gmra.mrb[0].mxu0 %v632
      %v767 = vpop.f32.mrb[0].mxu0
      %v768 = vadd.f32 %v667, %v767
      %v769 = vpop.f32.mrb[0].mxu0
      %v770 = vpop.f32.mrb[0].mxu0
      %v771 = vadd.f32 %v667, %v770
      %v772 = vpop.f32.mrb[0].mxu0
      %773 = vmatprep.mubr.bf16.mxu0 0
      %774 = vmatmul.mubr.bf16.gmra.mrb[0].mxu0 %v633
      %v775 = vpop.f32.mrb[0].mxu0
      %v776 = vadd.f32 %v667, %v775
      %v777 = vpop.f32.mrb[0].mxu0
      %v778 = vpop.f32.mrb[0].mxu0
      %v779 = vadd.f32 %v667, %v778
      %v780 = vpop.f32.mrb[0].mxu0
      %781 = vmatprep.mubr.bf16.mxu0 0
      %782 = vmatmul.mubr.bf16.gmra.mrb[0].mxu0 %v634
      %v783 = vpop.f32.mrb[0].mxu0
      %v784 = vadd.f32 %v667, %v783
      %v785 = vpop.f32.mrb[0].mxu0
      %v786 = vpop.f32.mrb[0].mxu0
      %v787 = vadd.f32 %v667, %v786
      %v788 = vpop.f32.mrb[0].mxu0
      %789 = vmatprep.mubr.bf16.mxu0 0
      %790 = vmatmul.mubr.bf16.gmra.mrb[0].mxu0 %v635
      %v791 = vpop.f32.mrb[0].mxu0
      %v792 = vadd.f32 %v667, %v791
      %v793 = vpop.f32.mrb[0].mxu0
      %v794 = vpop.f32.mrb[0].mxu0
      %v795 = vadd.f32 %v667, %v794
      %v796 = vpop.f32.mrb[0].mxu0
      %797 = vmatprep.mubr.bf16.mxu0 0
      %798 = vmatmul.mubr.bf16.gmra.mrb[0].mxu0 %v636
      %v799 = vpop.f32.mrb[0].mxu0
      %v800 = vadd.f32 %v667, %v799
      %v801 = vpop.f32.mrb[0].mxu0
      %v802 = vpop.f32.mrb[0].mxu0
      %v803 = vadd.f32 %v667, %v802
      %v804 = vpop.f32.mrb[0].mxu0
      %805 = vmatprep.mubr.bf16.mxu0 0
      %806 = vmatmul.mubr.bf16.gmra.mrb[0].mxu0 %v637
      %v807 = vpop.f32.mrb[0].mxu0
      %v808 = vadd.f32 %v667, %v807
      %v809 = vpop.f32.mrb[0].mxu0
      %v810 = vpop.f32.mrb[0].mxu0
      %v811 = vadd.f32 %v667, %v810
      %v812 = vpop.f32.mrb[0].mxu0
      %813 = vmatprep.mubr.bf16.mxu0 0
      %814 = vmatmul.mubr.bf16.gmra.mrb[0].mxu0 %v638
      %v815 = vpop.f32.mrb[0].mxu0
      %v816 = vadd.f32 %v667, %v815
      %v817 = vpop.f32.mrb[0].mxu0
      %v818 = vpop.f32.mrb[0].mxu0
      %v819 = vadd.f32 %v667, %v818
      %v820 = vpop.f32.mrb[0].mxu0
      %821 = vmatprep.mubr.bf16.mxu0 0
      %822 = vmatmul.mubr.bf16.gmra.mrb[0].mxu0 %v639
      %v823 = vpop.f32.mrb[0].mxu0
      %v824 = vadd.f32 %v667, %v823
      %v825 = vpop.f32.mrb[0].mxu0
      %v826 = vpop.f32.mrb[0].mxu0
      %v827 = vadd.f32 %v667, %v826
      %v828 = vpop.f32.mrb[0].mxu0
      %829 = vmatprep.mubr.bf16.mxu0 0
      %830 = vmatmul.mubr.bf16.gmra.mrb[0].mxu0 %v640
      %v831 = vpop.f32.mrb[0].mxu0
      %v832 = vadd.f32 %v667, %v831
      %v833 = vpop.f32.mrb[0].mxu0
      %v834 = vpop.f32.mrb[0].mxu0
      %v835 = vadd.f32 %v667, %v834
      %v836 = vpop.f32.mrb[0].mxu0
      %837 = vmatprep.mubr.bf16.mxu0 0
      %838 = vmatmul.mubr.bf16.gmra.mrb[0].mxu0 %v641
      %v839 = vpop.f32.mrb[0].mxu0
      %v840 = vadd.f32 %v667, %v839
      %v841 = vpop.f32.mrb[0].mxu0
      %v842 = vpop.f32.mrb[0].mxu0
      %v843 = vadd.f32 %v667, %v842
      %v844 = vpop.f32.mrb[0].mxu0
      %845 = vmatprep.mubr.bf16.mxu0 0
      %846 = vmatmul.mubr.bf16.gmra.mrb[0].mxu0 %v642
      %v847 = vpop.f32.mrb[0].mxu0
      %v848 = vadd.f32 %v667, %v847
      %v849 = vpop.f32.mrb[0].mxu0
      %v850 = vpop.f32.mrb[0].mxu0
      %v851 = vadd.f32 %v667, %v850
      %v852 = vpop.f32.mrb[0].mxu0
      %853 = vmatprep.mubr.bf16.mxu0 0
      %854 = vmatmul.mubr.bf16.gmra.mrb[0].mxu0 %v643
      %v855 = vpop.f32.mrb[0].mxu0
      %v856 = vadd.f32 %v667, %v855
      %v857 = vpop.f32.mrb[0].mxu0
      %v858 = vpop.f32.mrb[0].mxu0
      %v859 = vadd.f32 %v667, %v858
      %v860 = vpop.f32.mrb[0].mxu0
      %861 = vmatprep.mubr.bf16.mxu0 0
      %862 = vmatmul.mubr.bf16.gmra.mrb[0].mxu0 %v644
      %v863 = vpop.f32.mrb[0].mxu0
      %v864 = vadd.f32 %v667, %v863
      %v865 = vpop.f32.mrb[0].mxu0
      %v866 = vpop.f32.mrb[0].mxu0
      %v867 = vadd.f32 %v667, %v866
      %v868 = vpop.f32.mrb[0].mxu0
      %869 = vmatprep.mubr.bf16.mxu0 0
      %870 = vmatmul.mubr.bf16.gmra.mrb[0].mxu0 %v645
      %v871 = vpop.f32.mrb[0].mxu0
      %v872 = vadd.f32 %v667, %v871
      %v873 = vpop.f32.mrb[0].mxu0
      %v874 = vpop.f32.mrb[0].mxu0
      %v875 = vadd.f32 %v667, %v874
      %v876 = vpop.f32.mrb[0].mxu0
      %877 = vdwg.mxu0
      %v878 = vxor.u32 %v752, 2147483648
      %v879 = vxor.u32 %v755, 2147483648
      %v880 = vxor.u32 %v760, 2147483648
      %v881 = vxor.u32 %v763, 2147483648
      %v882 = vxor.u32 %v768, 2147483648
      %v883 = vxor.u32 %v771, 2147483648
      %v884 = vxor.u32 %v776, 2147483648
      %v885 = vxor.u32 %v779, 2147483648
      %v886 = vxor.u32 %v784, 2147483648
      %v887 = vxor.u32 %v787, 2147483648
      %v888 = vxor.u32 %v792, 2147483648
      %v889 = vxor.u32 %v795, 2147483648
      %v890 = vxor.u32 %v800, 2147483648
      %v891 = vxor.u32 %v803, 2147483648
      %v892 = vxor.u32 %v808, 2147483648
      %v893 = vxor.u32 %v811, 2147483648
      %v894 = vxor.u32 %v816, 2147483648
      %v895 = vxor.u32 %v819, 2147483648
      %v896 = vxor.u32 %v824, 2147483648
      %v897 = vxor.u32 %v827, 2147483648
      %v898 = vxor.u32 %v832, 2147483648
      %v899 = vxor.u32 %v835, 2147483648
      %v900 = vxor.u32 %v840, 2147483648
      %v901 = vxor.u32 %v843, 2147483648
      %v902 = vxor.u32 %v848, 2147483648
      %v903 = vxor.u32 %v851, 2147483648
      %v904 = vxor.u32 %v856, 2147483648
      %v905 = vxor.u32 %v859, 2147483648
      %v906 = vxor.u32 %v864, 2147483648
      %v907 = vxor.u32 %v867, 2147483648
      %v908 = vxor.u32 %v872, 2147483648
      %v909 = vxor.u32 %v875, 2147483648
      %v910 = vmul.f32 %v878, 1.442695
      %v911 = vpow.pop %v910
      %v912 = vmul.f32 %v879, 1.442695
      %v913 = vpow.pop %v912
      %v914 = vmul.f32 %v880, 1.442695
      %v915 = vpow.pop %v914
      %v916 = vmul.f32 %v881, 1.442695
      %v917 = vpow.pop %v916
      %v918 = vmul.f32 %v882, 1.442695
      %v919 = vpow.pop %v918
      %v920 = vmul.f32 %v883, 1.442695
      %v921 = vpow.pop %v920
      %v922 = vmul.f32 %v884, 1.442695
      %v923 = vpow.pop %v922
      %v924 = vmul.f32 %v885, 1.442695
      %v925 = vpow.pop %v924
      %v926 = vmul.f32 %v886, 1.442695
      %v927 = vpow.pop %v926
      %v928 = vmul.f32 %v887, 1.442695
      %v929 = vpow.pop %v928
      %v930 = vmul.f32 %v888, 1.442695
      %v931 = vpow.pop %v930
      %v932 = vmul.f32 %v889, 1.442695
      %v933 = vpow.pop %v932
      %v934 = vmul.f32 %v890, 1.442695
      %v935 = vpow.pop %v934
      %v936 = vmul.f32 %v891, 1.442695
      %v937 = vpow.pop %v936
      %v938 = vmul.f32 %v892, 1.442695
      %v939 = vpow.pop %v938
      %v940 = vmul.f32 %v893, 1.442695
      %v941 = vpow.pop %v940
      %v942 = vmul.f32 %v894, 1.442695
      %v943 = vpow.pop %v942
      %v944 = vmul.f32 %v895, 1.442695
      %v945 = vpow.pop %v944
      %v946 = vmul.f32 %v896, 1.442695
      %v947 = vpow.pop %v946
      %v948 = vmul.f32 %v897, 1.442695
      %v949 = vpow.pop %v948
      %v950 = vmul.f32 %v898, 1.442695
      %v951 = vpow.pop %v950
      %v952 = vmul.f32 %v899, 1.442695
      %v953 = vpow.pop %v952
      %v954 = vmul.f32 %v900, 1.442695
      %v955 = vpow.pop %v954
      %v956 = vmul.f32 %v901, 1.442695
      %v957 = vpow.pop %v956
      %v958 = vmul.f32 %v902, 1.442695
      %v959 = vpow.pop %v958
      %v960 = vmul.f32 %v903, 1.442695
      %v961 = vpow.pop %v960
      %v962 = vmul.f32 %v904, 1.442695
      %v963 = vpow.pop %v962
      %v964 = vmul.f32 %v905, 1.442695
      %v965 = vpow.pop %v964
      %v966 = vmul.f32 %v906, 1.442695
      %v967 = vpow.pop %v966
      %v968 = vmul.f32 %v907, 1.442695
      %v969 = vpow.pop %v968
      %v970 = vmul.f32 %v908, 1.442695
      %v971 = vpow.pop %v970
      %v972 = vmul.f32 %v909, 1.442695
      %v973 = vpow.pop %v972
      %v974 = vadd.f32 %v911, 1.0
      %v975 = vadd.f32 %v913, 1.0
      %v976 = vadd.f32 %v915, 1.0
      %v977 = vadd.f32 %v917, 1.0
      %v978 = vadd.f32 %v919, 1.0
      %v979 = vadd.f32 %v921, 1.0
      %v980 = vadd.f32 %v923, 1.0
      %v981 = vadd.f32 %v925, 1.0
      %v982 = vadd.f32 %v927, 1.0
      %v983 = vadd.f32 %v929, 1.0
      %v984 = vadd.f32 %v931, 1.0
      %v985 = vadd.f32 %v933, 1.0
      %v986 = vadd.f32 %v935, 1.0
      %v987 = vadd.f32 %v937, 1.0
      %v988 = vadd.f32 %v939, 1.0
      %v989 = vadd.f32 %v941, 1.0
      %v990 = vadd.f32 %v943, 1.0
      %v991 = vadd.f32 %v945, 1.0
      %v992 = vadd.f32 %v947, 1.0
      %v993 = vadd.f32 %v949, 1.0
      %v994 = vadd.f32 %v951, 1.0
      %v995 = vadd.f32 %v953, 1.0
      %v996 = vadd.f32 %v955, 1.0
      %v997 = vadd.f32 %v957, 1.0
      %v998 = vadd.f32 %v959, 1.0
      %v999 = vadd.f32 %v961, 1.0
      %v1000 = vadd.f32 %v963, 1.0
      %v1001 = vadd.f32 %v965, 1.0
      %v1002 = vadd.f32 %v967, 1.0
      %v1003 = vadd.f32 %v969, 1.0
      %v1004 = vadd.f32 %v971, 1.0
      %v1005 = vadd.f32 %v973, 1.0
      %v1006 = vrcp.pop %v974
      %v1007 = vmul.f32 1.0, %v1006
      %v1008 = vrcp.pop %v975
      %v1009 = vmul.f32 1.0, %v1008
      %v1010 = vrcp.pop %v976
      %v1011 = vmul.f32 1.0, %v1010
      %v1012 = vrcp.pop %v977
      %v1013 = vmul.f32 1.0, %v1012
      %v1014 = vrcp.pop %v978
      %v1015 = vmul.f32 1.0, %v1014
      %v1016 = vrcp.pop %v979
      %v1017 = vmul.f32 1.0, %v1016
      %v1018 = vrcp.pop %v980
      %v1019 = vmul.f32 1.0, %v1018
      %v1020 = vrcp.pop %v981
      %v1021 = vmul.f32 1.0, %v1020
      %v1022 = vrcp.pop %v982
      %v1023 = vmul.f32 1.0, %v1022
      %v1024 = vrcp.pop %v983
      %v1025 = vmul.f32 1.0, %v1024
      %v1026 = vrcp.pop %v984
      %v1027 = vmul.f32 1.0, %v1026
      %v1028 = vrcp.pop %v985
      %v1029 = vmul.f32 1.0, %v1028
      %v1030 = vrcp.pop %v986
      %v1031 = vmul.f32 1.0, %v1030
      %v1032 = vrcp.pop %v987
      %v1033 = vmul.f32 1.0, %v1032
      %v1034 = vrcp.pop %v988
      %v1035 = vmul.f32 1.0, %v1034
      %v1036 = vrcp.pop %v989
      %v1037 = vmul.f32 1.0, %v1036
      %v1038 = vrcp.pop %v990
      %v1039 = vmul.f32 1.0, %v1038
      %v1040 = vrcp.pop %v991
      %v1041 = vmul.f32 1.0, %v1040
      %v1042 = vrcp.pop %v992
      %v1043 = vmul.f32 1.0, %v1042
      %v1044 = vrcp.pop %v993
      %v1045 = vmul.f32 1.0, %v1044
      %v1046 = vrcp.pop %v994
      %v1047 = vmul.f32 1.0, %v1046
      %v1048 = vrcp.pop %v995
      %v1049 = vmul.f32 1.0, %v1048
      %v1050 = vrcp.pop %v996
      %v1051 = vmul.f32 1.0, %v1050
      %v1052 = vrcp.pop %v997
      %v1053 = vmul.f32 1.0, %v1052
      %v1054 = vrcp.pop %v998
      %v1055 = vmul.f32 1.0, %v1054
      %v1056 = vrcp.pop %v999
      %v1057 = vmul.f32 1.0, %v1056
      %v1058 = vrcp.pop %v1000
      %v1059 = vmul.f32 1.0, %v1058
      %v1060 = vrcp.pop %v1001
      %v1061 = vmul.f32 1.0, %v1060
      %v1062 = vrcp.pop %v1002
      %v1063 = vmul.f32 1.0, %v1062
      %v1064 = vrcp.pop %v1003
      %v1065 = vmul.f32 1.0, %v1064
      %v1066 = vrcp.pop %v1004
      %v1067 = vmul.f32 1.0, %v1066
      %v1068 = vrcp.pop %v1005
      %v1069 = vmul.f32 1.0, %v1068
      %1070 = vst [vmem:[%s226] sm:$0xff] %v1007
      %1071 = vst [vmem:[%s226 + $0x8] sm:$0xff] %v1009
      %1072 = vst [vmem:[%s226 + $0x10] sm:$0xff] %v1011
      %1073 = vst [vmem:[%s226 + $0x18] sm:$0xff] %v1013
      %1074 = vst [vmem:[%s226 + $0x20] sm:$0xff] %v1015
      %1075 = vst [vmem:[%s226 + $0x28] sm:$0xff] %v1017
      %1076 = vst [vmem:[%s226 + $0x30] sm:$0xff] %v1019
      %1077 = vst [vmem:[%s226 + $0x38] sm:$0xff] %v1021
      %1078 = vst [vmem:[%s226 + $0x40] sm:$0xff] %v1023
      %1079 = vst [vmem:[%s226 + $0x48] sm:$0xff] %v1025
      %1080 = vst [vmem:[%s226 + $0x50] sm:$0xff] %v1027
      %1081 = vst [vmem:[%s226 + $0x58] sm:$0xff] %v1029
      %1082 = vst [vmem:[%s226 + $0x60] sm:$0xff] %v1031
      %1083 = vst [vmem:[%s226 + $0x68] sm:$0xff] %v1033
      %1084 = vst [vmem:[%s226 + $0x70] sm:$0xff] %v1035
      %1085 = vst [vmem:[%s226 + $0x78] sm:$0xff] %v1037
      %1086 = vst [vmem:[%s226 + $0x80] sm:$0xff] %v1039
      %1087 = vst [vmem:[%s226 + $0x88] sm:$0xff] %v1041
      %1088 = vst [vmem:[%s226 + $0x90] sm:$0xff] %v1043
      %1089 = vst [vmem:[%s226 + $0x98] sm:$0xff] %v1045
      %1090 = vst [vmem:[%s226 + $0xa0] sm:$0xff] %v1047
      %1091 = vst [vmem:[%s226 + $0xa8] sm:$0xff] %v1049
      %1092 = vst [vmem:[%s226 + $0xb0] sm:$0xff] %v1051
      %1093 = vst [vmem:[%s226 + $0xb8] sm:$0xff] %v1053
      %1094 = vst [vmem:[%s226 + $0xc0] sm:$0xff] %v1055
      %1095 = vst [vmem:[%s226 + $0xc8] sm:$0xff] %v1057
      %1096 = vst [vmem:[%s226 + $0xd0] sm:$0xff] %v1059
      %1097 = vst [vmem:[%s226 + $0xd8] sm:$0xff] %v1061
      %1098 = vst [vmem:[%s226 + $0xe0] sm:$0xff] %v1063
      %1099 = vst [vmem:[%s226 + $0xe8] sm:$0xff] %v1065
      %1100 = vst [vmem:[%s226 + $0xf0] sm:$0xff] %v1067
      %1101 = vst [vmem:[%s226 + $0xf8] sm:$0xff] %v1069
      %s1102 = smul.u32 32, %s16
      %p1103 = scmp.lt.s32.totalorder %s1102, 63
      %s1104 = scalar_select %p1103, %s1102, 63
      %s1105 = smul.addr %s1104, 8
      %s1106 = scalar_lea.vmem %s5, %s1105
      // Predicated region
      $region41: #{maunet_forward.43} parent=39 // pred_check
        %p1107 = pneg %p144
      $region42: #{maunet_forward.43} parent=39 // pred_check_branch
        %1109 = sbr.rel (%p1107) target = $region44
      $region43: #{maunet_forward.43} parent=39 // pred_region
        %s1110 = smul.u32 32, %s16
      $region44: #{maunet_forward.43} parent=39 // pred_fallthru
        _
    $region40: #{maunet_forward.43} parent=5 // pred_fallthru
      _
    %p1111 = scmp.le.s32.totalorder 2, %s11
    // Predicated region
    $region45: #{maunet_forward.43} parent=5 // pred_check
      %p1112 = pneg %p1111
    $region46: #{maunet_forward.43} parent=5 // pred_check_branch
      %1114 = sbr.rel (%p1112) target = $region48
    $region47: #{maunet_forward.43} parent=5 // pred_region
      %s1115 = ssub.s32 %s11, 2
      // Predicated region
      $region49: #{maunet_forward.43} parent=47 // pred_check
        %p1116 = pneg %p150
      $region50: #{maunet_forward.43} parent=47 // pred_check_branch
        %1118 = sbr.rel (%p1116) target = $region52
      $region51: #{maunet_forward.43} parent=47 // pred_region
        %s1119 = smul.u32 32, %s17
        %p1120 = scmp.lt.s32.totalorder %s1119, 63
        %s1121 = scalar_select %p1120, %s1119, 63
        %s1122 = smul.addr %s1121, 8
        %s1123 = scalar_lea.vmem %s5, %s1122
      $region52: #{maunet_forward.43} parent=47 // pred_fallthru
        _
    $region48: #{maunet_forward.43} parent=5 // pred_fallthru
      _
  $region6: #{maunet_forward.43} parent=0 // loop_footer
    %s15 = sadd.s32 1, %s11
  $region7: #{maunet_forward.43} parent=0 // loop_footer_branch
    %10 = sbr.rel target = $region3
  $region8: #{maunet_forward.43} parent=0 // loop_exit
    _

</llo_original>
